<compile_context>
chip_gen: v7x
topology: tpu7x:2x2x1
jax: 0.10.0
libtpu: 0.0.40
codegen_flags: <defaults>
</compile_context>

<pallas_src>
import functools

import jax
import jax.numpy as jnp
from jax import lax
from jax.experimental import pallas as pl
from jax.experimental.pallas import tpu as pltpu


# ----------------------------------------------------------------------------
# VMEM budgeting helpers (padding-aware, per the performance review)
# ----------------------------------------------------------------------------
def _round_up(n, m):
    return -(-n // m) * m


def _padded_bytes(shape, dtype):
    """VMEM footprint of an array: last two dims tile to (8, 128) vregs; sub-32-bit
    dtypes pack along sublanes, so the sublane multiple grows accordingly."""
    itemsize = jnp.dtype(dtype).itemsize
    if len(shape) == 1:
        return _round_up(shape[0] * itemsize, 4 * 128)
    lead = 1
    for d in shape[:-2]:
        lead *= d
    sub_mult = 8 * max(1, 4 // itemsize)
    return (lead * _round_up(shape[-2], sub_mult)
            * _round_up(shape[-1], 128) * itemsize)


def _vmem_limit_bytes():
    """Scoped-VMEM limit: physical capacity minus headroom for Mosaic internal
    scratch and pipeline buffers (v5e/v6e: 128 MiB physical, v7x: 64 MiB)."""
    cap = 64 * 1024 * 1024          # conservative fallback (v7x-sized)
    try:
        cap = int(pltpu.get_tpu_info().vmem_capacity_bytes)
    except Exception:
        pass
    return cap - max(cap // 8, 8 * 1024 * 1024)


def _vmem_estimate(C, H, W, Cq, nqkv, th, cdt):
    """Conservative padded-byte estimate of resident scratch + per-tile live set."""
    f32 = jnp.float32
    resident = (
        _padded_bytes((C, H * W), f32)              # single-buffered x copy
        + _padded_bytes((H, W, Cq), cdt)            # q, row-major
        + _padded_bytes((W, H, Cq), cdt)            # k, column-major
        + _padded_bytes((W, H, C), cdt)             # v, column-major
        + 2 * _padded_bytes((C, th * W), f32)       # double-buffered output block
        + 2 * _padded_bytes((C, nqkv), cdt)         # double-buffered fused weights
        + 2 * _padded_bytes((1, nqkv), f32)
    )
    per_tile = (
        _padded_bytes((W, th, Cq), cdt) + 2 * _padded_bytes((th, W, Cq), cdt)   # q_c, k slice + k_rt
        + _padded_bytes((W, th, C), cdt) + _padded_bytes((th, W, C), cdt)       # v slice, v_rt
        + 2 * _padded_bytes((W, th, H), f32) + _padded_bytes((W, th, H), cdt)   # e_h, p_h (+cast)
        + 2 * _padded_bytes((th, W, W), f32) + _padded_bytes((th, W, W), cdt)   # e_w, p_w (+cast)
        + 2 * _padded_bytes((W, th, C), f32)                                    # out_h (+transpose)
        + 2 * _padded_bytes((th, W, C), f32)                                    # out_w, combined
        + 2 * _padded_bytes((C, th * W), f32)                                   # out_cf, x_res
    )
    proj = (                                         # t == 0 projection-chunk temporaries
        _padded_bytes((C, th * W), cdt)              # x chunk cast to MXU dtype
        + _padded_bytes((th * W, nqkv), f32)         # qkv chunk accumulator
        + 3 * _padded_bytes((th, W, C), cdt)         # q/k/v chunk splits + transposes
    )
    return resident + max(per_tile, proj)


def _pick_tile_h(C, H, W, Cq, nqkv, compute_dtype, vmem_limit_bytes):
    """Largest aligned row tile whose (padded) working set fits the VMEM budget."""
    budget = int(vmem_limit_bytes * 0.9)
    cands = [H] + [d for d in range(8, H, 8)
                   if H % d == 0 and (d * W) % 128 == 0]
    cands = sorted(set(cands), reverse=True)
    # Prefer <= 64 rows: M is already past the MXU sweet spot and the
    # (tile, W, H|W) energy/probability buffers grow linearly with tile_h.
    preferred = [d for d in cands if d <= 64] or cands
    for th in preferred:
        if _vmem_estimate(C, H, W, Cq, nqkv, th, compute_dtype) <= budget:
            return th
    # Never silently fall back (rev-2 did): over-subscribing VMEM fails at compile
    # time with a far less actionable error.
    raise ValueError(
        "criss_cross_attention: no row tile satisfying the (8,128) alignment "
        f"constraints fits the VMEM budget ({budget} bytes) for "
        f"C={C}, H={H}, W={W}; pass tile_h= explicitly or shrink the feature map.")


# ----------------------------------------------------------------------------
# Kernel
# ----------------------------------------------------------------------------
def _criss_cross_kernel(gamma_ref, x_hbm, wqkv_ref, bqkv_ref, o_ref,
                        x_vmem, q_hw, k_wh, v_wh, copy_sem,
                        *, H, W, C, Cq, tile_h, compute_dtype):
    """One (batch, row-tile) grid step.

    gamma_ref : (1,)          SMEM scalar
    x_hbm     : (B, C, H*W)   raw HBM ref (memory_space=pl.ANY)
    wqkv_ref  : (C, 2*Cq+C)   fused q/k/v 1x1-conv weights (compute dtype)
    bqkv_ref  : (1, 2*Cq+C)   fused bias (f32)
    o_ref     : (C, tile_h*W)
    x_vmem    : (C, H*W)      single-buffered per-batch copy of x (f32 scratch)
    q_hw      : (H, W, Cq)    full-image q, row-major     (compute-dtype scratch)
    k_wh      : (W, H, Cq)    full-image k, column-major  (compute-dtype scratch)
    v_wh      : (W, H, C)     full-image v, column-major  (compute-dtype scratch)
    """
    b = pl.program_id(0)
    t = pl.program_id(1)
    cdt = compute_dtype

    # ---- once per batch element: one DMA of x, then chunked fused QKV ----------
    @pl.when(t == 0)
    def _():
        cp = pltpu.make_async_copy(x_hbm.at[b], x_vmem, copy_sem)
        cp.start()
        cp.wait()

        n_chunks = H // tile_h

        def proj(cidx, carry):
            r0 = pl.multiple_of(cidx * tile_h, tile_h)
            # Contract the channel axis of the channel-first image directly:
            # no materialized (H*W, C) transpose, chunk-bounded temporaries.
            xc = x_vmem[:, pl.ds(r0 * W, tile_h * W)].astype(cdt)     # (C, tW)
            qkv = lax.dot_general(
                xc, wqkv_ref[...],
                dimension_numbers=(((0,), (0,)), ((), ())),
                preferred_element_type=jnp.float32)                   # (tW, nqkv)
            qkv = qkv + bqkv_ref[...]
            q = qkv[:, :Cq].reshape(tile_h, W, Cq)
            k = qkv[:, Cq:2 * Cq].reshape(tile_h, W, Cq)
            v = qkv[:, 2 * Cq:].reshape(tile_h, W, C)
            q_hw[pl.ds(r0, tile_h)] = q.astype(cdt)
            k_wh[:, pl.ds(r0, tile_h), :] = jnp.transpose(k, (1, 0, 2)).astype(cdt)
            v_wh[:, pl.ds(r0, tile_h), :] = jnp.transpose(v, (1, 0, 2)).astype(cdt)
            return carry

        lax.fori_loop(0, n_chunks, proj, 0)

    # ---- per-tile operands (single-layout scratch + small derived transposes) --
    i0 = pl.multiple_of(t * tile_h, tile_h)          # first image row of this tile

    q_r = q_hw[pl.ds(i0, tile_h)]                                   # (tH, W, Cq)
    q_c = jnp.transpose(q_r, (1, 0, 2))                             # (W, tH, Cq)
    k_c = k_wh[...]                                                 # (W, H,  Cq)
    k_rt = jnp.transpose(k_wh[:, pl.ds(i0, tile_h), :], (1, 0, 2))  # (tH, W, Cq)
    v_c = v_wh[...]                                                 # (W, H,  C)
    v_rt = jnp.transpose(v_wh[:, pl.ds(i0, tile_h), :], (1, 0, 2))  # (tH, W, C)

    # ---- column ("H") energies, batched over w:  e_h[w, i, j] -------------------
    e_h = jnp.einsum('wic,wjc->wij', q_c, k_c,
                     preferred_element_type=jnp.float32)            # (W, tH, H)
    row = lax.broadcasted_iota(jnp.int32, (tile_h, H), 0) + i0
    col = lax.broadcasted_iota(jnp.int32, (tile_h, H), 1)
    e_h = jnp.where((row == col)[None, :, :], -jnp.inf, e_h)        # the INF() self-mask

    # ---- row ("W") energies, batched over i:  e_w[i, x, y] ----------------------
    e_w = jnp.einsum('ixc,iyc->ixy', q_r, k_rt,
                     preferred_element_type=jnp.float32)            # (tH, W, W)

    # ---- joint softmax over the concatenated (H + W) axis (f32) -----------------
    m = jnp.maximum(jnp.max(e_h, axis=-1), jnp.max(e_w, axis=-1).T)   # (W, tH)
    p_h = jnp.exp(e_h - m[:, :, None])                                # (W, tH, H)
    p_w = jnp.exp(e_w - m.T[:, :, None])                              # (tH, W, W)
    denom = jnp.sum(p_h, axis=-1).T + jnp.sum(p_w, axis=-1)           # (tH, W)
    # Exact divide: the rev-2 approx reciprocal caused an ~8e-3 abs error.
    # gamma is folded in here so no extra elementwise pass is needed later.
    scale = gamma_ref[0] / denom                                      # (tH, W)

    # ---- aggregate with un-normalized probabilities, normalize once -------------
    out_h = jnp.einsum('wij,wjc->wic', p_h.astype(cdt), v_c,
                       preferred_element_type=jnp.float32)          # (W, tH, C)
    out_w = jnp.einsum('ixy,iyc->ixc', p_w.astype(cdt), v_rt,
                       preferred_element_type=jnp.float32)          # (tH, W, C)
    attn = (jnp.transpose(out_h, (1, 0, 2)) + out_w) * scale[:, :, None]  # (tH, W, C)

    # ---- back to channel-first, add residual, lane-dense store ------------------
    out_cf = attn.reshape(tile_h * W, C).T                          # (C, tH*W)
    x_res = x_vmem[:, pl.ds(i0 * W, tile_h * W)]                    # (C, tH*W) f32
    o_ref[...] = (out_cf + x_res).astype(o_ref.dtype)


# ----------------------------------------------------------------------------
# Wrapper
# ----------------------------------------------------------------------------
def criss_cross_attention(x, wq, bq, wk, bk, wv, bv, gamma, *,
                          tile_h=None, compute_dtype=jnp.bfloat16):
    """CCNet criss-cross attention forward (matches the PyTorch module).

    x : (B, C, H, W) float32 (NCHW).  wq/wk : (C, C//8), wv : (C, C) — the 1x1
    conv weights stored as (in, out).  bq/bk : (C//8,), bv : (C,), gamma : (1,).
    compute_dtype controls the MXU operand dtype (bf16 default; f32 for strict
    numerical parity).  Softmax and the residual path are always f32.
    """
    B, C, H, W = x.shape
    Cq = wq.shape[1]
    nqkv = 2 * Cq + C

    vmem_limit = _vmem_limit_bytes()
    if tile_h is None:
        tile_h = _pick_tile_h(C, H, W, Cq, nqkv, compute_dtype, vmem_limit)
    if tile_h != H and (H % tile_h != 0 or tile_h % 8 != 0
                        or (tile_h * W) % 128 != 0):
        raise ValueError(
            f"tile_h={tile_h} must divide H={H}, be a multiple of 8, and "
            f"tile_h*W must be a multiple of 128 (W={W}), or equal H")
    # Note: tile_h == H with (H*W) % 128 != 0 is allowed but produces masked
    # partial output stores (perf hazard, not a correctness issue).
    n_row_tiles = H // tile_h

    # Fuse the three 1x1-conv projections into one weight matrix / bias vector.
    wqkv = jnp.concatenate([wq, wk, wv], axis=1).astype(compute_dtype)  # (C, 2Cq+C)
    bqkv = jnp.concatenate([bq, bk, bv]).reshape(1, nqkv).astype(jnp.float32)

    # Flatten spatial dims (free reshape): lane-dense minor axis, NCHW in/out.
    x2 = x.reshape(B, C, H * W).astype(jnp.float32)
    gamma = gamma.reshape(1).astype(jnp.float32)

    kernel = functools.partial(_criss_cross_kernel, H=H, W=W, C=C, Cq=Cq,
                               tile_h=tile_h, compute_dtype=compute_dtype)

    out2 = pl.pallas_call(
        kernel,
        out_shape=jax.ShapeDtypeStruct((B, C, H * W), jnp.float32),
        grid_spec=pltpu.PrefetchScalarGridSpec(
            num_scalar_prefetch=0,
            grid=(B, n_row_tiles),
            in_specs=[
                pl.BlockSpec(memory_space=pltpu.MemorySpace.SMEM),    # gamma
                pl.BlockSpec(memory_space=pl.ANY),                    # x, raw HBM
                pl.BlockSpec((C, nqkv), lambda b, t: (0, 0)),         # fused weights
                pl.BlockSpec((1, nqkv), lambda b, t: (0, 0)),         # fused bias
            ],
            out_specs=pl.BlockSpec((None, C, tile_h * W), lambda b, t: (b, 0, t)),
            scratch_shapes=[
                pltpu.VMEM((C, H * W), jnp.float32),      # x, single-buffered copy
                pltpu.VMEM((H, W, Cq), compute_dtype),    # q, row-major
                pltpu.VMEM((W, H, Cq), compute_dtype),    # k, column-major
                pltpu.VMEM((W, H, C), compute_dtype),     # v, column-major
                pltpu.SemaphoreType.DMA,                  # x copy semaphore
            ],
        ),
        compiler_params=pltpu.CompilerParams(
            # Batch is megacore-parallel; the row-tile axis reuses per-batch
            # scratch and must stay sequential.
            # TODO(synk): for B == 1 inference on v7x, hoist the QKV projection
            # into its own pallas_call so both attention grid axes can be parallel.
            dimension_semantics=("parallel", "arbitrary"),
            vmem_limit_bytes=vmem_limit,
        ),
    )(gamma, x2, wqkv, bqkv)

    return out2.reshape(B, C, H, W).astype(x.dtype)


# ----------------------------------------------------------------------------
# Pure-JAX reference of the PyTorch forward (for validation)
# ----------------------------------------------------------------------------
def criss_cross_reference(x_nchw, wq, bq, wk, bk, wv, bv, gamma):
    B, C, H, W = x_nchw.shape
    x = jnp.transpose(x_nchw, (0, 2, 3, 1)).astype(jnp.float32)    # (B,H,W,C)
    q = jnp.einsum('bhwc,cd->bhwd', x, wq) + bq
    k = jnp.einsum('bhwc,cd->bhwd', x, wk) + bk
    v = jnp.einsum('bhwc,cd->bhwd', x, wv) + bv
    e_h = jnp.einsum('biwc,bjwc->biwj', q, k)                      # (B,H,W,H)
    eye = jnp.eye(H, dtype=bool)
    e_h = jnp.where(eye[None, :, None, :], -jnp.inf, e_h)
    e_w = jnp.einsum('bixc,biyc->bixy', q, k)                      # (B,H,W,W)
    att = jax.nn.softmax(jnp.concatenate([e_h, e_w], axis=-1), axis=-1)
    att_h, att_w = att[..., :H], att[..., H:]
    out_h = jnp.einsum('biwj,bjwc->biwc', att_h, v)
    out_w = jnp.einsum('bixy,biyc->bixc', att_w, v)
    out = gamma[0] * (out_h + out_w) + x
    return jnp.transpose(out, (0, 3, 1, 2))


if __name__ == "__main__":
    B, C, H, W = 2, 32, 16, 16          # in_dim = 32 -> query/key channels = 4
    Cq = C // 8

    key = jax.random.PRNGKey(0)
    kx, k1, k2, k3, k4, k5, k6 = jax.random.split(key, 7)

    std = (2.0 / C) ** 0.5              # kaiming-normal-like init for the 1x1 convs
    wq = jax.random.normal(k1, (C, Cq), jnp.float32) * std
    wk = jax.random.normal(k2, (C, Cq), jnp.float32) * std
    wv = jax.random.normal(k3, (C, C), jnp.float32) * std
    bq = jax.random.normal(k4, (Cq,), jnp.float32) * 0.01
    bk = jax.random.normal(k5, (Cq,), jnp.float32) * 0.01
    bv = jax.random.normal(k6, (C,), jnp.float32) * 0.01
    # The module initializes gamma = 0 (output would trivially equal x); use a
    # non-zero value so the attention path is actually exercised by the check.
    gamma = jnp.array([0.5], jnp.float32)

    x = jax.random.normal(kx, (B, C, H, W), jnp.float32)

    ref = jax.block_until_ready(
        criss_cross_reference(x, wq, bq, wk, bk, wv, bv, gamma))

    # 1) f32 MXU operands + explicit tile_h=8 -> grid (B, 2): exercises the
    #    row-tiled path, the chunked projection loop and scratch reuse at t > 0.
    out_f32 = jax.block_until_ready(
        criss_cross_attention(x, wq, bq, wk, bk, wv, bv, gamma,
                              tile_h=8, compute_dtype=jnp.float32))
    assert out_f32.shape == x.shape and out_f32.dtype == jnp.float32
    err32 = float(jnp.max(jnp.abs(out_f32 - ref)))
    assert jnp.allclose(out_f32, ref, rtol=1e-3, atol=1e-3), \
        f"f32 path max abs err = {err32}"

    # 2) bf16 MXU operands (production configuration), auto tile_h.
    #    bf16-rounded q/k energies pass through exp(), so ~1e-3 operand rounding
    #    can amplify to a few 1e-2 absolute on the attention output; the softmax
    #    statistics themselves stay in f32.
    out_bf16 = jax.block_until_ready(
        criss_cross_attention(x, wq, bq, wk, bk, wv, bv, gamma))
    assert out_bf16.shape == x.shape and out_bf16.dtype == jnp.float32
    errbf = float(jnp.max(jnp.abs(out_bf16 - ref)))
    assert jnp.allclose(out_bf16, ref, rtol=1e-1, atol=1e-1), \
        f"bf16 path max abs err = {errbf}"

    print("KERNEL_OK")
</pallas_src>

<mosaic_0001>
module attributes {stable_mosaic.version = 11 : i64} {
  func.func @_criss_cross_kernel(%arg0: i32, %arg1: i32, %arg2: memref<1xf32, #tpu.memory_space<smem>>, %arg3: memref<2x32x256xf32, #tpu.memory_space<any>>, %arg4: memref<32x40xf32, #tpu.memory_space<vmem>>, %arg5: memref<1x40xf32, #tpu.memory_space<vmem>>, %arg6: memref<1x32x128xf32, #tpu.memory_space<vmem>>, %arg7: memref<32x256xf32, #tpu.memory_space<vmem>>, %arg8: memref<16x16x4xf32, #tpu.memory_space<vmem>>, %arg9: memref<16x16x4xf32, #tpu.memory_space<vmem>>, %arg10: memref<16x16x32xf32, #tpu.memory_space<vmem>>, %arg11: memref<!tpu.dma_semaphore, #tpu.memory_space<semaphore_mem>>) attributes {dimension_semantics = [#tpu.dimension_semantics<parallel>, #tpu.dimension_semantics<arbitrary>], iteration_bounds = array<i64: 2, 2>, scalar_prefetch = 0 : i64, scratch_operands = 5 : i64, tpu.core_type = #tpu.core_type<tc>, window_params = [{transform_indices = @transform_0, window_bounds = array<i64: 1>}, {}, {pipeline_mode = #tpu.pipeline_mode<synchronous>, transform_indices = @transform_2, window_bounds = array<i64: 32, 40>}, {pipeline_mode = #tpu.pipeline_mode<synchronous>, transform_indices = @transform_3, window_bounds = array<i64: 1, 40>}, {transform_indices = @transform_4, window_bounds = array<i64: 1, 32, 128>}]} {
    %c0_i32 = arith.constant 0 : i32
    %0 = arith.cmpi eq, %arg1, %c0_i32 : i32
    %1 = arith.extui %0 : i1 to i32
    %c0_i32_0 = arith.constant 0 : i32
    %2 = arith.cmpi ne, %1, %c0_i32_0 : i32
    scf.if %2 {
      %c0_i32_25 = arith.constant 0 : i32
      %c0_i32_26 = arith.constant 0 : i32
      %64 = tpu.memref_slice %arg3[%arg0, %c0_i32_25, %c0_i32_26] : memref<2x32x256xf32, #tpu.memory_space<any>> -> memref<1x32x256xf32, #tpu.memory_space<any>>
      %65 = tpu.memref_squeeze %64 : memref<1x32x256xf32, #tpu.memory_space<any>> -> memref<32x256xf32, #tpu.memory_space<any>>
      tpu.enqueue_dma source(%65 : memref<32x256xf32, #tpu.memory_space<any>>) target(%arg7 : memref<32x256xf32, #tpu.memory_space<vmem>>) target_semaphore(%arg11 : memref<!tpu.dma_semaphore, #tpu.memory_space<semaphore_mem>>)
      %c0_i32_27 = arith.constant 0 : i32
      %c0_i32_28 = arith.constant 0 : i32
      %66 = tpu.memref_slice %arg3[%arg0, %c0_i32_27, %c0_i32_28] : memref<2x32x256xf32, #tpu.memory_space<any>> -> memref<1x32x256xf32, #tpu.memory_space<any>>
      %67 = tpu.memref_squeeze %66 : memref<1x32x256xf32, #tpu.memory_space<any>> -> memref<32x256xf32, #tpu.memory_space<any>>
      tpu.wait_dma2 semaphore(%arg11 : memref<!tpu.dma_semaphore, #tpu.memory_space<semaphore_mem>>) src(%67 : memref<32x256xf32, #tpu.memory_space<any>>) dst(%arg7 : memref<32x256xf32, #tpu.memory_space<vmem>>)
      %c0_i32_29 = arith.constant 0 : i32
      %c2_i32 = arith.constant 2 : i32
      %68 = arith.addi %c0_i32_29, %c2_i32 : i32
      %c1_i32 = arith.constant 1 : i32
      scf.for %arg12 = %c0_i32_29 to %68 step %c1_i32  : i32 {
        %c8_i32_31 = arith.constant 8 : i32
        %69 = arith.muli %arg12, %c8_i32_31 : i32
        %70 = tpu.assume_multiple %69, 8 : i32
        %c16_i32_32 = arith.constant 16 : i32
        %71 = arith.muli %70, %c16_i32_32 : i32
        %c0_33 = arith.constant 0 : index
        %72 = arith.index_cast %71 : i32 to index
        %73 = vector.load %arg7[%c0_33, %72] : memref<32x256xf32, #tpu.memory_space<vmem>>, vector<32x128xf32>
        %c0_34 = arith.constant 0 : index
        %c0_35 = arith.constant 0 : index
        %74 = vector.load %arg4[%c0_34, %c0_35] : memref<32x40xf32, #tpu.memory_space<vmem>>, vector<32x40xf32>
        %cst_36 = arith.constant dense<0.000000e+00> : vector<128x40xf32>
        %75 = tpu.matmul %73, %74, %cst_36 {dimension_numbers = #tpu.dot_dimension_numbers<[0], [0], [1], [1], [0, 1, 1, 1], [], []>} : vector<32x128xf32>, vector<32x40xf32>, vector<128x40xf32> -> vector<128x40xf32>
        %c0_37 = arith.constant 0 : index
        %c0_38 = arith.constant 0 : index
        %76 = vector.load %arg5[%c0_37, %c0_38] : memref<1x40xf32, #tpu.memory_space<vmem>>, vector<1x40xf32>
        %77 = vector.broadcast %76 : vector<1x40xf32> to vector<128x40xf32>
        %78 = arith.addf %75, %77 : vector<128x40xf32>
        %79 = vector.extract_strided_slice %78 {offsets = [0, 0], sizes = [128, 4], strides = [1, 1]} : vector<128x40xf32> to vector<128x4xf32>
        %80 = vector.shape_cast %79 : vector<128x4xf32> to vector<8x16x4xf32>
        %81 = vector.extract_strided_slice %78 {offsets = [0, 4], sizes = [128, 4], strides = [1, 1]} : vector<128x40xf32> to vector<128x4xf32>
        %82 = vector.shape_cast %81 : vector<128x4xf32> to vector<8x16x4xf32>
        %83 = vector.extract_strided_slice %78 {offsets = [0, 8], sizes = [128, 32], strides = [1, 1]} : vector<128x40xf32> to vector<128x32xf32>
        %84 = vector.shape_cast %83 : vector<128x32xf32> to vector<8x16x32xf32>
        %85 = arith.index_cast %70 : i32 to index
        %c0_39 = arith.constant 0 : index
        %c0_40 = arith.constant 0 : index
        %86 = vector.load %arg8[%85, %c0_39, %c0_40] : memref<16x16x4xf32, #tpu.memory_space<vmem>>, vector<8x16x4xf32>
        tpu.vector_store %arg8[%85, %c0_39, %c0_40], %80 {strides = array<i32>} : memref<16x16x4xf32, #tpu.memory_space<vmem>>, vector<8x16x4xf32>,
        %87 = tpu.transpose %82, [1, 0, 2] : vector<8x16x4xf32> -> vector<16x8x4xf32>
        %c0_41 = arith.constant 0 : index
        %88 = arith.index_cast %70 : i32 to index
        %c0_42 = arith.constant 0 : index
        %89 = vector.load %arg9[%c0_41, %88, %c0_42] : memref<16x16x4xf32, #tpu.memory_space<vmem>>, vector<16x8x4xf32>
        tpu.vector_store %arg9[%c0_41, %88, %c0_42], %87 {strides = array<i32>} : memref<16x16x4xf32, #tpu.memory_space<vmem>>, vector<16x8x4xf32>,
        %90 = tpu.transpose %84, [1, 0, 2] : vector<8x16x32xf32> -> vector<16x8x32xf32>
        %c0_43 = arith.constant 0 : index
        %91 = arith.index_cast %70 : i32 to index
        %c0_44 = arith.constant 0 : index
        %92 = vector.load %arg10[%c0_43, %91, %c0_44] : memref<16x16x32xf32, #tpu.memory_space<vmem>>, vector<16x8x32xf32>
        tpu.vector_store %arg10[%c0_43, %91, %c0_44], %90 {strides = array<i32>} : memref<16x16x32xf32, #tpu.memory_space<vmem>>, vector<16x8x32xf32>,
      }
      %c2_i32_30 = arith.constant 2 : i32
    } else {
    }
    %c8_i32 = arith.constant 8 : i32
    %3 = arith.muli %arg1, %c8_i32 : i32
    %4 = tpu.assume_multiple %3, 8 : i32
    %5 = arith.index_cast %4 : i32 to index
    %c0 = arith.constant 0 : index
    %c0_1 = arith.constant 0 : index
    %6 = vector.load %arg8[%5, %c0, %c0_1] : memref<16x16x4xf32, #tpu.memory_space<vmem>>, vector<8x16x4xf32>
    %7 = tpu.transpose %6, [1, 0, 2] : vector<8x16x4xf32> -> vector<16x8x4xf32>
    %c0_2 = arith.constant 0 : index
    %c0_3 = arith.constant 0 : index
    %c0_4 = arith.constant 0 : index
    %8 = vector.load %arg9[%c0_2, %c0_3, %c0_4] : memref<16x16x4xf32, #tpu.memory_space<vmem>>, vector<16x16x4xf32>
    %c0_5 = arith.constant 0 : index
    %9 = arith.index_cast %4 : i32 to index
    %c0_6 = arith.constant 0 : index
    %10 = vector.load %arg9[%c0_5, %9, %c0_6] : memref<16x16x4xf32, #tpu.memory_space<vmem>>, vector<16x8x4xf32>
    %11 = tpu.transpose %10, [1, 0, 2] : vector<16x8x4xf32> -> vector<8x16x4xf32>
    %c0_7 = arith.constant 0 : index
    %c0_8 = arith.constant 0 : index
    %c0_9 = arith.constant 0 : index
    %12 = vector.load %arg10[%c0_7, %c0_8, %c0_9] : memref<16x16x32xf32, #tpu.memory_space<vmem>>, vector<16x16x32xf32>
    %c0_10 = arith.constant 0 : index
    %13 = arith.index_cast %4 : i32 to index
    %c0_11 = arith.constant 0 : index
    %14 = vector.load %arg10[%c0_10, %13, %c0_11] : memref<16x16x32xf32, #tpu.memory_space<vmem>>, vector<16x8x32xf32>
    %15 = tpu.transpose %14, [1, 0, 2] : vector<16x8x32xf32> -> vector<8x16x32xf32>
    "tpu.trace_start"() <{level = 10 : i32, message = "wic,wjc->wij"}> : () -> ()
    %cst = arith.constant dense<0.000000e+00> : vector<16x8x16xf32>
    %16 = tpu.matmul %7, %8, %cst {dimension_numbers = #tpu.dot_dimension_numbers<[2], [2], [1], [1], [0, 0, 0, 1, 1, 1], [0], [0]>} : vector<16x8x4xf32>, vector<16x16x4xf32>, vector<16x8x16xf32> -> vector<16x8x16xf32>
    "tpu.trace_stop"() : () -> ()
    %17 = tpu.iota {dimensions = array<i32: 0>} : vector<8x16xi32>
    %18 = vector.broadcast %4 : i32 to vector<8x16xi32>
    %19 = arith.addi %17, %18 : vector<8x16xi32>
    %20 = tpu.iota {dimensions = array<i32: 1>} : vector<8x16xi32>
    %21 = arith.cmpi eq, %19, %20 : vector<8x16xi32>
    %22 = vector.shape_cast %21 : vector<8x16xi1> to vector<1x8x16xi1>
    %cst_12 = arith.constant 0xFF800000 : f32
    %23 = vector.shape_cast %22 : vector<1x8x16xi1> to vector<1x8x16xi1>
    %24 = vector.broadcast %23 : vector<1x8x16xi1> to vector<16x8x16xi1>
    %25 = vector.broadcast %cst_12 : f32 to vector<16x8x16xf32>
    %26 = arith.select %24, %25, %16 : vector<16x8x16xi1>, vector<16x8x16xf32>
    "tpu.trace_start"() <{level = 10 : i32, message = "ixc,iyc->ixy"}> : () -> ()
    %cst_13 = arith.constant dense<0.000000e+00> : vector<8x16x16xf32>
    %27 = tpu.matmul %6, %11, %cst_13 {dimension_numbers = #tpu.dot_dimension_numbers<[2], [2], [1], [1], [0, 0, 0, 1, 1, 1], [0], [0]>} : vector<8x16x4xf32>, vector<8x16x4xf32>, vector<8x16x16xf32> -> vector<8x16x16xf32>
    "tpu.trace_stop"() : () -> ()
    %cst_14 = arith.constant dense<0xFF800000> : vector<16x8xf32>
    %28 = vector.multi_reduction <maximumf>, %26, %cst_14 [2] : vector<16x8x16xf32> to vector<16x8xf32>
    %cst_15 = arith.constant dense<0xFF800000> : vector<8x16xf32>
    %29 = vector.multi_reduction <maximumf>, %27, %cst_15 [2] : vector<8x16x16xf32> to vector<8x16xf32>
    %30 = tpu.transpose %29, [1, 0] : vector<8x16xf32> -> vector<16x8xf32>
    %31 = arith.maximumf %28, %30 : vector<16x8xf32>
    %32 = vector.shape_cast %31 : vector<16x8xf32> to vector<16x8x1xf32>
    %33 = vector.broadcast %32 : vector<16x8x1xf32> to vector<16x8x16xf32>
    %34 = arith.subf %26, %33 : vector<16x8x16xf32>
    %35 = math.exp %34 : vector<16x8x16xf32>
    %36 = tpu.transpose %31, [1, 0] : vector<16x8xf32> -> vector<8x16xf32>
    %37 = vector.shape_cast %36 : vector<8x16xf32> to vector<8x16x1xf32>
    %38 = vector.broadcast %37 : vector<8x16x1xf32> to vector<8x16x16xf32>
    %39 = arith.subf %27, %38 : vector<8x16x16xf32>
    %40 = math.exp %39 : vector<8x16x16xf32>
    %cst_16 = arith.constant dense<0.000000e+00> : vector<16x8xf32>
    %41 = vector.multi_reduction <add>, %35, %cst_16 [2] : vector<16x8x16xf32> to vector<16x8xf32>
    %42 = tpu.transpose %41, [1, 0] : vector<16x8xf32> -> vector<8x16xf32>
    %cst_17 = arith.constant dense<0.000000e+00> : vector<8x16xf32>
    %43 = vector.multi_reduction <add>, %40, %cst_17 [2] : vector<8x16x16xf32> to vector<8x16xf32>
    %44 = arith.addf %42, %43 : vector<8x16xf32>
    %c0_18 = arith.constant 0 : index
    %45 = memref.load %arg2[%c0_18] : memref<1xf32, #tpu.memory_space<smem>>
    %46 = vector.broadcast %45 : f32 to vector<8x16xf32>
    %47 = arith.divf %46, %44 : vector<8x16xf32>
    "tpu.trace_start"() <{level = 10 : i32, message = "wij,wjc->wic"}> : () -> ()
    %cst_19 = arith.constant dense<0.000000e+00> : vector<16x8x32xf32>
    %48 = tpu.matmul %35, %12, %cst_19 {dimension_numbers = #tpu.dot_dimension_numbers<[2], [1], [1], [2], [0, 0, 0, 1, 1, 2], [0], [0]>} : vector<16x8x16xf32>, vector<16x16x32xf32>, vector<16x8x32xf32> -> vector<16x8x32xf32>
    "tpu.trace_stop"() : () -> ()
    "tpu.trace_start"() <{level = 10 : i32, message = "ixy,iyc->ixc"}> : () -> ()
    %cst_20 = arith.constant dense<0.000000e+00> : vector<8x16x32xf32>
    %49 = tpu.matmul %40, %15, %cst_20 {dimension_numbers = #tpu.dot_dimension_numbers<[2], [1], [1], [2], [0, 0, 0, 1, 1, 2], [0], [0]>} : vector<8x16x16xf32>, vector<8x16x32xf32>, vector<8x16x32xf32> -> vector<8x16x32xf32>
    "tpu.trace_stop"() : () -> ()
    %50 = tpu.transpose %48, [1, 0, 2] : vector<16x8x32xf32> -> vector<8x16x32xf32>
    %51 = arith.addf %50, %49 : vector<8x16x32xf32>
    %52 = vector.shape_cast %47 : vector<8x16xf32> to vector<8x16x1xf32>
    %53 = vector.broadcast %52 : vector<8x16x1xf32> to vector<8x16x32xf32>
    %54 = arith.mulf %51, %53 : vector<8x16x32xf32>
    %55 = vector.shape_cast %54 : vector<8x16x32xf32> to vector<128x32xf32>
    %56 = tpu.transpose %55, [1, 0] : vector<128x32xf32> -> vector<32x128xf32>
    %c16_i32 = arith.constant 16 : i32
    %57 = arith.muli %4, %c16_i32 : i32
    %c0_21 = arith.constant 0 : index
    %58 = arith.index_cast %57 : i32 to index
    %59 = vector.load %arg7[%c0_21, %58] : memref<32x256xf32, #tpu.memory_space<vmem>>, vector<32x128xf32>
    %60 = arith.addf %56, %59 : vector<32x128xf32>
    %c0_22 = arith.constant 0 : index
    %c0_23 = arith.constant 0 : index
    %c0_24 = arith.constant 0 : index
    %61 = vector.load %arg6[%c0_22, %c0_23, %c0_24] : memref<1x32x128xf32, #tpu.memory_space<vmem>>, vector<1x32x128xf32>
    %62 = vector.shape_cast %61 : vector<1x32x128xf32> to vector<32x128xf32>
    %63 = vector.shape_cast %60 : vector<32x128xf32> to vector<1x32x128xf32>
    tpu.vector_store %arg6[%c0_22, %c0_23, %c0_24], %63 {strides = array<i32>} : memref<1x32x128xf32, #tpu.memory_space<vmem>>, vector<1x32x128xf32>,
    return
  }
  func.func @transform_0(%arg0: i32, %arg1: i32) -> i32 {
    %c0_i32 = arith.constant 0 : i32
    %c0_i32_0 = arith.constant 0 : i32
    return %c0_i32 : i32
  }
  func.func @transform_2(%arg0: i32, %arg1: i32) -> (i32, i32) {
    %c0_i32 = arith.constant 0 : i32
    %c0_i32_0 = arith.constant 0 : i32
    %c0_i32_1 = arith.constant 0 : i32
    return %c0_i32, %c0_i32_0 : i32, i32
  }
  func.func @transform_3(%arg0: i32, %arg1: i32) -> (i32, i32) {
    %c0_i32 = arith.constant 0 : i32
    %c0_i32_0 = arith.constant 0 : i32
    %c0_i32_1 = arith.constant 0 : i32
    return %c0_i32, %c0_i32_0 : i32, i32
  }
  func.func @transform_4(%arg0: i32, %arg1: i32) -> (i32, i32, i32) {
    %c0_i32 = arith.constant 0 : i32
    %c0_i32_0 = arith.constant 0 : i32
    return %arg0, %c0_i32, %arg1 : i32, i32, i32
  }
}

</mosaic_0001>

<llo_original>
// kernel: tpu_custom_call.1
$region0: #{tpu_custom_call.1}
  #allocation0 [shape = 'u32[]', space=smem, size = 0x4, offset = 0x4, fixed_abs, tag = 'smem constant byte address 0x4 - core index']
  #allocation1 [shape = 'u32[144,128]{1,0:T(1,128)}', space=vmem, size = 0x12000, scoped, tag = 'internal scratch']
  #allocation2 [shape = 'f32[32,256]{1,0:T(8,128)}', space=vmem, size = 0x8000, scoped, tag = 'scratch operand']
  #allocation3 [shape = 'f32[16,16,4]{2,1,0:T(8,128)}', space=vmem, size = 0x20000, scoped, tag = 'scratch operand']
  #allocation4 [shape = 'f32[16,16,4]{2,1,0:T(8,128)}', space=vmem, size = 0x20000, scoped, tag = 'scratch operand']
  #allocation5 [shape = 'f32[16,16,32]{2,1,0:T(8,128)}', space=vmem, size = 0x20000, scoped, tag = 'scratch operand']
  #allocation6 [shape = 's32[1]{0}', space=sflag, size = 0x4, scoped, tag = 'scratch operand']
  #allocation7 [shape = 'f32[1]{0:T(128)S(6)}', space=smem, size = 0x200, scoped, tag = 'scoped memory for tpu_custom_call.1']
  #allocation12 [shape = 's32[]', space=sflag, size = 0x4, offset = 0, fixed_abs, tag = 'sflag constant byte address 0x0 - dummy sync flag']
  #allocation13 [shape = 's32[]', space=sflag, size = 0x4, offset = 0, fixed_abs, tag = 'sflag constant byte address 0x0 - dummy sync flag']
  #allocation14 [shape = 'u32[]', space=smem, size = 0x4, offset = 0x44, fixed_abs, tag = 'smem constant byte address 0x44 - assertion arg 0']
  #allocation15 [shape = 'u32[]', space=smem, size = 0x4, offset = 0x48, fixed_abs, tag = 'smem constant byte address 0x48 - assertion arg 1']
  %s0 = inlined_call_operand.<no memory space> [shape: f32[1], index: 0, kind: input, shape index: {}]
  %s1 = inlined_call_operand.hbm [shape: f32[2,32,256], index: 1, kind: input, shape index: {}]
  %s2 = inlined_call_operand.hbm [shape: f32[32,40], index: 2, kind: input, shape index: {}]
  %s3 = inlined_call_operand.vmem [shape: f32[1,40], index: 3, kind: input, shape index: {}]
  %s4 = inlined_call_operand.hbm [shape: f32[2,32,256], index: 4, kind: output, shape index: {}]
  %s5 = sld [smem:[#allocation0]]
  $region64: #{tpu_custom_call.1} parent=0
    _
  %s7 = ssub.s32 1, %s5
  %s8 = scalar_select 0, %s7, %s5
  %9 = sst [smem:[#allocation7]] %s0
  $region1: #{tpu_custom_call.1} parent=0
    #allocation8 [shape = 'u8[16384]{0}', space=vmem, size = 0x4000, scoped, tag = 'input window, operand 2, single buffered']
    #allocation9 [shape = 's32[2]{0}', space=sflag, size = 0x8, scoped, tag = 'scoped memory for tpu_custom_call.1']
    #allocation10 [shape = 's32[2]{0}', space=sflag, size = 0x8, scoped, tag = 'scoped memory for tpu_custom_call.1']
    #allocation11 [shape = 'u8[32768]{0}', space=vmem, size = 0x8000, scoped, tag = 'output window, operand 0']
    %10 = vsyncpa [#allocation9], 0
    %11 = vsyncpa [#allocation10], 0
    %s12 = scalar_lea.sflag [#allocation10], 1
    %13 = vsyncpa %s12, 0
    loop: start=0, step=1, limit=6
    $region2: #{tpu_custom_call.1} parent=1 // loop_pre_header
      _
    $region3: #{tpu_custom_call.1} parent=1 // loop_header
      %s15 = sphi 0, %s19
      %p16 = scmp.ge.s32.totalorder %s15, 6
      %s22 = sphi 0, %s34
      %s23 = sphi 0, %s30
      %s24 = sphi 0, %s22
      %s25 = sphi 0, %s23
      %s26 = sphi 0, %s24
      %s27 = sphi 0, %s25
      %s35 = sphi 0, %s35
      %s37 = sphi 0, %s35
      %s38 = sphi 0, %s37
      %s52 = sphi 0, %s38
      %s56 = sphi 0, %s56
      %s58 = sphi 0, %s56
      %s59 = sphi 0, %s58
      %s73 = sphi 0, %s59
      %s77 = sphi 0, %s77
      %s79 = sphi 0, %s77
      %s80 = sphi 0, %s79
      %s94 = sphi 0, %s80
      %s102 = sphi 0, %s104
      %s105 = sphi 0, %s102
      %s106 = sphi 0, %s105
      %s122 = sphi 0, %s106
    $region4: #{tpu_custom_call.1} parent=1 // loop_header_branch
      %18 = sbr.rel (%p16) target = $region8
    $region5: #{tpu_custom_call.1} parent=1 // loop_body
      %s20 = ssub.s32 %s15, 1
      %s21 = ssub.s32 %s15, 2
      %s28 = sadd.s32 1, %s23
      %p29 = scmp.ge.s32.totalorder %s28, 2
      %s30 = scalar_select %p29, 0, %s28
      %s31 = sadd.s32 1, %s22
      %s32 = scalar_select %p29, %s31, %s22
      %p33 = scmp.ge.s32.totalorder %s32, 2
      %s34 = scalar_select %p33, 0, %s32
      %s36 = sadd.s32 %s35, 1
      %p39 = scmp.eq.s32.totalorder %s15, 3
      %p40 = scmp.ne.s32.totalorder %s35, %s37
      %p41 = scmp.eq.s32.totalorder %s15, 0
      %p42 = por %p40, %p41
      %p43 = scmp.ne.s32.totalorder %s35, %s37
      %p44 = scmp.eq.s32.totalorder %s20, 3
      %p45 = por %p43, %p44
      %p46 = scmp.ne.s32.totalorder %s37, %s38
      %p47 = scmp.eq.s32.totalorder %s20, 0
      %p48 = por %p46, %p47
      %p49 = scmp.ne.s32.totalorder %s37, %s38
      %p50 = scmp.eq.s32.totalorder %s21, 3
      %p51 = por %p49, %p50
      %p53 = scmp.ne.s32.totalorder %s38, %s52
      %p54 = scmp.eq.s32.totalorder %s21, 0
      %p55 = por %p53, %p54
      %s57 = sadd.s32 %s56, 1
      %p60 = scmp.eq.s32.totalorder %s15, 3
      %p61 = scmp.ne.s32.totalorder %s56, %s58
      %p62 = scmp.eq.s32.totalorder %s15, 0
      %p63 = por %p61, %p62
      %p64 = scmp.ne.s32.totalorder %s56, %s58
      %p65 = scmp.eq.s32.totalorder %s20, 3
      %p66 = por %p64, %p65
      %p67 = scmp.ne.s32.totalorder %s58, %s59
      %p68 = scmp.eq.s32.totalorder %s20, 0
      %p69 = por %p67, %p68
      %p70 = scmp.ne.s32.totalorder %s58, %s59
      %p71 = scmp.eq.s32.totalorder %s21, 3
      %p72 = por %p70, %p71
      %p74 = scmp.ne.s32.totalorder %s59, %s73
      %p75 = scmp.eq.s32.totalorder %s21, 0
      %p76 = por %p74, %p75
      %s78 = sadd.s32 %s77, 1
      %p81 = scmp.eq.s32.totalorder %s15, 3
      %p82 = scmp.ne.s32.totalorder %s77, %s79
      %p83 = scmp.eq.s32.totalorder %s15, 0
      %p84 = por %p82, %p83
      %p85 = scmp.ne.s32.totalorder %s77, %s79
      %p86 = scmp.eq.s32.totalorder %s20, 3
      %p87 = por %p85, %p86
      %p88 = scmp.ne.s32.totalorder %s79, %s80
      %p89 = scmp.eq.s32.totalorder %s20, 0
      %p90 = por %p88, %p89
      %p91 = scmp.ne.s32.totalorder %s79, %s80
      %p92 = scmp.eq.s32.totalorder %s21, 3
      %p93 = por %p91, %p92
      %p95 = scmp.ne.s32.totalorder %s80, %s94
      %p96 = scmp.eq.s32.totalorder %s21, 0
      %p97 = por %p95, %p96
      %s98 = ssub.s32 %s22, %s34
      %s99 = ssub.s32 %s23, %s30
      %s100 = sor.u32 %s98, %s99
      %p101 = scmp.eq.s32.totalorder %s100, 0
      %s103 = sadd.s32 %s102, 1
      %s104 = scalar_select %p101, %s102, %s103
      %p107 = pneg %p101
      %p108 = scmp.eq.s32.totalorder %s15, 3
      %p109 = por %p107, %p108
      %p110 = scmp.ne.s32.totalorder %s102, %s105
      %p111 = scmp.eq.s32.totalorder %s15, 0
      %p112 = por %p110, %p111
      %p113 = scmp.ne.s32.totalorder %s102, %s105
      %p114 = scmp.eq.s32.totalorder %s20, 3
      %p115 = por %p113, %p114
      %p116 = scmp.ne.s32.totalorder %s105, %s106
      %p117 = scmp.eq.s32.totalorder %s20, 0
      %p118 = por %p116, %p117
      %p119 = scmp.ne.s32.totalorder %s105, %s106
      %p120 = scmp.eq.s32.totalorder %s21, 3
      %p121 = por %p119, %p120
      %p123 = scmp.ne.s32.totalorder %s106, %s122
      %p124 = scmp.eq.s32.totalorder %s21, 0
      %p125 = por %p123, %p124
      %p126 = scmp.le.s32.totalorder 1, %s15
      %p127 = scmp.lt.s32.totalorder %s15, 5
      %p128 = pnand %p126, %p127
      %p129 = pneg %p128
      // Predicated region
      $region9: #{tpu_custom_call.1} parent=5 // pred_check
        _
      $region10: #{tpu_custom_call.1} parent=5 // pred_check_branch
        %131 = sbr.rel (%p128) target = $region12
      $region11: #{tpu_custom_call.1} parent=5 // pred_region
        %s132 = ssub.s32 %s15, 1
        // Predicated region
        $region13: #{tpu_custom_call.1} parent=11 // pred_check
          %p133 = pneg %p48
        $region14: #{tpu_custom_call.1} parent=11 // pred_check_branch
          %135 = sbr.rel (%p133) target = $region16
        $region15: #{tpu_custom_call.1} parent=11 // pred_region
          _
        $region16: #{tpu_custom_call.1} parent=11 // pred_fallthru
          _
        // Predicated region
        $region17: #{tpu_custom_call.1} parent=11 // pred_check
          %p136 = pneg %p69
        $region18: #{tpu_custom_call.1} parent=11 // pred_check_branch
          %138 = sbr.rel (%p136) target = $region20
        $region19: #{tpu_custom_call.1} parent=11 // pred_region
          %s140 = ssub.s32 512, 512
          %141 = vsyncadd [#allocation9], %s140
          %s142 = sshll.u32 [#allocation8], 4
          %s143 = int_to_ptr.vmem [resolvable:$true] %s142
          %148 = dma.hbm_to_vmem [thread:$0]  %s2, 512, %s143, [#allocation9], 128, 128, 8
        $region20: #{tpu_custom_call.1} parent=11 // pred_fallthru
          _
        // Predicated region
        $region21: #{tpu_custom_call.1} parent=11 // pred_check
          %p149 = pneg %p90
        $region22: #{tpu_custom_call.1} parent=11 // pred_check_branch
          %151 = sbr.rel (%p149) target = $region24
        $region23: #{tpu_custom_call.1} parent=11 // pred_region
          _
        $region24: #{tpu_custom_call.1} parent=11 // pred_fallthru
          _
      $region12: #{tpu_custom_call.1} parent=5 // pred_fallthru
        _
      %p152 = scmp.lt.s32.totalorder %s15, 4
      // Predicated region
      $region25: #{tpu_custom_call.1} parent=5 // pred_check
        %p153 = pneg %p152
      $region26: #{tpu_custom_call.1} parent=5 // pred_check_branch
        %155 = sbr.rel (%p153) target = $region28
      $region27: #{tpu_custom_call.1} parent=5 // pred_region
        _
      $region28: #{tpu_custom_call.1} parent=5 // pred_fallthru
        _
      %p156 = scmp.le.s32.totalorder 1, %s15
      %p157 = scmp.lt.s32.totalorder %s15, 5
      %p158 = pnand %p156, %p157
      %p159 = pneg %p158
      // Predicated region
      $region29: #{tpu_custom_call.1} parent=5 // pred_check
        _
      $region30: #{tpu_custom_call.1} parent=5 // pred_check_branch
        %161 = sbr.rel (%p158) target = $region32
      $region31: #{tpu_custom_call.1} parent=5 // pred_region
        %s162 = ssub.s32 %s15, 1
        // Predicated region
        $region33: #{tpu_custom_call.1} parent=31 // pred_check
          %p163 = pneg %p69
        $region34: #{tpu_custom_call.1} parent=31 // pred_check_branch
          %165 = sbr.rel (%p163) target = $region36
        $region35: #{tpu_custom_call.1} parent=31 // pred_region
          %166 = dma.done [#allocation9], 512
        $region36: #{tpu_custom_call.1} parent=31 // pred_fallthru
          _
        %p167 = pneg %p48
        %p168 = pneg %p45
        %p169 = pneg %p69
        %p170 = pneg %p66
        %p171 = pneg %p90
        %p172 = pneg %p87
        %p173 = pneg %p118
        %p174 = pneg %p115
        %s175 = sand.u32 %s105, 1
        %s176 = scalar_lea.sflag [#allocation10], %s175
        %s177 = sand.u32 %s105, 1
        %s178 = smul.addr %s177, 32
        %s179 = scalar_lea.vmem [#allocation11], %s178
        %p180 = scmp.eq.s32.totalorder %s25, 0
        // Predicated region
        $region37: #{tpu_custom_call.1} parent=31 // pred_check
          %p181 = pneg %p180
        $region38: #{tpu_custom_call.1} parent=31 // pred_check_branch
          %183 = sbr.rel (%p181) target = $region40
        $region39: #{tpu_custom_call.1} parent=31 // pred_region
          %s184 = smul.u32 %s24, 8
          %s185 = smul.addr %s184, 128
          %s186 = scalar_lea.hbm %s1, %s185
          // Predicated region
          $region41: #{tpu_custom_call.1} parent=39 // pred_check
            _
          $region42: #{tpu_custom_call.1} parent=39 // pred_check_branch
            %188 = sbr.rel target = $region44
          $region43: #{tpu_custom_call.1} parent=39 // pred_region
            %189 = sst [smem:[#allocation14]] [#allocation13]
            %190 = sst [smem:[#allocation15]] [#allocation12]
          $region44: #{tpu_custom_call.1} parent=39 // pred_fallthru
            _
          %192 = shalt.err (0)
          %s194 = sshll.u32 [#allocation2], 4
          %s195 = int_to_ptr.vmem [resolvable:$true] %s194
          %197 = dma.hbm_to_vmem [thread:$0]  %s186, 1024, %s195, [#allocation6]
          %s198 = smul.u32 8, 4
          %s199 = smul.u32 %s198, 2
          %s200 = sshll.u32 %s199, 4
          %201 = dma.done [#allocation6], %s200
          loop: start=0, step=1, limit=2
          $region45: #{tpu_custom_call.1} parent=39 // loop_pre_header
            _
          $region46: #{tpu_custom_call.1} parent=39 // loop_header
            %s203 = sphi 0, %s207
            %p204 = scmp.ge.s32.totalorder %s203, 2
          $region47: #{tpu_custom_call.1} parent=39 // loop_header_branch
            %206 = sbr.rel (%p204) target = $region51
          $region48: #{tpu_custom_call.1} parent=39 // loop_body
            %s208 = smul.u32 %s203, 8
            %s209 = smul.u32 %s208, 16
            %s210 = sshra.s32 %s209, 7
            %s211 = sand.u32 %s209, 127
            %s212 = smul.addr %s210, 8
            %s213 = scalar_lea.vmem [#allocation2], %s212
            %v214 = vld [vmem:[%s213] sm:$0xff]
            %v215 = vld [vmem:[%s213 + $0x10] sm:$0xff]
            %v216 = vld [vmem:[%s213 + $0x20] sm:$0xff]
            %v217 = vld [vmem:[%s213 + $0x30] sm:$0xff]
            %v218 = vld [vmem:[#allocation8] sm:$0xff]
            %v219 = vld [vmem:[#allocation8 + $0x8] sm:$0xff]
            %v220 = vld [vmem:[#allocation8 + $0x10] sm:$0xff]
            %v221 = vld [vmem:[#allocation8 + $0x18] sm:$0xff]
            %v222 = vld [vmem:[%s3] sm:$0x1]
            %v224 = vlaneseq
            %v225 = vshrl.u32 %v224, 7
            %v226 = vsub.s32 0, %v225
            %v227 = vrot.slane %v222, %v226
            %229 = vxpose.xlu0.b32.start [1/16] %v214, 128
            %230 = vxpose.xlu0.b32.cont [2/16] %v215, 128
            %231 = vxpose.xlu0.b32.cont [3/16] %v216, 128
            %232 = vxpose.xlu0.b32.cont [4/16] %v217, 128
            %233 = vxpose.xlu0.b32.cont [5/16] 0.0, 128
            %234 = vxpose.xlu0.b32.cont [6/16] 0.0, 128
            %235 = vxpose.xlu0.b32.cont [7/16] 0.0, 128
            %236 = vxpose.xlu0.b32.cont [8/16] 0.0, 128
            %237 = vxpose.xlu0.b32.cont [9/16] 0.0, 128
            %238 = vxpose.xlu0.b32.cont [10/16] 0.0, 128
            %239 = vxpose.xlu0.b32.cont [11/16] 0.0, 128
            %240 = vxpose.xlu0.b32.cont [12/16] 0.0, 128
            %241 = vxpose.xlu0.b32.cont [13/16] 0.0, 128
            %242 = vxpose.xlu0.b32.cont [14/16] 0.0, 128
            %243 = vxpose.xlu0.b32.cont [15/16] 0.0, 128
            %244 = vxpose.xlu0.b32.end [16/16] 0.0, 128
            %v245 = vpop.trf.xlu0
            %v246 = vpop.trf.xlu0
            %v247 = vpop.trf.xlu0
            %v248 = vpop.trf.xlu0
            %v249 = vpop.trf.xlu0
            %v250 = vpop.trf.xlu0
            %v251 = vpop.trf.xlu0
            %v252 = vpop.trf.xlu0
            %v253 = vpop.trf.xlu0
            %v254 = vpop.trf.xlu0
            %v255 = vpop.trf.xlu0
            %v256 = vpop.trf.xlu0
            %v257 = vpop.trf.xlu0
            %v258 = vpop.trf.xlu0
            %v259 = vpop.trf.xlu0
            %v260 = vpop.trf.xlu0
            %vm261 = vcmask 261120
            %v263 = vsel %vm261, %v245, 0
            %v266 = vsel %vm261, %v246, 0
            %v269 = vsel %vm261, %v247, 0
            %v272 = vsel %vm261, %v248, 0
            %v275 = vsel %vm261, %v249, 0
            %v278 = vsel %vm261, %v250, 0
            %v281 = vsel %vm261, %v251, 0
            %v284 = vsel %vm261, %v252, 0
            %v287 = vsel %vm261, %v253, 0
            %v290 = vsel %vm261, %v254, 0
            %v293 = vsel %vm261, %v255, 0
            %v296 = vsel %vm261, %v256, 0
            %v299 = vsel %vm261, %v257, 0
            %v302 = vsel %vm261, %v258, 0
            %v305 = vsel %vm261, %v259, 0
            %v308 = vsel %vm261, %v260, 0
            %310 = vmatprep.subr.mxu0 0.0
            %311 = vmatpush1.msra.mxu0 %v218
            %312 = vmatprep.subr.mxu0 0.0
            %313 = vmatpush1.msra.mxu0 %v219
            %314 = vmatprep.subr.mxu0 0.0
            %315 = vmatpush1.msra.mxu0 %v220
            %316 = vmatprep.subr.mxu0 0.0
            %317 = vmatpush1.msra.mxu0 %v221
            %318 = vmatprep.subr.mxu0 0.0
            %319 = vmatpush1.msra.mxu0 0.0
            %320 = vmatprep.subr.mxu0 0.0
            %321 = vmatpush1.msra.mxu0 0.0
            %322 = vmatprep.subr.mxu0 0.0
            %323 = vmatpush1.msra.mxu0 0.0
            %324 = vmatprep.subr.mxu0 0.0
            %325 = vmatpush1.msra.mxu0 0.0
            %326 = vmatprep.subr.mxu0 0.0
            %327 = vmatpush1.msra.mxu0 0.0
            %328 = vmatprep.subr.mxu0 0.0
            %329 = vmatpush1.msra.mxu0 0.0
            %330 = vmatprep.subr.mxu0 0.0
            %331 = vmatpush1.msra.mxu0 0.0
            %332 = vmatprep.subr.mxu0 0.0
            %333 = vmatpush1.msra.mxu0 0.0
            %334 = vmatprep.subr.mxu0 0.0
            %335 = vmatpush1.msra.mxu0 0.0
            %336 = vmatprep.subr.mxu0 0.0
            %337 = vmatpush1.msra.mxu0 0.0
            %338 = vmatprep.subr.mxu0 0.0
            %339 = vmatpush1.msra.mxu0 0.0
            %340 = vmatprep.subr.mxu0 0.0
            %341 = vmatpush1.msra.mxu0 0.0
            %342 = vmatprep.subr.mxu0 0.0
            %343 = vmatpush1.msra.mxu0 0.0
            %344 = vmatprep.subr.mxu0 0.0
            %345 = vmatpush1.msra.mxu0 0.0
            %346 = vmatprep.subr.mxu0 0.0
            %347 = vmatpush1.msra.mxu0 0.0
            %348 = vmatprep.subr.mxu0 0.0
            %349 = vmatpush1.msra.mxu0 0.0
            %350 = vmatprep.subr.mxu0 0.0
            %351 = vmatpush1.msra.mxu0 0.0
            %352 = vmatprep.subr.mxu0 0.0
            %353 = vmatpush1.msra.mxu0 0.0
            %354 = vmatprep.subr.mxu0 0.0
            %355 = vmatpush1.msra.mxu0 0.0
            %356 = vmatprep.subr.mxu0 0.0
            %357 = vmatpush1.msra.mxu0 0.0
            %358 = vmatprep.subr.mxu0 0.0
            %359 = vmatpush1.msra.mxu0 0.0
            %360 = vmatprep.subr.mxu0 0.0
            %361 = vmatpush1.msra.mxu0 0.0
            %362 = vmatprep.subr.mxu0 0.0
            %363 = vmatpush1.msra.mxu0 0.0
            %364 = vmatprep.subr.mxu0 0.0
            %365 = vmatpush1.msra.mxu0 0.0
            %366 = vmatprep.subr.mxu0 0.0
            %367 = vmatpush1.msra.mxu0 0.0
            %368 = vmatprep.subr.mxu0 0.0
            %369 = vmatpush1.msra.mxu0 0.0
            %370 = vmatprep.subr.mxu0 0.0
            %371 = vmatpush1.msra.mxu0 0.0
            %372 = vmatprep.subr.mxu0 0.0
            %373 = vmatpush1.msra.mxu0 0.0
            %374 = vmatprep.mubr.f32.mxu0 0.0
            %375 = vmatmul.mubr.f32.gmra.mrb[0].mxu0 %v263
            %v376 = vpop.f32.mrb[0].mxu0
            %v377 = vadd.f32 %v227, %v376
            %v378 = vpop.f32.mrb[0].mxu0
            %379 = vmatprep.mubr.f32.mxu0 0.0
            %380 = vmatmul.mubr.f32.gmra.mrb[0].mxu0 %v266
            %v381 = vpop.f32.mrb[0].mxu0
            %v382 = vadd.f32 %v227, %v381
            %v383 = vpop.f32.mrb[0].mxu0
            %384 = vmatprep.mubr.f32.mxu0 0.0
            %385 = vmatmul.mubr.f32.gmra.mrb[0].mxu0 %v269
            %v386 = vpop.f32.mrb[0].mxu0
            %v387 = vadd.f32 %v227, %v386
            %v388 = vpop.f32.mrb[0].mxu0
            %389 = vmatprep.mubr.f32.mxu0 0.0
            %390 = vmatmul.mubr.f32.gmra.mrb[0].mxu0 %v272
            %v391 = vpop.f32.mrb[0].mxu0
            %v392 = vadd.f32 %v227, %v391
            %v393 = vpop.f32.mrb[0].mxu0
            %394 = vmatprep.mubr.f32.mxu0 0.0
            %395 = vmatmul.mubr.f32.gmra.mrb[0].mxu0 %v275
            %v396 = vpop.f32.mrb[0].mxu0
            %v397 = vadd.f32 %v227, %v396
            %v398 = vpop.f32.mrb[0].mxu0
            %399 = vmatprep.mubr.f32.mxu0 0.0
            %400 = vmatmul.mubr.f32.gmra.mrb[0].mxu0 %v278
            %v401 = vpop.f32.mrb[0].mxu0
            %v402 = vadd.f32 %v227, %v401
            %v403 = vpop.f32.mrb[0].mxu0
            %404 = vmatprep.mubr.f32.mxu0 0.0
            %405 = vmatmul.mubr.f32.gmra.mrb[0].mxu0 %v281
            %v406 = vpop.f32.mrb[0].mxu0
            %v407 = vadd.f32 %v227, %v406
            %v408 = vpop.f32.mrb[0].mxu0
            %409 = vmatprep.mubr.f32.mxu0 0.0
            %410 = vmatmul.mubr.f32.gmra.mrb[0].mxu0 %v284
            %v411 = vpop.f32.mrb[0].mxu0
            %v412 = vadd.f32 %v227, %v411
            %v413 = vpop.f32.mrb[0].mxu0
            %414 = vmatprep.mubr.f32.mxu0 0.0
            %415 = vmatmul.mubr.f32.gmra.mrb[0].mxu0 %v287
            %v416 = vpop.f32.mrb[0].mxu0
            %v417 = vadd.f32 %v227, %v416
            %v418 = vpop.f32.mrb[0].mxu0
            %419 = vmatprep.mubr.f32.mxu0 0.0
            %420 = vmatmul.mubr.f32.gmra.mrb[0].mxu0 %v290
            %v421 = vpop.f32.mrb[0].mxu0
            %v422 = vadd.f32 %v227, %v421
            %v423 = vpop.f32.mrb[0].mxu0
            %424 = vmatprep.mubr.f32.mxu0 0.0
            %425 = vmatmul.mubr.f32.gmra.mrb[0].mxu0 %v293
            %v426 = vpop.f32.mrb[0].mxu0
            %v427 = vadd.f32 %v227, %v426
            %v428 = vpop.f32.mrb[0].mxu0
            %429 = vmatprep.mubr.f32.mxu0 0.0
            %430 = vmatmul.mubr.f32.gmra.mrb[0].mxu0 %v296
            %v431 = vpop.f32.mrb[0].mxu0
            %v432 = vadd.f32 %v227, %v431
            %v433 = vpop.f32.mrb[0].mxu0
            %434 = vmatprep.mubr.f32.mxu0 0.0
            %435 = vmatmul.mubr.f32.gmra.mrb[0].mxu0 %v299
            %v436 = vpop.f32.mrb[0].mxu0
            %v437 = vadd.f32 %v227, %v436
            %v438 = vpop.f32.mrb[0].mxu0
            %439 = vmatprep.mubr.f32.mxu0 0.0
            %440 = vmatmul.mubr.f32.gmra.mrb[0].mxu0 %v302
            %v441 = vpop.f32.mrb[0].mxu0
            %v442 = vadd.f32 %v227, %v441
            %v443 = vpop.f32.mrb[0].mxu0
            %444 = vmatprep.mubr.f32.mxu0 0.0
            %445 = vmatmul.mubr.f32.gmra.mrb[0].mxu0 %v305
            %v446 = vpop.f32.mrb[0].mxu0
            %v447 = vadd.f32 %v227, %v446
            %v448 = vpop.f32.mrb[0].mxu0
            %449 = vmatprep.mubr.f32.mxu0 0.0
            %450 = vmatmul.mubr.f32.gmra.mrb[0].mxu0 %v308
            %v451 = vpop.f32.mrb[0].mxu0
            %v452 = vadd.f32 %v227, %v451
            %v453 = vpop.f32.mrb[0].mxu0
            %454 = vdwg.mxu0
            %s455 = scalar_lea.vmem [#allocation3], %s209
            %vm456 = vcmask 31744
            %457 = vst.msk [vmem:[%s455] sm:$0xff] %vm456, %v377
            %458 = vst.msk [vmem:[%s455 + $0x8] sm:$0xff] %vm456, %v382
            %459 = vst.msk [vmem:[%s455 + $0x10] sm:$0xff] %vm456, %v387
            %460 = vst.msk [vmem:[%s455 + $0x18] sm:$0xff] %vm456, %v392
            %461 = vst.msk [vmem:[%s455 + $0x20] sm:$0xff] %vm456, %v397
            %462 = vst.msk [vmem:[%s455 + $0x28] sm:$0xff] %vm456, %v402
            %463 = vst.msk [vmem:[%s455 + $0x30] sm:$0xff] %vm456, %v407
            %464 = vst.msk [vmem:[%s455 + $0x38] sm:$0xff] %vm456, %v412
            %465 = vst.msk [vmem:[%s455 + $0x40] sm:$0xff] %vm456, %v417
            %466 = vst.msk [vmem:[%s455 + $0x48] sm:$0xff] %vm456, %v422
            %467 = vst.msk [vmem:[%s455 + $0x50] sm:$0xff] %vm456, %v427
            %468 = vst.msk [vmem:[%s455 + $0x58] sm:$0xff] %vm456, %v432
            %469 = vst.msk [vmem:[%s455 + $0x60] sm:$0xff] %vm456, %v437
            %470 = vst.msk [vmem:[%s455 + $0x68] sm:$0xff] %vm456, %v442
            %471 = vst.msk [vmem:[%s455 + $0x70] sm:$0xff] %vm456, %v447
            %472 = vst.msk [vmem:[%s455 + $0x78] sm:$0xff] %vm456, %v452
            %489 = vrot.lane.b32.xlu0 %v377, 124
            %v490 = vpop.permute.xlu0 %489
            %491 = vrot.lane.b32.xlu0 %v382, 124
            %v492 = vpop.permute.xlu0 %491
            %493 = vrot.lane.b32.xlu0 %v387, 124
            %v494 = vpop.permute.xlu0 %493
            %495 = vrot.lane.b32.xlu0 %v392, 124
            %v496 = vpop.permute.xlu0 %495
            %497 = vrot.lane.b32.xlu0 %v397, 124
            %v498 = vpop.permute.xlu0 %497
            %499 = vrot.lane.b32.xlu0 %v402, 124
            %v500 = vpop.permute.xlu0 %499
            %501 = vrot.lane.b32.xlu0 %v407, 124
            %v502 = vpop.permute.xlu0 %501
            %503 = vrot.lane.b32.xlu0 %v412, 124
            %v504 = vpop.permute.xlu0 %503
            %505 = vrot.lane.b32.xlu0 %v417, 124
            %v506 = vpop.permute.xlu0 %505
            %507 = vrot.lane.b32.xlu0 %v422, 124
            %v508 = vpop.permute.xlu0 %507
            %509 = vrot.lane.b32.xlu0 %v427, 124
            %v510 = vpop.permute.xlu0 %509
            %511 = vrot.lane.b32.xlu0 %v432, 124
            %v512 = vpop.permute.xlu0 %511
            %513 = vrot.lane.b32.xlu0 %v437, 124
            %v514 = vpop.permute.xlu0 %513
            %515 = vrot.lane.b32.xlu0 %v442, 124
            %v516 = vpop.permute.xlu0 %515
            %517 = vrot.lane.b32.xlu0 %v447, 124
            %v518 = vpop.permute.xlu0 %517
            %519 = vrot.lane.b32.xlu0 %v452, 124
            %v520 = vpop.permute.xlu0 %519
            %v537 = vcombine.low %v490, %v498
            %v538 = vcombine.high %v490, %v498
            %v540 = vunpack.c.l.s4 1983009808
            %v541 = vunpack.c.0.s8 %v540
            %v542 = vlaneseq
            %v543 = vshrl.u32 %v542, 7
            %v544 = vsub.s32 %v541, %v543
            %v545 = vrot.slane %v537, %v544
            %v547 = vunpack.c.l.s4 1983009808
            %v548 = vunpack.c.0.s8 %v547
            %v549 = vlaneseq
            %v550 = vshrl.u32 %v549, 7
            %v551 = vsub.s32 %v548, %v550
            %v552 = vrot.slane %v538, %v551
            %v553 = vcombine.low %v494, %v502
            %v554 = vcombine.high %v494, %v502
            %v556 = vunpack.c.l.s4 1983009808
            %v557 = vunpack.c.0.s8 %v556
            %v558 = vlaneseq
            %v559 = vshrl.u32 %v558, 7
            %v560 = vsub.s32 %v557, %v559
            %v561 = vrot.slane %v553, %v560
            %v563 = vunpack.c.l.s4 1983009808
            %v564 = vunpack.c.0.s8 %v563
            %v565 = vlaneseq
            %v566 = vshrl.u32 %v565, 7
            %v567 = vsub.s32 %v564, %v566
            %v568 = vrot.slane %v554, %v567
            %v569 = vcombine.low %v506, %v514
            %v570 = vcombine.high %v506, %v514
            %v572 = vunpack.c.l.s4 1983009808
            %v573 = vunpack.c.0.s8 %v572
            %v574 = vlaneseq
            %v575 = vshrl.u32 %v574, 7
            %v576 = vsub.s32 %v573, %v575
            %v577 = vrot.slane %v569, %v576
            %v579 = vunpack.c.l.s4 1983009808
            %v580 = vunpack.c.0.s8 %v579
            %v581 = vlaneseq
            %v582 = vshrl.u32 %v581, 7
            %v583 = vsub.s32 %v580, %v582
            %v584 = vrot.slane %v570, %v583
            %v585 = vcombine.low %v510, %v518
            %v586 = vcombine.high %v510, %v518
            %v588 = vunpack.c.l.s4 1983009808
            %v589 = vunpack.c.0.s8 %v588
            %v590 = vlaneseq
            %v591 = vshrl.u32 %v590, 7
            %v592 = vsub.s32 %v589, %v591
            %v593 = vrot.slane %v585, %v592
            %v595 = vunpack.c.l.s4 1983009808
            %v596 = vunpack.c.0.s8 %v595
            %v597 = vlaneseq
            %v598 = vshrl.u32 %v597, 7
            %v599 = vsub.s32 %v596, %v598
            %v600 = vrot.slane %v586, %v599
            %v601 = vcombine.low %v545, %v561
            %v602 = vcombine.high %v545, %v561
            %v604 = vunpack.c.l.s4 1934713408
            %v605 = vunpack.c.0.s8 %v604
            %v606 = vlaneseq
            %v607 = vshrl.u32 %v606, 7
            %v608 = vsub.s32 %v605, %v607
            %v609 = vrot.slane %v601, %v608
            %v611 = vunpack.c.l.s4 1934713408
            %v612 = vunpack.c.0.s8 %v611
            %v613 = vlaneseq
            %v614 = vshrl.u32 %v613, 7
            %v615 = vsub.s32 %v612, %v614
            %v616 = vrot.slane %v602, %v615
            %v617 = vcombine.low %v552, %v568
            %v618 = vcombine.high %v552, %v568
            %v620 = vunpack.c.l.s4 1934713408
            %v621 = vunpack.c.0.s8 %v620
            %v622 = vlaneseq
            %v623 = vshrl.u32 %v622, 7
            %v624 = vsub.s32 %v621, %v623
            %v625 = vrot.slane %v617, %v624
            %v627 = vunpack.c.l.s4 1934713408
            %v628 = vunpack.c.0.s8 %v627
            %v629 = vlaneseq
            %v630 = vshrl.u32 %v629, 7
            %v631 = vsub.s32 %v628, %v630
            %v632 = vrot.slane %v618, %v631
            %v633 = vcombine.low %v577, %v593
            %v634 = vcombine.high %v577, %v593
            %v636 = vunpack.c.l.s4 1934713408
            %v637 = vunpack.c.0.s8 %v636
            %v638 = vlaneseq
            %v639 = vshrl.u32 %v638, 7
            %v640 = vsub.s32 %v637, %v639
            %v641 = vrot.slane %v633, %v640
            %v643 = vunpack.c.l.s4 1934713408
            %v644 = vunpack.c.0.s8 %v643
            %v645 = vlaneseq
            %v646 = vshrl.u32 %v645, 7
            %v647 = vsub.s32 %v644, %v646
            %v648 = vrot.slane %v634, %v647
            %v649 = vcombine.low %v584, %v600
            %v650 = vcombine.high %v584, %v600
            %v652 = vunpack.c.l.s4 1934713408
            %v653 = vunpack.c.0.s8 %v652
            %v654 = vlaneseq
            %v655 = vshrl.u32 %v654, 7
            %v656 = vsub.s32 %v653, %v655
            %v657 = vrot.slane %v649, %v656
            %v659 = vunpack.c.l.s4 1934713408
            %v660 = vunpack.c.0.s8 %v659
            %v661 = vlaneseq
            %v662 = vshrl.u32 %v661, 7
            %v663 = vsub.s32 %v660, %v662
            %v664 = vrot.slane %v650, %v663
            %v665 = vcombine.low %v609, %v641
            %v666 = vcombine.high %v609, %v641
            %v667 = vcombine.low %v616, %v648
            %v668 = vcombine.high %v616, %v648
            %v669 = vcombine.low %v625, %v657
            %v670 = vcombine.high %v625, %v657
            %v671 = vcombine.low %v632, %v664
            %v672 = vcombine.high %v632, %v664
            %v673 = vcombine.low %v492, %v500
            %v674 = vcombine.high %v492, %v500
            %v676 = vunpack.c.l.s4 1983009808
            %v677 = vunpack.c.0.s8 %v676
            %v678 = vlaneseq
            %v679 = vshrl.u32 %v678, 7
            %v680 = vsub.s32 %v677, %v679
            %v681 = vrot.slane %v673, %v680
            %v683 = vunpack.c.l.s4 1983009808
            %v684 = vunpack.c.0.s8 %v683
            %v685 = vlaneseq
            %v686 = vshrl.u32 %v685, 7
            %v687 = vsub.s32 %v684, %v686
            %v688 = vrot.slane %v674, %v687
            %v689 = vcombine.low %v496, %v504
            %v690 = vcombine.high %v496, %v504
            %v692 = vunpack.c.l.s4 1983009808
            %v693 = vunpack.c.0.s8 %v692
            %v694 = vlaneseq
            %v695 = vshrl.u32 %v694, 7
            %v696 = vsub.s32 %v693, %v695
            %v697 = vrot.slane %v689, %v696
            %v699 = vunpack.c.l.s4 1983009808
            %v700 = vunpack.c.0.s8 %v699
            %v701 = vlaneseq
            %v702 = vshrl.u32 %v701, 7
            %v703 = vsub.s32 %v700, %v702
            %v704 = vrot.slane %v690, %v703
            %v705 = vcombine.low %v508, %v516
            %v706 = vcombine.high %v508, %v516
            %v708 = vunpack.c.l.s4 1983009808
            %v709 = vunpack.c.0.s8 %v708
            %v710 = vlaneseq
            %v711 = vshrl.u32 %v710, 7
            %v712 = vsub.s32 %v709, %v711
            %v713 = vrot.slane %v705, %v712
            %v715 = vunpack.c.l.s4 1983009808
            %v716 = vunpack.c.0.s8 %v715
            %v717 = vlaneseq
            %v718 = vshrl.u32 %v717, 7
            %v719 = vsub.s32 %v716, %v718
            %v720 = vrot.slane %v706, %v719
            %v721 = vcombine.low %v512, %v520
            %v722 = vcombine.high %v512, %v520
            %v724 = vunpack.c.l.s4 1983009808
            %v725 = vunpack.c.0.s8 %v724
            %v726 = vlaneseq
            %v727 = vshrl.u32 %v726, 7
            %v728 = vsub.s32 %v725, %v727
            %v729 = vrot.slane %v721, %v728
            %v731 = vunpack.c.l.s4 1983009808
            %v732 = vunpack.c.0.s8 %v731
            %v733 = vlaneseq
            %v734 = vshrl.u32 %v733, 7
            %v735 = vsub.s32 %v732, %v734
            %v736 = vrot.slane %v722, %v735
            %v737 = vcombine.low %v681, %v697
            %v738 = vcombine.high %v681, %v697
            %v740 = vunpack.c.l.s4 1934713408
            %v741 = vunpack.c.0.s8 %v740
            %v742 = vlaneseq
            %v743 = vshrl.u32 %v742, 7
            %v744 = vsub.s32 %v741, %v743
            %v745 = vrot.slane %v737, %v744
            %v747 = vunpack.c.l.s4 1934713408
            %v748 = vunpack.c.0.s8 %v747
            %v749 = vlaneseq
            %v750 = vshrl.u32 %v749, 7
            %v751 = vsub.s32 %v748, %v750
            %v752 = vrot.slane %v738, %v751
            %v753 = vcombine.low %v688, %v704
            %v754 = vcombine.high %v688, %v704
            %v756 = vunpack.c.l.s4 1934713408
            %v757 = vunpack.c.0.s8 %v756
            %v758 = vlaneseq
            %v759 = vshrl.u32 %v758, 7
            %v760 = vsub.s32 %v757, %v759
            %v761 = vrot.slane %v753, %v760
            %v763 = vunpack.c.l.s4 1934713408
            %v764 = vunpack.c.0.s8 %v763
            %v765 = vlaneseq
            %v766 = vshrl.u32 %v765, 7
            %v767 = vsub.s32 %v764, %v766
            %v768 = vrot.slane %v754, %v767
            %v769 = vcombine.low %v713, %v729
            %v770 = vcombine.high %v713, %v729
            %v772 = vunpack.c.l.s4 1934713408
            %v773 = vunpack.c.0.s8 %v772
            %v774 = vlaneseq
            %v775 = vshrl.u32 %v774, 7
            %v776 = vsub.s32 %v773, %v775
            %v777 = vrot.slane %v769, %v776
            %v779 = vunpack.c.l.s4 1934713408
            %v780 = vunpack.c.0.s8 %v779
            %v781 = vlaneseq
            %v782 = vshrl.u32 %v781, 7
            %v783 = vsub.s32 %v780, %v782
            %v784 = vrot.slane %v770, %v783
            %v785 = vcombine.low %v720, %v736
            %v786 = vcombine.high %v720, %v736
            %v788 = vunpack.c.l.s4 1934713408
            %v789 = vunpack.c.0.s8 %v788
            %v790 = vlaneseq
            %v791 = vshrl.u32 %v790, 7
            %v792 = vsub.s32 %v789, %v791
            %v793 = vrot.slane %v785, %v792
            %v795 = vunpack.c.l.s4 1934713408
            %v796 = vunpack.c.0.s8 %v795
            %v797 = vlaneseq
            %v798 = vshrl.u32 %v797, 7
            %v799 = vsub.s32 %v796, %v798
            %v800 = vrot.slane %v786, %v799
            %v801 = vcombine.low %v745, %v777
            %v802 = vcombine.high %v745, %v777
            %v803 = vcombine.low %v752, %v784
            %v804 = vcombine.high %v752, %v784
            %v805 = vcombine.low %v761, %v793
            %v806 = vcombine.high %v761, %v793
            %v807 = vcombine.low %v768, %v800
            %v808 = vcombine.high %v768, %v800
            %s809 = scalar_lea.vmem [#allocation4], %s208
            %810 = vst.msk [vmem:[%s809] sm:$0xff] %vm456, %v665
            %811 = vst.msk [vmem:[%s809 + $0x10] sm:$0xff] %vm456, %v666
            %812 = vst.msk [vmem:[%s809 + $0x20] sm:$0xff] %vm456, %v667
            %813 = vst.msk [vmem:[%s809 + $0x30] sm:$0xff] %vm456, %v668
            %814 = vst.msk [vmem:[%s809 + $0x40] sm:$0xff] %vm456, %v669
            %815 = vst.msk [vmem:[%s809 + $0x50] sm:$0xff] %vm456, %v670
            %816 = vst.msk [vmem:[%s809 + $0x60] sm:$0xff] %vm456, %v671
            %817 = vst.msk [vmem:[%s809 + $0x70] sm:$0xff] %vm456, %v672
            %818 = vst.msk [vmem:[%s809 + $0x80] sm:$0xff] %vm456, %v801
            %819 = vst.msk [vmem:[%s809 + $0x90] sm:$0xff] %vm456, %v802
            %820 = vst.msk [vmem:[%s809 + $0xa0] sm:$0xff] %vm456, %v803
            %821 = vst.msk [vmem:[%s809 + $0xb0] sm:$0xff] %vm456, %v804
            %822 = vst.msk [vmem:[%s809 + $0xc0] sm:$0xff] %vm456, %v805
            %823 = vst.msk [vmem:[%s809 + $0xd0] sm:$0xff] %vm456, %v806
            %824 = vst.msk [vmem:[%s809 + $0xe0] sm:$0xff] %vm456, %v807
            %825 = vst.msk [vmem:[%s809 + $0xf0] sm:$0xff] %vm456, %v808
            %826 = vrot.lane.b32.xlu0 %v377, 120
            %v827 = vpop.permute.xlu0 %826
            %828 = vrot.lane.b32.xlu0 %v382, 120
            %v829 = vpop.permute.xlu0 %828
            %830 = vrot.lane.b32.xlu0 %v387, 120
            %v831 = vpop.permute.xlu0 %830
            %832 = vrot.lane.b32.xlu0 %v392, 120
            %v833 = vpop.permute.xlu0 %832
            %834 = vrot.lane.b32.xlu0 %v397, 120
            %v835 = vpop.permute.xlu0 %834
            %836 = vrot.lane.b32.xlu0 %v402, 120
            %v837 = vpop.permute.xlu0 %836
            %838 = vrot.lane.b32.xlu0 %v407, 120
            %v839 = vpop.permute.xlu0 %838
            %840 = vrot.lane.b32.xlu0 %v412, 120
            %v841 = vpop.permute.xlu0 %840
            %842 = vrot.lane.b32.xlu0 %v417, 120
            %v843 = vpop.permute.xlu0 %842
            %844 = vrot.lane.b32.xlu0 %v422, 120
            %v845 = vpop.permute.xlu0 %844
            %846 = vrot.lane.b32.xlu0 %v427, 120
            %v847 = vpop.permute.xlu0 %846
            %848 = vrot.lane.b32.xlu0 %v432, 120
            %v849 = vpop.permute.xlu0 %848
            %850 = vrot.lane.b32.xlu0 %v437, 120
            %v851 = vpop.permute.xlu0 %850
            %852 = vrot.lane.b32.xlu0 %v442, 120
            %v853 = vpop.permute.xlu0 %852
            %854 = vrot.lane.b32.xlu0 %v447, 120
            %v855 = vpop.permute.xlu0 %854
            %856 = vrot.lane.b32.xlu0 %v452, 120
            %v857 = vpop.permute.xlu0 %856
            %v874 = vcombine.low %v827, %v835
            %v875 = vcombine.high %v827, %v835
            %v877 = vunpack.c.l.s4 1983009808
            %v878 = vunpack.c.0.s8 %v877
            %v879 = vlaneseq
            %v880 = vshrl.u32 %v879, 7
            %v881 = vsub.s32 %v878, %v880
            %v882 = vrot.slane %v874, %v881
            %v884 = vunpack.c.l.s4 1983009808
            %v885 = vunpack.c.0.s8 %v884
            %v886 = vlaneseq
            %v887 = vshrl.u32 %v886, 7
            %v888 = vsub.s32 %v885, %v887
            %v889 = vrot.slane %v875, %v888
            %v890 = vcombine.low %v831, %v839
            %v891 = vcombine.high %v831, %v839
            %v893 = vunpack.c.l.s4 1983009808
            %v894 = vunpack.c.0.s8 %v893
            %v895 = vlaneseq
            %v896 = vshrl.u32 %v895, 7
            %v897 = vsub.s32 %v894, %v896
            %v898 = vrot.slane %v890, %v897
            %v900 = vunpack.c.l.s4 1983009808
            %v901 = vunpack.c.0.s8 %v900
            %v902 = vlaneseq
            %v903 = vshrl.u32 %v902, 7
            %v904 = vsub.s32 %v901, %v903
            %v905 = vrot.slane %v891, %v904
            %v906 = vcombine.low %v843, %v851
            %v907 = vcombine.high %v843, %v851
            %v909 = vunpack.c.l.s4 1983009808
            %v910 = vunpack.c.0.s8 %v909
            %v911 = vlaneseq
            %v912 = vshrl.u32 %v911, 7
            %v913 = vsub.s32 %v910, %v912
            %v914 = vrot.slane %v906, %v913
            %v916 = vunpack.c.l.s4 1983009808
            %v917 = vunpack.c.0.s8 %v916
            %v918 = vlaneseq
            %v919 = vshrl.u32 %v918, 7
            %v920 = vsub.s32 %v917, %v919
            %v921 = vrot.slane %v907, %v920
            %v922 = vcombine.low %v847, %v855
            %v923 = vcombine.high %v847, %v855
            %v925 = vunpack.c.l.s4 1983009808
            %v926 = vunpack.c.0.s8 %v925
            %v927 = vlaneseq
            %v928 = vshrl.u32 %v927, 7
            %v929 = vsub.s32 %v926, %v928
            %v930 = vrot.slane %v922, %v929
            %v932 = vunpack.c.l.s4 1983009808
            %v933 = vunpack.c.0.s8 %v932
            %v934 = vlaneseq
            %v935 = vshrl.u32 %v934, 7
            %v936 = vsub.s32 %v933, %v935
            %v937 = vrot.slane %v923, %v936
            %v938 = vcombine.low %v882, %v898
            %v939 = vcombine.high %v882, %v898
            %v941 = vunpack.c.l.s4 1934713408
            %v942 = vunpack.c.0.s8 %v941
            %v943 = vlaneseq
            %v944 = vshrl.u32 %v943, 7
            %v945 = vsub.s32 %v942, %v944
            %v946 = vrot.slane %v938, %v945
            %v948 = vunpack.c.l.s4 1934713408
            %v949 = vunpack.c.0.s8 %v948
            %v950 = vlaneseq
            %v951 = vshrl.u32 %v950, 7
            %v952 = vsub.s32 %v949, %v951
            %v953 = vrot.slane %v939, %v952
            %v954 = vcombine.low %v889, %v905
            %v955 = vcombine.high %v889, %v905
            %v957 = vunpack.c.l.s4 1934713408
            %v958 = vunpack.c.0.s8 %v957
            %v959 = vlaneseq
            %v960 = vshrl.u32 %v959, 7
            %v961 = vsub.s32 %v958, %v960
            %v962 = vrot.slane %v954, %v961
            %v964 = vunpack.c.l.s4 1934713408
            %v965 = vunpack.c.0.s8 %v964
            %v966 = vlaneseq
            %v967 = vshrl.u32 %v966, 7
            %v968 = vsub.s32 %v965, %v967
            %v969 = vrot.slane %v955, %v968
            %v970 = vcombine.low %v914, %v930
            %v971 = vcombine.high %v914, %v930
            %v973 = vunpack.c.l.s4 1934713408
            %v974 = vunpack.c.0.s8 %v973
            %v975 = vlaneseq
            %v976 = vshrl.u32 %v975, 7
            %v977 = vsub.s32 %v974, %v976
            %v978 = vrot.slane %v970, %v977
            %v980 = vunpack.c.l.s4 1934713408
            %v981 = vunpack.c.0.s8 %v980
            %v982 = vlaneseq
            %v983 = vshrl.u32 %v982, 7
            %v984 = vsub.s32 %v981, %v983
            %v985 = vrot.slane %v971, %v984
            %v986 = vcombine.low %v921, %v937
            %v987 = vcombine.high %v921, %v937
            %v989 = vunpack.c.l.s4 1934713408
            %v990 = vunpack.c.0.s8 %v989
            %v991 = vlaneseq
            %v992 = vshrl.u32 %v991, 7
            %v993 = vsub.s32 %v990, %v992
            %v994 = vrot.slane %v986, %v993
            %v996 = vunpack.c.l.s4 1934713408
            %v997 = vunpack.c.0.s8 %v996
            %v998 = vlaneseq
            %v999 = vshrl.u32 %v998, 7
            %v1000 = vsub.s32 %v997, %v999
            %v1001 = vrot.slane %v987, %v1000
            %v1002 = vcombine.low %v946, %v978
            %v1003 = vcombine.high %v946, %v978
            %v1004 = vcombine.low %v953, %v985
            %v1005 = vcombine.high %v953, %v985
            %v1006 = vcombine.low %v962, %v994
            %v1007 = vcombine.high %v962, %v994
            %v1008 = vcombine.low %v969, %v1001
            %v1009 = vcombine.high %v969, %v1001
            %v1010 = vcombine.low %v829, %v837
            %v1011 = vcombine.high %v829, %v837
            %v1013 = vunpack.c.l.s4 1983009808
            %v1014 = vunpack.c.0.s8 %v1013
            %v1015 = vlaneseq
            %v1016 = vshrl.u32 %v1015, 7
            %v1017 = vsub.s32 %v1014, %v1016
            %v1018 = vrot.slane %v1010, %v1017
            %v1020 = vunpack.c.l.s4 1983009808
            %v1021 = vunpack.c.0.s8 %v1020
            %v1022 = vlaneseq
            %v1023 = vshrl.u32 %v1022, 7
            %v1024 = vsub.s32 %v1021, %v1023
            %v1025 = vrot.slane %v1011, %v1024
            %v1026 = vcombine.low %v833, %v841
            %v1027 = vcombine.high %v833, %v841
            %v1029 = vunpack.c.l.s4 1983009808
            %v1030 = vunpack.c.0.s8 %v1029
            %v1031 = vlaneseq
            %v1032 = vshrl.u32 %v1031, 7
            %v1033 = vsub.s32 %v1030, %v1032
            %v1034 = vrot.slane %v1026, %v1033
            %v1036 = vunpack.c.l.s4 1983009808
            %v1037 = vunpack.c.0.s8 %v1036
            %v1038 = vlaneseq
            %v1039 = vshrl.u32 %v1038, 7
            %v1040 = vsub.s32 %v1037, %v1039
            %v1041 = vrot.slane %v1027, %v1040
            %v1042 = vcombine.low %v845, %v853
            %v1043 = vcombine.high %v845, %v853
            %v1045 = vunpack.c.l.s4 1983009808
            %v1046 = vunpack.c.0.s8 %v1045
            %v1047 = vlaneseq
            %v1048 = vshrl.u32 %v1047, 7
            %v1049 = vsub.s32 %v1046, %v1048
            %v1050 = vrot.slane %v1042, %v1049
            %v1052 = vunpack.c.l.s4 1983009808
            %v1053 = vunpack.c.0.s8 %v1052
            %v1054 = vlaneseq
            %v1055 = vshrl.u32 %v1054, 7
            %v1056 = vsub.s32 %v1053, %v1055
            %v1057 = vrot.slane %v1043, %v1056
            %v1058 = vcombine.low %v849, %v857
            %v1059 = vcombine.high %v849, %v857
            %v1061 = vunpack.c.l.s4 1983009808
            %v1062 = vunpack.c.0.s8 %v1061
            %v1063 = vlaneseq
            %v1064 = vshrl.u32 %v1063, 7
            %v1065 = vsub.s32 %v1062, %v1064
            %v1066 = vrot.slane %v1058, %v1065
            %v1068 = vunpack.c.l.s4 1983009808
            %v1069 = vunpack.c.0.s8 %v1068
            %v1070 = vlaneseq
            %v1071 = vshrl.u32 %v1070, 7
            %v1072 = vsub.s32 %v1069, %v1071
            %v1073 = vrot.slane %v1059, %v1072
            %v1074 = vcombine.low %v1018, %v1034
            %v1075 = vcombine.high %v1018, %v1034
            %v1077 = vunpack.c.l.s4 1934713408
            %v1078 = vunpack.c.0.s8 %v1077
            %v1079 = vlaneseq
            %v1080 = vshrl.u32 %v1079, 7
            %v1081 = vsub.s32 %v1078, %v1080
            %v1082 = vrot.slane %v1074, %v1081
            %v1084 = vunpack.c.l.s4 1934713408
            %v1085 = vunpack.c.0.s8 %v1084
            %v1086 = vlaneseq
            %v1087 = vshrl.u32 %v1086, 7
            %v1088 = vsub.s32 %v1085, %v1087
            %v1089 = vrot.slane %v1075, %v1088
            %v1090 = vcombine.low %v1025, %v1041
            %v1091 = vcombine.high %v1025, %v1041
            %v1093 = vunpack.c.l.s4 1934713408
            %v1094 = vunpack.c.0.s8 %v1093
            %v1095 = vlaneseq
            %v1096 = vshrl.u32 %v1095, 7
            %v1097 = vsub.s32 %v1094, %v1096
            %v1098 = vrot.slane %v1090, %v1097
            %v1100 = vunpack.c.l.s4 1934713408
            %v1101 = vunpack.c.0.s8 %v1100
            %v1102 = vlaneseq
            %v1103 = vshrl.u32 %v1102, 7
            %v1104 = vsub.s32 %v1101, %v1103
            %v1105 = vrot.slane %v1091, %v1104
            %v1106 = vcombine.low %v1050, %v1066
            %v1107 = vcombine.high %v1050, %v1066
            %v1109 = vunpack.c.l.s4 1934713408
            %v1110 = vunpack.c.0.s8 %v1109
            %v1111 = vlaneseq
            %v1112 = vshrl.u32 %v1111, 7
            %v1113 = vsub.s32 %v1110, %v1112
            %v1114 = vrot.slane %v1106, %v1113
            %v1116 = vunpack.c.l.s4 1934713408
            %v1117 = vunpack.c.0.s8 %v1116
            %v1118 = vlaneseq
            %v1119 = vshrl.u32 %v1118, 7
            %v1120 = vsub.s32 %v1117, %v1119
            %v1121 = vrot.slane %v1107, %v1120
            %v1122 = vcombine.low %v1057, %v1073
            %v1123 = vcombine.high %v1057, %v1073
            %v1125 = vunpack.c.l.s4 1934713408
            %v1126 = vunpack.c.0.s8 %v1125
            %v1127 = vlaneseq
            %v1128 = vshrl.u32 %v1127, 7
            %v1129 = vsub.s32 %v1126, %v1128
            %v1130 = vrot.slane %v1122, %v1129
            %v1132 = vunpack.c.l.s4 1934713408
            %v1133 = vunpack.c.0.s8 %v1132
            %v1134 = vlaneseq
            %v1135 = vshrl.u32 %v1134, 7
            %v1136 = vsub.s32 %v1133, %v1135
            %v1137 = vrot.slane %v1123, %v1136
            %v1138 = vcombine.low %v1082, %v1114
            %v1139 = vcombine.high %v1082, %v1114
            %v1140 = vcombine.low %v1089, %v1121
            %v1141 = vcombine.high %v1089, %v1121
            %v1142 = vcombine.low %v1098, %v1130
            %v1143 = vcombine.high %v1098, %v1130
            %v1144 = vcombine.low %v1105, %v1137
            %v1145 = vcombine.high %v1105, %v1137
            %s1146 = scalar_lea.vmem [#allocation5], %s208
            %1147 = vst.msk [vmem:[%s1146] sm:$0xff] %vm261, %v1002
            %1148 = vst.msk [vmem:[%s1146 + $0x10] sm:$0xff] %vm261, %v1003
            %1149 = vst.msk [vmem:[%s1146 + $0x20] sm:$0xff] %vm261, %v1004
            %1150 = vst.msk [vmem:[%s1146 + $0x30] sm:$0xff] %vm261, %v1005
            %1151 = vst.msk [vmem:[%s1146 + $0x40] sm:$0xff] %vm261, %v1006
            %1152 = vst.msk [vmem:[%s1146 + $0x50] sm:$0xff] %vm261, %v1007
            %1153 = vst.msk [vmem:[%s1146 + $0x60] sm:$0xff] %vm261, %v1008
            %1154 = vst.msk [vmem:[%s1146 + $0x70] sm:$0xff] %vm261, %v1009
            %1155 = vst.msk [vmem:[%s1146 + $0x80] sm:$0xff] %vm261, %v1138
            %1156 = vst.msk [vmem:[%s1146 + $0x90] sm:$0xff] %vm261, %v1139
            %1157 = vst.msk [vmem:[%s1146 + $0xa0] sm:$0xff] %vm261, %v1140
            %1158 = vst.msk [vmem:[%s1146 + $0xb0] sm:$0xff] %vm261, %v1141
            %1159 = vst.msk [vmem:[%s1146 + $0xc0] sm:$0xff] %vm261, %v1142
            %1160 = vst.msk [vmem:[%s1146 + $0xd0] sm:$0xff] %vm261, %v1143
            %1161 = vst.msk [vmem:[%s1146 + $0xe0] sm:$0xff] %vm261, %v1144
            %1162 = vst.msk [vmem:[%s1146 + $0xf0] sm:$0xff] %vm261, %v1145
          $region49: #{tpu_custom_call.1} parent=39 // loop_footer
            %s207 = sadd.s32 1, %s203
          $region50: #{tpu_custom_call.1} parent=39 // loop_footer_branch
            %202 = sbr.rel target = $region46
          $region51: #{tpu_custom_call.1} parent=39 // loop_exit
            _
        $region40: #{tpu_custom_call.1} parent=31 // pred_fallthru
          _
        %s1163 = smul.u32 %s25, 8
        %s1164 = smul.u32 %s1163, 16
        %s1165 = scalar_lea.vmem [#allocation3], %s1164
        %v1166 = vld [vmem:[%s1165] sm:$0xff]
        %v1167 = vld [vmem:[%s1165 + $0x8] sm:$0xff]
        %v1168 = vld [vmem:[%s1165 + $0x10] sm:$0xff]
        %v1169 = vld [vmem:[%s1165 + $0x18] sm:$0xff]
        %v1170 = vld [vmem:[%s1165 + $0x20] sm:$0xff]
        %v1171 = vld [vmem:[%s1165 + $0x28] sm:$0xff]
        %v1172 = vld [vmem:[%s1165 + $0x30] sm:$0xff]
        %v1173 = vld [vmem:[%s1165 + $0x38] sm:$0xff]
        %v1174 = vld [vmem:[%s1165 + $0x40] sm:$0xff]
        %v1175 = vld [vmem:[%s1165 + $0x48] sm:$0xff]
        %v1176 = vld [vmem:[%s1165 + $0x50] sm:$0xff]
        %v1177 = vld [vmem:[%s1165 + $0x58] sm:$0xff]
        %v1178 = vld [vmem:[%s1165 + $0x60] sm:$0xff]
        %v1179 = vld [vmem:[%s1165 + $0x68] sm:$0xff]
        %v1180 = vld [vmem:[%s1165 + $0x70] sm:$0xff]
        %v1181 = vld [vmem:[%s1165 + $0x78] sm:$0xff]
        %v1182 = vcombine.low %v1166, %v1170
        %v1183 = vcombine.high %v1166, %v1170
        %v1185 = vunpack.c.l.s4 1983009808
        %v1186 = vunpack.c.0.s8 %v1185
        %v1187 = vlaneseq
        %v1188 = vshrl.u32 %v1187, 7
        %v1189 = vsub.s32 %v1186, %v1188
        %v1190 = vrot.slane %v1182, %v1189
        %v1192 = vunpack.c.l.s4 1983009808
        %v1193 = vunpack.c.0.s8 %v1192
        %v1194 = vlaneseq
        %v1195 = vshrl.u32 %v1194, 7
        %v1196 = vsub.s32 %v1193, %v1195
        %v1197 = vrot.slane %v1183, %v1196
        %v1198 = vcombine.low %v1168, %v1172
        %v1199 = vcombine.high %v1168, %v1172
        %v1201 = vunpack.c.l.s4 1983009808
        %v1202 = vunpack.c.0.s8 %v1201
        %v1203 = vlaneseq
        %v1204 = vshrl.u32 %v1203, 7
        %v1205 = vsub.s32 %v1202, %v1204
        %v1206 = vrot.slane %v1198, %v1205
        %v1208 = vunpack.c.l.s4 1983009808
        %v1209 = vunpack.c.0.s8 %v1208
        %v1210 = vlaneseq
        %v1211 = vshrl.u32 %v1210, 7
        %v1212 = vsub.s32 %v1209, %v1211
        %v1213 = vrot.slane %v1199, %v1212
        %v1214 = vcombine.low %v1174, %v1178
        %v1215 = vcombine.high %v1174, %v1178
        %v1217 = vunpack.c.l.s4 1983009808
        %v1218 = vunpack.c.0.s8 %v1217
        %v1219 = vlaneseq
        %v1220 = vshrl.u32 %v1219, 7
        %v1221 = vsub.s32 %v1218, %v1220
        %v1222 = vrot.slane %v1214, %v1221
        %v1224 = vunpack.c.l.s4 1983009808
        %v1225 = vunpack.c.0.s8 %v1224
        %v1226 = vlaneseq
        %v1227 = vshrl.u32 %v1226, 7
        %v1228 = vsub.s32 %v1225, %v1227
        %v1229 = vrot.slane %v1215, %v1228
        %v1230 = vcombine.low %v1176, %v1180
        %v1231 = vcombine.high %v1176, %v1180
        %v1233 = vunpack.c.l.s4 1983009808
        %v1234 = vunpack.c.0.s8 %v1233
        %v1235 = vlaneseq
        %v1236 = vshrl.u32 %v1235, 7
        %v1237 = vsub.s32 %v1234, %v1236
        %v1238 = vrot.slane %v1230, %v1237
        %v1240 = vunpack.c.l.s4 1983009808
        %v1241 = vunpack.c.0.s8 %v1240
        %v1242 = vlaneseq
        %v1243 = vshrl.u32 %v1242, 7
        %v1244 = vsub.s32 %v1241, %v1243
        %v1245 = vrot.slane %v1231, %v1244
        %v1246 = vcombine.low %v1190, %v1206
        %v1247 = vcombine.high %v1190, %v1206
        %v1249 = vunpack.c.l.s4 1934713408
        %v1250 = vunpack.c.0.s8 %v1249
        %v1251 = vlaneseq
        %v1252 = vshrl.u32 %v1251, 7
        %v1253 = vsub.s32 %v1250, %v1252
        %v1254 = vrot.slane %v1246, %v1253
        %v1256 = vunpack.c.l.s4 1934713408
        %v1257 = vunpack.c.0.s8 %v1256
        %v1258 = vlaneseq
        %v1259 = vshrl.u32 %v1258, 7
        %v1260 = vsub.s32 %v1257, %v1259
        %v1261 = vrot.slane %v1247, %v1260
        %v1262 = vcombine.low %v1197, %v1213
        %v1263 = vcombine.high %v1197, %v1213
        %v1265 = vunpack.c.l.s4 1934713408
        %v1266 = vunpack.c.0.s8 %v1265
        %v1267 = vlaneseq
        %v1268 = vshrl.u32 %v1267, 7
        %v1269 = vsub.s32 %v1266, %v1268
        %v1270 = vrot.slane %v1262, %v1269
        %v1272 = vunpack.c.l.s4 1934713408
        %v1273 = vunpack.c.0.s8 %v1272
        %v1274 = vlaneseq
        %v1275 = vshrl.u32 %v1274, 7
        %v1276 = vsub.s32 %v1273, %v1275
        %v1277 = vrot.slane %v1263, %v1276
        %v1278 = vcombine.low %v1222, %v1238
        %v1279 = vcombine.high %v1222, %v1238
        %v1281 = vunpack.c.l.s4 1934713408
        %v1282 = vunpack.c.0.s8 %v1281
        %v1283 = vlaneseq
        %v1284 = vshrl.u32 %v1283, 7
        %v1285 = vsub.s32 %v1282, %v1284
        %v1286 = vrot.slane %v1278, %v1285
        %v1288 = vunpack.c.l.s4 1934713408
        %v1289 = vunpack.c.0.s8 %v1288
        %v1290 = vlaneseq
        %v1291 = vshrl.u32 %v1290, 7
        %v1292 = vsub.s32 %v1289, %v1291
        %v1293 = vrot.slane %v1279, %v1292
        %v1294 = vcombine.low %v1229, %v1245
        %v1295 = vcombine.high %v1229, %v1245
        %v1297 = vunpack.c.l.s4 1934713408
        %v1298 = vunpack.c.0.s8 %v1297
        %v1299 = vlaneseq
        %v1300 = vshrl.u32 %v1299, 7
        %v1301 = vsub.s32 %v1298, %v1300
        %v1302 = vrot.slane %v1294, %v1301
        %v1304 = vunpack.c.l.s4 1934713408
        %v1305 = vunpack.c.0.s8 %v1304
        %v1306 = vlaneseq
        %v1307 = vshrl.u32 %v1306, 7
        %v1308 = vsub.s32 %v1305, %v1307
        %v1309 = vrot.slane %v1295, %v1308
        %v1310 = vcombine.low %v1254, %v1286
        %v1311 = vcombine.high %v1254, %v1286
        %v1312 = vcombine.low %v1261, %v1293
        %v1313 = vcombine.high %v1261, %v1293
        %v1314 = vcombine.low %v1270, %v1302
        %v1315 = vcombine.high %v1270, %v1302
        %v1316 = vcombine.low %v1277, %v1309
        %v1317 = vcombine.high %v1277, %v1309
        %v1318 = vcombine.low %v1167, %v1171
        %v1319 = vcombine.high %v1167, %v1171
        %v1321 = vunpack.c.l.s4 1983009808
        %v1322 = vunpack.c.0.s8 %v1321
        %v1323 = vlaneseq
        %v1324 = vshrl.u32 %v1323, 7
        %v1325 = vsub.s32 %v1322, %v1324
        %v1326 = vrot.slane %v1318, %v1325
        %v1328 = vunpack.c.l.s4 1983009808
        %v1329 = vunpack.c.0.s8 %v1328
        %v1330 = vlaneseq
        %v1331 = vshrl.u32 %v1330, 7
        %v1332 = vsub.s32 %v1329, %v1331
        %v1333 = vrot.slane %v1319, %v1332
        %v1334 = vcombine.low %v1169, %v1173
        %v1335 = vcombine.high %v1169, %v1173
        %v1337 = vunpack.c.l.s4 1983009808
        %v1338 = vunpack.c.0.s8 %v1337
        %v1339 = vlaneseq
        %v1340 = vshrl.u32 %v1339, 7
        %v1341 = vsub.s32 %v1338, %v1340
        %v1342 = vrot.slane %v1334, %v1341
        %v1344 = vunpack.c.l.s4 1983009808
        %v1345 = vunpack.c.0.s8 %v1344
        %v1346 = vlaneseq
        %v1347 = vshrl.u32 %v1346, 7
        %v1348 = vsub.s32 %v1345, %v1347
        %v1349 = vrot.slane %v1335, %v1348
        %v1350 = vcombine.low %v1175, %v1179
        %v1351 = vcombine.high %v1175, %v1179
        %v1353 = vunpack.c.l.s4 1983009808
        %v1354 = vunpack.c.0.s8 %v1353
        %v1355 = vlaneseq
        %v1356 = vshrl.u32 %v1355, 7
        %v1357 = vsub.s32 %v1354, %v1356
        %v1358 = vrot.slane %v1350, %v1357
        %v1360 = vunpack.c.l.s4 1983009808
        %v1361 = vunpack.c.0.s8 %v1360
        %v1362 = vlaneseq
        %v1363 = vshrl.u32 %v1362, 7
        %v1364 = vsub.s32 %v1361, %v1363
        %v1365 = vrot.slane %v1351, %v1364
        %v1366 = vcombine.low %v1177, %v1181
        %v1367 = vcombine.high %v1177, %v1181
        %v1369 = vunpack.c.l.s4 1983009808
        %v1370 = vunpack.c.0.s8 %v1369
        %v1371 = vlaneseq
        %v1372 = vshrl.u32 %v1371, 7
        %v1373 = vsub.s32 %v1370, %v1372
        %v1374 = vrot.slane %v1366, %v1373
        %v1376 = vunpack.c.l.s4 1983009808
        %v1377 = vunpack.c.0.s8 %v1376
        %v1378 = vlaneseq
        %v1379 = vshrl.u32 %v1378, 7
        %v1380 = vsub.s32 %v1377, %v1379
        %v1381 = vrot.slane %v1367, %v1380
        %v1382 = vcombine.low %v1326, %v1342
        %v1383 = vcombine.high %v1326, %v1342
        %v1385 = vunpack.c.l.s4 1934713408
        %v1386 = vunpack.c.0.s8 %v1385
        %v1387 = vlaneseq
        %v1388 = vshrl.u32 %v1387, 7
        %v1389 = vsub.s32 %v1386, %v1388
        %v1390 = vrot.slane %v1382, %v1389
        %v1392 = vunpack.c.l.s4 1934713408
        %v1393 = vunpack.c.0.s8 %v1392
        %v1394 = vlaneseq
        %v1395 = vshrl.u32 %v1394, 7
        %v1396 = vsub.s32 %v1393, %v1395
        %v1397 = vrot.slane %v1383, %v1396
        %v1398 = vcombine.low %v1333, %v1349
        %v1399 = vcombine.high %v1333, %v1349
        %v1401 = vunpack.c.l.s4 1934713408
        %v1402 = vunpack.c.0.s8 %v1401
        %v1403 = vlaneseq
        %v1404 = vshrl.u32 %v1403, 7
        %v1405 = vsub.s32 %v1402, %v1404
        %v1406 = vrot.slane %v1398, %v1405
        %v1408 = vunpack.c.l.s4 1934713408
        %v1409 = vunpack.c.0.s8 %v1408
        %v1410 = vlaneseq
        %v1411 = vshrl.u32 %v1410, 7
        %v1412 = vsub.s32 %v1409, %v1411
        %v1413 = vrot.slane %v1399, %v1412
        %v1414 = vcombine.low %v1358, %v1374
        %v1415 = vcombine.high %v1358, %v1374
        %v1417 = vunpack.c.l.s4 1934713408
        %v1418 = vunpack.c.0.s8 %v1417
        %v1419 = vlaneseq
        %v1420 = vshrl.u32 %v1419, 7
        %v1421 = vsub.s32 %v1418, %v1420
        %v1422 = vrot.slane %v1414, %v1421
        %v1424 = vunpack.c.l.s4 1934713408
        %v1425 = vunpack.c.0.s8 %v1424
        %v1426 = vlaneseq
        %v1427 = vshrl.u32 %v1426, 7
        %v1428 = vsub.s32 %v1425, %v1427
        %v1429 = vrot.slane %v1415, %v1428
        %v1430 = vcombine.low %v1365, %v1381
        %v1431 = vcombine.high %v1365, %v1381
        %v1433 = vunpack.c.l.s4 1934713408
        %v1434 = vunpack.c.0.s8 %v1433
        %v1435 = vlaneseq
        %v1436 = vshrl.u32 %v1435, 7
        %v1437 = vsub.s32 %v1434, %v1436
        %v1438 = vrot.slane %v1430, %v1437
        %v1440 = vunpack.c.l.s4 1934713408
        %v1441 = vunpack.c.0.s8 %v1440
        %v1442 = vlaneseq
        %v1443 = vshrl.u32 %v1442, 7
        %v1444 = vsub.s32 %v1441, %v1443
        %v1445 = vrot.slane %v1431, %v1444
        %v1446 = vcombine.low %v1390, %v1422
        %v1447 = vcombine.high %v1390, %v1422
        %v1448 = vcombine.low %v1397, %v1429
        %v1449 = vcombine.high %v1397, %v1429
        %v1450 = vcombine.low %v1406, %v1438
        %v1451 = vcombine.high %v1406, %v1438
        %v1452 = vcombine.low %v1413, %v1445
        %v1453 = vcombine.high %v1413, %v1445
        %v1454 = vld [vmem:[#allocation4] sm:$0xff]
        %v1455 = vld [vmem:[#allocation4 + $0x8] sm:$0xff]
        %v1456 = vld [vmem:[#allocation4 + $0x10] sm:$0xff]
        %v1457 = vld [vmem:[#allocation4 + $0x18] sm:$0xff]
        %v1458 = vld [vmem:[#allocation4 + $0x20] sm:$0xff]
        %v1459 = vld [vmem:[#allocation4 + $0x28] sm:$0xff]
        %v1460 = vld [vmem:[#allocation4 + $0x30] sm:$0xff]
        %v1461 = vld [vmem:[#allocation4 + $0x38] sm:$0xff]
        %v1462 = vld [vmem:[#allocation4 + $0x40] sm:$0xff]
        %v1463 = vld [vmem:[#allocation4 + $0x48] sm:$0xff]
        %v1464 = vld [vmem:[#allocation4 + $0x50] sm:$0xff]
        %v1465 = vld [vmem:[#allocation4 + $0x58] sm:$0xff]
        %v1466 = vld [vmem:[#allocation4 + $0x60] sm:$0xff]
        %v1467 = vld [vmem:[#allocation4 + $0x68] sm:$0xff]
        %v1468 = vld [vmem:[#allocation4 + $0x70] sm:$0xff]
        %v1469 = vld [vmem:[#allocation4 + $0x78] sm:$0xff]
        %v1470 = vld [vmem:[#allocation4 + $0x80] sm:$0xff]
        %v1471 = vld [vmem:[#allocation4 + $0x88] sm:$0xff]
        %v1472 = vld [vmem:[#allocation4 + $0x90] sm:$0xff]
        %v1473 = vld [vmem:[#allocation4 + $0x98] sm:$0xff]
        %v1474 = vld [vmem:[#allocation4 + $0xa0] sm:$0xff]
        %v1475 = vld [vmem:[#allocation4 + $0xa8] sm:$0xff]
        %v1476 = vld [vmem:[#allocation4 + $0xb0] sm:$0xff]
        %v1477 = vld [vmem:[#allocation4 + $0xb8] sm:$0xff]
        %v1478 = vld [vmem:[#allocation4 + $0xc0] sm:$0xff]
        %v1479 = vld [vmem:[#allocation4 + $0xc8] sm:$0xff]
        %v1480 = vld [vmem:[#allocation4 + $0xd0] sm:$0xff]
        %v1481 = vld [vmem:[#allocation4 + $0xd8] sm:$0xff]
        %v1482 = vld [vmem:[#allocation4 + $0xe0] sm:$0xff]
        %v1483 = vld [vmem:[#allocation4 + $0xe8] sm:$0xff]
        %v1484 = vld [vmem:[#allocation4 + $0xf0] sm:$0xff]
        %v1485 = vld [vmem:[#allocation4 + $0xf8] sm:$0xff]
        %s1486 = scalar_lea.vmem [#allocation4], %s1163
        %v1487 = vld [vmem:[%s1486] sm:$0xff]
        %v1488 = vld [vmem:[%s1486 + $0x10] sm:$0xff]
        %v1489 = vld [vmem:[%s1486 + $0x20] sm:$0xff]
        %v1490 = vld [vmem:[%s1486 + $0x30] sm:$0xff]
        %v1491 = vld [vmem:[%s1486 + $0x40] sm:$0xff]
        %v1492 = vld [vmem:[%s1486 + $0x50] sm:$0xff]
        %v1493 = vld [vmem:[%s1486 + $0x60] sm:$0xff]
        %v1494 = vld [vmem:[%s1486 + $0x70] sm:$0xff]
        %v1495 = vld [vmem:[%s1486 + $0x80] sm:$0xff]
        %v1496 = vld [vmem:[%s1486 + $0x90] sm:$0xff]
        %v1497 = vld [vmem:[%s1486 + $0xa0] sm:$0xff]
        %v1498 = vld [vmem:[%s1486 + $0xb0] sm:$0xff]
        %v1499 = vld [vmem:[%s1486 + $0xc0] sm:$0xff]
        %v1500 = vld [vmem:[%s1486 + $0xd0] sm:$0xff]
        %v1501 = vld [vmem:[%s1486 + $0xe0] sm:$0xff]
        %v1502 = vld [vmem:[%s1486 + $0xf0] sm:$0xff]
        %v1503 = vcombine.low %v1487, %v1489
        %v1504 = vcombine.high %v1487, %v1489
        %v1506 = vunpack.c.l.s4 1983009808
        %v1507 = vunpack.c.0.s8 %v1506
        %v1508 = vlaneseq
        %v1509 = vshrl.u32 %v1508, 7
        %v1510 = vsub.s32 %v1507, %v1509
        %v1511 = vrot.slane %v1503, %v1510
        %v1513 = vunpack.c.l.s4 1983009808
        %v1514 = vunpack.c.0.s8 %v1513
        %v1515 = vlaneseq
        %v1516 = vshrl.u32 %v1515, 7
        %v1517 = vsub.s32 %v1514, %v1516
        %v1518 = vrot.slane %v1504, %v1517
        %v1519 = vcombine.low %v1488, %v1490
        %v1520 = vcombine.high %v1488, %v1490
        %v1522 = vunpack.c.l.s4 1983009808
        %v1523 = vunpack.c.0.s8 %v1522
        %v1524 = vlaneseq
        %v1525 = vshrl.u32 %v1524, 7
        %v1526 = vsub.s32 %v1523, %v1525
        %v1527 = vrot.slane %v1519, %v1526
        %v1529 = vunpack.c.l.s4 1983009808
        %v1530 = vunpack.c.0.s8 %v1529
        %v1531 = vlaneseq
        %v1532 = vshrl.u32 %v1531, 7
        %v1533 = vsub.s32 %v1530, %v1532
        %v1534 = vrot.slane %v1520, %v1533
        %v1535 = vcombine.low %v1491, %v1493
        %v1536 = vcombine.high %v1491, %v1493
        %v1538 = vunpack.c.l.s4 1983009808
        %v1539 = vunpack.c.0.s8 %v1538
        %v1540 = vlaneseq
        %v1541 = vshrl.u32 %v1540, 7
        %v1542 = vsub.s32 %v1539, %v1541
        %v1543 = vrot.slane %v1535, %v1542
        %v1545 = vunpack.c.l.s4 1983009808
        %v1546 = vunpack.c.0.s8 %v1545
        %v1547 = vlaneseq
        %v1548 = vshrl.u32 %v1547, 7
        %v1549 = vsub.s32 %v1546, %v1548
        %v1550 = vrot.slane %v1536, %v1549
        %v1551 = vcombine.low %v1492, %v1494
        %v1552 = vcombine.high %v1492, %v1494
        %v1554 = vunpack.c.l.s4 1983009808
        %v1555 = vunpack.c.0.s8 %v1554
        %v1556 = vlaneseq
        %v1557 = vshrl.u32 %v1556, 7
        %v1558 = vsub.s32 %v1555, %v1557
        %v1559 = vrot.slane %v1551, %v1558
        %v1561 = vunpack.c.l.s4 1983009808
        %v1562 = vunpack.c.0.s8 %v1561
        %v1563 = vlaneseq
        %v1564 = vshrl.u32 %v1563, 7
        %v1565 = vsub.s32 %v1562, %v1564
        %v1566 = vrot.slane %v1552, %v1565
        %v1567 = vcombine.low %v1511, %v1527
        %v1568 = vcombine.high %v1511, %v1527
        %v1570 = vunpack.c.l.s4 1934713408
        %v1571 = vunpack.c.0.s8 %v1570
        %v1572 = vlaneseq
        %v1573 = vshrl.u32 %v1572, 7
        %v1574 = vsub.s32 %v1571, %v1573
        %v1575 = vrot.slane %v1567, %v1574
        %v1577 = vunpack.c.l.s4 1934713408
        %v1578 = vunpack.c.0.s8 %v1577
        %v1579 = vlaneseq
        %v1580 = vshrl.u32 %v1579, 7
        %v1581 = vsub.s32 %v1578, %v1580
        %v1582 = vrot.slane %v1568, %v1581
        %v1583 = vcombine.low %v1518, %v1534
        %v1584 = vcombine.high %v1518, %v1534
        %v1586 = vunpack.c.l.s4 1934713408
        %v1587 = vunpack.c.0.s8 %v1586
        %v1588 = vlaneseq
        %v1589 = vshrl.u32 %v1588, 7
        %v1590 = vsub.s32 %v1587, %v1589
        %v1591 = vrot.slane %v1583, %v1590
        %v1593 = vunpack.c.l.s4 1934713408
        %v1594 = vunpack.c.0.s8 %v1593
        %v1595 = vlaneseq
        %v1596 = vshrl.u32 %v1595, 7
        %v1597 = vsub.s32 %v1594, %v1596
        %v1598 = vrot.slane %v1584, %v1597
        %v1599 = vcombine.low %v1543, %v1559
        %v1600 = vcombine.high %v1543, %v1559
        %v1602 = vunpack.c.l.s4 1934713408
        %v1603 = vunpack.c.0.s8 %v1602
        %v1604 = vlaneseq
        %v1605 = vshrl.u32 %v1604, 7
        %v1606 = vsub.s32 %v1603, %v1605
        %v1607 = vrot.slane %v1599, %v1606
        %v1609 = vunpack.c.l.s4 1934713408
        %v1610 = vunpack.c.0.s8 %v1609
        %v1611 = vlaneseq
        %v1612 = vshrl.u32 %v1611, 7
        %v1613 = vsub.s32 %v1610, %v1612
        %v1614 = vrot.slane %v1600, %v1613
        %v1615 = vcombine.low %v1550, %v1566
        %v1616 = vcombine.high %v1550, %v1566
        %v1618 = vunpack.c.l.s4 1934713408
        %v1619 = vunpack.c.0.s8 %v1618
        %v1620 = vlaneseq
        %v1621 = vshrl.u32 %v1620, 7
        %v1622 = vsub.s32 %v1619, %v1621
        %v1623 = vrot.slane %v1615, %v1622
        %v1625 = vunpack.c.l.s4 1934713408
        %v1626 = vunpack.c.0.s8 %v1625
        %v1627 = vlaneseq
        %v1628 = vshrl.u32 %v1627, 7
        %v1629 = vsub.s32 %v1626, %v1628
        %v1630 = vrot.slane %v1616, %v1629
        %v1631 = vcombine.low %v1575, %v1607
        %v1632 = vcombine.high %v1575, %v1607
        %v1633 = vcombine.low %v1582, %v1614
        %v1634 = vcombine.high %v1582, %v1614
        %v1635 = vcombine.low %v1591, %v1623
        %v1636 = vcombine.high %v1591, %v1623
        %v1637 = vcombine.low %v1598, %v1630
        %v1638 = vcombine.high %v1598, %v1630
        %v1639 = vcombine.low %v1495, %v1497
        %v1640 = vcombine.high %v1495, %v1497
        %v1642 = vunpack.c.l.s4 1983009808
        %v1643 = vunpack.c.0.s8 %v1642
        %v1644 = vlaneseq
        %v1645 = vshrl.u32 %v1644, 7
        %v1646 = vsub.s32 %v1643, %v1645
        %v1647 = vrot.slane %v1639, %v1646
        %v1649 = vunpack.c.l.s4 1983009808
        %v1650 = vunpack.c.0.s8 %v1649
        %v1651 = vlaneseq
        %v1652 = vshrl.u32 %v1651, 7
        %v1653 = vsub.s32 %v1650, %v1652
        %v1654 = vrot.slane %v1640, %v1653
        %v1655 = vcombine.low %v1496, %v1498
        %v1656 = vcombine.high %v1496, %v1498
        %v1658 = vunpack.c.l.s4 1983009808
        %v1659 = vunpack.c.0.s8 %v1658
        %v1660 = vlaneseq
        %v1661 = vshrl.u32 %v1660, 7
        %v1662 = vsub.s32 %v1659, %v1661
        %v1663 = vrot.slane %v1655, %v1662
        %v1665 = vunpack.c.l.s4 1983009808
        %v1666 = vunpack.c.0.s8 %v1665
        %v1667 = vlaneseq
        %v1668 = vshrl.u32 %v1667, 7
        %v1669 = vsub.s32 %v1666, %v1668
        %v1670 = vrot.slane %v1656, %v1669
        %v1671 = vcombine.low %v1499, %v1501
        %v1672 = vcombine.high %v1499, %v1501
        %v1674 = vunpack.c.l.s4 1983009808
        %v1675 = vunpack.c.0.s8 %v1674
        %v1676 = vlaneseq
        %v1677 = vshrl.u32 %v1676, 7
        %v1678 = vsub.s32 %v1675, %v1677
        %v1679 = vrot.slane %v1671, %v1678
        %v1681 = vunpack.c.l.s4 1983009808
        %v1682 = vunpack.c.0.s8 %v1681
        %v1683 = vlaneseq
        %v1684 = vshrl.u32 %v1683, 7
        %v1685 = vsub.s32 %v1682, %v1684
        %v1686 = vrot.slane %v1672, %v1685
        %v1687 = vcombine.low %v1500, %v1502
        %v1688 = vcombine.high %v1500, %v1502
        %v1690 = vunpack.c.l.s4 1983009808
        %v1691 = vunpack.c.0.s8 %v1690
        %v1692 = vlaneseq
        %v1693 = vshrl.u32 %v1692, 7
        %v1694 = vsub.s32 %v1691, %v1693
        %v1695 = vrot.slane %v1687, %v1694
        %v1697 = vunpack.c.l.s4 1983009808
        %v1698 = vunpack.c.0.s8 %v1697
        %v1699 = vlaneseq
        %v1700 = vshrl.u32 %v1699, 7
        %v1701 = vsub.s32 %v1698, %v1700
        %v1702 = vrot.slane %v1688, %v1701
        %v1703 = vcombine.low %v1647, %v1663
        %v1704 = vcombine.high %v1647, %v1663
        %v1706 = vunpack.c.l.s4 1934713408
        %v1707 = vunpack.c.0.s8 %v1706
        %v1708 = vlaneseq
        %v1709 = vshrl.u32 %v1708, 7
        %v1710 = vsub.s32 %v1707, %v1709
        %v1711 = vrot.slane %v1703, %v1710
        %v1713 = vunpack.c.l.s4 1934713408
        %v1714 = vunpack.c.0.s8 %v1713
        %v1715 = vlaneseq
        %v1716 = vshrl.u32 %v1715, 7
        %v1717 = vsub.s32 %v1714, %v1716
        %v1718 = vrot.slane %v1704, %v1717
        %v1719 = vcombine.low %v1654, %v1670
        %v1720 = vcombine.high %v1654, %v1670
        %v1722 = vunpack.c.l.s4 1934713408
        %v1723 = vunpack.c.0.s8 %v1722
        %v1724 = vlaneseq
        %v1725 = vshrl.u32 %v1724, 7
        %v1726 = vsub.s32 %v1723, %v1725
        %v1727 = vrot.slane %v1719, %v1726
        %v1729 = vunpack.c.l.s4 1934713408
        %v1730 = vunpack.c.0.s8 %v1729
        %v1731 = vlaneseq
        %v1732 = vshrl.u32 %v1731, 7
        %v1733 = vsub.s32 %v1730, %v1732
        %v1734 = vrot.slane %v1720, %v1733
        %v1735 = vcombine.low %v1679, %v1695
        %v1736 = vcombine.high %v1679, %v1695
        %v1738 = vunpack.c.l.s4 1934713408
        %v1739 = vunpack.c.0.s8 %v1738
        %v1740 = vlaneseq
        %v1741 = vshrl.u32 %v1740, 7
        %v1742 = vsub.s32 %v1739, %v1741
        %v1743 = vrot.slane %v1735, %v1742
        %v1745 = vunpack.c.l.s4 1934713408
        %v1746 = vunpack.c.0.s8 %v1745
        %v1747 = vlaneseq
        %v1748 = vshrl.u32 %v1747, 7
        %v1749 = vsub.s32 %v1746, %v1748
        %v1750 = vrot.slane %v1736, %v1749
        %v1751 = vcombine.low %v1686, %v1702
        %v1752 = vcombine.high %v1686, %v1702
        %v1754 = vunpack.c.l.s4 1934713408
        %v1755 = vunpack.c.0.s8 %v1754
        %v1756 = vlaneseq
        %v1757 = vshrl.u32 %v1756, 7
        %v1758 = vsub.s32 %v1755, %v1757
        %v1759 = vrot.slane %v1751, %v1758
        %v1761 = vunpack.c.l.s4 1934713408
        %v1762 = vunpack.c.0.s8 %v1761
        %v1763 = vlaneseq
        %v1764 = vshrl.u32 %v1763, 7
        %v1765 = vsub.s32 %v1762, %v1764
        %v1766 = vrot.slane %v1752, %v1765
        %v1767 = vcombine.low %v1711, %v1743
        %v1768 = vcombine.high %v1711, %v1743
        %v1769 = vcombine.low %v1718, %v1750
        %v1770 = vcombine.high %v1718, %v1750
        %v1771 = vcombine.low %v1727, %v1759
        %v1772 = vcombine.high %v1727, %v1759
        %v1773 = vcombine.low %v1734, %v1766
        %v1774 = vcombine.high %v1734, %v1766
        %v1775 = vld [vmem:[#allocation5] sm:$0xff]
        %v1776 = vld [vmem:[#allocation5 + $0x8] sm:$0xff]
        %v1777 = vld [vmem:[#allocation5 + $0x10] sm:$0xff]
        %v1778 = vld [vmem:[#allocation5 + $0x18] sm:$0xff]
        %v1779 = vld [vmem:[#allocation5 + $0x20] sm:$0xff]
        %v1780 = vld [vmem:[#allocation5 + $0x28] sm:$0xff]
        %v1781 = vld [vmem:[#allocation5 + $0x30] sm:$0xff]
        %v1782 = vld [vmem:[#allocation5 + $0x38] sm:$0xff]
        %v1783 = vld [vmem:[#allocation5 + $0x40] sm:$0xff]
        %v1784 = vld [vmem:[#allocation5 + $0x48] sm:$0xff]
        %v1785 = vld [vmem:[#allocation5 + $0x50] sm:$0xff]
        %v1786 = vld [vmem:[#allocation5 + $0x58] sm:$0xff]
        %v1787 = vld [vmem:[#allocation5 + $0x60] sm:$0xff]
        %v1788 = vld [vmem:[#allocation5 + $0x68] sm:$0xff]
        %v1789 = vld [vmem:[#allocation5 + $0x70] sm:$0xff]
        %v1790 = vld [vmem:[#allocation5 + $0x78] sm:$0xff]
        %v1791 = vld [vmem:[#allocation5 + $0x80] sm:$0xff]
        %v1792 = vld [vmem:[#allocation5 + $0x88] sm:$0xff]
        %v1793 = vld [vmem:[#allocation5 + $0x90] sm:$0xff]
        %v1794 = vld [vmem:[#allocation5 + $0x98] sm:$0xff]
        %v1795 = vld [vmem:[#allocation5 + $0xa0] sm:$0xff]
        %v1796 = vld [vmem:[#allocation5 + $0xa8] sm:$0xff]
        %v1797 = vld [vmem:[#allocation5 + $0xb0] sm:$0xff]
        %v1798 = vld [vmem:[#allocation5 + $0xb8] sm:$0xff]
        %v1799 = vld [vmem:[#allocation5 + $0xc0] sm:$0xff]
        %v1800 = vld [vmem:[#allocation5 + $0xc8] sm:$0xff]
        %v1801 = vld [vmem:[#allocation5 + $0xd0] sm:$0xff]
        %v1802 = vld [vmem:[#allocation5 + $0xd8] sm:$0xff]
        %v1803 = vld [vmem:[#allocation5 + $0xe0] sm:$0xff]
        %v1804 = vld [vmem:[#allocation5 + $0xe8] sm:$0xff]
        %v1805 = vld [vmem:[#allocation5 + $0xf0] sm:$0xff]
        %v1806 = vld [vmem:[#allocation5 + $0xf8] sm:$0xff]
        %s1807 = scalar_lea.vmem [#allocation5], %s1163
        %v1808 = vld [vmem:[%s1807] sm:$0xff]
        %v1809 = vld [vmem:[%s1807 + $0x10] sm:$0xff]
        %v1810 = vld [vmem:[%s1807 + $0x20] sm:$0xff]
        %v1811 = vld [vmem:[%s1807 + $0x30] sm:$0xff]
        %v1812 = vld [vmem:[%s1807 + $0x40] sm:$0xff]
        %v1813 = vld [vmem:[%s1807 + $0x50] sm:$0xff]
        %v1814 = vld [vmem:[%s1807 + $0x60] sm:$0xff]
        %v1815 = vld [vmem:[%s1807 + $0x70] sm:$0xff]
        %v1816 = vld [vmem:[%s1807 + $0x80] sm:$0xff]
        %v1817 = vld [vmem:[%s1807 + $0x90] sm:$0xff]
        %v1818 = vld [vmem:[%s1807 + $0xa0] sm:$0xff]
        %v1819 = vld [vmem:[%s1807 + $0xb0] sm:$0xff]
        %v1820 = vld [vmem:[%s1807 + $0xc0] sm:$0xff]
        %v1821 = vld [vmem:[%s1807 + $0xd0] sm:$0xff]
        %v1822 = vld [vmem:[%s1807 + $0xe0] sm:$0xff]
        %v1823 = vld [vmem:[%s1807 + $0xf0] sm:$0xff]
        %v1824 = vcombine.low %v1808, %v1810
        %v1825 = vcombine.high %v1808, %v1810
        %v1827 = vunpack.c.l.s4 1983009808
        %v1828 = vunpack.c.0.s8 %v1827
        %v1829 = vlaneseq
        %v1830 = vshrl.u32 %v1829, 7
        %v1831 = vsub.s32 %v1828, %v1830
        %v1832 = vrot.slane %v1824, %v1831
        %v1834 = vunpack.c.l.s4 1983009808
        %v1835 = vunpack.c.0.s8 %v1834
        %v1836 = vlaneseq
        %v1837 = vshrl.u32 %v1836, 7
        %v1838 = vsub.s32 %v1835, %v1837
        %v1839 = vrot.slane %v1825, %v1838
        %v1840 = vcombine.low %v1809, %v1811
        %v1841 = vcombine.high %v1809, %v1811
        %v1843 = vunpack.c.l.s4 1983009808
        %v1844 = vunpack.c.0.s8 %v1843
        %v1845 = vlaneseq
        %v1846 = vshrl.u32 %v1845, 7
        %v1847 = vsub.s32 %v1844, %v1846
        %v1848 = vrot.slane %v1840, %v1847
        %v1850 = vunpack.c.l.s4 1983009808
        %v1851 = vunpack.c.0.s8 %v1850
        %v1852 = vlaneseq
        %v1853 = vshrl.u32 %v1852, 7
        %v1854 = vsub.s32 %v1851, %v1853
        %v1855 = vrot.slane %v1841, %v1854
        %v1856 = vcombine.low %v1812, %v1814
        %v1857 = vcombine.high %v1812, %v1814
        %v1859 = vunpack.c.l.s4 1983009808
        %v1860 = vunpack.c.0.s8 %v1859
        %v1861 = vlaneseq
        %v1862 = vshrl.u32 %v1861, 7
        %v1863 = vsub.s32 %v1860, %v1862
        %v1864 = vrot.slane %v1856, %v1863
        %v1866 = vunpack.c.l.s4 1983009808
        %v1867 = vunpack.c.0.s8 %v1866
        %v1868 = vlaneseq
        %v1869 = vshrl.u32 %v1868, 7
        %v1870 = vsub.s32 %v1867, %v1869
        %v1871 = vrot.slane %v1857, %v1870
        %v1872 = vcombine.low %v1813, %v1815
        %v1873 = vcombine.high %v1813, %v1815
        %v1875 = vunpack.c.l.s4 1983009808
        %v1876 = vunpack.c.0.s8 %v1875
        %v1877 = vlaneseq
        %v1878 = vshrl.u32 %v1877, 7
        %v1879 = vsub.s32 %v1876, %v1878
        %v1880 = vrot.slane %v1872, %v1879
        %v1882 = vunpack.c.l.s4 1983009808
        %v1883 = vunpack.c.0.s8 %v1882
        %v1884 = vlaneseq
        %v1885 = vshrl.u32 %v1884, 7
        %v1886 = vsub.s32 %v1883, %v1885
        %v1887 = vrot.slane %v1873, %v1886
        %v1888 = vcombine.low %v1832, %v1848
        %v1889 = vcombine.high %v1832, %v1848
        %v1891 = vunpack.c.l.s4 1934713408
        %v1892 = vunpack.c.0.s8 %v1891
        %v1893 = vlaneseq
        %v1894 = vshrl.u32 %v1893, 7
        %v1895 = vsub.s32 %v1892, %v1894
        %v1896 = vrot.slane %v1888, %v1895
        %v1898 = vunpack.c.l.s4 1934713408
        %v1899 = vunpack.c.0.s8 %v1898
        %v1900 = vlaneseq
        %v1901 = vshrl.u32 %v1900, 7
        %v1902 = vsub.s32 %v1899, %v1901
        %v1903 = vrot.slane %v1889, %v1902
        %v1904 = vcombine.low %v1839, %v1855
        %v1905 = vcombine.high %v1839, %v1855
        %v1907 = vunpack.c.l.s4 1934713408
        %v1908 = vunpack.c.0.s8 %v1907
        %v1909 = vlaneseq
        %v1910 = vshrl.u32 %v1909, 7
        %v1911 = vsub.s32 %v1908, %v1910
        %v1912 = vrot.slane %v1904, %v1911
        %v1914 = vunpack.c.l.s4 1934713408
        %v1915 = vunpack.c.0.s8 %v1914
        %v1916 = vlaneseq
        %v1917 = vshrl.u32 %v1916, 7
        %v1918 = vsub.s32 %v1915, %v1917
        %v1919 = vrot.slane %v1905, %v1918
        %v1920 = vcombine.low %v1864, %v1880
        %v1921 = vcombine.high %v1864, %v1880
        %v1923 = vunpack.c.l.s4 1934713408
        %v1924 = vunpack.c.0.s8 %v1923
        %v1925 = vlaneseq
        %v1926 = vshrl.u32 %v1925, 7
        %v1927 = vsub.s32 %v1924, %v1926
        %v1928 = vrot.slane %v1920, %v1927
        %v1930 = vunpack.c.l.s4 1934713408
        %v1931 = vunpack.c.0.s8 %v1930
        %v1932 = vlaneseq
        %v1933 = vshrl.u32 %v1932, 7
        %v1934 = vsub.s32 %v1931, %v1933
        %v1935 = vrot.slane %v1921, %v1934
        %v1936 = vcombine.low %v1871, %v1887
        %v1937 = vcombine.high %v1871, %v1887
        %v1939 = vunpack.c.l.s4 1934713408
        %v1940 = vunpack.c.0.s8 %v1939
        %v1941 = vlaneseq
        %v1942 = vshrl.u32 %v1941, 7
        %v1943 = vsub.s32 %v1940, %v1942
        %v1944 = vrot.slane %v1936, %v1943
        %v1946 = vunpack.c.l.s4 1934713408
        %v1947 = vunpack.c.0.s8 %v1946
        %v1948 = vlaneseq
        %v1949 = vshrl.u32 %v1948, 7
        %v1950 = vsub.s32 %v1947, %v1949
        %v1951 = vrot.slane %v1937, %v1950
        %v1952 = vcombine.low %v1896, %v1928
        %v1953 = vcombine.high %v1896, %v1928
        %v1954 = vcombine.low %v1903, %v1935
        %v1955 = vcombine.high %v1903, %v1935
        %v1956 = vcombine.low %v1912, %v1944
        %v1957 = vcombine.high %v1912, %v1944
        %v1958 = vcombine.low %v1919, %v1951
        %v1959 = vcombine.high %v1919, %v1951
        %v1960 = vcombine.low %v1816, %v1818
        %v1961 = vcombine.high %v1816, %v1818
        %v1963 = vunpack.c.l.s4 1983009808
        %v1964 = vunpack.c.0.s8 %v1963
        %v1965 = vlaneseq
        %v1966 = vshrl.u32 %v1965, 7
        %v1967 = vsub.s32 %v1964, %v1966
        %v1968 = vrot.slane %v1960, %v1967
        %v1970 = vunpack.c.l.s4 1983009808
        %v1971 = vunpack.c.0.s8 %v1970
        %v1972 = vlaneseq
        %v1973 = vshrl.u32 %v1972, 7
        %v1974 = vsub.s32 %v1971, %v1973
        %v1975 = vrot.slane %v1961, %v1974
        %v1976 = vcombine.low %v1817, %v1819
        %v1977 = vcombine.high %v1817, %v1819
        %v1979 = vunpack.c.l.s4 1983009808
        %v1980 = vunpack.c.0.s8 %v1979
        %v1981 = vlaneseq
        %v1982 = vshrl.u32 %v1981, 7
        %v1983 = vsub.s32 %v1980, %v1982
        %v1984 = vrot.slane %v1976, %v1983
        %v1986 = vunpack.c.l.s4 1983009808
        %v1987 = vunpack.c.0.s8 %v1986
        %v1988 = vlaneseq
        %v1989 = vshrl.u32 %v1988, 7
        %v1990 = vsub.s32 %v1987, %v1989
        %v1991 = vrot.slane %v1977, %v1990
        %v1992 = vcombine.low %v1820, %v1822
        %v1993 = vcombine.high %v1820, %v1822
        %v1995 = vunpack.c.l.s4 1983009808
        %v1996 = vunpack.c.0.s8 %v1995
        %v1997 = vlaneseq
        %v1998 = vshrl.u32 %v1997, 7
        %v1999 = vsub.s32 %v1996, %v1998
        %v2000 = vrot.slane %v1992, %v1999
        %v2002 = vunpack.c.l.s4 1983009808
        %v2003 = vunpack.c.0.s8 %v2002
        %v2004 = vlaneseq
        %v2005 = vshrl.u32 %v2004, 7
        %v2006 = vsub.s32 %v2003, %v2005
        %v2007 = vrot.slane %v1993, %v2006
        %v2008 = vcombine.low %v1821, %v1823
        %v2009 = vcombine.high %v1821, %v1823
        %v2011 = vunpack.c.l.s4 1983009808
        %v2012 = vunpack.c.0.s8 %v2011
        %v2013 = vlaneseq
        %v2014 = vshrl.u32 %v2013, 7
        %v2015 = vsub.s32 %v2012, %v2014
        %v2016 = vrot.slane %v2008, %v2015
        %v2018 = vunpack.c.l.s4 1983009808
        %v2019 = vunpack.c.0.s8 %v2018
        %v2020 = vlaneseq
        %v2021 = vshrl.u32 %v2020, 7
        %v2022 = vsub.s32 %v2019, %v2021
        %v2023 = vrot.slane %v2009, %v2022
        %v2024 = vcombine.low %v1968, %v1984
        %v2025 = vcombine.high %v1968, %v1984
        %v2027 = vunpack.c.l.s4 1934713408
        %v2028 = vunpack.c.0.s8 %v2027
        %v2029 = vlaneseq
        %v2030 = vshrl.u32 %v2029, 7
        %v2031 = vsub.s32 %v2028, %v2030
        %v2032 = vrot.slane %v2024, %v2031
        %v2034 = vunpack.c.l.s4 1934713408
        %v2035 = vunpack.c.0.s8 %v2034
        %v2036 = vlaneseq
        %v2037 = vshrl.u32 %v2036, 7
        %v2038 = vsub.s32 %v2035, %v2037
        %v2039 = vrot.slane %v2025, %v2038
        %v2040 = vcombine.low %v1975, %v1991
        %v2041 = vcombine.high %v1975, %v1991
        %v2043 = vunpack.c.l.s4 1934713408
        %v2044 = vunpack.c.0.s8 %v2043
        %v2045 = vlaneseq
        %v2046 = vshrl.u32 %v2045, 7
        %v2047 = vsub.s32 %v2044, %v2046
        %v2048 = vrot.slane %v2040, %v2047
        %v2050 = vunpack.c.l.s4 1934713408
        %v2051 = vunpack.c.0.s8 %v2050
        %v2052 = vlaneseq
        %v2053 = vshrl.u32 %v2052, 7
        %v2054 = vsub.s32 %v2051, %v2053
        %v2055 = vrot.slane %v2041, %v2054
        %v2056 = vcombine.low %v2000, %v2016
        %v2057 = vcombine.high %v2000, %v2016
        %v2059 = vunpack.c.l.s4 1934713408
        %v2060 = vunpack.c.0.s8 %v2059
        %v2061 = vlaneseq
        %v2062 = vshrl.u32 %v2061, 7
        %v2063 = vsub.s32 %v2060, %v2062
        %v2064 = vrot.slane %v2056, %v2063
        %v2066 = vunpack.c.l.s4 1934713408
        %v2067 = vunpack.c.0.s8 %v2066
        %v2068 = vlaneseq
        %v2069 = vshrl.u32 %v2068, 7
        %v2070 = vsub.s32 %v2067, %v2069
        %v2071 = vrot.slane %v2057, %v2070
        %v2072 = vcombine.low %v2007, %v2023
        %v2073 = vcombine.high %v2007, %v2023
        %v2075 = vunpack.c.l.s4 1934713408
        %v2076 = vunpack.c.0.s8 %v2075
        %v2077 = vlaneseq
        %v2078 = vshrl.u32 %v2077, 7
        %v2079 = vsub.s32 %v2076, %v2078
        %v2080 = vrot.slane %v2072, %v2079
        %v2082 = vunpack.c.l.s4 1934713408
        %v2083 = vunpack.c.0.s8 %v2082
        %v2084 = vlaneseq
        %v2085 = vshrl.u32 %v2084, 7
        %v2086 = vsub.s32 %v2083, %v2085
        %v2087 = vrot.slane %v2073, %v2086
        %v2088 = vcombine.low %v2032, %v2064
        %v2089 = vcombine.high %v2032, %v2064
        %v2090 = vcombine.low %v2039, %v2071
        %v2091 = vcombine.high %v2039, %v2071
        %v2092 = vcombine.low %v2048, %v2080
        %v2093 = vcombine.high %v2048, %v2080
        %v2094 = vcombine.low %v2055, %v2087
        %v2095 = vcombine.high %v2055, %v2087
        %vm2096 = vcmask 31744
        %v2098 = vsel %vm2096, %v1310, 0
        %v2101 = vsel %vm2096, %v1454, 0
        %v2104 = vsel %vm2096, %v1455, 0
        %2106 = vmatprep.subr.mxu0 0.0
        %2107 = vmatpush1.xpose.msra.mxu0 %v2101
        %2108 = vmatprep.subr.mxu0 0.0
        %2109 = vmatpush1.xpose.msra.mxu0 %v2104
        %2110 = vmatprep.subr.mxu0 0.0
        %2111 = vmatpush1.xpose.msra.mxu0 0.0
        %2112 = vmatprep.subr.mxu0 0.0
        %2113 = vmatpush1.xpose.msra.mxu0 0.0
        %2114 = vmatprep.subr.mxu0 0.0
        %2115 = vmatpush1.xpose.msra.mxu0 0.0
        %2116 = vmatprep.subr.mxu0 0.0
        %2117 = vmatpush1.xpose.msra.mxu0 0.0
        %2118 = vmatprep.subr.mxu0 0.0
        %2119 = vmatpush1.xpose.msra.mxu0 0.0
        %2120 = vmatprep.subr.mxu0 0.0
        %2121 = vmatpush1.xpose.msra.mxu0 0.0
        %2122 = vmatprep.subr.mxu0 0.0
        %2123 = vmatpush1.xpose.msra.mxu0 0.0
        %2124 = vmatprep.subr.mxu0 0.0
        %2125 = vmatpush1.xpose.msra.mxu0 0.0
        %2126 = vmatprep.subr.mxu0 0.0
        %2127 = vmatpush1.xpose.msra.mxu0 0.0
        %2128 = vmatprep.subr.mxu0 0.0
        %2129 = vmatpush1.xpose.msra.mxu0 0.0
        %2130 = vmatprep.subr.mxu0 0.0
        %2131 = vmatpush1.xpose.msra.mxu0 0.0
        %2132 = vmatprep.subr.mxu0 0.0
        %2133 = vmatpush1.xpose.msra.mxu0 0.0
        %2134 = vmatprep.subr.mxu0 0.0
        %2135 = vmatpush1.xpose.msra.mxu0 0.0
        %2136 = vmatprep.subr.mxu0 0.0
        %2137 = vmatpush1.xpose.msra.mxu0 0.0
        %2138 = vmatprep.subr.mxu0 0.0
        %2139 = vmatpush1.xpose.msra.mxu0 0.0
        %2140 = vmatprep.subr.mxu0 0.0
        %2141 = vmatpush1.xpose.msra.mxu0 0.0
        %2142 = vmatprep.subr.mxu0 0.0
        %2143 = vmatpush1.xpose.msra.mxu0 0.0
        %2144 = vmatprep.subr.mxu0 0.0
        %2145 = vmatpush1.xpose.msra.mxu0 0.0
        %2146 = vmatprep.subr.mxu0 0.0
        %2147 = vmatpush1.xpose.msra.mxu0 0.0
        %2148 = vmatprep.subr.mxu0 0.0
        %2149 = vmatpush1.xpose.msra.mxu0 0.0
        %2150 = vmatprep.subr.mxu0 0.0
        %2151 = vmatpush1.xpose.msra.mxu0 0.0
        %2152 = vmatprep.subr.mxu0 0.0
        %2153 = vmatpush1.xpose.msra.mxu0 0.0
        %2154 = vmatprep.subr.mxu0 0.0
        %2155 = vmatpush1.xpose.msra.mxu0 0.0
        %2156 = vmatprep.subr.mxu0 0.0
        %2157 = vmatpush1.xpose.msra.mxu0 0.0
        %2158 = vmatprep.subr.mxu0 0.0
        %2159 = vmatpush1.xpose.msra.mxu0 0.0
        %2160 = vmatprep.subr.mxu0 0.0
        %2161 = vmatpush1.xpose.msra.mxu0 0.0
        %2162 = vmatprep.subr.mxu0 0.0
        %2163 = vmatpush1.xpose.msra.mxu0 0.0
        %2164 = vmatprep.subr.mxu0 0.0
        %2165 = vmatpush1.xpose.msra.mxu0 0.0
        %2166 = vmatprep.subr.mxu0 0.0
        %2167 = vmatpush1.xpose.msra.mxu0 0.0
        %2168 = vmatprep.subr.mxu0 0.0
        %2169 = vmatpush1.xpose.msra.mxu0 0.0
        %2170 = vmatprep.mubr.f32.mxu0 0.0
        %2171 = vmatmul.mubr.f32.gmra.mrb[0].mxu0 %v2098
        %v2172 = vpop.f32.mrb[0].mxu0
        %v2173 = vadd.f32 0.0, %v2172
        %v2174 = vpop.f32.mrb[0].mxu0
        %2175 = vdwg.mxu0
        %v2177 = vsel %vm2096, %v1311, 0
        %v2180 = vsel %vm2096, %v1456, 0
        %v2183 = vsel %vm2096, %v1457, 0
        %2185 = vmatprep.subr.mxu0 0.0
        %2186 = vmatpush1.xpose.msra.mxu0 %v2180
        %2187 = vmatprep.subr.mxu0 0.0
        %2188 = vmatpush1.xpose.msra.mxu0 %v2183
        %2189 = vmatprep.subr.mxu0 0.0
        %2190 = vmatpush1.xpose.msra.mxu0 0.0
        %2191 = vmatprep.subr.mxu0 0.0
        %2192 = vmatpush1.xpose.msra.mxu0 0.0
        %2193 = vmatprep.subr.mxu0 0.0
        %2194 = vmatpush1.xpose.msra.mxu0 0.0
        %2195 = vmatprep.subr.mxu0 0.0
        %2196 = vmatpush1.xpose.msra.mxu0 0.0
        %2197 = vmatprep.subr.mxu0 0.0
        %2198 = vmatpush1.xpose.msra.mxu0 0.0
        %2199 = vmatprep.subr.mxu0 0.0
        %2200 = vmatpush1.xpose.msra.mxu0 0.0
        %2201 = vmatprep.subr.mxu0 0.0
        %2202 = vmatpush1.xpose.msra.mxu0 0.0
        %2203 = vmatprep.subr.mxu0 0.0
        %2204 = vmatpush1.xpose.msra.mxu0 0.0
        %2205 = vmatprep.subr.mxu0 0.0
        %2206 = vmatpush1.xpose.msra.mxu0 0.0
        %2207 = vmatprep.subr.mxu0 0.0
        %2208 = vmatpush1.xpose.msra.mxu0 0.0
        %2209 = vmatprep.subr.mxu0 0.0
        %2210 = vmatpush1.xpose.msra.mxu0 0.0
        %2211 = vmatprep.subr.mxu0 0.0
        %2212 = vmatpush1.xpose.msra.mxu0 0.0
        %2213 = vmatprep.subr.mxu0 0.0
        %2214 = vmatpush1.xpose.msra.mxu0 0.0
        %2215 = vmatprep.subr.mxu0 0.0
        %2216 = vmatpush1.xpose.msra.mxu0 0.0
        %2217 = vmatprep.subr.mxu0 0.0
        %2218 = vmatpush1.xpose.msra.mxu0 0.0
        %2219 = vmatprep.subr.mxu0 0.0
        %2220 = vmatpush1.xpose.msra.mxu0 0.0
        %2221 = vmatprep.subr.mxu0 0.0
        %2222 = vmatpush1.xpose.msra.mxu0 0.0
        %2223 = vmatprep.subr.mxu0 0.0
        %2224 = vmatpush1.xpose.msra.mxu0 0.0
        %2225 = vmatprep.subr.mxu0 0.0
        %2226 = vmatpush1.xpose.msra.mxu0 0.0
        %2227 = vmatprep.subr.mxu0 0.0
        %2228 = vmatpush1.xpose.msra.mxu0 0.0
        %2229 = vmatprep.subr.mxu0 0.0
        %2230 = vmatpush1.xpose.msra.mxu0 0.0
        %2231 = vmatprep.subr.mxu0 0.0
        %2232 = vmatpush1.xpose.msra.mxu0 0.0
        %2233 = vmatprep.subr.mxu0 0.0
        %2234 = vmatpush1.xpose.msra.mxu0 0.0
        %2235 = vmatprep.subr.mxu0 0.0
        %2236 = vmatpush1.xpose.msra.mxu0 0.0
        %2237 = vmatprep.subr.mxu0 0.0
        %2238 = vmatpush1.xpose.msra.mxu0 0.0
        %2239 = vmatprep.subr.mxu0 0.0
        %2240 = vmatpush1.xpose.msra.mxu0 0.0
        %2241 = vmatprep.subr.mxu0 0.0
        %2242 = vmatpush1.xpose.msra.mxu0 0.0
        %2243 = vmatprep.subr.mxu0 0.0
        %2244 = vmatpush1.xpose.msra.mxu0 0.0
        %2245 = vmatprep.subr.mxu0 0.0
        %2246 = vmatpush1.xpose.msra.mxu0 0.0
        %2247 = vmatprep.subr.mxu0 0.0
        %2248 = vmatpush1.xpose.msra.mxu0 0.0
        %2249 = vmatprep.mubr.f32.mxu0 0.0
        %2250 = vmatmul.mubr.f32.gmra.mrb[0].mxu0 %v2177
        %v2251 = vpop.f32.mrb[0].mxu0
        %v2252 = vadd.f32 0.0, %v2251
        %v2253 = vpop.f32.mrb[0].mxu0
        %2254 = vdwg.mxu0
        %v2256 = vsel %vm2096, %v1312, 0
        %v2259 = vsel %vm2096, %v1458, 0
        %v2262 = vsel %vm2096, %v1459, 0
        %2264 = vmatprep.subr.mxu0 0.0
        %2265 = vmatpush1.xpose.msra.mxu0 %v2259
        %2266 = vmatprep.subr.mxu0 0.0
        %2267 = vmatpush1.xpose.msra.mxu0 %v2262
        %2268 = vmatprep.subr.mxu0 0.0
        %2269 = vmatpush1.xpose.msra.mxu0 0.0
        %2270 = vmatprep.subr.mxu0 0.0
        %2271 = vmatpush1.xpose.msra.mxu0 0.0
        %2272 = vmatprep.subr.mxu0 0.0
        %2273 = vmatpush1.xpose.msra.mxu0 0.0
        %2274 = vmatprep.subr.mxu0 0.0
        %2275 = vmatpush1.xpose.msra.mxu0 0.0
        %2276 = vmatprep.subr.mxu0 0.0
        %2277 = vmatpush1.xpose.msra.mxu0 0.0
        %2278 = vmatprep.subr.mxu0 0.0
        %2279 = vmatpush1.xpose.msra.mxu0 0.0
        %2280 = vmatprep.subr.mxu0 0.0
        %2281 = vmatpush1.xpose.msra.mxu0 0.0
        %2282 = vmatprep.subr.mxu0 0.0
        %2283 = vmatpush1.xpose.msra.mxu0 0.0
        %2284 = vmatprep.subr.mxu0 0.0
        %2285 = vmatpush1.xpose.msra.mxu0 0.0
        %2286 = vmatprep.subr.mxu0 0.0
        %2287 = vmatpush1.xpose.msra.mxu0 0.0
        %2288 = vmatprep.subr.mxu0 0.0
        %2289 = vmatpush1.xpose.msra.mxu0 0.0
        %2290 = vmatprep.subr.mxu0 0.0
        %2291 = vmatpush1.xpose.msra.mxu0 0.0
        %2292 = vmatprep.subr.mxu0 0.0
        %2293 = vmatpush1.xpose.msra.mxu0 0.0
        %2294 = vmatprep.subr.mxu0 0.0
        %2295 = vmatpush1.xpose.msra.mxu0 0.0
        %2296 = vmatprep.subr.mxu0 0.0
        %2297 = vmatpush1.xpose.msra.mxu0 0.0
        %2298 = vmatprep.subr.mxu0 0.0
        %2299 = vmatpush1.xpose.msra.mxu0 0.0
        %2300 = vmatprep.subr.mxu0 0.0
        %2301 = vmatpush1.xpose.msra.mxu0 0.0
        %2302 = vmatprep.subr.mxu0 0.0
        %2303 = vmatpush1.xpose.msra.mxu0 0.0
        %2304 = vmatprep.subr.mxu0 0.0
        %2305 = vmatpush1.xpose.msra.mxu0 0.0
        %2306 = vmatprep.subr.mxu0 0.0
        %2307 = vmatpush1.xpose.msra.mxu0 0.0
        %2308 = vmatprep.subr.mxu0 0.0
        %2309 = vmatpush1.xpose.msra.mxu0 0.0
        %2310 = vmatprep.subr.mxu0 0.0
        %2311 = vmatpush1.xpose.msra.mxu0 0.0
        %2312 = vmatprep.subr.mxu0 0.0
        %2313 = vmatpush1.xpose.msra.mxu0 0.0
        %2314 = vmatprep.subr.mxu0 0.0
        %2315 = vmatpush1.xpose.msra.mxu0 0.0
        %2316 = vmatprep.subr.mxu0 0.0
        %2317 = vmatpush1.xpose.msra.mxu0 0.0
        %2318 = vmatprep.subr.mxu0 0.0
        %2319 = vmatpush1.xpose.msra.mxu0 0.0
        %2320 = vmatprep.subr.mxu0 0.0
        %2321 = vmatpush1.xpose.msra.mxu0 0.0
        %2322 = vmatprep.subr.mxu0 0.0
        %2323 = vmatpush1.xpose.msra.mxu0 0.0
        %2324 = vmatprep.subr.mxu0 0.0
        %2325 = vmatpush1.xpose.msra.mxu0 0.0
        %2326 = vmatprep.subr.mxu0 0.0
        %2327 = vmatpush1.xpose.msra.mxu0 0.0
        %2328 = vmatprep.mubr.f32.mxu0 0.0
        %2329 = vmatmul.mubr.f32.gmra.mrb[0].mxu0 %v2256
        %v2330 = vpop.f32.mrb[0].mxu0
        %v2331 = vadd.f32 0.0, %v2330
        %v2332 = vpop.f32.mrb[0].mxu0
        %2333 = vdwg.mxu0
        %v2335 = vsel %vm2096, %v1313, 0
        %v2338 = vsel %vm2096, %v1460, 0
        %v2341 = vsel %vm2096, %v1461, 0
        %2343 = vmatprep.subr.mxu0 0.0
        %2344 = vmatpush1.xpose.msra.mxu0 %v2338
        %2345 = vmatprep.subr.mxu0 0.0
        %2346 = vmatpush1.xpose.msra.mxu0 %v2341
        %2347 = vmatprep.subr.mxu0 0.0
        %2348 = vmatpush1.xpose.msra.mxu0 0.0
        %2349 = vmatprep.subr.mxu0 0.0
        %2350 = vmatpush1.xpose.msra.mxu0 0.0
        %2351 = vmatprep.subr.mxu0 0.0
        %2352 = vmatpush1.xpose.msra.mxu0 0.0
        %2353 = vmatprep.subr.mxu0 0.0
        %2354 = vmatpush1.xpose.msra.mxu0 0.0
        %2355 = vmatprep.subr.mxu0 0.0
        %2356 = vmatpush1.xpose.msra.mxu0 0.0
        %2357 = vmatprep.subr.mxu0 0.0
        %2358 = vmatpush1.xpose.msra.mxu0 0.0
        %2359 = vmatprep.subr.mxu0 0.0
        %2360 = vmatpush1.xpose.msra.mxu0 0.0
        %2361 = vmatprep.subr.mxu0 0.0
        %2362 = vmatpush1.xpose.msra.mxu0 0.0
        %2363 = vmatprep.subr.mxu0 0.0
        %2364 = vmatpush1.xpose.msra.mxu0 0.0
        %2365 = vmatprep.subr.mxu0 0.0
        %2366 = vmatpush1.xpose.msra.mxu0 0.0
        %2367 = vmatprep.subr.mxu0 0.0
        %2368 = vmatpush1.xpose.msra.mxu0 0.0
        %2369 = vmatprep.subr.mxu0 0.0
        %2370 = vmatpush1.xpose.msra.mxu0 0.0
        %2371 = vmatprep.subr.mxu0 0.0
        %2372 = vmatpush1.xpose.msra.mxu0 0.0
        %2373 = vmatprep.subr.mxu0 0.0
        %2374 = vmatpush1.xpose.msra.mxu0 0.0
        %2375 = vmatprep.subr.mxu0 0.0
        %2376 = vmatpush1.xpose.msra.mxu0 0.0
        %2377 = vmatprep.subr.mxu0 0.0
        %2378 = vmatpush1.xpose.msra.mxu0 0.0
        %2379 = vmatprep.subr.mxu0 0.0
        %2380 = vmatpush1.xpose.msra.mxu0 0.0
        %2381 = vmatprep.subr.mxu0 0.0
        %2382 = vmatpush1.xpose.msra.mxu0 0.0
        %2383 = vmatprep.subr.mxu0 0.0
        %2384 = vmatpush1.xpose.msra.mxu0 0.0
        %2385 = vmatprep.subr.mxu0 0.0
        %2386 = vmatpush1.xpose.msra.mxu0 0.0
        %2387 = vmatprep.subr.mxu0 0.0
        %2388 = vmatpush1.xpose.msra.mxu0 0.0
        %2389 = vmatprep.subr.mxu0 0.0
        %2390 = vmatpush1.xpose.msra.mxu0 0.0
        %2391 = vmatprep.subr.mxu0 0.0
        %2392 = vmatpush1.xpose.msra.mxu0 0.0
        %2393 = vmatprep.subr.mxu0 0.0
        %2394 = vmatpush1.xpose.msra.mxu0 0.0
        %2395 = vmatprep.subr.mxu0 0.0
        %2396 = vmatpush1.xpose.msra.mxu0 0.0
        %2397 = vmatprep.subr.mxu0 0.0
        %2398 = vmatpush1.xpose.msra.mxu0 0.0
        %2399 = vmatprep.subr.mxu0 0.0
        %2400 = vmatpush1.xpose.msra.mxu0 0.0
        %2401 = vmatprep.subr.mxu0 0.0
        %2402 = vmatpush1.xpose.msra.mxu0 0.0
        %2403 = vmatprep.subr.mxu0 0.0
        %2404 = vmatpush1.xpose.msra.mxu0 0.0
        %2405 = vmatprep.subr.mxu0 0.0
        %2406 = vmatpush1.xpose.msra.mxu0 0.0
        %2407 = vmatprep.mubr.f32.mxu0 0.0
        %2408 = vmatmul.mubr.f32.gmra.mrb[0].mxu0 %v2335
        %v2409 = vpop.f32.mrb[0].mxu0
        %v2410 = vadd.f32 0.0, %v2409
        %v2411 = vpop.f32.mrb[0].mxu0
        %2412 = vdwg.mxu0
        %v2414 = vsel %vm2096, %v1314, 0
        %v2417 = vsel %vm2096, %v1462, 0
        %v2420 = vsel %vm2096, %v1463, 0
        %2422 = vmatprep.subr.mxu0 0.0
        %2423 = vmatpush1.xpose.msra.mxu0 %v2417
        %2424 = vmatprep.subr.mxu0 0.0
        %2425 = vmatpush1.xpose.msra.mxu0 %v2420
        %2426 = vmatprep.subr.mxu0 0.0
        %2427 = vmatpush1.xpose.msra.mxu0 0.0
        %2428 = vmatprep.subr.mxu0 0.0
        %2429 = vmatpush1.xpose.msra.mxu0 0.0
        %2430 = vmatprep.subr.mxu0 0.0
        %2431 = vmatpush1.xpose.msra.mxu0 0.0
        %2432 = vmatprep.subr.mxu0 0.0
        %2433 = vmatpush1.xpose.msra.mxu0 0.0
        %2434 = vmatprep.subr.mxu0 0.0
        %2435 = vmatpush1.xpose.msra.mxu0 0.0
        %2436 = vmatprep.subr.mxu0 0.0
        %2437 = vmatpush1.xpose.msra.mxu0 0.0
        %2438 = vmatprep.subr.mxu0 0.0
        %2439 = vmatpush1.xpose.msra.mxu0 0.0
        %2440 = vmatprep.subr.mxu0 0.0
        %2441 = vmatpush1.xpose.msra.mxu0 0.0
        %2442 = vmatprep.subr.mxu0 0.0
        %2443 = vmatpush1.xpose.msra.mxu0 0.0
        %2444 = vmatprep.subr.mxu0 0.0
        %2445 = vmatpush1.xpose.msra.mxu0 0.0
        %2446 = vmatprep.subr.mxu0 0.0
        %2447 = vmatpush1.xpose.msra.mxu0 0.0
        %2448 = vmatprep.subr.mxu0 0.0
        %2449 = vmatpush1.xpose.msra.mxu0 0.0
        %2450 = vmatprep.subr.mxu0 0.0
        %2451 = vmatpush1.xpose.msra.mxu0 0.0
        %2452 = vmatprep.subr.mxu0 0.0
        %2453 = vmatpush1.xpose.msra.mxu0 0.0
        %2454 = vmatprep.subr.mxu0 0.0
        %2455 = vmatpush1.xpose.msra.mxu0 0.0
        %2456 = vmatprep.subr.mxu0 0.0
        %2457 = vmatpush1.xpose.msra.mxu0 0.0
        %2458 = vmatprep.subr.mxu0 0.0
        %2459 = vmatpush1.xpose.msra.mxu0 0.0
        %2460 = vmatprep.subr.mxu0 0.0
        %2461 = vmatpush1.xpose.msra.mxu0 0.0
        %2462 = vmatprep.subr.mxu0 0.0
        %2463 = vmatpush1.xpose.msra.mxu0 0.0
        %2464 = vmatprep.subr.mxu0 0.0
        %2465 = vmatpush1.xpose.msra.mxu0 0.0
        %2466 = vmatprep.subr.mxu0 0.0
        %2467 = vmatpush1.xpose.msra.mxu0 0.0
        %2468 = vmatprep.subr.mxu0 0.0
        %2469 = vmatpush1.xpose.msra.mxu0 0.0
        %2470 = vmatprep.subr.mxu0 0.0
        %2471 = vmatpush1.xpose.msra.mxu0 0.0
        %2472 = vmatprep.subr.mxu0 0.0
        %2473 = vmatpush1.xpose.msra.mxu0 0.0
        %2474 = vmatprep.subr.mxu0 0.0
        %2475 = vmatpush1.xpose.msra.mxu0 0.0
        %2476 = vmatprep.subr.mxu0 0.0
        %2477 = vmatpush1.xpose.msra.mxu0 0.0
        %2478 = vmatprep.subr.mxu0 0.0
        %2479 = vmatpush1.xpose.msra.mxu0 0.0
        %2480 = vmatprep.subr.mxu0 0.0
        %2481 = vmatpush1.xpose.msra.mxu0 0.0
        %2482 = vmatprep.subr.mxu0 0.0
        %2483 = vmatpush1.xpose.msra.mxu0 0.0
        %2484 = vmatprep.subr.mxu0 0.0
        %2485 = vmatpush1.xpose.msra.mxu0 0.0
        %2486 = vmatprep.mubr.f32.mxu0 0.0
        %2487 = vmatmul.mubr.f32.gmra.mrb[0].mxu0 %v2414
        %v2488 = vpop.f32.mrb[0].mxu0
        %v2489 = vadd.f32 0.0, %v2488
        %v2490 = vpop.f32.mrb[0].mxu0
        %2491 = vdwg.mxu0
        %v2493 = vsel %vm2096, %v1315, 0
        %v2496 = vsel %vm2096, %v1464, 0
        %v2499 = vsel %vm2096, %v1465, 0
        %2501 = vmatprep.subr.mxu0 0.0
        %2502 = vmatpush1.xpose.msra.mxu0 %v2496
        %2503 = vmatprep.subr.mxu0 0.0
        %2504 = vmatpush1.xpose.msra.mxu0 %v2499
        %2505 = vmatprep.subr.mxu0 0.0
        %2506 = vmatpush1.xpose.msra.mxu0 0.0
        %2507 = vmatprep.subr.mxu0 0.0
        %2508 = vmatpush1.xpose.msra.mxu0 0.0
        %2509 = vmatprep.subr.mxu0 0.0
        %2510 = vmatpush1.xpose.msra.mxu0 0.0
        %2511 = vmatprep.subr.mxu0 0.0
        %2512 = vmatpush1.xpose.msra.mxu0 0.0
        %2513 = vmatprep.subr.mxu0 0.0
        %2514 = vmatpush1.xpose.msra.mxu0 0.0
        %2515 = vmatprep.subr.mxu0 0.0
        %2516 = vmatpush1.xpose.msra.mxu0 0.0
        %2517 = vmatprep.subr.mxu0 0.0
        %2518 = vmatpush1.xpose.msra.mxu0 0.0
        %2519 = vmatprep.subr.mxu0 0.0
        %2520 = vmatpush1.xpose.msra.mxu0 0.0
        %2521 = vmatprep.subr.mxu0 0.0
        %2522 = vmatpush1.xpose.msra.mxu0 0.0
        %2523 = vmatprep.subr.mxu0 0.0
        %2524 = vmatpush1.xpose.msra.mxu0 0.0
        %2525 = vmatprep.subr.mxu0 0.0
        %2526 = vmatpush1.xpose.msra.mxu0 0.0
        %2527 = vmatprep.subr.mxu0 0.0
        %2528 = vmatpush1.xpose.msra.mxu0 0.0
        %2529 = vmatprep.subr.mxu0 0.0
        %2530 = vmatpush1.xpose.msra.mxu0 0.0
        %2531 = vmatprep.subr.mxu0 0.0
        %2532 = vmatpush1.xpose.msra.mxu0 0.0
        %2533 = vmatprep.subr.mxu0 0.0
        %2534 = vmatpush1.xpose.msra.mxu0 0.0
        %2535 = vmatprep.subr.mxu0 0.0
        %2536 = vmatpush1.xpose.msra.mxu0 0.0
        %2537 = vmatprep.subr.mxu0 0.0
        %2538 = vmatpush1.xpose.msra.mxu0 0.0
        %2539 = vmatprep.subr.mxu0 0.0
        %2540 = vmatpush1.xpose.msra.mxu0 0.0
        %2541 = vmatprep.subr.mxu0 0.0
        %2542 = vmatpush1.xpose.msra.mxu0 0.0
        %2543 = vmatprep.subr.mxu0 0.0
        %2544 = vmatpush1.xpose.msra.mxu0 0.0
        %2545 = vmatprep.subr.mxu0 0.0
        %2546 = vmatpush1.xpose.msra.mxu0 0.0
        %2547 = vmatprep.subr.mxu0 0.0
        %2548 = vmatpush1.xpose.msra.mxu0 0.0
        %2549 = vmatprep.subr.mxu0 0.0
        %2550 = vmatpush1.xpose.msra.mxu0 0.0
        %2551 = vmatprep.subr.mxu0 0.0
        %2552 = vmatpush1.xpose.msra.mxu0 0.0
        %2553 = vmatprep.subr.mxu0 0.0
        %2554 = vmatpush1.xpose.msra.mxu0 0.0
        %2555 = vmatprep.subr.mxu0 0.0
        %2556 = vmatpush1.xpose.msra.mxu0 0.0
        %2557 = vmatprep.subr.mxu0 0.0
        %2558 = vmatpush1.xpose.msra.mxu0 0.0
        %2559 = vmatprep.subr.mxu0 0.0
        %2560 = vmatpush1.xpose.msra.mxu0 0.0
        %2561 = vmatprep.subr.mxu0 0.0
        %2562 = vmatpush1.xpose.msra.mxu0 0.0
        %2563 = vmatprep.subr.mxu0 0.0
        %2564 = vmatpush1.xpose.msra.mxu0 0.0
        %2565 = vmatprep.mubr.f32.mxu0 0.0
        %2566 = vmatmul.mubr.f32.gmra.mrb[0].mxu0 %v2493
        %v2567 = vpop.f32.mrb[0].mxu0
        %v2568 = vadd.f32 0.0, %v2567
        %v2569 = vpop.f32.mrb[0].mxu0
        %2570 = vdwg.mxu0
        %v2572 = vsel %vm2096, %v1316, 0
        %v2575 = vsel %vm2096, %v1466, 0
        %v2578 = vsel %vm2096, %v1467, 0
        %2580 = vmatprep.subr.mxu0 0.0
        %2581 = vmatpush1.xpose.msra.mxu0 %v2575
        %2582 = vmatprep.subr.mxu0 0.0
        %2583 = vmatpush1.xpose.msra.mxu0 %v2578
        %2584 = vmatprep.subr.mxu0 0.0
        %2585 = vmatpush1.xpose.msra.mxu0 0.0
        %2586 = vmatprep.subr.mxu0 0.0
        %2587 = vmatpush1.xpose.msra.mxu0 0.0
        %2588 = vmatprep.subr.mxu0 0.0
        %2589 = vmatpush1.xpose.msra.mxu0 0.0
        %2590 = vmatprep.subr.mxu0 0.0
        %2591 = vmatpush1.xpose.msra.mxu0 0.0
        %2592 = vmatprep.subr.mxu0 0.0
        %2593 = vmatpush1.xpose.msra.mxu0 0.0
        %2594 = vmatprep.subr.mxu0 0.0
        %2595 = vmatpush1.xpose.msra.mxu0 0.0
        %2596 = vmatprep.subr.mxu0 0.0
        %2597 = vmatpush1.xpose.msra.mxu0 0.0
        %2598 = vmatprep.subr.mxu0 0.0
        %2599 = vmatpush1.xpose.msra.mxu0 0.0
        %2600 = vmatprep.subr.mxu0 0.0
        %2601 = vmatpush1.xpose.msra.mxu0 0.0
        %2602 = vmatprep.subr.mxu0 0.0
        %2603 = vmatpush1.xpose.msra.mxu0 0.0
        %2604 = vmatprep.subr.mxu0 0.0
        %2605 = vmatpush1.xpose.msra.mxu0 0.0
        %2606 = vmatprep.subr.mxu0 0.0
        %2607 = vmatpush1.xpose.msra.mxu0 0.0
        %2608 = vmatprep.subr.mxu0 0.0
        %2609 = vmatpush1.xpose.msra.mxu0 0.0
        %2610 = vmatprep.subr.mxu0 0.0
        %2611 = vmatpush1.xpose.msra.mxu0 0.0
        %2612 = vmatprep.subr.mxu0 0.0
        %2613 = vmatpush1.xpose.msra.mxu0 0.0
        %2614 = vmatprep.subr.mxu0 0.0
        %2615 = vmatpush1.xpose.msra.mxu0 0.0
        %2616 = vmatprep.subr.mxu0 0.0
        %2617 = vmatpush1.xpose.msra.mxu0 0.0
        %2618 = vmatprep.subr.mxu0 0.0
        %2619 = vmatpush1.xpose.msra.mxu0 0.0
        %2620 = vmatprep.subr.mxu0 0.0
        %2621 = vmatpush1.xpose.msra.mxu0 0.0
        %2622 = vmatprep.subr.mxu0 0.0
        %2623 = vmatpush1.xpose.msra.mxu0 0.0
        %2624 = vmatprep.subr.mxu0 0.0
        %2625 = vmatpush1.xpose.msra.mxu0 0.0
        %2626 = vmatprep.subr.mxu0 0.0
        %2627 = vmatpush1.xpose.msra.mxu0 0.0
        %2628 = vmatprep.subr.mxu0 0.0
        %2629 = vmatpush1.xpose.msra.mxu0 0.0
        %2630 = vmatprep.subr.mxu0 0.0
        %2631 = vmatpush1.xpose.msra.mxu0 0.0
        %2632 = vmatprep.subr.mxu0 0.0
        %2633 = vmatpush1.xpose.msra.mxu0 0.0
        %2634 = vmatprep.subr.mxu0 0.0
        %2635 = vmatpush1.xpose.msra.mxu0 0.0
        %2636 = vmatprep.subr.mxu0 0.0
        %2637 = vmatpush1.xpose.msra.mxu0 0.0
        %2638 = vmatprep.subr.mxu0 0.0
        %2639 = vmatpush1.xpose.msra.mxu0 0.0
        %2640 = vmatprep.subr.mxu0 0.0
        %2641 = vmatpush1.xpose.msra.mxu0 0.0
        %2642 = vmatprep.subr.mxu0 0.0
        %2643 = vmatpush1.xpose.msra.mxu0 0.0
        %2644 = vmatprep.mubr.f32.mxu0 0.0
        %2645 = vmatmul.mubr.f32.gmra.mrb[0].mxu0 %v2572
        %v2646 = vpop.f32.mrb[0].mxu0
        %v2647 = vadd.f32 0.0, %v2646
        %v2648 = vpop.f32.mrb[0].mxu0
        %2649 = vdwg.mxu0
        %v2651 = vsel %vm2096, %v1317, 0
        %v2654 = vsel %vm2096, %v1468, 0
        %v2657 = vsel %vm2096, %v1469, 0
        %2659 = vmatprep.subr.mxu0 0.0
        %2660 = vmatpush1.xpose.msra.mxu0 %v2654
        %2661 = vmatprep.subr.mxu0 0.0
        %2662 = vmatpush1.xpose.msra.mxu0 %v2657
        %2663 = vmatprep.subr.mxu0 0.0
        %2664 = vmatpush1.xpose.msra.mxu0 0.0
        %2665 = vmatprep.subr.mxu0 0.0
        %2666 = vmatpush1.xpose.msra.mxu0 0.0
        %2667 = vmatprep.subr.mxu0 0.0
        %2668 = vmatpush1.xpose.msra.mxu0 0.0
        %2669 = vmatprep.subr.mxu0 0.0
        %2670 = vmatpush1.xpose.msra.mxu0 0.0
        %2671 = vmatprep.subr.mxu0 0.0
        %2672 = vmatpush1.xpose.msra.mxu0 0.0
        %2673 = vmatprep.subr.mxu0 0.0
        %2674 = vmatpush1.xpose.msra.mxu0 0.0
        %2675 = vmatprep.subr.mxu0 0.0
        %2676 = vmatpush1.xpose.msra.mxu0 0.0
        %2677 = vmatprep.subr.mxu0 0.0
        %2678 = vmatpush1.xpose.msra.mxu0 0.0
        %2679 = vmatprep.subr.mxu0 0.0
        %2680 = vmatpush1.xpose.msra.mxu0 0.0
        %2681 = vmatprep.subr.mxu0 0.0
        %2682 = vmatpush1.xpose.msra.mxu0 0.0
        %2683 = vmatprep.subr.mxu0 0.0
        %2684 = vmatpush1.xpose.msra.mxu0 0.0
        %2685 = vmatprep.subr.mxu0 0.0
        %2686 = vmatpush1.xpose.msra.mxu0 0.0
        %2687 = vmatprep.subr.mxu0 0.0
        %2688 = vmatpush1.xpose.msra.mxu0 0.0
        %2689 = vmatprep.subr.mxu0 0.0
        %2690 = vmatpush1.xpose.msra.mxu0 0.0
        %2691 = vmatprep.subr.mxu0 0.0
        %2692 = vmatpush1.xpose.msra.mxu0 0.0
        %2693 = vmatprep.subr.mxu0 0.0
        %2694 = vmatpush1.xpose.msra.mxu0 0.0
        %2695 = vmatprep.subr.mxu0 0.0
        %2696 = vmatpush1.xpose.msra.mxu0 0.0
        %2697 = vmatprep.subr.mxu0 0.0
        %2698 = vmatpush1.xpose.msra.mxu0 0.0
        %2699 = vmatprep.subr.mxu0 0.0
        %2700 = vmatpush1.xpose.msra.mxu0 0.0
        %2701 = vmatprep.subr.mxu0 0.0
        %2702 = vmatpush1.xpose.msra.mxu0 0.0
        %2703 = vmatprep.subr.mxu0 0.0
        %2704 = vmatpush1.xpose.msra.mxu0 0.0
        %2705 = vmatprep.subr.mxu0 0.0
        %2706 = vmatpush1.xpose.msra.mxu0 0.0
        %2707 = vmatprep.subr.mxu0 0.0
        %2708 = vmatpush1.xpose.msra.mxu0 0.0
        %2709 = vmatprep.subr.mxu0 0.0
        %2710 = vmatpush1.xpose.msra.mxu0 0.0
        %2711 = vmatprep.subr.mxu0 0.0
        %2712 = vmatpush1.xpose.msra.mxu0 0.0
        %2713 = vmatprep.subr.mxu0 0.0
        %2714 = vmatpush1.xpose.msra.mxu0 0.0
        %2715 = vmatprep.subr.mxu0 0.0
        %2716 = vmatpush1.xpose.msra.mxu0 0.0
        %2717 = vmatprep.subr.mxu0 0.0
        %2718 = vmatpush1.xpose.msra.mxu0 0.0
        %2719 = vmatprep.subr.mxu0 0.0
        %2720 = vmatpush1.xpose.msra.mxu0 0.0
        %2721 = vmatprep.subr.mxu0 0.0
        %2722 = vmatpush1.xpose.msra.mxu0 0.0
        %2723 = vmatprep.mubr.f32.mxu0 0.0
        %2724 = vmatmul.mubr.f32.gmra.mrb[0].mxu0 %v2651
        %v2725 = vpop.f32.mrb[0].mxu0
        %v2726 = vadd.f32 0.0, %v2725
        %v2727 = vpop.f32.mrb[0].mxu0
        %2728 = vdwg.mxu0
        %v2730 = vsel %vm2096, %v1446, 0
        %v2733 = vsel %vm2096, %v1470, 0
        %v2736 = vsel %vm2096, %v1471, 0
        %2738 = vmatprep.subr.mxu0 0.0
        %2739 = vmatpush1.xpose.msra.mxu0 %v2733
        %2740 = vmatprep.subr.mxu0 0.0
        %2741 = vmatpush1.xpose.msra.mxu0 %v2736
        %2742 = vmatprep.subr.mxu0 0.0
        %2743 = vmatpush1.xpose.msra.mxu0 0.0
        %2744 = vmatprep.subr.mxu0 0.0
        %2745 = vmatpush1.xpose.msra.mxu0 0.0
        %2746 = vmatprep.subr.mxu0 0.0
        %2747 = vmatpush1.xpose.msra.mxu0 0.0
        %2748 = vmatprep.subr.mxu0 0.0
        %2749 = vmatpush1.xpose.msra.mxu0 0.0
        %2750 = vmatprep.subr.mxu0 0.0
        %2751 = vmatpush1.xpose.msra.mxu0 0.0
        %2752 = vmatprep.subr.mxu0 0.0
        %2753 = vmatpush1.xpose.msra.mxu0 0.0
        %2754 = vmatprep.subr.mxu0 0.0
        %2755 = vmatpush1.xpose.msra.mxu0 0.0
        %2756 = vmatprep.subr.mxu0 0.0
        %2757 = vmatpush1.xpose.msra.mxu0 0.0
        %2758 = vmatprep.subr.mxu0 0.0
        %2759 = vmatpush1.xpose.msra.mxu0 0.0
        %2760 = vmatprep.subr.mxu0 0.0
        %2761 = vmatpush1.xpose.msra.mxu0 0.0
        %2762 = vmatprep.subr.mxu0 0.0
        %2763 = vmatpush1.xpose.msra.mxu0 0.0
        %2764 = vmatprep.subr.mxu0 0.0
        %2765 = vmatpush1.xpose.msra.mxu0 0.0
        %2766 = vmatprep.subr.mxu0 0.0
        %2767 = vmatpush1.xpose.msra.mxu0 0.0
        %2768 = vmatprep.subr.mxu0 0.0
        %2769 = vmatpush1.xpose.msra.mxu0 0.0
        %2770 = vmatprep.subr.mxu0 0.0
        %2771 = vmatpush1.xpose.msra.mxu0 0.0
        %2772 = vmatprep.subr.mxu0 0.0
        %2773 = vmatpush1.xpose.msra.mxu0 0.0
        %2774 = vmatprep.subr.mxu0 0.0
        %2775 = vmatpush1.xpose.msra.mxu0 0.0
        %2776 = vmatprep.subr.mxu0 0.0
        %2777 = vmatpush1.xpose.msra.mxu0 0.0
        %2778 = vmatprep.subr.mxu0 0.0
        %2779 = vmatpush1.xpose.msra.mxu0 0.0
        %2780 = vmatprep.subr.mxu0 0.0
        %2781 = vmatpush1.xpose.msra.mxu0 0.0
        %2782 = vmatprep.subr.mxu0 0.0
        %2783 = vmatpush1.xpose.msra.mxu0 0.0
        %2784 = vmatprep.subr.mxu0 0.0
        %2785 = vmatpush1.xpose.msra.mxu0 0.0
        %2786 = vmatprep.subr.mxu0 0.0
        %2787 = vmatpush1.xpose.msra.mxu0 0.0
        %2788 = vmatprep.subr.mxu0 0.0
        %2789 = vmatpush1.xpose.msra.mxu0 0.0
        %2790 = vmatprep.subr.mxu0 0.0
        %2791 = vmatpush1.xpose.msra.mxu0 0.0
        %2792 = vmatprep.subr.mxu0 0.0
        %2793 = vmatpush1.xpose.msra.mxu0 0.0
        %2794 = vmatprep.subr.mxu0 0.0
        %2795 = vmatpush1.xpose.msra.mxu0 0.0
        %2796 = vmatprep.subr.mxu0 0.0
        %2797 = vmatpush1.xpose.msra.mxu0 0.0
        %2798 = vmatprep.subr.mxu0 0.0
        %2799 = vmatpush1.xpose.msra.mxu0 0.0
        %2800 = vmatprep.subr.mxu0 0.0
        %2801 = vmatpush1.xpose.msra.mxu0 0.0
        %2802 = vmatprep.mubr.f32.mxu0 0.0
        %2803 = vmatmul.mubr.f32.gmra.mrb[0].mxu0 %v2730
        %v2804 = vpop.f32.mrb[0].mxu0
        %v2805 = vadd.f32 0.0, %v2804
        %v2806 = vpop.f32.mrb[0].mxu0
        %2807 = vdwg.mxu0
        %v2809 = vsel %vm2096, %v1447, 0
        %v2812 = vsel %vm2096, %v1472, 0
        %v2815 = vsel %vm2096, %v1473, 0
        %2817 = vmatprep.subr.mxu0 0.0
        %2818 = vmatpush1.xpose.msra.mxu0 %v2812
        %2819 = vmatprep.subr.mxu0 0.0
        %2820 = vmatpush1.xpose.msra.mxu0 %v2815
        %2821 = vmatprep.subr.mxu0 0.0
        %2822 = vmatpush1.xpose.msra.mxu0 0.0
        %2823 = vmatprep.subr.mxu0 0.0
        %2824 = vmatpush1.xpose.msra.mxu0 0.0
        %2825 = vmatprep.subr.mxu0 0.0
        %2826 = vmatpush1.xpose.msra.mxu0 0.0
        %2827 = vmatprep.subr.mxu0 0.0
        %2828 = vmatpush1.xpose.msra.mxu0 0.0
        %2829 = vmatprep.subr.mxu0 0.0
        %2830 = vmatpush1.xpose.msra.mxu0 0.0
        %2831 = vmatprep.subr.mxu0 0.0
        %2832 = vmatpush1.xpose.msra.mxu0 0.0
        %2833 = vmatprep.subr.mxu0 0.0
        %2834 = vmatpush1.xpose.msra.mxu0 0.0
        %2835 = vmatprep.subr.mxu0 0.0
        %2836 = vmatpush1.xpose.msra.mxu0 0.0
        %2837 = vmatprep.subr.mxu0 0.0
        %2838 = vmatpush1.xpose.msra.mxu0 0.0
        %2839 = vmatprep.subr.mxu0 0.0
        %2840 = vmatpush1.xpose.msra.mxu0 0.0
        %2841 = vmatprep.subr.mxu0 0.0
        %2842 = vmatpush1.xpose.msra.mxu0 0.0
        %2843 = vmatprep.subr.mxu0 0.0
        %2844 = vmatpush1.xpose.msra.mxu0 0.0
        %2845 = vmatprep.subr.mxu0 0.0
        %2846 = vmatpush1.xpose.msra.mxu0 0.0
        %2847 = vmatprep.subr.mxu0 0.0
        %2848 = vmatpush1.xpose.msra.mxu0 0.0
        %2849 = vmatprep.subr.mxu0 0.0
        %2850 = vmatpush1.xpose.msra.mxu0 0.0
        %2851 = vmatprep.subr.mxu0 0.0
        %2852 = vmatpush1.xpose.msra.mxu0 0.0
        %2853 = vmatprep.subr.mxu0 0.0
        %2854 = vmatpush1.xpose.msra.mxu0 0.0
        %2855 = vmatprep.subr.mxu0 0.0
        %2856 = vmatpush1.xpose.msra.mxu0 0.0
        %2857 = vmatprep.subr.mxu0 0.0
        %2858 = vmatpush1.xpose.msra.mxu0 0.0
        %2859 = vmatprep.subr.mxu0 0.0
        %2860 = vmatpush1.xpose.msra.mxu0 0.0
        %2861 = vmatprep.subr.mxu0 0.0
        %2862 = vmatpush1.xpose.msra.mxu0 0.0
        %2863 = vmatprep.subr.mxu0 0.0
        %2864 = vmatpush1.xpose.msra.mxu0 0.0
        %2865 = vmatprep.subr.mxu0 0.0
        %2866 = vmatpush1.xpose.msra.mxu0 0.0
        %2867 = vmatprep.subr.mxu0 0.0
        %2868 = vmatpush1.xpose.msra.mxu0 0.0
        %2869 = vmatprep.subr.mxu0 0.0
        %2870 = vmatpush1.xpose.msra.mxu0 0.0
        %2871 = vmatprep.subr.mxu0 0.0
        %2872 = vmatpush1.xpose.msra.mxu0 0.0
        %2873 = vmatprep.subr.mxu0 0.0
        %2874 = vmatpush1.xpose.msra.mxu0 0.0
        %2875 = vmatprep.subr.mxu0 0.0
        %2876 = vmatpush1.xpose.msra.mxu0 0.0
        %2877 = vmatprep.subr.mxu0 0.0
        %2878 = vmatpush1.xpose.msra.mxu0 0.0
        %2879 = vmatprep.subr.mxu0 0.0
        %2880 = vmatpush1.xpose.msra.mxu0 0.0
        %2881 = vmatprep.mubr.f32.mxu0 0.0
        %2882 = vmatmul.mubr.f32.gmra.mrb[0].mxu0 %v2809
        %v2883 = vpop.f32.mrb[0].mxu0
        %v2884 = vadd.f32 0.0, %v2883
        %v2885 = vpop.f32.mrb[0].mxu0
        %2886 = vdwg.mxu0
        %v2888 = vsel %vm2096, %v1448, 0
        %v2891 = vsel %vm2096, %v1474, 0
        %v2894 = vsel %vm2096, %v1475, 0
        %2896 = vmatprep.subr.mxu0 0.0
        %2897 = vmatpush1.xpose.msra.mxu0 %v2891
        %2898 = vmatprep.subr.mxu0 0.0
        %2899 = vmatpush1.xpose.msra.mxu0 %v2894
        %2900 = vmatprep.subr.mxu0 0.0
        %2901 = vmatpush1.xpose.msra.mxu0 0.0
        %2902 = vmatprep.subr.mxu0 0.0
        %2903 = vmatpush1.xpose.msra.mxu0 0.0
        %2904 = vmatprep.subr.mxu0 0.0
        %2905 = vmatpush1.xpose.msra.mxu0 0.0
        %2906 = vmatprep.subr.mxu0 0.0
        %2907 = vmatpush1.xpose.msra.mxu0 0.0
        %2908 = vmatprep.subr.mxu0 0.0
        %2909 = vmatpush1.xpose.msra.mxu0 0.0
        %2910 = vmatprep.subr.mxu0 0.0
        %2911 = vmatpush1.xpose.msra.mxu0 0.0
        %2912 = vmatprep.subr.mxu0 0.0
        %2913 = vmatpush1.xpose.msra.mxu0 0.0
        %2914 = vmatprep.subr.mxu0 0.0
        %2915 = vmatpush1.xpose.msra.mxu0 0.0
        %2916 = vmatprep.subr.mxu0 0.0
        %2917 = vmatpush1.xpose.msra.mxu0 0.0
        %2918 = vmatprep.subr.mxu0 0.0
        %2919 = vmatpush1.xpose.msra.mxu0 0.0
        %2920 = vmatprep.subr.mxu0 0.0
        %2921 = vmatpush1.xpose.msra.mxu0 0.0
        %2922 = vmatprep.subr.mxu0 0.0
        %2923 = vmatpush1.xpose.msra.mxu0 0.0
        %2924 = vmatprep.subr.mxu0 0.0
        %2925 = vmatpush1.xpose.msra.mxu0 0.0
        %2926 = vmatprep.subr.mxu0 0.0
        %2927 = vmatpush1.xpose.msra.mxu0 0.0
        %2928 = vmatprep.subr.mxu0 0.0
        %2929 = vmatpush1.xpose.msra.mxu0 0.0
        %2930 = vmatprep.subr.mxu0 0.0
        %2931 = vmatpush1.xpose.msra.mxu0 0.0
        %2932 = vmatprep.subr.mxu0 0.0
        %2933 = vmatpush1.xpose.msra.mxu0 0.0
        %2934 = vmatprep.subr.mxu0 0.0
        %2935 = vmatpush1.xpose.msra.mxu0 0.0
        %2936 = vmatprep.subr.mxu0 0.0
        %2937 = vmatpush1.xpose.msra.mxu0 0.0
        %2938 = vmatprep.subr.mxu0 0.0
        %2939 = vmatpush1.xpose.msra.mxu0 0.0
        %2940 = vmatprep.subr.mxu0 0.0
        %2941 = vmatpush1.xpose.msra.mxu0 0.0
        %2942 = vmatprep.subr.mxu0 0.0
        %2943 = vmatpush1.xpose.msra.mxu0 0.0
        %2944 = vmatprep.subr.mxu0 0.0
        %2945 = vmatpush1.xpose.msra.mxu0 0.0
        %2946 = vmatprep.subr.mxu0 0.0
        %2947 = vmatpush1.xpose.msra.mxu0 0.0
        %2948 = vmatprep.subr.mxu0 0.0
        %2949 = vmatpush1.xpose.msra.mxu0 0.0
        %2950 = vmatprep.subr.mxu0 0.0
        %2951 = vmatpush1.xpose.msra.mxu0 0.0
        %2952 = vmatprep.subr.mxu0 0.0
        %2953 = vmatpush1.xpose.msra.mxu0 0.0
        %2954 = vmatprep.subr.mxu0 0.0
        %2955 = vmatpush1.xpose.msra.mxu0 0.0
        %2956 = vmatprep.subr.mxu0 0.0
        %2957 = vmatpush1.xpose.msra.mxu0 0.0
        %2958 = vmatprep.subr.mxu0 0.0
        %2959 = vmatpush1.xpose.msra.mxu0 0.0
        %2960 = vmatprep.mubr.f32.mxu0 0.0
        %2961 = vmatmul.mubr.f32.gmra.mrb[0].mxu0 %v2888
        %v2962 = vpop.f32.mrb[0].mxu0
        %v2963 = vadd.f32 0.0, %v2962
        %v2964 = vpop.f32.mrb[0].mxu0
        %2965 = vdwg.mxu0
        %v2967 = vsel %vm2096, %v1449, 0
        %v2970 = vsel %vm2096, %v1476, 0
        %v2973 = vsel %vm2096, %v1477, 0
        %2975 = vmatprep.subr.mxu0 0.0
        %2976 = vmatpush1.xpose.msra.mxu0 %v2970
        %2977 = vmatprep.subr.mxu0 0.0
        %2978 = vmatpush1.xpose.msra.mxu0 %v2973
        %2979 = vmatprep.subr.mxu0 0.0
        %2980 = vmatpush1.xpose.msra.mxu0 0.0
        %2981 = vmatprep.subr.mxu0 0.0
        %2982 = vmatpush1.xpose.msra.mxu0 0.0
        %2983 = vmatprep.subr.mxu0 0.0
        %2984 = vmatpush1.xpose.msra.mxu0 0.0
        %2985 = vmatprep.subr.mxu0 0.0
        %2986 = vmatpush1.xpose.msra.mxu0 0.0
        %2987 = vmatprep.subr.mxu0 0.0
        %2988 = vmatpush1.xpose.msra.mxu0 0.0
        %2989 = vmatprep.subr.mxu0 0.0
        %2990 = vmatpush1.xpose.msra.mxu0 0.0
        %2991 = vmatprep.subr.mxu0 0.0
        %2992 = vmatpush1.xpose.msra.mxu0 0.0
        %2993 = vmatprep.subr.mxu0 0.0
        %2994 = vmatpush1.xpose.msra.mxu0 0.0
        %2995 = vmatprep.subr.mxu0 0.0
        %2996 = vmatpush1.xpose.msra.mxu0 0.0
        %2997 = vmatprep.subr.mxu0 0.0
        %2998 = vmatpush1.xpose.msra.mxu0 0.0
        %2999 = vmatprep.subr.mxu0 0.0
        %3000 = vmatpush1.xpose.msra.mxu0 0.0
        %3001 = vmatprep.subr.mxu0 0.0
        %3002 = vmatpush1.xpose.msra.mxu0 0.0
        %3003 = vmatprep.subr.mxu0 0.0
        %3004 = vmatpush1.xpose.msra.mxu0 0.0
        %3005 = vmatprep.subr.mxu0 0.0
        %3006 = vmatpush1.xpose.msra.mxu0 0.0
        %3007 = vmatprep.subr.mxu0 0.0
        %3008 = vmatpush1.xpose.msra.mxu0 0.0
        %3009 = vmatprep.subr.mxu0 0.0
        %3010 = vmatpush1.xpose.msra.mxu0 0.0
        %3011 = vmatprep.subr.mxu0 0.0
        %3012 = vmatpush1.xpose.msra.mxu0 0.0
        %3013 = vmatprep.subr.mxu0 0.0
        %3014 = vmatpush1.xpose.msra.mxu0 0.0
        %3015 = vmatprep.subr.mxu0 0.0
        %3016 = vmatpush1.xpose.msra.mxu0 0.0
        %3017 = vmatprep.subr.mxu0 0.0
        %3018 = vmatpush1.xpose.msra.mxu0 0.0
        %3019 = vmatprep.subr.mxu0 0.0
        %3020 = vmatpush1.xpose.msra.mxu0 0.0
        %3021 = vmatprep.subr.mxu0 0.0
        %3022 = vmatpush1.xpose.msra.mxu0 0.0
        %3023 = vmatprep.subr.mxu0 0.0
        %3024 = vmatpush1.xpose.msra.mxu0 0.0
        %3025 = vmatprep.subr.mxu0 0.0
        %3026 = vmatpush1.xpose.msra.mxu0 0.0
        %3027 = vmatprep.subr.mxu0 0.0
        %3028 = vmatpush1.xpose.msra.mxu0 0.0
        %3029 = vmatprep.subr.mxu0 0.0
        %3030 = vmatpush1.xpose.msra.mxu0 0.0
        %3031 = vmatprep.subr.mxu0 0.0
        %3032 = vmatpush1.xpose.msra.mxu0 0.0
        %3033 = vmatprep.subr.mxu0 0.0
        %3034 = vmatpush1.xpose.msra.mxu0 0.0
        %3035 = vmatprep.subr.mxu0 0.0
        %3036 = vmatpush1.xpose.msra.mxu0 0.0
        %3037 = vmatprep.subr.mxu0 0.0
        %3038 = vmatpush1.xpose.msra.mxu0 0.0
        %3039 = vmatprep.mubr.f32.mxu0 0.0
        %3040 = vmatmul.mubr.f32.gmra.mrb[0].mxu0 %v2967
        %v3041 = vpop.f32.mrb[0].mxu0
        %v3042 = vadd.f32 0.0, %v3041
        %v3043 = vpop.f32.mrb[0].mxu0
        %3044 = vdwg.mxu0
        %v3046 = vsel %vm2096, %v1450, 0
        %v3049 = vsel %vm2096, %v1478, 0
        %v3052 = vsel %vm2096, %v1479, 0
        %3054 = vmatprep.subr.mxu0 0.0
        %3055 = vmatpush1.xpose.msra.mxu0 %v3049
        %3056 = vmatprep.subr.mxu0 0.0
        %3057 = vmatpush1.xpose.msra.mxu0 %v3052
        %3058 = vmatprep.subr.mxu0 0.0
        %3059 = vmatpush1.xpose.msra.mxu0 0.0
        %3060 = vmatprep.subr.mxu0 0.0
        %3061 = vmatpush1.xpose.msra.mxu0 0.0
        %3062 = vmatprep.subr.mxu0 0.0
        %3063 = vmatpush1.xpose.msra.mxu0 0.0
        %3064 = vmatprep.subr.mxu0 0.0
        %3065 = vmatpush1.xpose.msra.mxu0 0.0
        %3066 = vmatprep.subr.mxu0 0.0
        %3067 = vmatpush1.xpose.msra.mxu0 0.0
        %3068 = vmatprep.subr.mxu0 0.0
        %3069 = vmatpush1.xpose.msra.mxu0 0.0
        %3070 = vmatprep.subr.mxu0 0.0
        %3071 = vmatpush1.xpose.msra.mxu0 0.0
        %3072 = vmatprep.subr.mxu0 0.0
        %3073 = vmatpush1.xpose.msra.mxu0 0.0
        %3074 = vmatprep.subr.mxu0 0.0
        %3075 = vmatpush1.xpose.msra.mxu0 0.0
        %3076 = vmatprep.subr.mxu0 0.0
        %3077 = vmatpush1.xpose.msra.mxu0 0.0
        %3078 = vmatprep.subr.mxu0 0.0
        %3079 = vmatpush1.xpose.msra.mxu0 0.0
        %3080 = vmatprep.subr.mxu0 0.0
        %3081 = vmatpush1.xpose.msra.mxu0 0.0
        %3082 = vmatprep.subr.mxu0 0.0
        %3083 = vmatpush1.xpose.msra.mxu0 0.0
        %3084 = vmatprep.subr.mxu0 0.0
        %3085 = vmatpush1.xpose.msra.mxu0 0.0
        %3086 = vmatprep.subr.mxu0 0.0
        %3087 = vmatpush1.xpose.msra.mxu0 0.0
        %3088 = vmatprep.subr.mxu0 0.0
        %3089 = vmatpush1.xpose.msra.mxu0 0.0
        %3090 = vmatprep.subr.mxu0 0.0
        %3091 = vmatpush1.xpose.msra.mxu0 0.0
        %3092 = vmatprep.subr.mxu0 0.0
        %3093 = vmatpush1.xpose.msra.mxu0 0.0
        %3094 = vmatprep.subr.mxu0 0.0
        %3095 = vmatpush1.xpose.msra.mxu0 0.0
        %3096 = vmatprep.subr.mxu0 0.0
        %3097 = vmatpush1.xpose.msra.mxu0 0.0
        %3098 = vmatprep.subr.mxu0 0.0
        %3099 = vmatpush1.xpose.msra.mxu0 0.0
        %3100 = vmatprep.subr.mxu0 0.0
        %3101 = vmatpush1.xpose.msra.mxu0 0.0
        %3102 = vmatprep.subr.mxu0 0.0
        %3103 = vmatpush1.xpose.msra.mxu0 0.0
        %3104 = vmatprep.subr.mxu0 0.0
        %3105 = vmatpush1.xpose.msra.mxu0 0.0
        %3106 = vmatprep.subr.mxu0 0.0
        %3107 = vmatpush1.xpose.msra.mxu0 0.0
        %3108 = vmatprep.subr.mxu0 0.0
        %3109 = vmatpush1.xpose.msra.mxu0 0.0
        %3110 = vmatprep.subr.mxu0 0.0
        %3111 = vmatpush1.xpose.msra.mxu0 0.0
        %3112 = vmatprep.subr.mxu0 0.0
        %3113 = vmatpush1.xpose.msra.mxu0 0.0
        %3114 = vmatprep.subr.mxu0 0.0
        %3115 = vmatpush1.xpose.msra.mxu0 0.0
        %3116 = vmatprep.subr.mxu0 0.0
        %3117 = vmatpush1.xpose.msra.mxu0 0.0
        %3118 = vmatprep.mubr.f32.mxu0 0.0
        %3119 = vmatmul.mubr.f32.gmra.mrb[0].mxu0 %v3046
        %v3120 = vpop.f32.mrb[0].mxu0
        %v3121 = vadd.f32 0.0, %v3120
        %v3122 = vpop.f32.mrb[0].mxu0
        %3123 = vdwg.mxu0
        %v3125 = vsel %vm2096, %v1451, 0
        %v3128 = vsel %vm2096, %v1480, 0
        %v3131 = vsel %vm2096, %v1481, 0
        %3133 = vmatprep.subr.mxu0 0.0
        %3134 = vmatpush1.xpose.msra.mxu0 %v3128
        %3135 = vmatprep.subr.mxu0 0.0
        %3136 = vmatpush1.xpose.msra.mxu0 %v3131
        %3137 = vmatprep.subr.mxu0 0.0
        %3138 = vmatpush1.xpose.msra.mxu0 0.0
        %3139 = vmatprep.subr.mxu0 0.0
        %3140 = vmatpush1.xpose.msra.mxu0 0.0
        %3141 = vmatprep.subr.mxu0 0.0
        %3142 = vmatpush1.xpose.msra.mxu0 0.0
        %3143 = vmatprep.subr.mxu0 0.0
        %3144 = vmatpush1.xpose.msra.mxu0 0.0
        %3145 = vmatprep.subr.mxu0 0.0
        %3146 = vmatpush1.xpose.msra.mxu0 0.0
        %3147 = vmatprep.subr.mxu0 0.0
        %3148 = vmatpush1.xpose.msra.mxu0 0.0
        %3149 = vmatprep.subr.mxu0 0.0
        %3150 = vmatpush1.xpose.msra.mxu0 0.0
        %3151 = vmatprep.subr.mxu0 0.0
        %3152 = vmatpush1.xpose.msra.mxu0 0.0
        %3153 = vmatprep.subr.mxu0 0.0
        %3154 = vmatpush1.xpose.msra.mxu0 0.0
        %3155 = vmatprep.subr.mxu0 0.0
        %3156 = vmatpush1.xpose.msra.mxu0 0.0
        %3157 = vmatprep.subr.mxu0 0.0
        %3158 = vmatpush1.xpose.msra.mxu0 0.0
        %3159 = vmatprep.subr.mxu0 0.0
        %3160 = vmatpush1.xpose.msra.mxu0 0.0
        %3161 = vmatprep.subr.mxu0 0.0
        %3162 = vmatpush1.xpose.msra.mxu0 0.0
        %3163 = vmatprep.subr.mxu0 0.0
        %3164 = vmatpush1.xpose.msra.mxu0 0.0
        %3165 = vmatprep.subr.mxu0 0.0
        %3166 = vmatpush1.xpose.msra.mxu0 0.0
        %3167 = vmatprep.subr.mxu0 0.0
        %3168 = vmatpush1.xpose.msra.mxu0 0.0
        %3169 = vmatprep.subr.mxu0 0.0
        %3170 = vmatpush1.xpose.msra.mxu0 0.0
        %3171 = vmatprep.subr.mxu0 0.0
        %3172 = vmatpush1.xpose.msra.mxu0 0.0
        %3173 = vmatprep.subr.mxu0 0.0
        %3174 = vmatpush1.xpose.msra.mxu0 0.0
        %3175 = vmatprep.subr.mxu0 0.0
        %3176 = vmatpush1.xpose.msra.mxu0 0.0
        %3177 = vmatprep.subr.mxu0 0.0
        %3178 = vmatpush1.xpose.msra.mxu0 0.0
        %3179 = vmatprep.subr.mxu0 0.0
        %3180 = vmatpush1.xpose.msra.mxu0 0.0
        %3181 = vmatprep.subr.mxu0 0.0
        %3182 = vmatpush1.xpose.msra.mxu0 0.0
        %3183 = vmatprep.subr.mxu0 0.0
        %3184 = vmatpush1.xpose.msra.mxu0 0.0
        %3185 = vmatprep.subr.mxu0 0.0
        %3186 = vmatpush1.xpose.msra.mxu0 0.0
        %3187 = vmatprep.subr.mxu0 0.0
        %3188 = vmatpush1.xpose.msra.mxu0 0.0
        %3189 = vmatprep.subr.mxu0 0.0
        %3190 = vmatpush1.xpose.msra.mxu0 0.0
        %3191 = vmatprep.subr.mxu0 0.0
        %3192 = vmatpush1.xpose.msra.mxu0 0.0
        %3193 = vmatprep.subr.mxu0 0.0
        %3194 = vmatpush1.xpose.msra.mxu0 0.0
        %3195 = vmatprep.subr.mxu0 0.0
        %3196 = vmatpush1.xpose.msra.mxu0 0.0
        %3197 = vmatprep.mubr.f32.mxu0 0.0
        %3198 = vmatmul.mubr.f32.gmra.mrb[0].mxu0 %v3125
        %v3199 = vpop.f32.mrb[0].mxu0
        %v3200 = vadd.f32 0.0, %v3199
        %v3201 = vpop.f32.mrb[0].mxu0
        %3202 = vdwg.mxu0
        %v3204 = vsel %vm2096, %v1452, 0
        %v3207 = vsel %vm2096, %v1482, 0
        %v3210 = vsel %vm2096, %v1483, 0
        %3212 = vmatprep.subr.mxu0 0.0
        %3213 = vmatpush1.xpose.msra.mxu0 %v3207
        %3214 = vmatprep.subr.mxu0 0.0
        %3215 = vmatpush1.xpose.msra.mxu0 %v3210
        %3216 = vmatprep.subr.mxu0 0.0
        %3217 = vmatpush1.xpose.msra.mxu0 0.0
        %3218 = vmatprep.subr.mxu0 0.0
        %3219 = vmatpush1.xpose.msra.mxu0 0.0
        %3220 = vmatprep.subr.mxu0 0.0
        %3221 = vmatpush1.xpose.msra.mxu0 0.0
        %3222 = vmatprep.subr.mxu0 0.0
        %3223 = vmatpush1.xpose.msra.mxu0 0.0
        %3224 = vmatprep.subr.mxu0 0.0
        %3225 = vmatpush1.xpose.msra.mxu0 0.0
        %3226 = vmatprep.subr.mxu0 0.0
        %3227 = vmatpush1.xpose.msra.mxu0 0.0
        %3228 = vmatprep.subr.mxu0 0.0
        %3229 = vmatpush1.xpose.msra.mxu0 0.0
        %3230 = vmatprep.subr.mxu0 0.0
        %3231 = vmatpush1.xpose.msra.mxu0 0.0
        %3232 = vmatprep.subr.mxu0 0.0
        %3233 = vmatpush1.xpose.msra.mxu0 0.0
        %3234 = vmatprep.subr.mxu0 0.0
        %3235 = vmatpush1.xpose.msra.mxu0 0.0
        %3236 = vmatprep.subr.mxu0 0.0
        %3237 = vmatpush1.xpose.msra.mxu0 0.0
        %3238 = vmatprep.subr.mxu0 0.0
        %3239 = vmatpush1.xpose.msra.mxu0 0.0
        %3240 = vmatprep.subr.mxu0 0.0
        %3241 = vmatpush1.xpose.msra.mxu0 0.0
        %3242 = vmatprep.subr.mxu0 0.0
        %3243 = vmatpush1.xpose.msra.mxu0 0.0
        %3244 = vmatprep.subr.mxu0 0.0
        %3245 = vmatpush1.xpose.msra.mxu0 0.0
        %3246 = vmatprep.subr.mxu0 0.0
        %3247 = vmatpush1.xpose.msra.mxu0 0.0
        %3248 = vmatprep.subr.mxu0 0.0
        %3249 = vmatpush1.xpose.msra.mxu0 0.0
        %3250 = vmatprep.subr.mxu0 0.0
        %3251 = vmatpush1.xpose.msra.mxu0 0.0
        %3252 = vmatprep.subr.mxu0 0.0
        %3253 = vmatpush1.xpose.msra.mxu0 0.0
        %3254 = vmatprep.subr.mxu0 0.0
        %3255 = vmatpush1.xpose.msra.mxu0 0.0
        %3256 = vmatprep.subr.mxu0 0.0
        %3257 = vmatpush1.xpose.msra.mxu0 0.0
        %3258 = vmatprep.subr.mxu0 0.0
        %3259 = vmatpush1.xpose.msra.mxu0 0.0
        %3260 = vmatprep.subr.mxu0 0.0
        %3261 = vmatpush1.xpose.msra.mxu0 0.0
        %3262 = vmatprep.subr.mxu0 0.0
        %3263 = vmatpush1.xpose.msra.mxu0 0.0
        %3264 = vmatprep.subr.mxu0 0.0
        %3265 = vmatpush1.xpose.msra.mxu0 0.0
        %3266 = vmatprep.subr.mxu0 0.0
        %3267 = vmatpush1.xpose.msra.mxu0 0.0
        %3268 = vmatprep.subr.mxu0 0.0
        %3269 = vmatpush1.xpose.msra.mxu0 0.0
        %3270 = vmatprep.subr.mxu0 0.0
        %3271 = vmatpush1.xpose.msra.mxu0 0.0
        %3272 = vmatprep.subr.mxu0 0.0
        %3273 = vmatpush1.xpose.msra.mxu0 0.0
        %3274 = vmatprep.subr.mxu0 0.0
        %3275 = vmatpush1.xpose.msra.mxu0 0.0
        %3276 = vmatprep.mubr.f32.mxu0 0.0
        %3277 = vmatmul.mubr.f32.gmra.mrb[0].mxu0 %v3204
        %v3278 = vpop.f32.mrb[0].mxu0
        %v3279 = vadd.f32 0.0, %v3278
        %v3280 = vpop.f32.mrb[0].mxu0
        %3281 = vdwg.mxu0
        %v3283 = vsel %vm2096, %v1453, 0
        %v3286 = vsel %vm2096, %v1484, 0
        %v3289 = vsel %vm2096, %v1485, 0
        %3291 = vmatprep.subr.mxu0 0.0
        %3292 = vmatpush1.xpose.msra.mxu0 %v3286
        %3293 = vmatprep.subr.mxu0 0.0
        %3294 = vmatpush1.xpose.msra.mxu0 %v3289
        %3295 = vmatprep.subr.mxu0 0.0
        %3296 = vmatpush1.xpose.msra.mxu0 0.0
        %3297 = vmatprep.subr.mxu0 0.0
        %3298 = vmatpush1.xpose.msra.mxu0 0.0
        %3299 = vmatprep.subr.mxu0 0.0
        %3300 = vmatpush1.xpose.msra.mxu0 0.0
        %3301 = vmatprep.subr.mxu0 0.0
        %3302 = vmatpush1.xpose.msra.mxu0 0.0
        %3303 = vmatprep.subr.mxu0 0.0
        %3304 = vmatpush1.xpose.msra.mxu0 0.0
        %3305 = vmatprep.subr.mxu0 0.0
        %3306 = vmatpush1.xpose.msra.mxu0 0.0
        %3307 = vmatprep.subr.mxu0 0.0
        %3308 = vmatpush1.xpose.msra.mxu0 0.0
        %3309 = vmatprep.subr.mxu0 0.0
        %3310 = vmatpush1.xpose.msra.mxu0 0.0
        %3311 = vmatprep.subr.mxu0 0.0
        %3312 = vmatpush1.xpose.msra.mxu0 0.0
        %3313 = vmatprep.subr.mxu0 0.0
        %3314 = vmatpush1.xpose.msra.mxu0 0.0
        %3315 = vmatprep.subr.mxu0 0.0
        %3316 = vmatpush1.xpose.msra.mxu0 0.0
        %3317 = vmatprep.subr.mxu0 0.0
        %3318 = vmatpush1.xpose.msra.mxu0 0.0
        %3319 = vmatprep.subr.mxu0 0.0
        %3320 = vmatpush1.xpose.msra.mxu0 0.0
        %3321 = vmatprep.subr.mxu0 0.0
        %3322 = vmatpush1.xpose.msra.mxu0 0.0
        %3323 = vmatprep.subr.mxu0 0.0
        %3324 = vmatpush1.xpose.msra.mxu0 0.0
        %3325 = vmatprep.subr.mxu0 0.0
        %3326 = vmatpush1.xpose.msra.mxu0 0.0
        %3327 = vmatprep.subr.mxu0 0.0
        %3328 = vmatpush1.xpose.msra.mxu0 0.0
        %3329 = vmatprep.subr.mxu0 0.0
        %3330 = vmatpush1.xpose.msra.mxu0 0.0
        %3331 = vmatprep.subr.mxu0 0.0
        %3332 = vmatpush1.xpose.msra.mxu0 0.0
        %3333 = vmatprep.subr.mxu0 0.0
        %3334 = vmatpush1.xpose.msra.mxu0 0.0
        %3335 = vmatprep.subr.mxu0 0.0
        %3336 = vmatpush1.xpose.msra.mxu0 0.0
        %3337 = vmatprep.subr.mxu0 0.0
        %3338 = vmatpush1.xpose.msra.mxu0 0.0
        %3339 = vmatprep.subr.mxu0 0.0
        %3340 = vmatpush1.xpose.msra.mxu0 0.0
        %3341 = vmatprep.subr.mxu0 0.0
        %3342 = vmatpush1.xpose.msra.mxu0 0.0
        %3343 = vmatprep.subr.mxu0 0.0
        %3344 = vmatpush1.xpose.msra.mxu0 0.0
        %3345 = vmatprep.subr.mxu0 0.0
        %3346 = vmatpush1.xpose.msra.mxu0 0.0
        %3347 = vmatprep.subr.mxu0 0.0
        %3348 = vmatpush1.xpose.msra.mxu0 0.0
        %3349 = vmatprep.subr.mxu0 0.0
        %3350 = vmatpush1.xpose.msra.mxu0 0.0
        %3351 = vmatprep.subr.mxu0 0.0
        %3352 = vmatpush1.xpose.msra.mxu0 0.0
        %3353 = vmatprep.subr.mxu0 0.0
        %3354 = vmatpush1.xpose.msra.mxu0 0.0
        %3355 = vmatprep.mubr.f32.mxu0 0.0
        %3356 = vmatmul.mubr.f32.gmra.mrb[0].mxu0 %v3283
        %v3357 = vpop.f32.mrb[0].mxu0
        %v3358 = vadd.f32 0.0, %v3357
        %v3359 = vpop.f32.mrb[0].mxu0
        %3360 = vdwg.mxu0
        %v3361 = vlaneseq
        %v3362 = vshrl.u32 %v3361, 7
        %v3363 = vstv %s1163
        %v3364 = vadd.s32 %v3362, %v3363
        %v3365 = vlaneseq
        %v3366 = vand.u32 %v3365, 127
        %vm3367 = vcmp.eq.s32.totalorder %v3364, %v3366
        %v3368 = vsel %vm3367, 1, 0
        %vm3369 = vcmp.eq.s32.totalorder %v3368, 1
        %v3370 = vsel %vm3369, -inf, %v2173
        %v3371 = vsel %vm3369, -inf, %v2252
        %v3372 = vsel %vm3369, -inf, %v2331
        %v3373 = vsel %vm3369, -inf, %v2410
        %v3374 = vsel %vm3369, -inf, %v2489
        %v3375 = vsel %vm3369, -inf, %v2568
        %v3376 = vsel %vm3369, -inf, %v2647
        %v3377 = vsel %vm3369, -inf, %v2726
        %v3378 = vsel %vm3369, -inf, %v2805
        %v3379 = vsel %vm3369, -inf, %v2884
        %v3380 = vsel %vm3369, -inf, %v2963
        %v3381 = vsel %vm3369, -inf, %v3042
        %v3382 = vsel %vm3369, -inf, %v3121
        %v3383 = vsel %vm3369, -inf, %v3200
        %v3384 = vsel %vm3369, -inf, %v3279
        %v3385 = vsel %vm3369, -inf, %v3358
        %v3387 = vsel %vm2096, %v1166, 0
        %v3390 = vsel %vm2096, %v1167, 0
        %v3393 = vsel %vm2096, %v1631, 0
        %v3396 = vsel %vm2096, %v1767, 0
        %3398 = vmatprep.subr.mxu0 0.0
        %3399 = vmatpush1.xpose.msra.mxu0 %v3393
        %3400 = vmatprep.subr.mxu0 0.0
        %3401 = vmatpush1.xpose.msra.mxu0 %v3396
        %3402 = vmatprep.subr.mxu0 0.0
        %3403 = vmatpush1.xpose.msra.mxu0 0.0
        %3404 = vmatprep.subr.mxu0 0.0
        %3405 = vmatpush1.xpose.msra.mxu0 0.0
        %3406 = vmatprep.subr.mxu0 0.0
        %3407 = vmatpush1.xpose.msra.mxu0 0.0
        %3408 = vmatprep.subr.mxu0 0.0
        %3409 = vmatpush1.xpose.msra.mxu0 0.0
        %3410 = vmatprep.subr.mxu0 0.0
        %3411 = vmatpush1.xpose.msra.mxu0 0.0
        %3412 = vmatprep.subr.mxu0 0.0
        %3413 = vmatpush1.xpose.msra.mxu0 0.0
        %3414 = vmatprep.subr.mxu0 0.0
        %3415 = vmatpush1.xpose.msra.mxu0 0.0
        %3416 = vmatprep.subr.mxu0 0.0
        %3417 = vmatpush1.xpose.msra.mxu0 0.0
        %3418 = vmatprep.subr.mxu0 0.0
        %3419 = vmatpush1.xpose.msra.mxu0 0.0
        %3420 = vmatprep.subr.mxu0 0.0
        %3421 = vmatpush1.xpose.msra.mxu0 0.0
        %3422 = vmatprep.subr.mxu0 0.0
        %3423 = vmatpush1.xpose.msra.mxu0 0.0
        %3424 = vmatprep.subr.mxu0 0.0
        %3425 = vmatpush1.xpose.msra.mxu0 0.0
        %3426 = vmatprep.subr.mxu0 0.0
        %3427 = vmatpush1.xpose.msra.mxu0 0.0
        %3428 = vmatprep.subr.mxu0 0.0
        %3429 = vmatpush1.xpose.msra.mxu0 0.0
        %3430 = vmatprep.subr.mxu0 0.0
        %3431 = vmatpush1.xpose.msra.mxu0 0.0
        %3432 = vmatprep.subr.mxu0 0.0
        %3433 = vmatpush1.xpose.msra.mxu0 0.0
        %3434 = vmatprep.subr.mxu0 0.0
        %3435 = vmatpush1.xpose.msra.mxu0 0.0
        %3436 = vmatprep.subr.mxu0 0.0
        %3437 = vmatpush1.xpose.msra.mxu0 0.0
        %3438 = vmatprep.subr.mxu0 0.0
        %3439 = vmatpush1.xpose.msra.mxu0 0.0
        %3440 = vmatprep.subr.mxu0 0.0
        %3441 = vmatpush1.xpose.msra.mxu0 0.0
        %3442 = vmatprep.subr.mxu0 0.0
        %3443 = vmatpush1.xpose.msra.mxu0 0.0
        %3444 = vmatprep.subr.mxu0 0.0
        %3445 = vmatpush1.xpose.msra.mxu0 0.0
        %3446 = vmatprep.subr.mxu0 0.0
        %3447 = vmatpush1.xpose.msra.mxu0 0.0
        %3448 = vmatprep.subr.mxu0 0.0
        %3449 = vmatpush1.xpose.msra.mxu0 0.0
        %3450 = vmatprep.subr.mxu0 0.0
        %3451 = vmatpush1.xpose.msra.mxu0 0.0
        %3452 = vmatprep.subr.mxu0 0.0
        %3453 = vmatpush1.xpose.msra.mxu0 0.0
        %3454 = vmatprep.subr.mxu0 0.0
        %3455 = vmatpush1.xpose.msra.mxu0 0.0
        %3456 = vmatprep.subr.mxu0 0.0
        %3457 = vmatpush1.xpose.msra.mxu0 0.0
        %3458 = vmatprep.subr.mxu0 0.0
        %3459 = vmatpush1.xpose.msra.mxu0 0.0
        %3460 = vmatprep.subr.mxu0 0.0
        %3461 = vmatpush1.xpose.msra.mxu0 0.0
        %3462 = vmatprep.mubr.f32.mxu0 0.0
        %3463 = vmatmul.mubr.f32.gmra.mrb[0].mxu0 %v3387
        %v3464 = vpop.f32.mrb[0].mxu0
        %v3465 = vadd.f32 0.0, %v3464
        %v3466 = vpop.f32.mrb[0].mxu0
        %3467 = vmatprep.mubr.f32.mxu0 0.0
        %3468 = vmatmul.mubr.f32.gmra.mrb[0].mxu0 %v3390
        %v3469 = vpop.f32.mrb[0].mxu0
        %v3470 = vadd.f32 0.0, %v3469
        %v3471 = vpop.f32.mrb[0].mxu0
        %3472 = vdwg.mxu0
        %v3474 = vsel %vm2096, %v1168, 0
        %v3477 = vsel %vm2096, %v1169, 0
        %v3480 = vsel %vm2096, %v1632, 0
        %v3483 = vsel %vm2096, %v1768, 0
        %3485 = vmatprep.subr.mxu0 0.0
        %3486 = vmatpush1.xpose.msra.mxu0 %v3480
        %3487 = vmatprep.subr.mxu0 0.0
        %3488 = vmatpush1.xpose.msra.mxu0 %v3483
        %3489 = vmatprep.subr.mxu0 0.0
        %3490 = vmatpush1.xpose.msra.mxu0 0.0
        %3491 = vmatprep.subr.mxu0 0.0
        %3492 = vmatpush1.xpose.msra.mxu0 0.0
        %3493 = vmatprep.subr.mxu0 0.0
        %3494 = vmatpush1.xpose.msra.mxu0 0.0
        %3495 = vmatprep.subr.mxu0 0.0
        %3496 = vmatpush1.xpose.msra.mxu0 0.0
        %3497 = vmatprep.subr.mxu0 0.0
        %3498 = vmatpush1.xpose.msra.mxu0 0.0
        %3499 = vmatprep.subr.mxu0 0.0
        %3500 = vmatpush1.xpose.msra.mxu0 0.0
        %3501 = vmatprep.subr.mxu0 0.0
        %3502 = vmatpush1.xpose.msra.mxu0 0.0
        %3503 = vmatprep.subr.mxu0 0.0
        %3504 = vmatpush1.xpose.msra.mxu0 0.0
        %3505 = vmatprep.subr.mxu0 0.0
        %3506 = vmatpush1.xpose.msra.mxu0 0.0
        %3507 = vmatprep.subr.mxu0 0.0
        %3508 = vmatpush1.xpose.msra.mxu0 0.0
        %3509 = vmatprep.subr.mxu0 0.0
        %3510 = vmatpush1.xpose.msra.mxu0 0.0
        %3511 = vmatprep.subr.mxu0 0.0
        %3512 = vmatpush1.xpose.msra.mxu0 0.0
        %3513 = vmatprep.subr.mxu0 0.0
        %3514 = vmatpush1.xpose.msra.mxu0 0.0
        %3515 = vmatprep.subr.mxu0 0.0
        %3516 = vmatpush1.xpose.msra.mxu0 0.0
        %3517 = vmatprep.subr.mxu0 0.0
        %3518 = vmatpush1.xpose.msra.mxu0 0.0
        %3519 = vmatprep.subr.mxu0 0.0
        %3520 = vmatpush1.xpose.msra.mxu0 0.0
        %3521 = vmatprep.subr.mxu0 0.0
        %3522 = vmatpush1.xpose.msra.mxu0 0.0
        %3523 = vmatprep.subr.mxu0 0.0
        %3524 = vmatpush1.xpose.msra.mxu0 0.0
        %3525 = vmatprep.subr.mxu0 0.0
        %3526 = vmatpush1.xpose.msra.mxu0 0.0
        %3527 = vmatprep.subr.mxu0 0.0
        %3528 = vmatpush1.xpose.msra.mxu0 0.0
        %3529 = vmatprep.subr.mxu0 0.0
        %3530 = vmatpush1.xpose.msra.mxu0 0.0
        %3531 = vmatprep.subr.mxu0 0.0
        %3532 = vmatpush1.xpose.msra.mxu0 0.0
        %3533 = vmatprep.subr.mxu0 0.0
        %3534 = vmatpush1.xpose.msra.mxu0 0.0
        %3535 = vmatprep.subr.mxu0 0.0
        %3536 = vmatpush1.xpose.msra.mxu0 0.0
        %3537 = vmatprep.subr.mxu0 0.0
        %3538 = vmatpush1.xpose.msra.mxu0 0.0
        %3539 = vmatprep.subr.mxu0 0.0
        %3540 = vmatpush1.xpose.msra.mxu0 0.0
        %3541 = vmatprep.subr.mxu0 0.0
        %3542 = vmatpush1.xpose.msra.mxu0 0.0
        %3543 = vmatprep.subr.mxu0 0.0
        %3544 = vmatpush1.xpose.msra.mxu0 0.0
        %3545 = vmatprep.subr.mxu0 0.0
        %3546 = vmatpush1.xpose.msra.mxu0 0.0
        %3547 = vmatprep.subr.mxu0 0.0
        %3548 = vmatpush1.xpose.msra.mxu0 0.0
        %3549 = vmatprep.mubr.f32.mxu0 0.0
        %3550 = vmatmul.mubr.f32.gmra.mrb[0].mxu0 %v3474
        %v3551 = vpop.f32.mrb[0].mxu0
        %v3552 = vadd.f32 0.0, %v3551
        %v3553 = vpop.f32.mrb[0].mxu0
        %3554 = vmatprep.mubr.f32.mxu0 0.0
        %3555 = vmatmul.mubr.f32.gmra.mrb[0].mxu0 %v3477
        %v3556 = vpop.f32.mrb[0].mxu0
        %v3557 = vadd.f32 0.0, %v3556
        %v3558 = vpop.f32.mrb[0].mxu0
        %3559 = vdwg.mxu0
        %v3561 = vsel %vm2096, %v1170, 0
        %v3564 = vsel %vm2096, %v1171, 0
        %v3567 = vsel %vm2096, %v1633, 0
        %v3570 = vsel %vm2096, %v1769, 0
        %3572 = vmatprep.subr.mxu0 0.0
        %3573 = vmatpush1.xpose.msra.mxu0 %v3567
        %3574 = vmatprep.subr.mxu0 0.0
        %3575 = vmatpush1.xpose.msra.mxu0 %v3570
        %3576 = vmatprep.subr.mxu0 0.0
        %3577 = vmatpush1.xpose.msra.mxu0 0.0
        %3578 = vmatprep.subr.mxu0 0.0
        %3579 = vmatpush1.xpose.msra.mxu0 0.0
        %3580 = vmatprep.subr.mxu0 0.0
        %3581 = vmatpush1.xpose.msra.mxu0 0.0
        %3582 = vmatprep.subr.mxu0 0.0
        %3583 = vmatpush1.xpose.msra.mxu0 0.0
        %3584 = vmatprep.subr.mxu0 0.0
        %3585 = vmatpush1.xpose.msra.mxu0 0.0
        %3586 = vmatprep.subr.mxu0 0.0
        %3587 = vmatpush1.xpose.msra.mxu0 0.0
        %3588 = vmatprep.subr.mxu0 0.0
        %3589 = vmatpush1.xpose.msra.mxu0 0.0
        %3590 = vmatprep.subr.mxu0 0.0
        %3591 = vmatpush1.xpose.msra.mxu0 0.0
        %3592 = vmatprep.subr.mxu0 0.0
        %3593 = vmatpush1.xpose.msra.mxu0 0.0
        %3594 = vmatprep.subr.mxu0 0.0
        %3595 = vmatpush1.xpose.msra.mxu0 0.0
        %3596 = vmatprep.subr.mxu0 0.0
        %3597 = vmatpush1.xpose.msra.mxu0 0.0
        %3598 = vmatprep.subr.mxu0 0.0
        %3599 = vmatpush1.xpose.msra.mxu0 0.0
        %3600 = vmatprep.subr.mxu0 0.0
        %3601 = vmatpush1.xpose.msra.mxu0 0.0
        %3602 = vmatprep.subr.mxu0 0.0
        %3603 = vmatpush1.xpose.msra.mxu0 0.0
        %3604 = vmatprep.subr.mxu0 0.0
        %3605 = vmatpush1.xpose.msra.mxu0 0.0
        %3606 = vmatprep.subr.mxu0 0.0
        %3607 = vmatpush1.xpose.msra.mxu0 0.0
        %3608 = vmatprep.subr.mxu0 0.0
        %3609 = vmatpush1.xpose.msra.mxu0 0.0
        %3610 = vmatprep.subr.mxu0 0.0
        %3611 = vmatpush1.xpose.msra.mxu0 0.0
        %3612 = vmatprep.subr.mxu0 0.0
        %3613 = vmatpush1.xpose.msra.mxu0 0.0
        %3614 = vmatprep.subr.mxu0 0.0
        %3615 = vmatpush1.xpose.msra.mxu0 0.0
        %3616 = vmatprep.subr.mxu0 0.0
        %3617 = vmatpush1.xpose.msra.mxu0 0.0
        %3618 = vmatprep.subr.mxu0 0.0
        %3619 = vmatpush1.xpose.msra.mxu0 0.0
        %3620 = vmatprep.subr.mxu0 0.0
        %3621 = vmatpush1.xpose.msra.mxu0 0.0
        %3622 = vmatprep.subr.mxu0 0.0
        %3623 = vmatpush1.xpose.msra.mxu0 0.0
        %3624 = vmatprep.subr.mxu0 0.0
        %3625 = vmatpush1.xpose.msra.mxu0 0.0
        %3626 = vmatprep.subr.mxu0 0.0
        %3627 = vmatpush1.xpose.msra.mxu0 0.0
        %3628 = vmatprep.subr.mxu0 0.0
        %3629 = vmatpush1.xpose.msra.mxu0 0.0
        %3630 = vmatprep.subr.mxu0 0.0
        %3631 = vmatpush1.xpose.msra.mxu0 0.0
        %3632 = vmatprep.subr.mxu0 0.0
        %3633 = vmatpush1.xpose.msra.mxu0 0.0
        %3634 = vmatprep.subr.mxu0 0.0
        %3635 = vmatpush1.xpose.msra.mxu0 0.0
        %3636 = vmatprep.mubr.f32.mxu0 0.0
        %3637 = vmatmul.mubr.f32.gmra.mrb[0].mxu0 %v3561
        %v3638 = vpop.f32.mrb[0].mxu0
        %v3639 = vadd.f32 0.0, %v3638
        %v3640 = vpop.f32.mrb[0].mxu0
        %3641 = vmatprep.mubr.f32.mxu0 0.0
        %3642 = vmatmul.mubr.f32.gmra.mrb[0].mxu0 %v3564
        %v3643 = vpop.f32.mrb[0].mxu0
        %v3644 = vadd.f32 0.0, %v3643
        %v3645 = vpop.f32.mrb[0].mxu0
        %3646 = vdwg.mxu0
        %v3648 = vsel %vm2096, %v1172, 0
        %v3651 = vsel %vm2096, %v1173, 0
        %v3654 = vsel %vm2096, %v1634, 0
        %v3657 = vsel %vm2096, %v1770, 0
        %3659 = vmatprep.subr.mxu0 0.0
        %3660 = vmatpush1.xpose.msra.mxu0 %v3654
        %3661 = vmatprep.subr.mxu0 0.0
        %3662 = vmatpush1.xpose.msra.mxu0 %v3657
        %3663 = vmatprep.subr.mxu0 0.0
        %3664 = vmatpush1.xpose.msra.mxu0 0.0
        %3665 = vmatprep.subr.mxu0 0.0
        %3666 = vmatpush1.xpose.msra.mxu0 0.0
        %3667 = vmatprep.subr.mxu0 0.0
        %3668 = vmatpush1.xpose.msra.mxu0 0.0
        %3669 = vmatprep.subr.mxu0 0.0
        %3670 = vmatpush1.xpose.msra.mxu0 0.0
        %3671 = vmatprep.subr.mxu0 0.0
        %3672 = vmatpush1.xpose.msra.mxu0 0.0
        %3673 = vmatprep.subr.mxu0 0.0
        %3674 = vmatpush1.xpose.msra.mxu0 0.0
        %3675 = vmatprep.subr.mxu0 0.0
        %3676 = vmatpush1.xpose.msra.mxu0 0.0
        %3677 = vmatprep.subr.mxu0 0.0
        %3678 = vmatpush1.xpose.msra.mxu0 0.0
        %3679 = vmatprep.subr.mxu0 0.0
        %3680 = vmatpush1.xpose.msra.mxu0 0.0
        %3681 = vmatprep.subr.mxu0 0.0
        %3682 = vmatpush1.xpose.msra.mxu0 0.0
        %3683 = vmatprep.subr.mxu0 0.0
        %3684 = vmatpush1.xpose.msra.mxu0 0.0
        %3685 = vmatprep.subr.mxu0 0.0
        %3686 = vmatpush1.xpose.msra.mxu0 0.0
        %3687 = vmatprep.subr.mxu0 0.0
        %3688 = vmatpush1.xpose.msra.mxu0 0.0
        %3689 = vmatprep.subr.mxu0 0.0
        %3690 = vmatpush1.xpose.msra.mxu0 0.0
        %3691 = vmatprep.subr.mxu0 0.0
        %3692 = vmatpush1.xpose.msra.mxu0 0.0
        %3693 = vmatprep.subr.mxu0 0.0
        %3694 = vmatpush1.xpose.msra.mxu0 0.0
        %3695 = vmatprep.subr.mxu0 0.0
        %3696 = vmatpush1.xpose.msra.mxu0 0.0
        %3697 = vmatprep.subr.mxu0 0.0
        %3698 = vmatpush1.xpose.msra.mxu0 0.0
        %3699 = vmatprep.subr.mxu0 0.0
        %3700 = vmatpush1.xpose.msra.mxu0 0.0
        %3701 = vmatprep.subr.mxu0 0.0
        %3702 = vmatpush1.xpose.msra.mxu0 0.0
        %3703 = vmatprep.subr.mxu0 0.0
        %3704 = vmatpush1.xpose.msra.mxu0 0.0
        %3705 = vmatprep.subr.mxu0 0.0
        %3706 = vmatpush1.xpose.msra.mxu0 0.0
        %3707 = vmatprep.subr.mxu0 0.0
        %3708 = vmatpush1.xpose.msra.mxu0 0.0
        %3709 = vmatprep.subr.mxu0 0.0
        %3710 = vmatpush1.xpose.msra.mxu0 0.0
        %3711 = vmatprep.subr.mxu0 0.0
        %3712 = vmatpush1.xpose.msra.mxu0 0.0
        %3713 = vmatprep.subr.mxu0 0.0
        %3714 = vmatpush1.xpose.msra.mxu0 0.0
        %3715 = vmatprep.subr.mxu0 0.0
        %3716 = vmatpush1.xpose.msra.mxu0 0.0
        %3717 = vmatprep.subr.mxu0 0.0
        %3718 = vmatpush1.xpose.msra.mxu0 0.0
        %3719 = vmatprep.subr.mxu0 0.0
        %3720 = vmatpush1.xpose.msra.mxu0 0.0
        %3721 = vmatprep.subr.mxu0 0.0
        %3722 = vmatpush1.xpose.msra.mxu0 0.0
        %3723 = vmatprep.mubr.f32.mxu0 0.0
        %3724 = vmatmul.mubr.f32.gmra.mrb[0].mxu0 %v3648
        %v3725 = vpop.f32.mrb[0].mxu0
        %v3726 = vadd.f32 0.0, %v3725
        %v3727 = vpop.f32.mrb[0].mxu0
        %3728 = vmatprep.mubr.f32.mxu0 0.0
        %3729 = vmatmul.mubr.f32.gmra.mrb[0].mxu0 %v3651
        %v3730 = vpop.f32.mrb[0].mxu0
        %v3731 = vadd.f32 0.0, %v3730
        %v3732 = vpop.f32.mrb[0].mxu0
        %3733 = vdwg.mxu0
        %v3735 = vsel %vm2096, %v1174, 0
        %v3738 = vsel %vm2096, %v1175, 0
        %v3741 = vsel %vm2096, %v1635, 0
        %v3744 = vsel %vm2096, %v1771, 0
        %3746 = vmatprep.subr.mxu0 0.0
        %3747 = vmatpush1.xpose.msra.mxu0 %v3741
        %3748 = vmatprep.subr.mxu0 0.0
        %3749 = vmatpush1.xpose.msra.mxu0 %v3744
        %3750 = vmatprep.subr.mxu0 0.0
        %3751 = vmatpush1.xpose.msra.mxu0 0.0
        %3752 = vmatprep.subr.mxu0 0.0
        %3753 = vmatpush1.xpose.msra.mxu0 0.0
        %3754 = vmatprep.subr.mxu0 0.0
        %3755 = vmatpush1.xpose.msra.mxu0 0.0
        %3756 = vmatprep.subr.mxu0 0.0
        %3757 = vmatpush1.xpose.msra.mxu0 0.0
        %3758 = vmatprep.subr.mxu0 0.0
        %3759 = vmatpush1.xpose.msra.mxu0 0.0
        %3760 = vmatprep.subr.mxu0 0.0
        %3761 = vmatpush1.xpose.msra.mxu0 0.0
        %3762 = vmatprep.subr.mxu0 0.0
        %3763 = vmatpush1.xpose.msra.mxu0 0.0
        %3764 = vmatprep.subr.mxu0 0.0
        %3765 = vmatpush1.xpose.msra.mxu0 0.0
        %3766 = vmatprep.subr.mxu0 0.0
        %3767 = vmatpush1.xpose.msra.mxu0 0.0
        %3768 = vmatprep.subr.mxu0 0.0
        %3769 = vmatpush1.xpose.msra.mxu0 0.0
        %3770 = vmatprep.subr.mxu0 0.0
        %3771 = vmatpush1.xpose.msra.mxu0 0.0
        %3772 = vmatprep.subr.mxu0 0.0
        %3773 = vmatpush1.xpose.msra.mxu0 0.0
        %3774 = vmatprep.subr.mxu0 0.0
        %3775 = vmatpush1.xpose.msra.mxu0 0.0
        %3776 = vmatprep.subr.mxu0 0.0
        %3777 = vmatpush1.xpose.msra.mxu0 0.0
        %3778 = vmatprep.subr.mxu0 0.0
        %3779 = vmatpush1.xpose.msra.mxu0 0.0
        %3780 = vmatprep.subr.mxu0 0.0
        %3781 = vmatpush1.xpose.msra.mxu0 0.0
        %3782 = vmatprep.subr.mxu0 0.0
        %3783 = vmatpush1.xpose.msra.mxu0 0.0
        %3784 = vmatprep.subr.mxu0 0.0
        %3785 = vmatpush1.xpose.msra.mxu0 0.0
        %3786 = vmatprep.subr.mxu0 0.0
        %3787 = vmatpush1.xpose.msra.mxu0 0.0
        %3788 = vmatprep.subr.mxu0 0.0
        %3789 = vmatpush1.xpose.msra.mxu0 0.0
        %3790 = vmatprep.subr.mxu0 0.0
        %3791 = vmatpush1.xpose.msra.mxu0 0.0
        %3792 = vmatprep.subr.mxu0 0.0
        %3793 = vmatpush1.xpose.msra.mxu0 0.0
        %3794 = vmatprep.subr.mxu0 0.0
        %3795 = vmatpush1.xpose.msra.mxu0 0.0
        %3796 = vmatprep.subr.mxu0 0.0
        %3797 = vmatpush1.xpose.msra.mxu0 0.0
        %3798 = vmatprep.subr.mxu0 0.0
        %3799 = vmatpush1.xpose.msra.mxu0 0.0
        %3800 = vmatprep.subr.mxu0 0.0
        %3801 = vmatpush1.xpose.msra.mxu0 0.0
        %3802 = vmatprep.subr.mxu0 0.0
        %3803 = vmatpush1.xpose.msra.mxu0 0.0
        %3804 = vmatprep.subr.mxu0 0.0
        %3805 = vmatpush1.xpose.msra.mxu0 0.0
        %3806 = vmatprep.subr.mxu0 0.0
        %3807 = vmatpush1.xpose.msra.mxu0 0.0
        %3808 = vmatprep.subr.mxu0 0.0
        %3809 = vmatpush1.xpose.msra.mxu0 0.0
        %3810 = vmatprep.mubr.f32.mxu0 0.0
        %3811 = vmatmul.mubr.f32.gmra.mrb[0].mxu0 %v3735
        %v3812 = vpop.f32.mrb[0].mxu0
        %v3813 = vadd.f32 0.0, %v3812
        %v3814 = vpop.f32.mrb[0].mxu0
        %3815 = vmatprep.mubr.f32.mxu0 0.0
        %3816 = vmatmul.mubr.f32.gmra.mrb[0].mxu0 %v3738
        %v3817 = vpop.f32.mrb[0].mxu0
        %v3818 = vadd.f32 0.0, %v3817
        %v3819 = vpop.f32.mrb[0].mxu0
        %3820 = vdwg.mxu0
        %v3822 = vsel %vm2096, %v1176, 0
        %v3825 = vsel %vm2096, %v1177, 0
        %v3828 = vsel %vm2096, %v1636, 0
        %v3831 = vsel %vm2096, %v1772, 0
        %3833 = vmatprep.subr.mxu0 0.0
        %3834 = vmatpush1.xpose.msra.mxu0 %v3828
        %3835 = vmatprep.subr.mxu0 0.0
        %3836 = vmatpush1.xpose.msra.mxu0 %v3831
        %3837 = vmatprep.subr.mxu0 0.0
        %3838 = vmatpush1.xpose.msra.mxu0 0.0
        %3839 = vmatprep.subr.mxu0 0.0
        %3840 = vmatpush1.xpose.msra.mxu0 0.0
        %3841 = vmatprep.subr.mxu0 0.0
        %3842 = vmatpush1.xpose.msra.mxu0 0.0
        %3843 = vmatprep.subr.mxu0 0.0
        %3844 = vmatpush1.xpose.msra.mxu0 0.0
        %3845 = vmatprep.subr.mxu0 0.0
        %3846 = vmatpush1.xpose.msra.mxu0 0.0
        %3847 = vmatprep.subr.mxu0 0.0
        %3848 = vmatpush1.xpose.msra.mxu0 0.0
        %3849 = vmatprep.subr.mxu0 0.0
        %3850 = vmatpush1.xpose.msra.mxu0 0.0
        %3851 = vmatprep.subr.mxu0 0.0
        %3852 = vmatpush1.xpose.msra.mxu0 0.0
        %3853 = vmatprep.subr.mxu0 0.0
        %3854 = vmatpush1.xpose.msra.mxu0 0.0
        %3855 = vmatprep.subr.mxu0 0.0
        %3856 = vmatpush1.xpose.msra.mxu0 0.0
        %3857 = vmatprep.subr.mxu0 0.0
        %3858 = vmatpush1.xpose.msra.mxu0 0.0
        %3859 = vmatprep.subr.mxu0 0.0
        %3860 = vmatpush1.xpose.msra.mxu0 0.0
        %3861 = vmatprep.subr.mxu0 0.0
        %3862 = vmatpush1.xpose.msra.mxu0 0.0
        %3863 = vmatprep.subr.mxu0 0.0
        %3864 = vmatpush1.xpose.msra.mxu0 0.0
        %3865 = vmatprep.subr.mxu0 0.0
        %3866 = vmatpush1.xpose.msra.mxu0 0.0
        %3867 = vmatprep.subr.mxu0 0.0
        %3868 = vmatpush1.xpose.msra.mxu0 0.0
        %3869 = vmatprep.subr.mxu0 0.0
        %3870 = vmatpush1.xpose.msra.mxu0 0.0
        %3871 = vmatprep.subr.mxu0 0.0
        %3872 = vmatpush1.xpose.msra.mxu0 0.0
        %3873 = vmatprep.subr.mxu0 0.0
        %3874 = vmatpush1.xpose.msra.mxu0 0.0
        %3875 = vmatprep.subr.mxu0 0.0
        %3876 = vmatpush1.xpose.msra.mxu0 0.0
        %3877 = vmatprep.subr.mxu0 0.0
        %3878 = vmatpush1.xpose.msra.mxu0 0.0
        %3879 = vmatprep.subr.mxu0 0.0
        %3880 = vmatpush1.xpose.msra.mxu0 0.0
        %3881 = vmatprep.subr.mxu0 0.0
        %3882 = vmatpush1.xpose.msra.mxu0 0.0
        %3883 = vmatprep.subr.mxu0 0.0
        %3884 = vmatpush1.xpose.msra.mxu0 0.0
        %3885 = vmatprep.subr.mxu0 0.0
        %3886 = vmatpush1.xpose.msra.mxu0 0.0
        %3887 = vmatprep.subr.mxu0 0.0
        %3888 = vmatpush1.xpose.msra.mxu0 0.0
        %3889 = vmatprep.subr.mxu0 0.0
        %3890 = vmatpush1.xpose.msra.mxu0 0.0
        %3891 = vmatprep.subr.mxu0 0.0
        %3892 = vmatpush1.xpose.msra.mxu0 0.0
        %3893 = vmatprep.subr.mxu0 0.0
        %3894 = vmatpush1.xpose.msra.mxu0 0.0
        %3895 = vmatprep.subr.mxu0 0.0
        %3896 = vmatpush1.xpose.msra.mxu0 0.0
        %3897 = vmatprep.mubr.f32.mxu0 0.0
        %3898 = vmatmul.mubr.f32.gmra.mrb[0].mxu0 %v3822
        %v3899 = vpop.f32.mrb[0].mxu0
        %v3900 = vadd.f32 0.0, %v3899
        %v3901 = vpop.f32.mrb[0].mxu0
        %3902 = vmatprep.mubr.f32.mxu0 0.0
        %3903 = vmatmul.mubr.f32.gmra.mrb[0].mxu0 %v3825
        %v3904 = vpop.f32.mrb[0].mxu0
        %v3905 = vadd.f32 0.0, %v3904
        %v3906 = vpop.f32.mrb[0].mxu0
        %3907 = vdwg.mxu0
        %v3909 = vsel %vm2096, %v1178, 0
        %v3912 = vsel %vm2096, %v1179, 0
        %v3915 = vsel %vm2096, %v1637, 0
        %v3918 = vsel %vm2096, %v1773, 0
        %3920 = vmatprep.subr.mxu0 0.0
        %3921 = vmatpush1.xpose.msra.mxu0 %v3915
        %3922 = vmatprep.subr.mxu0 0.0
        %3923 = vmatpush1.xpose.msra.mxu0 %v3918
        %3924 = vmatprep.subr.mxu0 0.0
        %3925 = vmatpush1.xpose.msra.mxu0 0.0
        %3926 = vmatprep.subr.mxu0 0.0
        %3927 = vmatpush1.xpose.msra.mxu0 0.0
        %3928 = vmatprep.subr.mxu0 0.0
        %3929 = vmatpush1.xpose.msra.mxu0 0.0
        %3930 = vmatprep.subr.mxu0 0.0
        %3931 = vmatpush1.xpose.msra.mxu0 0.0
        %3932 = vmatprep.subr.mxu0 0.0
        %3933 = vmatpush1.xpose.msra.mxu0 0.0
        %3934 = vmatprep.subr.mxu0 0.0
        %3935 = vmatpush1.xpose.msra.mxu0 0.0
        %3936 = vmatprep.subr.mxu0 0.0
        %3937 = vmatpush1.xpose.msra.mxu0 0.0
        %3938 = vmatprep.subr.mxu0 0.0
        %3939 = vmatpush1.xpose.msra.mxu0 0.0
        %3940 = vmatprep.subr.mxu0 0.0
        %3941 = vmatpush1.xpose.msra.mxu0 0.0
        %3942 = vmatprep.subr.mxu0 0.0
        %3943 = vmatpush1.xpose.msra.mxu0 0.0
        %3944 = vmatprep.subr.mxu0 0.0
        %3945 = vmatpush1.xpose.msra.mxu0 0.0
        %3946 = vmatprep.subr.mxu0 0.0
        %3947 = vmatpush1.xpose.msra.mxu0 0.0
        %3948 = vmatprep.subr.mxu0 0.0
        %3949 = vmatpush1.xpose.msra.mxu0 0.0
        %3950 = vmatprep.subr.mxu0 0.0
        %3951 = vmatpush1.xpose.msra.mxu0 0.0
        %3952 = vmatprep.subr.mxu0 0.0
        %3953 = vmatpush1.xpose.msra.mxu0 0.0
        %3954 = vmatprep.subr.mxu0 0.0
        %3955 = vmatpush1.xpose.msra.mxu0 0.0
        %3956 = vmatprep.subr.mxu0 0.0
        %3957 = vmatpush1.xpose.msra.mxu0 0.0
        %3958 = vmatprep.subr.mxu0 0.0
        %3959 = vmatpush1.xpose.msra.mxu0 0.0
        %3960 = vmatprep.subr.mxu0 0.0
        %3961 = vmatpush1.xpose.msra.mxu0 0.0
        %3962 = vmatprep.subr.mxu0 0.0
        %3963 = vmatpush1.xpose.msra.mxu0 0.0
        %3964 = vmatprep.subr.mxu0 0.0
        %3965 = vmatpush1.xpose.msra.mxu0 0.0
        %3966 = vmatprep.subr.mxu0 0.0
        %3967 = vmatpush1.xpose.msra.mxu0 0.0
        %3968 = vmatprep.subr.mxu0 0.0
        %3969 = vmatpush1.xpose.msra.mxu0 0.0
        %3970 = vmatprep.subr.mxu0 0.0
        %3971 = vmatpush1.xpose.msra.mxu0 0.0
        %3972 = vmatprep.subr.mxu0 0.0
        %3973 = vmatpush1.xpose.msra.mxu0 0.0
        %3974 = vmatprep.subr.mxu0 0.0
        %3975 = vmatpush1.xpose.msra.mxu0 0.0
        %3976 = vmatprep.subr.mxu0 0.0
        %3977 = vmatpush1.xpose.msra.mxu0 0.0
        %3978 = vmatprep.subr.mxu0 0.0
        %3979 = vmatpush1.xpose.msra.mxu0 0.0
        %3980 = vmatprep.subr.mxu0 0.0
        %3981 = vmatpush1.xpose.msra.mxu0 0.0
        %3982 = vmatprep.subr.mxu0 0.0
        %3983 = vmatpush1.xpose.msra.mxu0 0.0
        %3984 = vmatprep.mubr.f32.mxu0 0.0
        %3985 = vmatmul.mubr.f32.gmra.mrb[0].mxu0 %v3909
        %v3986 = vpop.f32.mrb[0].mxu0
        %v3987 = vadd.f32 0.0, %v3986
        %v3988 = vpop.f32.mrb[0].mxu0
        %3989 = vmatprep.mubr.f32.mxu0 0.0
        %3990 = vmatmul.mubr.f32.gmra.mrb[0].mxu0 %v3912
        %v3991 = vpop.f32.mrb[0].mxu0
        %v3992 = vadd.f32 0.0, %v3991
        %v3993 = vpop.f32.mrb[0].mxu0
        %3994 = vdwg.mxu0
        %v3996 = vsel %vm2096, %v1180, 0
        %v3999 = vsel %vm2096, %v1181, 0
        %v4002 = vsel %vm2096, %v1638, 0
        %v4005 = vsel %vm2096, %v1774, 0
        %4007 = vmatprep.subr.mxu0 0.0
        %4008 = vmatpush1.xpose.msra.mxu0 %v4002
        %4009 = vmatprep.subr.mxu0 0.0
        %4010 = vmatpush1.xpose.msra.mxu0 %v4005
        %4011 = vmatprep.subr.mxu0 0.0
        %4012 = vmatpush1.xpose.msra.mxu0 0.0
        %4013 = vmatprep.subr.mxu0 0.0
        %4014 = vmatpush1.xpose.msra.mxu0 0.0
        %4015 = vmatprep.subr.mxu0 0.0
        %4016 = vmatpush1.xpose.msra.mxu0 0.0
        %4017 = vmatprep.subr.mxu0 0.0
        %4018 = vmatpush1.xpose.msra.mxu0 0.0
        %4019 = vmatprep.subr.mxu0 0.0
        %4020 = vmatpush1.xpose.msra.mxu0 0.0
        %4021 = vmatprep.subr.mxu0 0.0
        %4022 = vmatpush1.xpose.msra.mxu0 0.0
        %4023 = vmatprep.subr.mxu0 0.0
        %4024 = vmatpush1.xpose.msra.mxu0 0.0
        %4025 = vmatprep.subr.mxu0 0.0
        %4026 = vmatpush1.xpose.msra.mxu0 0.0
        %4027 = vmatprep.subr.mxu0 0.0
        %4028 = vmatpush1.xpose.msra.mxu0 0.0
        %4029 = vmatprep.subr.mxu0 0.0
        %4030 = vmatpush1.xpose.msra.mxu0 0.0
        %4031 = vmatprep.subr.mxu0 0.0
        %4032 = vmatpush1.xpose.msra.mxu0 0.0
        %4033 = vmatprep.subr.mxu0 0.0
        %4034 = vmatpush1.xpose.msra.mxu0 0.0
        %4035 = vmatprep.subr.mxu0 0.0
        %4036 = vmatpush1.xpose.msra.mxu0 0.0
        %4037 = vmatprep.subr.mxu0 0.0
        %4038 = vmatpush1.xpose.msra.mxu0 0.0
        %4039 = vmatprep.subr.mxu0 0.0
        %4040 = vmatpush1.xpose.msra.mxu0 0.0
        %4041 = vmatprep.subr.mxu0 0.0
        %4042 = vmatpush1.xpose.msra.mxu0 0.0
        %4043 = vmatprep.subr.mxu0 0.0
        %4044 = vmatpush1.xpose.msra.mxu0 0.0
        %4045 = vmatprep.subr.mxu0 0.0
        %4046 = vmatpush1.xpose.msra.mxu0 0.0
        %4047 = vmatprep.subr.mxu0 0.0
        %4048 = vmatpush1.xpose.msra.mxu0 0.0
        %4049 = vmatprep.subr.mxu0 0.0
        %4050 = vmatpush1.xpose.msra.mxu0 0.0
        %4051 = vmatprep.subr.mxu0 0.0
        %4052 = vmatpush1.xpose.msra.mxu0 0.0
        %4053 = vmatprep.subr.mxu0 0.0
        %4054 = vmatpush1.xpose.msra.mxu0 0.0
        %4055 = vmatprep.subr.mxu0 0.0
        %4056 = vmatpush1.xpose.msra.mxu0 0.0
        %4057 = vmatprep.subr.mxu0 0.0
        %4058 = vmatpush1.xpose.msra.mxu0 0.0
        %4059 = vmatprep.subr.mxu0 0.0
        %4060 = vmatpush1.xpose.msra.mxu0 0.0
        %4061 = vmatprep.subr.mxu0 0.0
        %4062 = vmatpush1.xpose.msra.mxu0 0.0
        %4063 = vmatprep.subr.mxu0 0.0
        %4064 = vmatpush1.xpose.msra.mxu0 0.0
        %4065 = vmatprep.subr.mxu0 0.0
        %4066 = vmatpush1.xpose.msra.mxu0 0.0
        %4067 = vmatprep.subr.mxu0 0.0
        %4068 = vmatpush1.xpose.msra.mxu0 0.0
        %4069 = vmatprep.subr.mxu0 0.0
        %4070 = vmatpush1.xpose.msra.mxu0 0.0
        %4071 = vmatprep.mubr.f32.mxu0 0.0
        %4072 = vmatmul.mubr.f32.gmra.mrb[0].mxu0 %v3996
        %v4073 = vpop.f32.mrb[0].mxu0
        %v4074 = vadd.f32 0.0, %v4073
        %v4075 = vpop.f32.mrb[0].mxu0
        %4076 = vmatprep.mubr.f32.mxu0 0.0
        %4077 = vmatmul.mubr.f32.gmra.mrb[0].mxu0 %v3999
        %v4078 = vpop.f32.mrb[0].mxu0
        %v4079 = vadd.f32 0.0, %v4078
        %v4080 = vpop.f32.mrb[0].mxu0
        %4081 = vdwg.mxu0
        %vm4082 = vcmask 130048
        %v4083 = vsel %vm4082, %v3370, -inf
        %4084 = vmax.xlane.f32.xlu0 %v4083
        %v4085 = vpop.xlane.xlu0 %4084
        %v4086 = vsel %vm4082, %v3371, -inf
        %4087 = vmax.xlane.f32.xlu0 %v4086
        %v4088 = vpop.xlane.xlu0 %4087
        %v4089 = vsel %vm4082, %v3372, -inf
        %4090 = vmax.xlane.f32.xlu0 %v4089
        %v4091 = vpop.xlane.xlu0 %4090
        %v4092 = vsel %vm4082, %v3373, -inf
        %4093 = vmax.xlane.f32.xlu0 %v4092
        %v4094 = vpop.xlane.xlu0 %4093
        %v4095 = vsel %vm4082, %v3374, -inf
        %4096 = vmax.xlane.f32.xlu0 %v4095
        %v4097 = vpop.xlane.xlu0 %4096
        %v4098 = vsel %vm4082, %v3375, -inf
        %4099 = vmax.xlane.f32.xlu0 %v4098
        %v4100 = vpop.xlane.xlu0 %4099
        %v4101 = vsel %vm4082, %v3376, -inf
        %4102 = vmax.xlane.f32.xlu0 %v4101
        %v4103 = vpop.xlane.xlu0 %4102
        %v4104 = vsel %vm4082, %v3377, -inf
        %4105 = vmax.xlane.f32.xlu0 %v4104
        %v4106 = vpop.xlane.xlu0 %4105
        %v4107 = vsel %vm4082, %v3378, -inf
        %4108 = vmax.xlane.f32.xlu0 %v4107
        %v4109 = vpop.xlane.xlu0 %4108
        %v4110 = vsel %vm4082, %v3379, -inf
        %4111 = vmax.xlane.f32.xlu0 %v4110
        %v4112 = vpop.xlane.xlu0 %4111
        %v4113 = vsel %vm4082, %v3380, -inf
        %4114 = vmax.xlane.f32.xlu0 %v4113
        %v4115 = vpop.xlane.xlu0 %4114
        %v4116 = vsel %vm4082, %v3381, -inf
        %4117 = vmax.xlane.f32.xlu0 %v4116
        %v4118 = vpop.xlane.xlu0 %4117
        %v4119 = vsel %vm4082, %v3382, -inf
        %4120 = vmax.xlane.f32.xlu0 %v4119
        %v4121 = vpop.xlane.xlu0 %4120
        %v4122 = vsel %vm4082, %v3383, -inf
        %4123 = vmax.xlane.f32.xlu0 %v4122
        %v4124 = vpop.xlane.xlu0 %4123
        %v4125 = vsel %vm4082, %v3384, -inf
        %4126 = vmax.xlane.f32.xlu0 %v4125
        %v4127 = vpop.xlane.xlu0 %4126
        %v4128 = vsel %vm4082, %v3385, -inf
        %4129 = vmax.xlane.f32.xlu0 %v4128
        %v4130 = vpop.xlane.xlu0 %4129
        %v4131 = vsel %vm4082, %v3465, -inf
        %4132 = vmax.xlane.f32.xlu0 %v4131
        %v4133 = vpop.xlane.xlu0 %4132
        %v4134 = vsel %vm4082, %v3470, -inf
        %4135 = vmax.xlane.f32.xlu0 %v4134
        %v4136 = vpop.xlane.xlu0 %4135
        %v4137 = vsel %vm4082, %v3552, -inf
        %4138 = vmax.xlane.f32.xlu0 %v4137
        %v4139 = vpop.xlane.xlu0 %4138
        %v4140 = vsel %vm4082, %v3557, -inf
        %4141 = vmax.xlane.f32.xlu0 %v4140
        %v4142 = vpop.xlane.xlu0 %4141
        %v4143 = vsel %vm4082, %v3639, -inf
        %4144 = vmax.xlane.f32.xlu0 %v4143
        %v4145 = vpop.xlane.xlu0 %4144
        %v4146 = vsel %vm4082, %v3644, -inf
        %4147 = vmax.xlane.f32.xlu0 %v4146
        %v4148 = vpop.xlane.xlu0 %4147
        %v4149 = vsel %vm4082, %v3726, -inf
        %4150 = vmax.xlane.f32.xlu0 %v4149
        %v4151 = vpop.xlane.xlu0 %4150
        %v4152 = vsel %vm4082, %v3731, -inf
        %4153 = vmax.xlane.f32.xlu0 %v4152
        %v4154 = vpop.xlane.xlu0 %4153
        %v4155 = vsel %vm4082, %v3813, -inf
        %4156 = vmax.xlane.f32.xlu0 %v4155
        %v4157 = vpop.xlane.xlu0 %4156
        %v4158 = vsel %vm4082, %v3818, -inf
        %4159 = vmax.xlane.f32.xlu0 %v4158
        %v4160 = vpop.xlane.xlu0 %4159
        %v4161 = vsel %vm4082, %v3900, -inf
        %4162 = vmax.xlane.f32.xlu0 %v4161
        %v4163 = vpop.xlane.xlu0 %4162
        %v4164 = vsel %vm4082, %v3905, -inf
        %4165 = vmax.xlane.f32.xlu0 %v4164
        %v4166 = vpop.xlane.xlu0 %4165
        %v4167 = vsel %vm4082, %v3987, -inf
        %4168 = vmax.xlane.f32.xlu0 %v4167
        %v4169 = vpop.xlane.xlu0 %4168
        %v4170 = vsel %vm4082, %v3992, -inf
        %4171 = vmax.xlane.f32.xlu0 %v4170
        %v4172 = vpop.xlane.xlu0 %4171
        %v4173 = vsel %vm4082, %v4074, -inf
        %4174 = vmax.xlane.f32.xlu0 %v4173
        %v4175 = vpop.xlane.xlu0 %4174
        %v4176 = vsel %vm4082, %v4079, -inf
        %4177 = vmax.xlane.f32.xlu0 %v4176
        %v4178 = vpop.xlane.xlu0 %4177
        %v4195 = vlaneseq
        %v4196 = vshrl.u32 %v4195, 7
        %v4197 = vsub.s32 %v3366, %v4196
        %v4198 = vrot.slane %v4133, %v4197
        %v4199 = vadd.s32 %v3366, 4294967288
        %v4200 = vlaneseq
        %v4201 = vshrl.u32 %v4200, 7
        %v4202 = vsub.s32 %v4199, %v4201
        %v4203 = vrot.slane %v4136, %v4202
        %vm4204 = vcmask 130112
        %v4205 = vsel %vm4204, %v4203, %v4198
        %v4206 = vlaneseq
        %v4207 = vshrl.u32 %v4206, 7
        %v4208 = vsub.s32 %v3366, %v4207
        %v4209 = vrot.slane %v4139, %v4208
        %v4210 = vlaneseq
        %v4211 = vshrl.u32 %v4210, 7
        %v4212 = vsub.s32 %v4199, %v4211
        %v4213 = vrot.slane %v4142, %v4212
        %v4214 = vsel %vm4204, %v4213, %v4209
        %v4215 = vlaneseq
        %v4216 = vshrl.u32 %v4215, 7
        %v4217 = vsub.s32 %v3366, %v4216
        %v4218 = vrot.slane %v4145, %v4217
        %v4219 = vlaneseq
        %v4220 = vshrl.u32 %v4219, 7
        %v4221 = vsub.s32 %v4199, %v4220
        %v4222 = vrot.slane %v4148, %v4221
        %v4223 = vsel %vm4204, %v4222, %v4218
        %v4224 = vlaneseq
        %v4225 = vshrl.u32 %v4224, 7
        %v4226 = vsub.s32 %v3366, %v4225
        %v4227 = vrot.slane %v4151, %v4226
        %v4228 = vlaneseq
        %v4229 = vshrl.u32 %v4228, 7
        %v4230 = vsub.s32 %v4199, %v4229
        %v4231 = vrot.slane %v4154, %v4230
        %v4232 = vsel %vm4204, %v4231, %v4227
        %v4233 = vlaneseq
        %v4234 = vshrl.u32 %v4233, 7
        %v4235 = vsub.s32 %v3366, %v4234
        %v4236 = vrot.slane %v4157, %v4235
        %v4237 = vlaneseq
        %v4238 = vshrl.u32 %v4237, 7
        %v4239 = vsub.s32 %v4199, %v4238
        %v4240 = vrot.slane %v4160, %v4239
        %v4241 = vsel %vm4204, %v4240, %v4236
        %v4242 = vlaneseq
        %v4243 = vshrl.u32 %v4242, 7
        %v4244 = vsub.s32 %v3366, %v4243
        %v4245 = vrot.slane %v4163, %v4244
        %v4246 = vlaneseq
        %v4247 = vshrl.u32 %v4246, 7
        %v4248 = vsub.s32 %v4199, %v4247
        %v4249 = vrot.slane %v4166, %v4248
        %v4250 = vsel %vm4204, %v4249, %v4245
        %v4251 = vlaneseq
        %v4252 = vshrl.u32 %v4251, 7
        %v4253 = vsub.s32 %v3366, %v4252
        %v4254 = vrot.slane %v4169, %v4253
        %v4255 = vlaneseq
        %v4256 = vshrl.u32 %v4255, 7
        %v4257 = vsub.s32 %v4199, %v4256
        %v4258 = vrot.slane %v4172, %v4257
        %v4259 = vsel %vm4204, %v4258, %v4254
        %v4260 = vlaneseq
        %v4261 = vshrl.u32 %v4260, 7
        %v4262 = vsub.s32 %v3366, %v4261
        %v4263 = vrot.slane %v4175, %v4262
        %v4264 = vlaneseq
        %v4265 = vshrl.u32 %v4264, 7
        %v4266 = vsub.s32 %v4199, %v4265
        %v4267 = vrot.slane %v4178, %v4266
        %v4268 = vsel %vm4204, %v4267, %v4263
        %vm4269 = vcmask 1041409
        %v4270 = vsel %vm4269, %v4214, %v4205
        %vm4271 = vcmask 1042434
        %v4272 = vsel %vm4271, %v4223, %v4270
        %vm4273 = vcmask 1043459
        %v4274 = vsel %vm4273, %v4232, %v4272
        %vm4275 = vcmask 1044484
        %v4276 = vsel %vm4275, %v4241, %v4274
        %vm4277 = vcmask 1045509
        %v4278 = vsel %vm4277, %v4250, %v4276
        %vm4279 = vcmask 1046534
        %v4280 = vsel %vm4279, %v4259, %v4278
        %vm4281 = vcmask 1047559
        %v4282 = vsel %vm4281, %v4268, %v4280
        %4284 = vxpose.xlu0.b32.start [1/16] %v4282, 128
        %4285 = vxpose.xlu0.b32.cont [2/16] 0.0, 128
        %4286 = vxpose.xlu0.b32.cont [3/16] 0.0, 128
        %4287 = vxpose.xlu0.b32.cont [4/16] 0.0, 128
        %4288 = vxpose.xlu0.b32.cont [5/16] 0.0, 128
        %4289 = vxpose.xlu0.b32.cont [6/16] 0.0, 128
        %4290 = vxpose.xlu0.b32.cont [7/16] 0.0, 128
        %4291 = vxpose.xlu0.b32.cont [8/16] 0.0, 128
        %4292 = vxpose.xlu0.b32.cont [9/16] 0.0, 128
        %4293 = vxpose.xlu0.b32.cont [10/16] 0.0, 128
        %4294 = vxpose.xlu0.b32.cont [11/16] 0.0, 128
        %4295 = vxpose.xlu0.b32.cont [12/16] 0.0, 128
        %4296 = vxpose.xlu0.b32.cont [13/16] 0.0, 128
        %4297 = vxpose.xlu0.b32.cont [14/16] 0.0, 128
        %4298 = vxpose.xlu0.b32.cont [15/16] 0.0, 128
        %4299 = vxpose.xlu0.b32.end [16/16] 0.0, 128
        %v4300 = vpop.trf.xlu0
        %v4301 = vpop.trf.xlu0
        %v4302 = vpop.trf.xlu0
        %v4303 = vpop.trf.xlu0
        %v4304 = vpop.trf.xlu0
        %v4305 = vpop.trf.xlu0
        %v4306 = vpop.trf.xlu0
        %v4307 = vpop.trf.xlu0
        %v4308 = vpop.trf.xlu0
        %v4309 = vpop.trf.xlu0
        %v4310 = vpop.trf.xlu0
        %v4311 = vpop.trf.xlu0
        %v4312 = vpop.trf.xlu0
        %v4313 = vpop.trf.xlu0
        %v4314 = vpop.trf.xlu0
        %v4315 = vpop.trf.xlu0
        %v4318 = vlaneseq
        %v4319 = vshrl.u32 %v4318, 7
        %v4320 = vsub.s32 0, %v4319
        %v4321 = vrot.slane %v4300, %v4320
        %4323 = vbcast.lane.b32.xlu0 %v4321, 256
        %v4324 = vpop.permute.xlu0 %4323
        %v4325 = vlaneseq
        %v4326 = vshrl.u32 %v4325, 7
        %v4327 = vsub.s32 1, %v4326
        %v4328 = vrot.slane %v4300, %v4327
        %4330 = vbcast.lane.b32.xlu0 %v4328, 256
        %v4331 = vpop.permute.xlu0 %4330
        %v4332 = vlaneseq
        %v4333 = vshrl.u32 %v4332, 7
        %v4334 = vsub.s32 2, %v4333
        %v4335 = vrot.slane %v4300, %v4334
        %4337 = vbcast.lane.b32.xlu0 %v4335, 256
        %v4338 = vpop.permute.xlu0 %4337
        %v4339 = vlaneseq
        %v4340 = vshrl.u32 %v4339, 7
        %v4341 = vsub.s32 3, %v4340
        %v4342 = vrot.slane %v4300, %v4341
        %4344 = vbcast.lane.b32.xlu0 %v4342, 256
        %v4345 = vpop.permute.xlu0 %4344
        %v4346 = vlaneseq
        %v4347 = vshrl.u32 %v4346, 7
        %v4348 = vsub.s32 4, %v4347
        %v4349 = vrot.slane %v4300, %v4348
        %4351 = vbcast.lane.b32.xlu0 %v4349, 256
        %v4352 = vpop.permute.xlu0 %4351
        %v4353 = vlaneseq
        %v4354 = vshrl.u32 %v4353, 7
        %v4355 = vsub.s32 5, %v4354
        %v4356 = vrot.slane %v4300, %v4355
        %4358 = vbcast.lane.b32.xlu0 %v4356, 256
        %v4359 = vpop.permute.xlu0 %4358
        %v4360 = vlaneseq
        %v4361 = vshrl.u32 %v4360, 7
        %v4362 = vsub.s32 6, %v4361
        %v4363 = vrot.slane %v4300, %v4362
        %4365 = vbcast.lane.b32.xlu0 %v4363, 256
        %v4366 = vpop.permute.xlu0 %4365
        %v4367 = vlaneseq
        %v4368 = vshrl.u32 %v4367, 7
        %v4369 = vsub.s32 7, %v4368
        %v4370 = vrot.slane %v4300, %v4369
        %4372 = vbcast.lane.b32.xlu0 %v4370, 256
        %v4373 = vpop.permute.xlu0 %4372
        %v4374 = vlaneseq
        %v4375 = vshrl.u32 %v4374, 7
        %v4376 = vsub.s32 0, %v4375
        %v4377 = vrot.slane %v4301, %v4376
        %4379 = vbcast.lane.b32.xlu0 %v4377, 256
        %v4380 = vpop.permute.xlu0 %4379
        %v4381 = vlaneseq
        %v4382 = vshrl.u32 %v4381, 7
        %v4383 = vsub.s32 1, %v4382
        %v4384 = vrot.slane %v4301, %v4383
        %4386 = vbcast.lane.b32.xlu0 %v4384, 256
        %v4387 = vpop.permute.xlu0 %4386
        %v4388 = vlaneseq
        %v4389 = vshrl.u32 %v4388, 7
        %v4390 = vsub.s32 2, %v4389
        %v4391 = vrot.slane %v4301, %v4390
        %4393 = vbcast.lane.b32.xlu0 %v4391, 256
        %v4394 = vpop.permute.xlu0 %4393
        %v4395 = vlaneseq
        %v4396 = vshrl.u32 %v4395, 7
        %v4397 = vsub.s32 3, %v4396
        %v4398 = vrot.slane %v4301, %v4397
        %4400 = vbcast.lane.b32.xlu0 %v4398, 256
        %v4401 = vpop.permute.xlu0 %4400
        %v4402 = vlaneseq
        %v4403 = vshrl.u32 %v4402, 7
        %v4404 = vsub.s32 4, %v4403
        %v4405 = vrot.slane %v4301, %v4404
        %4407 = vbcast.lane.b32.xlu0 %v4405, 256
        %v4408 = vpop.permute.xlu0 %4407
        %v4409 = vlaneseq
        %v4410 = vshrl.u32 %v4409, 7
        %v4411 = vsub.s32 5, %v4410
        %v4412 = vrot.slane %v4301, %v4411
        %4414 = vbcast.lane.b32.xlu0 %v4412, 256
        %v4415 = vpop.permute.xlu0 %4414
        %v4416 = vlaneseq
        %v4417 = vshrl.u32 %v4416, 7
        %v4418 = vsub.s32 6, %v4417
        %v4419 = vrot.slane %v4301, %v4418
        %4421 = vbcast.lane.b32.xlu0 %v4419, 256
        %v4422 = vpop.permute.xlu0 %4421
        %v4423 = vlaneseq
        %v4424 = vshrl.u32 %v4423, 7
        %v4425 = vsub.s32 7, %v4424
        %v4426 = vrot.slane %v4301, %v4425
        %4428 = vbcast.lane.b32.xlu0 %v4426, 256
        %v4429 = vpop.permute.xlu0 %4428
        %v4446 = vmax.f32 %v4085, %v4324
        %v4447 = vmax.f32 %v4088, %v4331
        %v4448 = vmax.f32 %v4091, %v4338
        %v4449 = vmax.f32 %v4094, %v4345
        %v4450 = vmax.f32 %v4097, %v4352
        %v4451 = vmax.f32 %v4100, %v4359
        %v4452 = vmax.f32 %v4103, %v4366
        %v4453 = vmax.f32 %v4106, %v4373
        %v4454 = vmax.f32 %v4109, %v4380
        %v4455 = vmax.f32 %v4112, %v4387
        %v4456 = vmax.f32 %v4115, %v4394
        %v4457 = vmax.f32 %v4118, %v4401
        %v4458 = vmax.f32 %v4121, %v4408
        %v4459 = vmax.f32 %v4124, %v4415
        %v4460 = vmax.f32 %v4127, %v4422
        %v4461 = vmax.f32 %v4130, %v4429
        %4463 = vset.pattern.permute.xlu0 0
        %4464 = vperm.xlu0 %4463, %v4446
        %v4465 = vpop.permute.xlu0 %4464
        %4468 = vset.pattern.permute.xlu0 0
        %4469 = vperm.xlu0 %4468, %v4447
        %v4470 = vpop.permute.xlu0 %4469
        %4473 = vset.pattern.permute.xlu0 0
        %4474 = vperm.xlu0 %4473, %v4448
        %v4475 = vpop.permute.xlu0 %4474
        %4478 = vset.pattern.permute.xlu0 0
        %4479 = vperm.xlu0 %4478, %v4449
        %v4480 = vpop.permute.xlu0 %4479
        %4483 = vset.pattern.permute.xlu0 0
        %4484 = vperm.xlu0 %4483, %v4450
        %v4485 = vpop.permute.xlu0 %4484
        %4488 = vset.pattern.permute.xlu0 0
        %4489 = vperm.xlu0 %4488, %v4451
        %v4490 = vpop.permute.xlu0 %4489
        %4493 = vset.pattern.permute.xlu0 0
        %4494 = vperm.xlu0 %4493, %v4452
        %v4495 = vpop.permute.xlu0 %4494
        %4498 = vset.pattern.permute.xlu0 0
        %4499 = vperm.xlu0 %4498, %v4453
        %v4500 = vpop.permute.xlu0 %4499
        %4503 = vset.pattern.permute.xlu0 0
        %4504 = vperm.xlu0 %4503, %v4454
        %v4505 = vpop.permute.xlu0 %4504
        %4508 = vset.pattern.permute.xlu0 0
        %4509 = vperm.xlu0 %4508, %v4455
        %v4510 = vpop.permute.xlu0 %4509
        %4513 = vset.pattern.permute.xlu0 0
        %4514 = vperm.xlu0 %4513, %v4456
        %v4515 = vpop.permute.xlu0 %4514
        %4518 = vset.pattern.permute.xlu0 0
        %4519 = vperm.xlu0 %4518, %v4457
        %v4520 = vpop.permute.xlu0 %4519
        %4523 = vset.pattern.permute.xlu0 0
        %4524 = vperm.xlu0 %4523, %v4458
        %v4525 = vpop.permute.xlu0 %4524
        %4528 = vset.pattern.permute.xlu0 0
        %4529 = vperm.xlu0 %4528, %v4459
        %v4530 = vpop.permute.xlu0 %4529
        %4533 = vset.pattern.permute.xlu0 0
        %4534 = vperm.xlu0 %4533, %v4460
        %v4535 = vpop.permute.xlu0 %4534
        %4538 = vset.pattern.permute.xlu0 0
        %4539 = vperm.xlu0 %4538, %v4461
        %v4540 = vpop.permute.xlu0 %4539
        %v4542 = vsub.f32 %v3370, %v4465
        %v4543 = vsub.f32 %v3371, %v4470
        %v4544 = vsub.f32 %v3372, %v4475
        %v4545 = vsub.f32 %v3373, %v4480
        %v4546 = vsub.f32 %v3374, %v4485
        %v4547 = vsub.f32 %v3375, %v4490
        %v4548 = vsub.f32 %v3376, %v4495
        %v4549 = vsub.f32 %v3377, %v4500
        %v4550 = vsub.f32 %v3378, %v4505
        %v4551 = vsub.f32 %v3379, %v4510
        %v4552 = vsub.f32 %v3380, %v4515
        %v4553 = vsub.f32 %v3381, %v4520
        %v4554 = vsub.f32 %v3382, %v4525
        %v4555 = vsub.f32 %v3383, %v4530
        %v4556 = vsub.f32 %v3384, %v4535
        %v4557 = vsub.f32 %v3385, %v4540
        %v4558 = vmul.f32 %v4542, 1.442695
        %v4559 = vpow.pop %v4558
        %v4560 = vmul.f32 %v4543, 1.442695
        %v4561 = vpow.pop %v4560
        %v4562 = vmul.f32 %v4544, 1.442695
        %v4563 = vpow.pop %v4562
        %v4564 = vmul.f32 %v4545, 1.442695
        %v4565 = vpow.pop %v4564
        %v4566 = vmul.f32 %v4546, 1.442695
        %v4567 = vpow.pop %v4566
        %v4568 = vmul.f32 %v4547, 1.442695
        %v4569 = vpow.pop %v4568
        %v4570 = vmul.f32 %v4548, 1.442695
        %v4571 = vpow.pop %v4570
        %v4572 = vmul.f32 %v4549, 1.442695
        %v4573 = vpow.pop %v4572
        %v4574 = vmul.f32 %v4550, 1.442695
        %v4575 = vpow.pop %v4574
        %v4576 = vmul.f32 %v4551, 1.442695
        %v4577 = vpow.pop %v4576
        %v4578 = vmul.f32 %v4552, 1.442695
        %v4579 = vpow.pop %v4578
        %v4580 = vmul.f32 %v4553, 1.442695
        %v4581 = vpow.pop %v4580
        %v4582 = vmul.f32 %v4554, 1.442695
        %v4583 = vpow.pop %v4582
        %v4584 = vmul.f32 %v4555, 1.442695
        %v4585 = vpow.pop %v4584
        %v4586 = vmul.f32 %v4556, 1.442695
        %v4587 = vpow.pop %v4586
        %v4588 = vmul.f32 %v4557, 1.442695
        %v4589 = vpow.pop %v4588
        %v4590 = vlaneseq
        %v4591 = vshrl.u32 %v4590, 7
        %v4592 = vsub.s32 %v3366, %v4591
        %v4593 = vrot.slane %v4465, %v4592
        %v4594 = vlaneseq
        %v4595 = vshrl.u32 %v4594, 7
        %v4596 = vsub.s32 %v3366, %v4595
        %v4597 = vrot.slane %v4470, %v4596
        %v4598 = vlaneseq
        %v4599 = vshrl.u32 %v4598, 7
        %v4600 = vsub.s32 %v3366, %v4599
        %v4601 = vrot.slane %v4475, %v4600
        %v4602 = vlaneseq
        %v4603 = vshrl.u32 %v4602, 7
        %v4604 = vsub.s32 %v3366, %v4603
        %v4605 = vrot.slane %v4480, %v4604
        %v4606 = vlaneseq
        %v4607 = vshrl.u32 %v4606, 7
        %v4608 = vsub.s32 %v3366, %v4607
        %v4609 = vrot.slane %v4485, %v4608
        %v4610 = vlaneseq
        %v4611 = vshrl.u32 %v4610, 7
        %v4612 = vsub.s32 %v3366, %v4611
        %v4613 = vrot.slane %v4490, %v4612
        %v4614 = vlaneseq
        %v4615 = vshrl.u32 %v4614, 7
        %v4616 = vsub.s32 %v3366, %v4615
        %v4617 = vrot.slane %v4495, %v4616
        %v4618 = vlaneseq
        %v4619 = vshrl.u32 %v4618, 7
        %v4620 = vsub.s32 %v3366, %v4619
        %v4621 = vrot.slane %v4500, %v4620
        %v4622 = vlaneseq
        %v4623 = vshrl.u32 %v4622, 7
        %v4624 = vsub.s32 %v3366, %v4623
        %v4625 = vrot.slane %v4505, %v4624
        %v4626 = vlaneseq
        %v4627 = vshrl.u32 %v4626, 7
        %v4628 = vsub.s32 %v3366, %v4627
        %v4629 = vrot.slane %v4510, %v4628
        %v4630 = vlaneseq
        %v4631 = vshrl.u32 %v4630, 7
        %v4632 = vsub.s32 %v3366, %v4631
        %v4633 = vrot.slane %v4515, %v4632
        %v4634 = vlaneseq
        %v4635 = vshrl.u32 %v4634, 7
        %v4636 = vsub.s32 %v3366, %v4635
        %v4637 = vrot.slane %v4520, %v4636
        %v4638 = vlaneseq
        %v4639 = vshrl.u32 %v4638, 7
        %v4640 = vsub.s32 %v3366, %v4639
        %v4641 = vrot.slane %v4525, %v4640
        %v4642 = vlaneseq
        %v4643 = vshrl.u32 %v4642, 7
        %v4644 = vsub.s32 %v3366, %v4643
        %v4645 = vrot.slane %v4530, %v4644
        %v4646 = vlaneseq
        %v4647 = vshrl.u32 %v4646, 7
        %v4648 = vsub.s32 %v3366, %v4647
        %v4649 = vrot.slane %v4535, %v4648
        %v4650 = vlaneseq
        %v4651 = vshrl.u32 %v4650, 7
        %v4652 = vsub.s32 %v3366, %v4651
        %v4653 = vrot.slane %v4540, %v4652
        %v4654 = vsel %vm4269, %v4597, %v4593
        %v4655 = vsel %vm4271, %v4601, %v4654
        %v4656 = vsel %vm4273, %v4605, %v4655
        %v4657 = vsel %vm4275, %v4609, %v4656
        %v4658 = vsel %vm4277, %v4613, %v4657
        %v4659 = vsel %vm4279, %v4617, %v4658
        %v4660 = vsel %vm4281, %v4621, %v4659
        %v4661 = vsel %vm4269, %v4629, %v4625
        %v4662 = vsel %vm4271, %v4633, %v4661
        %v4663 = vsel %vm4273, %v4637, %v4662
        %v4664 = vsel %vm4275, %v4641, %v4663
        %v4665 = vsel %vm4277, %v4645, %v4664
        %v4666 = vsel %vm4279, %v4649, %v4665
        %v4667 = vsel %vm4281, %v4653, %v4666
        %4670 = vxpose.xlu0.b32.start [1/16] %v4660, 128
        %4671 = vxpose.xlu0.b32.cont [2/16] %v4667, 128
        %4672 = vxpose.xlu0.b32.cont [3/16] 0.0, 128
        %4673 = vxpose.xlu0.b32.cont [4/16] 0.0, 128
        %4674 = vxpose.xlu0.b32.cont [5/16] 0.0, 128
        %4675 = vxpose.xlu0.b32.cont [6/16] 0.0, 128
        %4676 = vxpose.xlu0.b32.cont [7/16] 0.0, 128
        %4677 = vxpose.xlu0.b32.cont [8/16] 0.0, 128
        %4678 = vxpose.xlu0.b32.cont [9/16] 0.0, 128
        %4679 = vxpose.xlu0.b32.cont [10/16] 0.0, 128
        %4680 = vxpose.xlu0.b32.cont [11/16] 0.0, 128
        %4681 = vxpose.xlu0.b32.cont [12/16] 0.0, 128
        %4682 = vxpose.xlu0.b32.cont [13/16] 0.0, 128
        %4683 = vxpose.xlu0.b32.cont [14/16] 0.0, 128
        %4684 = vxpose.xlu0.b32.cont [15/16] 0.0, 128
        %4685 = vxpose.xlu0.b32.end [16/16] 0.0, 128
        %v4686 = vpop.trf.xlu0
        %v4687 = vpop.trf.xlu0
        %v4688 = vpop.trf.xlu0
        %v4689 = vpop.trf.xlu0
        %v4690 = vpop.trf.xlu0
        %v4691 = vpop.trf.xlu0
        %v4692 = vpop.trf.xlu0
        %v4693 = vpop.trf.xlu0
        %v4694 = vpop.trf.xlu0
        %v4695 = vpop.trf.xlu0
        %v4696 = vpop.trf.xlu0
        %v4697 = vpop.trf.xlu0
        %v4698 = vpop.trf.xlu0
        %v4699 = vpop.trf.xlu0
        %v4700 = vpop.trf.xlu0
        %v4701 = vpop.trf.xlu0
        %v4702 = vlaneseq
        %v4703 = vshrl.u32 %v4702, 7
        %v4704 = vsub.s32 0, %v4703
        %v4705 = vrot.slane %v4686, %v4704
        %4707 = vbcast.lane.b32.xlu0 %v4705, 256
        %v4708 = vpop.permute.xlu0 %4707
        %s4710 = sor.u32 256, 8
        %4711 = vbcast.lane.b32.xlu0 %v4705, %s4710
        %v4712 = vpop.permute.xlu0 %4711
        %v4713 = vlaneseq
        %v4714 = vshrl.u32 %v4713, 7
        %v4715 = vsub.s32 1, %v4714
        %v4716 = vrot.slane %v4686, %v4715
        %4718 = vbcast.lane.b32.xlu0 %v4716, 256
        %v4719 = vpop.permute.xlu0 %4718
        %s4721 = sor.u32 256, 8
        %4722 = vbcast.lane.b32.xlu0 %v4716, %s4721
        %v4723 = vpop.permute.xlu0 %4722
        %v4724 = vlaneseq
        %v4725 = vshrl.u32 %v4724, 7
        %v4726 = vsub.s32 2, %v4725
        %v4727 = vrot.slane %v4686, %v4726
        %4729 = vbcast.lane.b32.xlu0 %v4727, 256
        %v4730 = vpop.permute.xlu0 %4729
        %s4732 = sor.u32 256, 8
        %4733 = vbcast.lane.b32.xlu0 %v4727, %s4732
        %v4734 = vpop.permute.xlu0 %4733
        %v4735 = vlaneseq
        %v4736 = vshrl.u32 %v4735, 7
        %v4737 = vsub.s32 3, %v4736
        %v4738 = vrot.slane %v4686, %v4737
        %4740 = vbcast.lane.b32.xlu0 %v4738, 256
        %v4741 = vpop.permute.xlu0 %4740
        %s4743 = sor.u32 256, 8
        %4744 = vbcast.lane.b32.xlu0 %v4738, %s4743
        %v4745 = vpop.permute.xlu0 %4744
        %v4746 = vlaneseq
        %v4747 = vshrl.u32 %v4746, 7
        %v4748 = vsub.s32 4, %v4747
        %v4749 = vrot.slane %v4686, %v4748
        %4751 = vbcast.lane.b32.xlu0 %v4749, 256
        %v4752 = vpop.permute.xlu0 %4751
        %s4754 = sor.u32 256, 8
        %4755 = vbcast.lane.b32.xlu0 %v4749, %s4754
        %v4756 = vpop.permute.xlu0 %4755
        %v4757 = vlaneseq
        %v4758 = vshrl.u32 %v4757, 7
        %v4759 = vsub.s32 5, %v4758
        %v4760 = vrot.slane %v4686, %v4759
        %4762 = vbcast.lane.b32.xlu0 %v4760, 256
        %v4763 = vpop.permute.xlu0 %4762
        %s4765 = sor.u32 256, 8
        %4766 = vbcast.lane.b32.xlu0 %v4760, %s4765
        %v4767 = vpop.permute.xlu0 %4766
        %v4768 = vlaneseq
        %v4769 = vshrl.u32 %v4768, 7
        %v4770 = vsub.s32 6, %v4769
        %v4771 = vrot.slane %v4686, %v4770
        %4773 = vbcast.lane.b32.xlu0 %v4771, 256
        %v4774 = vpop.permute.xlu0 %4773
        %s4776 = sor.u32 256, 8
        %4777 = vbcast.lane.b32.xlu0 %v4771, %s4776
        %v4778 = vpop.permute.xlu0 %4777
        %v4779 = vlaneseq
        %v4780 = vshrl.u32 %v4779, 7
        %v4781 = vsub.s32 7, %v4780
        %v4782 = vrot.slane %v4686, %v4781
        %4784 = vbcast.lane.b32.xlu0 %v4782, 256
        %v4785 = vpop.permute.xlu0 %4784
        %s4787 = sor.u32 256, 8
        %4788 = vbcast.lane.b32.xlu0 %v4782, %s4787
        %v4789 = vpop.permute.xlu0 %4788
        %v4790 = vsub.f32 %v3465, %v4708
        %v4791 = vsub.f32 %v3470, %v4712
        %v4792 = vsub.f32 %v3552, %v4719
        %v4793 = vsub.f32 %v3557, %v4723
        %v4794 = vsub.f32 %v3639, %v4730
        %v4795 = vsub.f32 %v3644, %v4734
        %v4796 = vsub.f32 %v3726, %v4741
        %v4797 = vsub.f32 %v3731, %v4745
        %v4798 = vsub.f32 %v3813, %v4752
        %v4799 = vsub.f32 %v3818, %v4756
        %v4800 = vsub.f32 %v3900, %v4763
        %v4801 = vsub.f32 %v3905, %v4767
        %v4802 = vsub.f32 %v3987, %v4774
        %v4803 = vsub.f32 %v3992, %v4778
        %v4804 = vsub.f32 %v4074, %v4785
        %v4805 = vsub.f32 %v4079, %v4789
        %v4806 = vmul.f32 %v4790, 1.442695
        %v4807 = vpow.pop %v4806
        %v4808 = vmul.f32 %v4791, 1.442695
        %v4809 = vpow.pop %v4808
        %v4810 = vmul.f32 %v4792, 1.442695
        %v4811 = vpow.pop %v4810
        %v4812 = vmul.f32 %v4793, 1.442695
        %v4813 = vpow.pop %v4812
        %v4814 = vmul.f32 %v4794, 1.442695
        %v4815 = vpow.pop %v4814
        %v4816 = vmul.f32 %v4795, 1.442695
        %v4817 = vpow.pop %v4816
        %v4818 = vmul.f32 %v4796, 1.442695
        %v4819 = vpow.pop %v4818
        %v4820 = vmul.f32 %v4797, 1.442695
        %v4821 = vpow.pop %v4820
        %v4822 = vmul.f32 %v4798, 1.442695
        %v4823 = vpow.pop %v4822
        %v4824 = vmul.f32 %v4799, 1.442695
        %v4825 = vpow.pop %v4824
        %v4826 = vmul.f32 %v4800, 1.442695
        %v4827 = vpow.pop %v4826
        %v4828 = vmul.f32 %v4801, 1.442695
        %v4829 = vpow.pop %v4828
        %v4830 = vmul.f32 %v4802, 1.442695
        %v4831 = vpow.pop %v4830
        %v4832 = vmul.f32 %v4803, 1.442695
        %v4833 = vpow.pop %v4832
        %v4834 = vmul.f32 %v4804, 1.442695
        %v4835 = vpow.pop %v4834
        %v4836 = vmul.f32 %v4805, 1.442695
        %v4837 = vpow.pop %v4836
        %v4838 = vsel %vm4082, %v4559, 0.0
        %4839 = vadd.xlane.f32.xlu0 %v4838
        %v4840 = vpop.xlane.xlu0 %4839
        %v4841 = vsel %vm4082, %v4561, 0.0
        %4842 = vadd.xlane.f32.xlu0 %v4841
        %v4843 = vpop.xlane.xlu0 %4842
        %v4844 = vsel %vm4082, %v4563, 0.0
        %4845 = vadd.xlane.f32.xlu0 %v4844
        %v4846 = vpop.xlane.xlu0 %4845
        %v4847 = vsel %vm4082, %v4565, 0.0
        %4848 = vadd.xlane.f32.xlu0 %v4847
        %v4849 = vpop.xlane.xlu0 %4848
        %v4850 = vsel %vm4082, %v4567, 0.0
        %4851 = vadd.xlane.f32.xlu0 %v4850
        %v4852 = vpop.xlane.xlu0 %4851
        %v4853 = vsel %vm4082, %v4569, 0.0
        %4854 = vadd.xlane.f32.xlu0 %v4853
        %v4855 = vpop.xlane.xlu0 %4854
        %v4856 = vsel %vm4082, %v4571, 0.0
        %4857 = vadd.xlane.f32.xlu0 %v4856
        %v4858 = vpop.xlane.xlu0 %4857
        %v4859 = vsel %vm4082, %v4573, 0.0
        %4860 = vadd.xlane.f32.xlu0 %v4859
        %v4861 = vpop.xlane.xlu0 %4860
        %v4862 = vsel %vm4082, %v4575, 0.0
        %4863 = vadd.xlane.f32.xlu0 %v4862
        %v4864 = vpop.xlane.xlu0 %4863
        %v4865 = vsel %vm4082, %v4577, 0.0
        %4866 = vadd.xlane.f32.xlu0 %v4865
        %v4867 = vpop.xlane.xlu0 %4866
        %v4868 = vsel %vm4082, %v4579, 0.0
        %4869 = vadd.xlane.f32.xlu0 %v4868
        %v4870 = vpop.xlane.xlu0 %4869
        %v4871 = vsel %vm4082, %v4581, 0.0
        %4872 = vadd.xlane.f32.xlu0 %v4871
        %v4873 = vpop.xlane.xlu0 %4872
        %v4874 = vsel %vm4082, %v4583, 0.0
        %4875 = vadd.xlane.f32.xlu0 %v4874
        %v4876 = vpop.xlane.xlu0 %4875
        %v4877 = vsel %vm4082, %v4585, 0.0
        %4878 = vadd.xlane.f32.xlu0 %v4877
        %v4879 = vpop.xlane.xlu0 %4878
        %v4880 = vsel %vm4082, %v4587, 0.0
        %4881 = vadd.xlane.f32.xlu0 %v4880
        %v4882 = vpop.xlane.xlu0 %4881
        %v4883 = vsel %vm4082, %v4589, 0.0
        %4884 = vadd.xlane.f32.xlu0 %v4883
        %v4885 = vpop.xlane.xlu0 %4884
        %v4902 = vlaneseq
        %v4903 = vshrl.u32 %v4902, 7
        %v4904 = vsub.s32 %v3366, %v4903
        %v4905 = vrot.slane %v4840, %v4904
        %v4906 = vlaneseq
        %v4907 = vshrl.u32 %v4906, 7
        %v4908 = vsub.s32 %v3366, %v4907
        %v4909 = vrot.slane %v4843, %v4908
        %v4910 = vlaneseq
        %v4911 = vshrl.u32 %v4910, 7
        %v4912 = vsub.s32 %v3366, %v4911
        %v4913 = vrot.slane %v4846, %v4912
        %v4914 = vlaneseq
        %v4915 = vshrl.u32 %v4914, 7
        %v4916 = vsub.s32 %v3366, %v4915
        %v4917 = vrot.slane %v4849, %v4916
        %v4918 = vlaneseq
        %v4919 = vshrl.u32 %v4918, 7
        %v4920 = vsub.s32 %v3366, %v4919
        %v4921 = vrot.slane %v4852, %v4920
        %v4922 = vlaneseq
        %v4923 = vshrl.u32 %v4922, 7
        %v4924 = vsub.s32 %v3366, %v4923
        %v4925 = vrot.slane %v4855, %v4924
        %v4926 = vlaneseq
        %v4927 = vshrl.u32 %v4926, 7
        %v4928 = vsub.s32 %v3366, %v4927
        %v4929 = vrot.slane %v4858, %v4928
        %v4930 = vlaneseq
        %v4931 = vshrl.u32 %v4930, 7
        %v4932 = vsub.s32 %v3366, %v4931
        %v4933 = vrot.slane %v4861, %v4932
        %v4934 = vlaneseq
        %v4935 = vshrl.u32 %v4934, 7
        %v4936 = vsub.s32 %v3366, %v4935
        %v4937 = vrot.slane %v4864, %v4936
        %v4938 = vlaneseq
        %v4939 = vshrl.u32 %v4938, 7
        %v4940 = vsub.s32 %v3366, %v4939
        %v4941 = vrot.slane %v4867, %v4940
        %v4942 = vlaneseq
        %v4943 = vshrl.u32 %v4942, 7
        %v4944 = vsub.s32 %v3366, %v4943
        %v4945 = vrot.slane %v4870, %v4944
        %v4946 = vlaneseq
        %v4947 = vshrl.u32 %v4946, 7
        %v4948 = vsub.s32 %v3366, %v4947
        %v4949 = vrot.slane %v4873, %v4948
        %v4950 = vlaneseq
        %v4951 = vshrl.u32 %v4950, 7
        %v4952 = vsub.s32 %v3366, %v4951
        %v4953 = vrot.slane %v4876, %v4952
        %v4954 = vlaneseq
        %v4955 = vshrl.u32 %v4954, 7
        %v4956 = vsub.s32 %v3366, %v4955
        %v4957 = vrot.slane %v4879, %v4956
        %v4958 = vlaneseq
        %v4959 = vshrl.u32 %v4958, 7
        %v4960 = vsub.s32 %v3366, %v4959
        %v4961 = vrot.slane %v4882, %v4960
        %v4962 = vlaneseq
        %v4963 = vshrl.u32 %v4962, 7
        %v4964 = vsub.s32 %v3366, %v4963
        %v4965 = vrot.slane %v4885, %v4964
        %v4966 = vsel %vm4269, %v4909, %v4905
        %v4967 = vsel %vm4271, %v4913, %v4966
        %v4968 = vsel %vm4273, %v4917, %v4967
        %v4969 = vsel %vm4275, %v4921, %v4968
        %v4970 = vsel %vm4277, %v4925, %v4969
        %v4971 = vsel %vm4279, %v4929, %v4970
        %v4972 = vsel %vm4281, %v4933, %v4971
        %v4973 = vsel %vm4269, %v4941, %v4937
        %v4974 = vsel %vm4271, %v4945, %v4973
        %v4975 = vsel %vm4273, %v4949, %v4974
        %v4976 = vsel %vm4275, %v4953, %v4975
        %v4977 = vsel %vm4277, %v4957, %v4976
        %v4978 = vsel %vm4279, %v4961, %v4977
        %v4979 = vsel %vm4281, %v4965, %v4978
        %4982 = vxpose.xlu0.b32.start [1/16] %v4972, 128
        %4983 = vxpose.xlu0.b32.cont [2/16] %v4979, 128
        %4984 = vxpose.xlu0.b32.cont [3/16] 0.0, 128
        %4985 = vxpose.xlu0.b32.cont [4/16] 0.0, 128
        %4986 = vxpose.xlu0.b32.cont [5/16] 0.0, 128
        %4987 = vxpose.xlu0.b32.cont [6/16] 0.0, 128
        %4988 = vxpose.xlu0.b32.cont [7/16] 0.0, 128
        %4989 = vxpose.xlu0.b32.cont [8/16] 0.0, 128
        %4990 = vxpose.xlu0.b32.cont [9/16] 0.0, 128
        %4991 = vxpose.xlu0.b32.cont [10/16] 0.0, 128
        %4992 = vxpose.xlu0.b32.cont [11/16] 0.0, 128
        %4993 = vxpose.xlu0.b32.cont [12/16] 0.0, 128
        %4994 = vxpose.xlu0.b32.cont [13/16] 0.0, 128
        %4995 = vxpose.xlu0.b32.cont [14/16] 0.0, 128
        %4996 = vxpose.xlu0.b32.cont [15/16] 0.0, 128
        %4997 = vxpose.xlu0.b32.end [16/16] 0.0, 128
        %v4998 = vpop.trf.xlu0
        %v4999 = vpop.trf.xlu0
        %v5000 = vpop.trf.xlu0
        %v5001 = vpop.trf.xlu0
        %v5002 = vpop.trf.xlu0
        %v5003 = vpop.trf.xlu0
        %v5004 = vpop.trf.xlu0
        %v5005 = vpop.trf.xlu0
        %v5006 = vpop.trf.xlu0
        %v5007 = vpop.trf.xlu0
        %v5008 = vpop.trf.xlu0
        %v5009 = vpop.trf.xlu0
        %v5010 = vpop.trf.xlu0
        %v5011 = vpop.trf.xlu0
        %v5012 = vpop.trf.xlu0
        %v5013 = vpop.trf.xlu0
        %v5014 = vsel %vm4082, %v4807, 0.0
        %5015 = vadd.xlane.f32.xlu0 %v5014
        %v5016 = vpop.xlane.xlu0 %5015
        %v5017 = vsel %vm4082, %v4809, 0.0
        %5018 = vadd.xlane.f32.xlu0 %v5017
        %v5019 = vpop.xlane.xlu0 %5018
        %v5020 = vsel %vm4082, %v4811, 0.0
        %5021 = vadd.xlane.f32.xlu0 %v5020
        %v5022 = vpop.xlane.xlu0 %5021
        %v5023 = vsel %vm4082, %v4813, 0.0
        %5024 = vadd.xlane.f32.xlu0 %v5023
        %v5025 = vpop.xlane.xlu0 %5024
        %v5026 = vsel %vm4082, %v4815, 0.0
        %5027 = vadd.xlane.f32.xlu0 %v5026
        %v5028 = vpop.xlane.xlu0 %5027
        %v5029 = vsel %vm4082, %v4817, 0.0
        %5030 = vadd.xlane.f32.xlu0 %v5029
        %v5031 = vpop.xlane.xlu0 %5030
        %v5032 = vsel %vm4082, %v4819, 0.0
        %5033 = vadd.xlane.f32.xlu0 %v5032
        %v5034 = vpop.xlane.xlu0 %5033
        %v5035 = vsel %vm4082, %v4821, 0.0
        %5036 = vadd.xlane.f32.xlu0 %v5035
        %v5037 = vpop.xlane.xlu0 %5036
        %v5038 = vsel %vm4082, %v4823, 0.0
        %5039 = vadd.xlane.f32.xlu0 %v5038
        %v5040 = vpop.xlane.xlu0 %5039
        %v5041 = vsel %vm4082, %v4825, 0.0
        %5042 = vadd.xlane.f32.xlu0 %v5041
        %v5043 = vpop.xlane.xlu0 %5042
        %v5044 = vsel %vm4082, %v4827, 0.0
        %5045 = vadd.xlane.f32.xlu0 %v5044
        %v5046 = vpop.xlane.xlu0 %5045
        %v5047 = vsel %vm4082, %v4829, 0.0
        %5048 = vadd.xlane.f32.xlu0 %v5047
        %v5049 = vpop.xlane.xlu0 %5048
        %v5050 = vsel %vm4082, %v4831, 0.0
        %5051 = vadd.xlane.f32.xlu0 %v5050
        %v5052 = vpop.xlane.xlu0 %5051
        %v5053 = vsel %vm4082, %v4833, 0.0
        %5054 = vadd.xlane.f32.xlu0 %v5053
        %v5055 = vpop.xlane.xlu0 %5054
        %v5056 = vsel %vm4082, %v4835, 0.0
        %5057 = vadd.xlane.f32.xlu0 %v5056
        %v5058 = vpop.xlane.xlu0 %5057
        %v5059 = vsel %vm4082, %v4837, 0.0
        %5060 = vadd.xlane.f32.xlu0 %v5059
        %v5061 = vpop.xlane.xlu0 %5060
        %v5078 = vlaneseq
        %v5079 = vshrl.u32 %v5078, 7
        %v5080 = vsub.s32 %v3366, %v5079
        %v5081 = vrot.slane %v5016, %v5080
        %v5082 = vlaneseq
        %v5083 = vshrl.u32 %v5082, 7
        %v5084 = vsub.s32 %v4199, %v5083
        %v5085 = vrot.slane %v5019, %v5084
        %v5086 = vsel %vm4204, %v5085, %v5081
        %v5087 = vlaneseq
        %v5088 = vshrl.u32 %v5087, 7
        %v5089 = vsub.s32 %v3366, %v5088
        %v5090 = vrot.slane %v5022, %v5089
        %v5091 = vlaneseq
        %v5092 = vshrl.u32 %v5091, 7
        %v5093 = vsub.s32 %v4199, %v5092
        %v5094 = vrot.slane %v5025, %v5093
        %v5095 = vsel %vm4204, %v5094, %v5090
        %v5096 = vlaneseq
        %v5097 = vshrl.u32 %v5096, 7
        %v5098 = vsub.s32 %v3366, %v5097
        %v5099 = vrot.slane %v5028, %v5098
        %v5100 = vlaneseq
        %v5101 = vshrl.u32 %v5100, 7
        %v5102 = vsub.s32 %v4199, %v5101
        %v5103 = vrot.slane %v5031, %v5102
        %v5104 = vsel %vm4204, %v5103, %v5099
        %v5105 = vlaneseq
        %v5106 = vshrl.u32 %v5105, 7
        %v5107 = vsub.s32 %v3366, %v5106
        %v5108 = vrot.slane %v5034, %v5107
        %v5109 = vlaneseq
        %v5110 = vshrl.u32 %v5109, 7
        %v5111 = vsub.s32 %v4199, %v5110
        %v5112 = vrot.slane %v5037, %v5111
        %v5113 = vsel %vm4204, %v5112, %v5108
        %v5114 = vlaneseq
        %v5115 = vshrl.u32 %v5114, 7
        %v5116 = vsub.s32 %v3366, %v5115
        %v5117 = vrot.slane %v5040, %v5116
        %v5118 = vlaneseq
        %v5119 = vshrl.u32 %v5118, 7
        %v5120 = vsub.s32 %v4199, %v5119
        %v5121 = vrot.slane %v5043, %v5120
        %v5122 = vsel %vm4204, %v5121, %v5117
        %v5123 = vlaneseq
        %v5124 = vshrl.u32 %v5123, 7
        %v5125 = vsub.s32 %v3366, %v5124
        %v5126 = vrot.slane %v5046, %v5125
        %v5127 = vlaneseq
        %v5128 = vshrl.u32 %v5127, 7
        %v5129 = vsub.s32 %v4199, %v5128
        %v5130 = vrot.slane %v5049, %v5129
        %v5131 = vsel %vm4204, %v5130, %v5126
        %v5132 = vlaneseq
        %v5133 = vshrl.u32 %v5132, 7
        %v5134 = vsub.s32 %v3366, %v5133
        %v5135 = vrot.slane %v5052, %v5134
        %v5136 = vlaneseq
        %v5137 = vshrl.u32 %v5136, 7
        %v5138 = vsub.s32 %v4199, %v5137
        %v5139 = vrot.slane %v5055, %v5138
        %v5140 = vsel %vm4204, %v5139, %v5135
        %v5141 = vlaneseq
        %v5142 = vshrl.u32 %v5141, 7
        %v5143 = vsub.s32 %v3366, %v5142
        %v5144 = vrot.slane %v5058, %v5143
        %v5145 = vlaneseq
        %v5146 = vshrl.u32 %v5145, 7
        %v5147 = vsub.s32 %v4199, %v5146
        %v5148 = vrot.slane %v5061, %v5147
        %v5149 = vsel %vm4204, %v5148, %v5144
        %v5150 = vsel %vm4269, %v5095, %v5086
        %v5151 = vsel %vm4271, %v5104, %v5150
        %v5152 = vsel %vm4273, %v5113, %v5151
        %v5153 = vsel %vm4275, %v5122, %v5152
        %v5154 = vsel %vm4277, %v5131, %v5153
        %v5155 = vsel %vm4279, %v5140, %v5154
        %v5156 = vsel %vm4281, %v5149, %v5155
        %v5158 = vadd.f32 %v4998, %v5156
        %s5159 = sld [smem:[#allocation7]]
        %v5160 = vstv %s5159
        %v5161 = vrcp.pop %v5158
        %v5162 = vmul.f32 %v5160, %v5161
        %v5164 = vsel %vm4082, %v4559, 0
        %5166 = vmatprep.subr.mxu0 0.0
        %5167 = vmatpush1.msra.mxu0 %v1775
        %5168 = vmatprep.subr.mxu0 0.0
        %5169 = vmatpush1.msra.mxu0 %v1776
        %5170 = vmatprep.subr.mxu0 0.0
        %5171 = vmatpush1.msra.mxu0 0.0
        %5172 = vmatprep.subr.mxu0 0.0
        %5173 = vmatpush1.msra.mxu0 0.0
        %5174 = vmatprep.subr.mxu0 0.0
        %5175 = vmatpush1.msra.mxu0 0.0
        %5176 = vmatprep.subr.mxu0 0.0
        %5177 = vmatpush1.msra.mxu0 0.0
        %5178 = vmatprep.subr.mxu0 0.0
        %5179 = vmatpush1.msra.mxu0 0.0
        %5180 = vmatprep.subr.mxu0 0.0
        %5181 = vmatpush1.msra.mxu0 0.0
        %5182 = vmatprep.subr.mxu0 0.0
        %5183 = vmatpush1.msra.mxu0 0.0
        %5184 = vmatprep.subr.mxu0 0.0
        %5185 = vmatpush1.msra.mxu0 0.0
        %5186 = vmatprep.subr.mxu0 0.0
        %5187 = vmatpush1.msra.mxu0 0.0
        %5188 = vmatprep.subr.mxu0 0.0
        %5189 = vmatpush1.msra.mxu0 0.0
        %5190 = vmatprep.subr.mxu0 0.0
        %5191 = vmatpush1.msra.mxu0 0.0
        %5192 = vmatprep.subr.mxu0 0.0
        %5193 = vmatpush1.msra.mxu0 0.0
        %5194 = vmatprep.subr.mxu0 0.0
        %5195 = vmatpush1.msra.mxu0 0.0
        %5196 = vmatprep.subr.mxu0 0.0
        %5197 = vmatpush1.msra.mxu0 0.0
        %5198 = vmatprep.subr.mxu0 0.0
        %5199 = vmatpush1.msra.mxu0 0.0
        %5200 = vmatprep.subr.mxu0 0.0
        %5201 = vmatpush1.msra.mxu0 0.0
        %5202 = vmatprep.subr.mxu0 0.0
        %5203 = vmatpush1.msra.mxu0 0.0
        %5204 = vmatprep.subr.mxu0 0.0
        %5205 = vmatpush1.msra.mxu0 0.0
        %5206 = vmatprep.subr.mxu0 0.0
        %5207 = vmatpush1.msra.mxu0 0.0
        %5208 = vmatprep.subr.mxu0 0.0
        %5209 = vmatpush1.msra.mxu0 0.0
        %5210 = vmatprep.subr.mxu0 0.0
        %5211 = vmatpush1.msra.mxu0 0.0
        %5212 = vmatprep.subr.mxu0 0.0
        %5213 = vmatpush1.msra.mxu0 0.0
        %5214 = vmatprep.subr.mxu0 0.0
        %5215 = vmatpush1.msra.mxu0 0.0
        %5216 = vmatprep.subr.mxu0 0.0
        %5217 = vmatpush1.msra.mxu0 0.0
        %5218 = vmatprep.subr.mxu0 0.0
        %5219 = vmatpush1.msra.mxu0 0.0
        %5220 = vmatprep.subr.mxu0 0.0
        %5221 = vmatpush1.msra.mxu0 0.0
        %5222 = vmatprep.subr.mxu0 0.0
        %5223 = vmatpush1.msra.mxu0 0.0
        %5224 = vmatprep.subr.mxu0 0.0
        %5225 = vmatpush1.msra.mxu0 0.0
        %5226 = vmatprep.subr.mxu0 0.0
        %5227 = vmatpush1.msra.mxu0 0.0
        %5228 = vmatprep.subr.mxu0 0.0
        %5229 = vmatpush1.msra.mxu0 0.0
        %5230 = vmatprep.mubr.f32.mxu0 0.0
        %5231 = vmatmul.mubr.f32.gmra.mrb[0].mxu0 %v5164
        %v5232 = vpop.f32.mrb[0].mxu0
        %v5233 = vadd.f32 0.0, %v5232
        %v5234 = vpop.f32.mrb[0].mxu0
        %5235 = vdwg.mxu0
        %v5237 = vsel %vm4082, %v4561, 0
        %5239 = vmatprep.subr.mxu0 0.0
        %5240 = vmatpush1.msra.mxu0 %v1777
        %5241 = vmatprep.subr.mxu0 0.0
        %5242 = vmatpush1.msra.mxu0 %v1778
        %5243 = vmatprep.subr.mxu0 0.0
        %5244 = vmatpush1.msra.mxu0 0.0
        %5245 = vmatprep.subr.mxu0 0.0
        %5246 = vmatpush1.msra.mxu0 0.0
        %5247 = vmatprep.subr.mxu0 0.0
        %5248 = vmatpush1.msra.mxu0 0.0
        %5249 = vmatprep.subr.mxu0 0.0
        %5250 = vmatpush1.msra.mxu0 0.0
        %5251 = vmatprep.subr.mxu0 0.0
        %5252 = vmatpush1.msra.mxu0 0.0
        %5253 = vmatprep.subr.mxu0 0.0
        %5254 = vmatpush1.msra.mxu0 0.0
        %5255 = vmatprep.subr.mxu0 0.0
        %5256 = vmatpush1.msra.mxu0 0.0
        %5257 = vmatprep.subr.mxu0 0.0
        %5258 = vmatpush1.msra.mxu0 0.0
        %5259 = vmatprep.subr.mxu0 0.0
        %5260 = vmatpush1.msra.mxu0 0.0
        %5261 = vmatprep.subr.mxu0 0.0
        %5262 = vmatpush1.msra.mxu0 0.0
        %5263 = vmatprep.subr.mxu0 0.0
        %5264 = vmatpush1.msra.mxu0 0.0
        %5265 = vmatprep.subr.mxu0 0.0
        %5266 = vmatpush1.msra.mxu0 0.0
        %5267 = vmatprep.subr.mxu0 0.0
        %5268 = vmatpush1.msra.mxu0 0.0
        %5269 = vmatprep.subr.mxu0 0.0
        %5270 = vmatpush1.msra.mxu0 0.0
        %5271 = vmatprep.subr.mxu0 0.0
        %5272 = vmatpush1.msra.mxu0 0.0
        %5273 = vmatprep.subr.mxu0 0.0
        %5274 = vmatpush1.msra.mxu0 0.0
        %5275 = vmatprep.subr.mxu0 0.0
        %5276 = vmatpush1.msra.mxu0 0.0
        %5277 = vmatprep.subr.mxu0 0.0
        %5278 = vmatpush1.msra.mxu0 0.0
        %5279 = vmatprep.subr.mxu0 0.0
        %5280 = vmatpush1.msra.mxu0 0.0
        %5281 = vmatprep.subr.mxu0 0.0
        %5282 = vmatpush1.msra.mxu0 0.0
        %5283 = vmatprep.subr.mxu0 0.0
        %5284 = vmatpush1.msra.mxu0 0.0
        %5285 = vmatprep.subr.mxu0 0.0
        %5286 = vmatpush1.msra.mxu0 0.0
        %5287 = vmatprep.subr.mxu0 0.0
        %5288 = vmatpush1.msra.mxu0 0.0
        %5289 = vmatprep.subr.mxu0 0.0
        %5290 = vmatpush1.msra.mxu0 0.0
        %5291 = vmatprep.subr.mxu0 0.0
        %5292 = vmatpush1.msra.mxu0 0.0
        %5293 = vmatprep.subr.mxu0 0.0
        %5294 = vmatpush1.msra.mxu0 0.0
        %5295 = vmatprep.subr.mxu0 0.0
        %5296 = vmatpush1.msra.mxu0 0.0
        %5297 = vmatprep.subr.mxu0 0.0
        %5298 = vmatpush1.msra.mxu0 0.0
        %5299 = vmatprep.subr.mxu0 0.0
        %5300 = vmatpush1.msra.mxu0 0.0
        %5301 = vmatprep.subr.mxu0 0.0
        %5302 = vmatpush1.msra.mxu0 0.0
        %5303 = vmatprep.mubr.f32.mxu0 0.0
        %5304 = vmatmul.mubr.f32.gmra.mrb[0].mxu0 %v5237
        %v5305 = vpop.f32.mrb[0].mxu0
        %v5306 = vadd.f32 0.0, %v5305
        %v5307 = vpop.f32.mrb[0].mxu0
        %5308 = vdwg.mxu0
        %v5310 = vsel %vm4082, %v4563, 0
        %5312 = vmatprep.subr.mxu0 0.0
        %5313 = vmatpush1.msra.mxu0 %v1779
        %5314 = vmatprep.subr.mxu0 0.0
        %5315 = vmatpush1.msra.mxu0 %v1780
        %5316 = vmatprep.subr.mxu0 0.0
        %5317 = vmatpush1.msra.mxu0 0.0
        %5318 = vmatprep.subr.mxu0 0.0
        %5319 = vmatpush1.msra.mxu0 0.0
        %5320 = vmatprep.subr.mxu0 0.0
        %5321 = vmatpush1.msra.mxu0 0.0
        %5322 = vmatprep.subr.mxu0 0.0
        %5323 = vmatpush1.msra.mxu0 0.0
        %5324 = vmatprep.subr.mxu0 0.0
        %5325 = vmatpush1.msra.mxu0 0.0
        %5326 = vmatprep.subr.mxu0 0.0
        %5327 = vmatpush1.msra.mxu0 0.0
        %5328 = vmatprep.subr.mxu0 0.0
        %5329 = vmatpush1.msra.mxu0 0.0
        %5330 = vmatprep.subr.mxu0 0.0
        %5331 = vmatpush1.msra.mxu0 0.0
        %5332 = vmatprep.subr.mxu0 0.0
        %5333 = vmatpush1.msra.mxu0 0.0
        %5334 = vmatprep.subr.mxu0 0.0
        %5335 = vmatpush1.msra.mxu0 0.0
        %5336 = vmatprep.subr.mxu0 0.0
        %5337 = vmatpush1.msra.mxu0 0.0
        %5338 = vmatprep.subr.mxu0 0.0
        %5339 = vmatpush1.msra.mxu0 0.0
        %5340 = vmatprep.subr.mxu0 0.0
        %5341 = vmatpush1.msra.mxu0 0.0
        %5342 = vmatprep.subr.mxu0 0.0
        %5343 = vmatpush1.msra.mxu0 0.0
        %5344 = vmatprep.subr.mxu0 0.0
        %5345 = vmatpush1.msra.mxu0 0.0
        %5346 = vmatprep.subr.mxu0 0.0
        %5347 = vmatpush1.msra.mxu0 0.0
        %5348 = vmatprep.subr.mxu0 0.0
        %5349 = vmatpush1.msra.mxu0 0.0
        %5350 = vmatprep.subr.mxu0 0.0
        %5351 = vmatpush1.msra.mxu0 0.0
        %5352 = vmatprep.subr.mxu0 0.0
        %5353 = vmatpush1.msra.mxu0 0.0
        %5354 = vmatprep.subr.mxu0 0.0
        %5355 = vmatpush1.msra.mxu0 0.0
        %5356 = vmatprep.subr.mxu0 0.0
        %5357 = vmatpush1.msra.mxu0 0.0
        %5358 = vmatprep.subr.mxu0 0.0
        %5359 = vmatpush1.msra.mxu0 0.0
        %5360 = vmatprep.subr.mxu0 0.0
        %5361 = vmatpush1.msra.mxu0 0.0
        %5362 = vmatprep.subr.mxu0 0.0
        %5363 = vmatpush1.msra.mxu0 0.0
        %5364 = vmatprep.subr.mxu0 0.0
        %5365 = vmatpush1.msra.mxu0 0.0
        %5366 = vmatprep.subr.mxu0 0.0
        %5367 = vmatpush1.msra.mxu0 0.0
        %5368 = vmatprep.subr.mxu0 0.0
        %5369 = vmatpush1.msra.mxu0 0.0
        %5370 = vmatprep.subr.mxu0 0.0
        %5371 = vmatpush1.msra.mxu0 0.0
        %5372 = vmatprep.subr.mxu0 0.0
        %5373 = vmatpush1.msra.mxu0 0.0
        %5374 = vmatprep.subr.mxu0 0.0
        %5375 = vmatpush1.msra.mxu0 0.0
        %5376 = vmatprep.mubr.f32.mxu0 0.0
        %5377 = vmatmul.mubr.f32.gmra.mrb[0].mxu0 %v5310
        %v5378 = vpop.f32.mrb[0].mxu0
        %v5379 = vadd.f32 0.0, %v5378
        %v5380 = vpop.f32.mrb[0].mxu0
        %5381 = vdwg.mxu0
        %v5383 = vsel %vm4082, %v4565, 0
        %5385 = vmatprep.subr.mxu0 0.0
        %5386 = vmatpush1.msra.mxu0 %v1781
        %5387 = vmatprep.subr.mxu0 0.0
        %5388 = vmatpush1.msra.mxu0 %v1782
        %5389 = vmatprep.subr.mxu0 0.0
        %5390 = vmatpush1.msra.mxu0 0.0
        %5391 = vmatprep.subr.mxu0 0.0
        %5392 = vmatpush1.msra.mxu0 0.0
        %5393 = vmatprep.subr.mxu0 0.0
        %5394 = vmatpush1.msra.mxu0 0.0
        %5395 = vmatprep.subr.mxu0 0.0
        %5396 = vmatpush1.msra.mxu0 0.0
        %5397 = vmatprep.subr.mxu0 0.0
        %5398 = vmatpush1.msra.mxu0 0.0
        %5399 = vmatprep.subr.mxu0 0.0
        %5400 = vmatpush1.msra.mxu0 0.0
        %5401 = vmatprep.subr.mxu0 0.0
        %5402 = vmatpush1.msra.mxu0 0.0
        %5403 = vmatprep.subr.mxu0 0.0
        %5404 = vmatpush1.msra.mxu0 0.0
        %5405 = vmatprep.subr.mxu0 0.0
        %5406 = vmatpush1.msra.mxu0 0.0
        %5407 = vmatprep.subr.mxu0 0.0
        %5408 = vmatpush1.msra.mxu0 0.0
        %5409 = vmatprep.subr.mxu0 0.0
        %5410 = vmatpush1.msra.mxu0 0.0
        %5411 = vmatprep.subr.mxu0 0.0
        %5412 = vmatpush1.msra.mxu0 0.0
        %5413 = vmatprep.subr.mxu0 0.0
        %5414 = vmatpush1.msra.mxu0 0.0
        %5415 = vmatprep.subr.mxu0 0.0
        %5416 = vmatpush1.msra.mxu0 0.0
        %5417 = vmatprep.subr.mxu0 0.0
        %5418 = vmatpush1.msra.mxu0 0.0
        %5419 = vmatprep.subr.mxu0 0.0
        %5420 = vmatpush1.msra.mxu0 0.0
        %5421 = vmatprep.subr.mxu0 0.0
        %5422 = vmatpush1.msra.mxu0 0.0
        %5423 = vmatprep.subr.mxu0 0.0
        %5424 = vmatpush1.msra.mxu0 0.0
        %5425 = vmatprep.subr.mxu0 0.0
        %5426 = vmatpush1.msra.mxu0 0.0
        %5427 = vmatprep.subr.mxu0 0.0
        %5428 = vmatpush1.msra.mxu0 0.0
        %5429 = vmatprep.subr.mxu0 0.0
        %5430 = vmatpush1.msra.mxu0 0.0
        %5431 = vmatprep.subr.mxu0 0.0
        %5432 = vmatpush1.msra.mxu0 0.0
        %5433 = vmatprep.subr.mxu0 0.0
        %5434 = vmatpush1.msra.mxu0 0.0
        %5435 = vmatprep.subr.mxu0 0.0
        %5436 = vmatpush1.msra.mxu0 0.0
        %5437 = vmatprep.subr.mxu0 0.0
        %5438 = vmatpush1.msra.mxu0 0.0
        %5439 = vmatprep.subr.mxu0 0.0
        %5440 = vmatpush1.msra.mxu0 0.0
        %5441 = vmatprep.subr.mxu0 0.0
        %5442 = vmatpush1.msra.mxu0 0.0
        %5443 = vmatprep.subr.mxu0 0.0
        %5444 = vmatpush1.msra.mxu0 0.0
        %5445 = vmatprep.subr.mxu0 0.0
        %5446 = vmatpush1.msra.mxu0 0.0
        %5447 = vmatprep.subr.mxu0 0.0
        %5448 = vmatpush1.msra.mxu0 0.0
        %5449 = vmatprep.mubr.f32.mxu0 0.0
        %5450 = vmatmul.mubr.f32.gmra.mrb[0].mxu0 %v5383
        %v5451 = vpop.f32.mrb[0].mxu0
        %v5452 = vadd.f32 0.0, %v5451
        %v5453 = vpop.f32.mrb[0].mxu0
        %5454 = vdwg.mxu0
        %v5456 = vsel %vm4082, %v4567, 0
        %5458 = vmatprep.subr.mxu0 0.0
        %5459 = vmatpush1.msra.mxu0 %v1783
        %5460 = vmatprep.subr.mxu0 0.0
        %5461 = vmatpush1.msra.mxu0 %v1784
        %5462 = vmatprep.subr.mxu0 0.0
        %5463 = vmatpush1.msra.mxu0 0.0
        %5464 = vmatprep.subr.mxu0 0.0
        %5465 = vmatpush1.msra.mxu0 0.0
        %5466 = vmatprep.subr.mxu0 0.0
        %5467 = vmatpush1.msra.mxu0 0.0
        %5468 = vmatprep.subr.mxu0 0.0
        %5469 = vmatpush1.msra.mxu0 0.0
        %5470 = vmatprep.subr.mxu0 0.0
        %5471 = vmatpush1.msra.mxu0 0.0
        %5472 = vmatprep.subr.mxu0 0.0
        %5473 = vmatpush1.msra.mxu0 0.0
        %5474 = vmatprep.subr.mxu0 0.0
        %5475 = vmatpush1.msra.mxu0 0.0
        %5476 = vmatprep.subr.mxu0 0.0
        %5477 = vmatpush1.msra.mxu0 0.0
        %5478 = vmatprep.subr.mxu0 0.0
        %5479 = vmatpush1.msra.mxu0 0.0
        %5480 = vmatprep.subr.mxu0 0.0
        %5481 = vmatpush1.msra.mxu0 0.0
        %5482 = vmatprep.subr.mxu0 0.0
        %5483 = vmatpush1.msra.mxu0 0.0
        %5484 = vmatprep.subr.mxu0 0.0
        %5485 = vmatpush1.msra.mxu0 0.0
        %5486 = vmatprep.subr.mxu0 0.0
        %5487 = vmatpush1.msra.mxu0 0.0
        %5488 = vmatprep.subr.mxu0 0.0
        %5489 = vmatpush1.msra.mxu0 0.0
        %5490 = vmatprep.subr.mxu0 0.0
        %5491 = vmatpush1.msra.mxu0 0.0
        %5492 = vmatprep.subr.mxu0 0.0
        %5493 = vmatpush1.msra.mxu0 0.0
        %5494 = vmatprep.subr.mxu0 0.0
        %5495 = vmatpush1.msra.mxu0 0.0
        %5496 = vmatprep.subr.mxu0 0.0
        %5497 = vmatpush1.msra.mxu0 0.0
        %5498 = vmatprep.subr.mxu0 0.0
        %5499 = vmatpush1.msra.mxu0 0.0
        %5500 = vmatprep.subr.mxu0 0.0
        %5501 = vmatpush1.msra.mxu0 0.0
        %5502 = vmatprep.subr.mxu0 0.0
        %5503 = vmatpush1.msra.mxu0 0.0
        %5504 = vmatprep.subr.mxu0 0.0
        %5505 = vmatpush1.msra.mxu0 0.0
        %5506 = vmatprep.subr.mxu0 0.0
        %5507 = vmatpush1.msra.mxu0 0.0
        %5508 = vmatprep.subr.mxu0 0.0
        %5509 = vmatpush1.msra.mxu0 0.0
        %5510 = vmatprep.subr.mxu0 0.0
        %5511 = vmatpush1.msra.mxu0 0.0
        %5512 = vmatprep.subr.mxu0 0.0
        %5513 = vmatpush1.msra.mxu0 0.0
        %5514 = vmatprep.subr.mxu0 0.0
        %5515 = vmatpush1.msra.mxu0 0.0
        %5516 = vmatprep.subr.mxu0 0.0
        %5517 = vmatpush1.msra.mxu0 0.0
        %5518 = vmatprep.subr.mxu0 0.0
        %5519 = vmatpush1.msra.mxu0 0.0
        %5520 = vmatprep.subr.mxu0 0.0
        %5521 = vmatpush1.msra.mxu0 0.0
        %5522 = vmatprep.mubr.f32.mxu0 0.0
        %5523 = vmatmul.mubr.f32.gmra.mrb[0].mxu0 %v5456
        %v5524 = vpop.f32.mrb[0].mxu0
        %v5525 = vadd.f32 0.0, %v5524
        %v5526 = vpop.f32.mrb[0].mxu0
        %5527 = vdwg.mxu0
        %v5529 = vsel %vm4082, %v4569, 0
        %5531 = vmatprep.subr.mxu0 0.0
        %5532 = vmatpush1.msra.mxu0 %v1785
        %5533 = vmatprep.subr.mxu0 0.0
        %5534 = vmatpush1.msra.mxu0 %v1786
        %5535 = vmatprep.subr.mxu0 0.0
        %5536 = vmatpush1.msra.mxu0 0.0
        %5537 = vmatprep.subr.mxu0 0.0
        %5538 = vmatpush1.msra.mxu0 0.0
        %5539 = vmatprep.subr.mxu0 0.0
        %5540 = vmatpush1.msra.mxu0 0.0
        %5541 = vmatprep.subr.mxu0 0.0
        %5542 = vmatpush1.msra.mxu0 0.0
        %5543 = vmatprep.subr.mxu0 0.0
        %5544 = vmatpush1.msra.mxu0 0.0
        %5545 = vmatprep.subr.mxu0 0.0
        %5546 = vmatpush1.msra.mxu0 0.0
        %5547 = vmatprep.subr.mxu0 0.0
        %5548 = vmatpush1.msra.mxu0 0.0
        %5549 = vmatprep.subr.mxu0 0.0
        %5550 = vmatpush1.msra.mxu0 0.0
        %5551 = vmatprep.subr.mxu0 0.0
        %5552 = vmatpush1.msra.mxu0 0.0
        %5553 = vmatprep.subr.mxu0 0.0
        %5554 = vmatpush1.msra.mxu0 0.0
        %5555 = vmatprep.subr.mxu0 0.0
        %5556 = vmatpush1.msra.mxu0 0.0
        %5557 = vmatprep.subr.mxu0 0.0
        %5558 = vmatpush1.msra.mxu0 0.0
        %5559 = vmatprep.subr.mxu0 0.0
        %5560 = vmatpush1.msra.mxu0 0.0
        %5561 = vmatprep.subr.mxu0 0.0
        %5562 = vmatpush1.msra.mxu0 0.0
        %5563 = vmatprep.subr.mxu0 0.0
        %5564 = vmatpush1.msra.mxu0 0.0
        %5565 = vmatprep.subr.mxu0 0.0
        %5566 = vmatpush1.msra.mxu0 0.0
        %5567 = vmatprep.subr.mxu0 0.0
        %5568 = vmatpush1.msra.mxu0 0.0
        %5569 = vmatprep.subr.mxu0 0.0
        %5570 = vmatpush1.msra.mxu0 0.0
        %5571 = vmatprep.subr.mxu0 0.0
        %5572 = vmatpush1.msra.mxu0 0.0
        %5573 = vmatprep.subr.mxu0 0.0
        %5574 = vmatpush1.msra.mxu0 0.0
        %5575 = vmatprep.subr.mxu0 0.0
        %5576 = vmatpush1.msra.mxu0 0.0
        %5577 = vmatprep.subr.mxu0 0.0
        %5578 = vmatpush1.msra.mxu0 0.0
        %5579 = vmatprep.subr.mxu0 0.0
        %5580 = vmatpush1.msra.mxu0 0.0
        %5581 = vmatprep.subr.mxu0 0.0
        %5582 = vmatpush1.msra.mxu0 0.0
        %5583 = vmatprep.subr.mxu0 0.0
        %5584 = vmatpush1.msra.mxu0 0.0
        %5585 = vmatprep.subr.mxu0 0.0
        %5586 = vmatpush1.msra.mxu0 0.0
        %5587 = vmatprep.subr.mxu0 0.0
        %5588 = vmatpush1.msra.mxu0 0.0
        %5589 = vmatprep.subr.mxu0 0.0
        %5590 = vmatpush1.msra.mxu0 0.0
        %5591 = vmatprep.subr.mxu0 0.0
        %5592 = vmatpush1.msra.mxu0 0.0
        %5593 = vmatprep.subr.mxu0 0.0
        %5594 = vmatpush1.msra.mxu0 0.0
        %5595 = vmatprep.mubr.f32.mxu0 0.0
        %5596 = vmatmul.mubr.f32.gmra.mrb[0].mxu0 %v5529
        %v5597 = vpop.f32.mrb[0].mxu0
        %v5598 = vadd.f32 0.0, %v5597
        %v5599 = vpop.f32.mrb[0].mxu0
        %5600 = vdwg.mxu0
        %v5602 = vsel %vm4082, %v4571, 0
        %5604 = vmatprep.subr.mxu0 0.0
        %5605 = vmatpush1.msra.mxu0 %v1787
        %5606 = vmatprep.subr.mxu0 0.0
        %5607 = vmatpush1.msra.mxu0 %v1788
        %5608 = vmatprep.subr.mxu0 0.0
        %5609 = vmatpush1.msra.mxu0 0.0
        %5610 = vmatprep.subr.mxu0 0.0
        %5611 = vmatpush1.msra.mxu0 0.0
        %5612 = vmatprep.subr.mxu0 0.0
        %5613 = vmatpush1.msra.mxu0 0.0
        %5614 = vmatprep.subr.mxu0 0.0
        %5615 = vmatpush1.msra.mxu0 0.0
        %5616 = vmatprep.subr.mxu0 0.0
        %5617 = vmatpush1.msra.mxu0 0.0
        %5618 = vmatprep.subr.mxu0 0.0
        %5619 = vmatpush1.msra.mxu0 0.0
        %5620 = vmatprep.subr.mxu0 0.0
        %5621 = vmatpush1.msra.mxu0 0.0
        %5622 = vmatprep.subr.mxu0 0.0
        %5623 = vmatpush1.msra.mxu0 0.0
        %5624 = vmatprep.subr.mxu0 0.0
        %5625 = vmatpush1.msra.mxu0 0.0
        %5626 = vmatprep.subr.mxu0 0.0
        %5627 = vmatpush1.msra.mxu0 0.0
        %5628 = vmatprep.subr.mxu0 0.0
        %5629 = vmatpush1.msra.mxu0 0.0
        %5630 = vmatprep.subr.mxu0 0.0
        %5631 = vmatpush1.msra.mxu0 0.0
        %5632 = vmatprep.subr.mxu0 0.0
        %5633 = vmatpush1.msra.mxu0 0.0
        %5634 = vmatprep.subr.mxu0 0.0
        %5635 = vmatpush1.msra.mxu0 0.0
        %5636 = vmatprep.subr.mxu0 0.0
        %5637 = vmatpush1.msra.mxu0 0.0
        %5638 = vmatprep.subr.mxu0 0.0
        %5639 = vmatpush1.msra.mxu0 0.0
        %5640 = vmatprep.subr.mxu0 0.0
        %5641 = vmatpush1.msra.mxu0 0.0
        %5642 = vmatprep.subr.mxu0 0.0
        %5643 = vmatpush1.msra.mxu0 0.0
        %5644 = vmatprep.subr.mxu0 0.0
        %5645 = vmatpush1.msra.mxu0 0.0
        %5646 = vmatprep.subr.mxu0 0.0
        %5647 = vmatpush1.msra.mxu0 0.0
        %5648 = vmatprep.subr.mxu0 0.0
        %5649 = vmatpush1.msra.mxu0 0.0
        %5650 = vmatprep.subr.mxu0 0.0
        %5651 = vmatpush1.msra.mxu0 0.0
        %5652 = vmatprep.subr.mxu0 0.0
        %5653 = vmatpush1.msra.mxu0 0.0
        %5654 = vmatprep.subr.mxu0 0.0
        %5655 = vmatpush1.msra.mxu0 0.0
        %5656 = vmatprep.subr.mxu0 0.0
        %5657 = vmatpush1.msra.mxu0 0.0
        %5658 = vmatprep.subr.mxu0 0.0
        %5659 = vmatpush1.msra.mxu0 0.0
        %5660 = vmatprep.subr.mxu0 0.0
        %5661 = vmatpush1.msra.mxu0 0.0
        %5662 = vmatprep.subr.mxu0 0.0
        %5663 = vmatpush1.msra.mxu0 0.0
        %5664 = vmatprep.subr.mxu0 0.0
        %5665 = vmatpush1.msra.mxu0 0.0
        %5666 = vmatprep.subr.mxu0 0.0
        %5667 = vmatpush1.msra.mxu0 0.0
        %5668 = vmatprep.mubr.f32.mxu0 0.0
        %5669 = vmatmul.mubr.f32.gmra.mrb[0].mxu0 %v5602
        %v5670 = vpop.f32.mrb[0].mxu0
        %v5671 = vadd.f32 0.0, %v5670
        %v5672 = vpop.f32.mrb[0].mxu0
        %5673 = vdwg.mxu0
        %v5675 = vsel %vm4082, %v4573, 0
        %5677 = vmatprep.subr.mxu0 0.0
        %5678 = vmatpush1.msra.mxu0 %v1789
        %5679 = vmatprep.subr.mxu0 0.0
        %5680 = vmatpush1.msra.mxu0 %v1790
        %5681 = vmatprep.subr.mxu0 0.0
        %5682 = vmatpush1.msra.mxu0 0.0
        %5683 = vmatprep.subr.mxu0 0.0
        %5684 = vmatpush1.msra.mxu0 0.0
        %5685 = vmatprep.subr.mxu0 0.0
        %5686 = vmatpush1.msra.mxu0 0.0
        %5687 = vmatprep.subr.mxu0 0.0
        %5688 = vmatpush1.msra.mxu0 0.0
        %5689 = vmatprep.subr.mxu0 0.0
        %5690 = vmatpush1.msra.mxu0 0.0
        %5691 = vmatprep.subr.mxu0 0.0
        %5692 = vmatpush1.msra.mxu0 0.0
        %5693 = vmatprep.subr.mxu0 0.0
        %5694 = vmatpush1.msra.mxu0 0.0
        %5695 = vmatprep.subr.mxu0 0.0
        %5696 = vmatpush1.msra.mxu0 0.0
        %5697 = vmatprep.subr.mxu0 0.0
        %5698 = vmatpush1.msra.mxu0 0.0
        %5699 = vmatprep.subr.mxu0 0.0
        %5700 = vmatpush1.msra.mxu0 0.0
        %5701 = vmatprep.subr.mxu0 0.0
        %5702 = vmatpush1.msra.mxu0 0.0
        %5703 = vmatprep.subr.mxu0 0.0
        %5704 = vmatpush1.msra.mxu0 0.0
        %5705 = vmatprep.subr.mxu0 0.0
        %5706 = vmatpush1.msra.mxu0 0.0
        %5707 = vmatprep.subr.mxu0 0.0
        %5708 = vmatpush1.msra.mxu0 0.0
        %5709 = vmatprep.subr.mxu0 0.0
        %5710 = vmatpush1.msra.mxu0 0.0
        %5711 = vmatprep.subr.mxu0 0.0
        %5712 = vmatpush1.msra.mxu0 0.0
        %5713 = vmatprep.subr.mxu0 0.0
        %5714 = vmatpush1.msra.mxu0 0.0
        %5715 = vmatprep.subr.mxu0 0.0
        %5716 = vmatpush1.msra.mxu0 0.0
        %5717 = vmatprep.subr.mxu0 0.0
        %5718 = vmatpush1.msra.mxu0 0.0
        %5719 = vmatprep.subr.mxu0 0.0
        %5720 = vmatpush1.msra.mxu0 0.0
        %5721 = vmatprep.subr.mxu0 0.0
        %5722 = vmatpush1.msra.mxu0 0.0
        %5723 = vmatprep.subr.mxu0 0.0
        %5724 = vmatpush1.msra.mxu0 0.0
        %5725 = vmatprep.subr.mxu0 0.0
        %5726 = vmatpush1.msra.mxu0 0.0
        %5727 = vmatprep.subr.mxu0 0.0
        %5728 = vmatpush1.msra.mxu0 0.0
        %5729 = vmatprep.subr.mxu0 0.0
        %5730 = vmatpush1.msra.mxu0 0.0
        %5731 = vmatprep.subr.mxu0 0.0
        %5732 = vmatpush1.msra.mxu0 0.0
        %5733 = vmatprep.subr.mxu0 0.0
        %5734 = vmatpush1.msra.mxu0 0.0
        %5735 = vmatprep.subr.mxu0 0.0
        %5736 = vmatpush1.msra.mxu0 0.0
        %5737 = vmatprep.subr.mxu0 0.0
        %5738 = vmatpush1.msra.mxu0 0.0
        %5739 = vmatprep.subr.mxu0 0.0
        %5740 = vmatpush1.msra.mxu0 0.0
        %5741 = vmatprep.mubr.f32.mxu0 0.0
        %5742 = vmatmul.mubr.f32.gmra.mrb[0].mxu0 %v5675
        %v5743 = vpop.f32.mrb[0].mxu0
        %v5744 = vadd.f32 0.0, %v5743
        %v5745 = vpop.f32.mrb[0].mxu0
        %5746 = vdwg.mxu0
        %v5748 = vsel %vm4082, %v4575, 0
        %5750 = vmatprep.subr.mxu0 0.0
        %5751 = vmatpush1.msra.mxu0 %v1791
        %5752 = vmatprep.subr.mxu0 0.0
        %5753 = vmatpush1.msra.mxu0 %v1792
        %5754 = vmatprep.subr.mxu0 0.0
        %5755 = vmatpush1.msra.mxu0 0.0
        %5756 = vmatprep.subr.mxu0 0.0
        %5757 = vmatpush1.msra.mxu0 0.0
        %5758 = vmatprep.subr.mxu0 0.0
        %5759 = vmatpush1.msra.mxu0 0.0
        %5760 = vmatprep.subr.mxu0 0.0
        %5761 = vmatpush1.msra.mxu0 0.0
        %5762 = vmatprep.subr.mxu0 0.0
        %5763 = vmatpush1.msra.mxu0 0.0
        %5764 = vmatprep.subr.mxu0 0.0
        %5765 = vmatpush1.msra.mxu0 0.0
        %5766 = vmatprep.subr.mxu0 0.0
        %5767 = vmatpush1.msra.mxu0 0.0
        %5768 = vmatprep.subr.mxu0 0.0
        %5769 = vmatpush1.msra.mxu0 0.0
        %5770 = vmatprep.subr.mxu0 0.0
        %5771 = vmatpush1.msra.mxu0 0.0
        %5772 = vmatprep.subr.mxu0 0.0
        %5773 = vmatpush1.msra.mxu0 0.0
        %5774 = vmatprep.subr.mxu0 0.0
        %5775 = vmatpush1.msra.mxu0 0.0
        %5776 = vmatprep.subr.mxu0 0.0
        %5777 = vmatpush1.msra.mxu0 0.0
        %5778 = vmatprep.subr.mxu0 0.0
        %5779 = vmatpush1.msra.mxu0 0.0
        %5780 = vmatprep.subr.mxu0 0.0
        %5781 = vmatpush1.msra.mxu0 0.0
        %5782 = vmatprep.subr.mxu0 0.0
        %5783 = vmatpush1.msra.mxu0 0.0
        %5784 = vmatprep.subr.mxu0 0.0
        %5785 = vmatpush1.msra.mxu0 0.0
        %5786 = vmatprep.subr.mxu0 0.0
        %5787 = vmatpush1.msra.mxu0 0.0
        %5788 = vmatprep.subr.mxu0 0.0
        %5789 = vmatpush1.msra.mxu0 0.0
        %5790 = vmatprep.subr.mxu0 0.0
        %5791 = vmatpush1.msra.mxu0 0.0
        %5792 = vmatprep.subr.mxu0 0.0
        %5793 = vmatpush1.msra.mxu0 0.0
        %5794 = vmatprep.subr.mxu0 0.0
        %5795 = vmatpush1.msra.mxu0 0.0
        %5796 = vmatprep.subr.mxu0 0.0
        %5797 = vmatpush1.msra.mxu0 0.0
        %5798 = vmatprep.subr.mxu0 0.0
        %5799 = vmatpush1.msra.mxu0 0.0
        %5800 = vmatprep.subr.mxu0 0.0
        %5801 = vmatpush1.msra.mxu0 0.0
        %5802 = vmatprep.subr.mxu0 0.0
        %5803 = vmatpush1.msra.mxu0 0.0
        %5804 = vmatprep.subr.mxu0 0.0
        %5805 = vmatpush1.msra.mxu0 0.0
        %5806 = vmatprep.subr.mxu0 0.0
        %5807 = vmatpush1.msra.mxu0 0.0
        %5808 = vmatprep.subr.mxu0 0.0
        %5809 = vmatpush1.msra.mxu0 0.0
        %5810 = vmatprep.subr.mxu0 0.0
        %5811 = vmatpush1.msra.mxu0 0.0
        %5812 = vmatprep.subr.mxu0 0.0
        %5813 = vmatpush1.msra.mxu0 0.0
        %5814 = vmatprep.mubr.f32.mxu0 0.0
        %5815 = vmatmul.mubr.f32.gmra.mrb[0].mxu0 %v5748
        %v5816 = vpop.f32.mrb[0].mxu0
        %v5817 = vadd.f32 0.0, %v5816
        %v5818 = vpop.f32.mrb[0].mxu0
        %5819 = vdwg.mxu0
        %v5821 = vsel %vm4082, %v4577, 0
        %5823 = vmatprep.subr.mxu0 0.0
        %5824 = vmatpush1.msra.mxu0 %v1793
        %5825 = vmatprep.subr.mxu0 0.0
        %5826 = vmatpush1.msra.mxu0 %v1794
        %5827 = vmatprep.subr.mxu0 0.0
        %5828 = vmatpush1.msra.mxu0 0.0
        %5829 = vmatprep.subr.mxu0 0.0
        %5830 = vmatpush1.msra.mxu0 0.0
        %5831 = vmatprep.subr.mxu0 0.0
        %5832 = vmatpush1.msra.mxu0 0.0
        %5833 = vmatprep.subr.mxu0 0.0
        %5834 = vmatpush1.msra.mxu0 0.0
        %5835 = vmatprep.subr.mxu0 0.0
        %5836 = vmatpush1.msra.mxu0 0.0
        %5837 = vmatprep.subr.mxu0 0.0
        %5838 = vmatpush1.msra.mxu0 0.0
        %5839 = vmatprep.subr.mxu0 0.0
        %5840 = vmatpush1.msra.mxu0 0.0
        %5841 = vmatprep.subr.mxu0 0.0
        %5842 = vmatpush1.msra.mxu0 0.0
        %5843 = vmatprep.subr.mxu0 0.0
        %5844 = vmatpush1.msra.mxu0 0.0
        %5845 = vmatprep.subr.mxu0 0.0
        %5846 = vmatpush1.msra.mxu0 0.0
        %5847 = vmatprep.subr.mxu0 0.0
        %5848 = vmatpush1.msra.mxu0 0.0
        %5849 = vmatprep.subr.mxu0 0.0
        %5850 = vmatpush1.msra.mxu0 0.0
        %5851 = vmatprep.subr.mxu0 0.0
        %5852 = vmatpush1.msra.mxu0 0.0
        %5853 = vmatprep.subr.mxu0 0.0
        %5854 = vmatpush1.msra.mxu0 0.0
        %5855 = vmatprep.subr.mxu0 0.0
        %5856 = vmatpush1.msra.mxu0 0.0
        %5857 = vmatprep.subr.mxu0 0.0
        %5858 = vmatpush1.msra.mxu0 0.0
        %5859 = vmatprep.subr.mxu0 0.0
        %5860 = vmatpush1.msra.mxu0 0.0
        %5861 = vmatprep.subr.mxu0 0.0
        %5862 = vmatpush1.msra.mxu0 0.0
        %5863 = vmatprep.subr.mxu0 0.0
        %5864 = vmatpush1.msra.mxu0 0.0
        %5865 = vmatprep.subr.mxu0 0.0
        %5866 = vmatpush1.msra.mxu0 0.0
        %5867 = vmatprep.subr.mxu0 0.0
        %5868 = vmatpush1.msra.mxu0 0.0
        %5869 = vmatprep.subr.mxu0 0.0
        %5870 = vmatpush1.msra.mxu0 0.0
        %5871 = vmatprep.subr.mxu0 0.0
        %5872 = vmatpush1.msra.mxu0 0.0
        %5873 = vmatprep.subr.mxu0 0.0
        %5874 = vmatpush1.msra.mxu0 0.0
        %5875 = vmatprep.subr.mxu0 0.0
        %5876 = vmatpush1.msra.mxu0 0.0
        %5877 = vmatprep.subr.mxu0 0.0
        %5878 = vmatpush1.msra.mxu0 0.0
        %5879 = vmatprep.subr.mxu0 0.0
        %5880 = vmatpush1.msra.mxu0 0.0
        %5881 = vmatprep.subr.mxu0 0.0
        %5882 = vmatpush1.msra.mxu0 0.0
        %5883 = vmatprep.subr.mxu0 0.0
        %5884 = vmatpush1.msra.mxu0 0.0
        %5885 = vmatprep.subr.mxu0 0.0
        %5886 = vmatpush1.msra.mxu0 0.0
        %5887 = vmatprep.mubr.f32.mxu0 0.0
        %5888 = vmatmul.mubr.f32.gmra.mrb[0].mxu0 %v5821
        %v5889 = vpop.f32.mrb[0].mxu0
        %v5890 = vadd.f32 0.0, %v5889
        %v5891 = vpop.f32.mrb[0].mxu0
        %5892 = vdwg.mxu0
        %v5894 = vsel %vm4082, %v4579, 0
        %5896 = vmatprep.subr.mxu0 0.0
        %5897 = vmatpush1.msra.mxu0 %v1795
        %5898 = vmatprep.subr.mxu0 0.0
        %5899 = vmatpush1.msra.mxu0 %v1796
        %5900 = vmatprep.subr.mxu0 0.0
        %5901 = vmatpush1.msra.mxu0 0.0
        %5902 = vmatprep.subr.mxu0 0.0
        %5903 = vmatpush1.msra.mxu0 0.0
        %5904 = vmatprep.subr.mxu0 0.0
        %5905 = vmatpush1.msra.mxu0 0.0
        %5906 = vmatprep.subr.mxu0 0.0
        %5907 = vmatpush1.msra.mxu0 0.0
        %5908 = vmatprep.subr.mxu0 0.0
        %5909 = vmatpush1.msra.mxu0 0.0
        %5910 = vmatprep.subr.mxu0 0.0
        %5911 = vmatpush1.msra.mxu0 0.0
        %5912 = vmatprep.subr.mxu0 0.0
        %5913 = vmatpush1.msra.mxu0 0.0
        %5914 = vmatprep.subr.mxu0 0.0
        %5915 = vmatpush1.msra.mxu0 0.0
        %5916 = vmatprep.subr.mxu0 0.0
        %5917 = vmatpush1.msra.mxu0 0.0
        %5918 = vmatprep.subr.mxu0 0.0
        %5919 = vmatpush1.msra.mxu0 0.0
        %5920 = vmatprep.subr.mxu0 0.0
        %5921 = vmatpush1.msra.mxu0 0.0
        %5922 = vmatprep.subr.mxu0 0.0
        %5923 = vmatpush1.msra.mxu0 0.0
        %5924 = vmatprep.subr.mxu0 0.0
        %5925 = vmatpush1.msra.mxu0 0.0
        %5926 = vmatprep.subr.mxu0 0.0
        %5927 = vmatpush1.msra.mxu0 0.0
        %5928 = vmatprep.subr.mxu0 0.0
        %5929 = vmatpush1.msra.mxu0 0.0
        %5930 = vmatprep.subr.mxu0 0.0
        %5931 = vmatpush1.msra.mxu0 0.0
        %5932 = vmatprep.subr.mxu0 0.0
        %5933 = vmatpush1.msra.mxu0 0.0
        %5934 = vmatprep.subr.mxu0 0.0
        %5935 = vmatpush1.msra.mxu0 0.0
        %5936 = vmatprep.subr.mxu0 0.0
        %5937 = vmatpush1.msra.mxu0 0.0
        %5938 = vmatprep.subr.mxu0 0.0
        %5939 = vmatpush1.msra.mxu0 0.0
        %5940 = vmatprep.subr.mxu0 0.0
        %5941 = vmatpush1.msra.mxu0 0.0
        %5942 = vmatprep.subr.mxu0 0.0
        %5943 = vmatpush1.msra.mxu0 0.0
        %5944 = vmatprep.subr.mxu0 0.0
        %5945 = vmatpush1.msra.mxu0 0.0
        %5946 = vmatprep.subr.mxu0 0.0
        %5947 = vmatpush1.msra.mxu0 0.0
        %5948 = vmatprep.subr.mxu0 0.0
        %5949 = vmatpush1.msra.mxu0 0.0
        %5950 = vmatprep.subr.mxu0 0.0
        %5951 = vmatpush1.msra.mxu0 0.0
        %5952 = vmatprep.subr.mxu0 0.0
        %5953 = vmatpush1.msra.mxu0 0.0
        %5954 = vmatprep.subr.mxu0 0.0
        %5955 = vmatpush1.msra.mxu0 0.0
        %5956 = vmatprep.subr.mxu0 0.0
        %5957 = vmatpush1.msra.mxu0 0.0
        %5958 = vmatprep.subr.mxu0 0.0
        %5959 = vmatpush1.msra.mxu0 0.0
        %5960 = vmatprep.mubr.f32.mxu0 0.0
        %5961 = vmatmul.mubr.f32.gmra.mrb[0].mxu0 %v5894
        %v5962 = vpop.f32.mrb[0].mxu0
        %v5963 = vadd.f32 0.0, %v5962
        %v5964 = vpop.f32.mrb[0].mxu0
        %5965 = vdwg.mxu0
        %v5967 = vsel %vm4082, %v4581, 0
        %5969 = vmatprep.subr.mxu0 0.0
        %5970 = vmatpush1.msra.mxu0 %v1797
        %5971 = vmatprep.subr.mxu0 0.0
        %5972 = vmatpush1.msra.mxu0 %v1798
        %5973 = vmatprep.subr.mxu0 0.0
        %5974 = vmatpush1.msra.mxu0 0.0
        %5975 = vmatprep.subr.mxu0 0.0
        %5976 = vmatpush1.msra.mxu0 0.0
        %5977 = vmatprep.subr.mxu0 0.0
        %5978 = vmatpush1.msra.mxu0 0.0
        %5979 = vmatprep.subr.mxu0 0.0
        %5980 = vmatpush1.msra.mxu0 0.0
        %5981 = vmatprep.subr.mxu0 0.0
        %5982 = vmatpush1.msra.mxu0 0.0
        %5983 = vmatprep.subr.mxu0 0.0
        %5984 = vmatpush1.msra.mxu0 0.0
        %5985 = vmatprep.subr.mxu0 0.0
        %5986 = vmatpush1.msra.mxu0 0.0
        %5987 = vmatprep.subr.mxu0 0.0
        %5988 = vmatpush1.msra.mxu0 0.0
        %5989 = vmatprep.subr.mxu0 0.0
        %5990 = vmatpush1.msra.mxu0 0.0
        %5991 = vmatprep.subr.mxu0 0.0
        %5992 = vmatpush1.msra.mxu0 0.0
        %5993 = vmatprep.subr.mxu0 0.0
        %5994 = vmatpush1.msra.mxu0 0.0
        %5995 = vmatprep.subr.mxu0 0.0
        %5996 = vmatpush1.msra.mxu0 0.0
        %5997 = vmatprep.subr.mxu0 0.0
        %5998 = vmatpush1.msra.mxu0 0.0
        %5999 = vmatprep.subr.mxu0 0.0
        %6000 = vmatpush1.msra.mxu0 0.0
        %6001 = vmatprep.subr.mxu0 0.0
        %6002 = vmatpush1.msra.mxu0 0.0
        %6003 = vmatprep.subr.mxu0 0.0
        %6004 = vmatpush1.msra.mxu0 0.0
        %6005 = vmatprep.subr.mxu0 0.0
        %6006 = vmatpush1.msra.mxu0 0.0
        %6007 = vmatprep.subr.mxu0 0.0
        %6008 = vmatpush1.msra.mxu0 0.0
        %6009 = vmatprep.subr.mxu0 0.0
        %6010 = vmatpush1.msra.mxu0 0.0
        %6011 = vmatprep.subr.mxu0 0.0
        %6012 = vmatpush1.msra.mxu0 0.0
        %6013 = vmatprep.subr.mxu0 0.0
        %6014 = vmatpush1.msra.mxu0 0.0
        %6015 = vmatprep.subr.mxu0 0.0
        %6016 = vmatpush1.msra.mxu0 0.0
        %6017 = vmatprep.subr.mxu0 0.0
        %6018 = vmatpush1.msra.mxu0 0.0
        %6019 = vmatprep.subr.mxu0 0.0
        %6020 = vmatpush1.msra.mxu0 0.0
        %6021 = vmatprep.subr.mxu0 0.0
        %6022 = vmatpush1.msra.mxu0 0.0
        %6023 = vmatprep.subr.mxu0 0.0
        %6024 = vmatpush1.msra.mxu0 0.0
        %6025 = vmatprep.subr.mxu0 0.0
        %6026 = vmatpush1.msra.mxu0 0.0
        %6027 = vmatprep.subr.mxu0 0.0
        %6028 = vmatpush1.msra.mxu0 0.0
        %6029 = vmatprep.subr.mxu0 0.0
        %6030 = vmatpush1.msra.mxu0 0.0
        %6031 = vmatprep.subr.mxu0 0.0
        %6032 = vmatpush1.msra.mxu0 0.0
        %6033 = vmatprep.mubr.f32.mxu0 0.0
        %6034 = vmatmul.mubr.f32.gmra.mrb[0].mxu0 %v5967
        %v6035 = vpop.f32.mrb[0].mxu0
        %v6036 = vadd.f32 0.0, %v6035
        %v6037 = vpop.f32.mrb[0].mxu0
        %6038 = vdwg.mxu0
        %v6040 = vsel %vm4082, %v4583, 0
        %6042 = vmatprep.subr.mxu0 0.0
        %6043 = vmatpush1.msra.mxu0 %v1799
        %6044 = vmatprep.subr.mxu0 0.0
        %6045 = vmatpush1.msra.mxu0 %v1800
        %6046 = vmatprep.subr.mxu0 0.0
        %6047 = vmatpush1.msra.mxu0 0.0
        %6048 = vmatprep.subr.mxu0 0.0
        %6049 = vmatpush1.msra.mxu0 0.0
        %6050 = vmatprep.subr.mxu0 0.0
        %6051 = vmatpush1.msra.mxu0 0.0
        %6052 = vmatprep.subr.mxu0 0.0
        %6053 = vmatpush1.msra.mxu0 0.0
        %6054 = vmatprep.subr.mxu0 0.0
        %6055 = vmatpush1.msra.mxu0 0.0
        %6056 = vmatprep.subr.mxu0 0.0
        %6057 = vmatpush1.msra.mxu0 0.0
        %6058 = vmatprep.subr.mxu0 0.0
        %6059 = vmatpush1.msra.mxu0 0.0
        %6060 = vmatprep.subr.mxu0 0.0
        %6061 = vmatpush1.msra.mxu0 0.0
        %6062 = vmatprep.subr.mxu0 0.0
        %6063 = vmatpush1.msra.mxu0 0.0
        %6064 = vmatprep.subr.mxu0 0.0
        %6065 = vmatpush1.msra.mxu0 0.0
        %6066 = vmatprep.subr.mxu0 0.0
        %6067 = vmatpush1.msra.mxu0 0.0
        %6068 = vmatprep.subr.mxu0 0.0
        %6069 = vmatpush1.msra.mxu0 0.0
        %6070 = vmatprep.subr.mxu0 0.0
        %6071 = vmatpush1.msra.mxu0 0.0
        %6072 = vmatprep.subr.mxu0 0.0
        %6073 = vmatpush1.msra.mxu0 0.0
        %6074 = vmatprep.subr.mxu0 0.0
        %6075 = vmatpush1.msra.mxu0 0.0
        %6076 = vmatprep.subr.mxu0 0.0
        %6077 = vmatpush1.msra.mxu0 0.0
        %6078 = vmatprep.subr.mxu0 0.0
        %6079 = vmatpush1.msra.mxu0 0.0
        %6080 = vmatprep.subr.mxu0 0.0
        %6081 = vmatpush1.msra.mxu0 0.0
        %6082 = vmatprep.subr.mxu0 0.0
        %6083 = vmatpush1.msra.mxu0 0.0
        %6084 = vmatprep.subr.mxu0 0.0
        %6085 = vmatpush1.msra.mxu0 0.0
        %6086 = vmatprep.subr.mxu0 0.0
        %6087 = vmatpush1.msra.mxu0 0.0
        %6088 = vmatprep.subr.mxu0 0.0
        %6089 = vmatpush1.msra.mxu0 0.0
        %6090 = vmatprep.subr.mxu0 0.0
        %6091 = vmatpush1.msra.mxu0 0.0
        %6092 = vmatprep.subr.mxu0 0.0
        %6093 = vmatpush1.msra.mxu0 0.0
        %6094 = vmatprep.subr.mxu0 0.0
        %6095 = vmatpush1.msra.mxu0 0.0
        %6096 = vmatprep.subr.mxu0 0.0
        %6097 = vmatpush1.msra.mxu0 0.0
        %6098 = vmatprep.subr.mxu0 0.0
        %6099 = vmatpush1.msra.mxu0 0.0
        %6100 = vmatprep.subr.mxu0 0.0
        %6101 = vmatpush1.msra.mxu0 0.0
        %6102 = vmatprep.subr.mxu0 0.0
        %6103 = vmatpush1.msra.mxu0 0.0
        %6104 = vmatprep.subr.mxu0 0.0
        %6105 = vmatpush1.msra.mxu0 0.0
        %6106 = vmatprep.mubr.f32.mxu0 0.0
        %6107 = vmatmul.mubr.f32.gmra.mrb[0].mxu0 %v6040
        %v6108 = vpop.f32.mrb[0].mxu0
        %v6109 = vadd.f32 0.0, %v6108
        %v6110 = vpop.f32.mrb[0].mxu0
        %6111 = vdwg.mxu0
        %v6113 = vsel %vm4082, %v4585, 0
        %6115 = vmatprep.subr.mxu0 0.0
        %6116 = vmatpush1.msra.mxu0 %v1801
        %6117 = vmatprep.subr.mxu0 0.0
        %6118 = vmatpush1.msra.mxu0 %v1802
        %6119 = vmatprep.subr.mxu0 0.0
        %6120 = vmatpush1.msra.mxu0 0.0
        %6121 = vmatprep.subr.mxu0 0.0
        %6122 = vmatpush1.msra.mxu0 0.0
        %6123 = vmatprep.subr.mxu0 0.0
        %6124 = vmatpush1.msra.mxu0 0.0
        %6125 = vmatprep.subr.mxu0 0.0
        %6126 = vmatpush1.msra.mxu0 0.0
        %6127 = vmatprep.subr.mxu0 0.0
        %6128 = vmatpush1.msra.mxu0 0.0
        %6129 = vmatprep.subr.mxu0 0.0
        %6130 = vmatpush1.msra.mxu0 0.0
        %6131 = vmatprep.subr.mxu0 0.0
        %6132 = vmatpush1.msra.mxu0 0.0
        %6133 = vmatprep.subr.mxu0 0.0
        %6134 = vmatpush1.msra.mxu0 0.0
        %6135 = vmatprep.subr.mxu0 0.0
        %6136 = vmatpush1.msra.mxu0 0.0
        %6137 = vmatprep.subr.mxu0 0.0
        %6138 = vmatpush1.msra.mxu0 0.0
        %6139 = vmatprep.subr.mxu0 0.0
        %6140 = vmatpush1.msra.mxu0 0.0
        %6141 = vmatprep.subr.mxu0 0.0
        %6142 = vmatpush1.msra.mxu0 0.0
        %6143 = vmatprep.subr.mxu0 0.0
        %6144 = vmatpush1.msra.mxu0 0.0
        %6145 = vmatprep.subr.mxu0 0.0
        %6146 = vmatpush1.msra.mxu0 0.0
        %6147 = vmatprep.subr.mxu0 0.0
        %6148 = vmatpush1.msra.mxu0 0.0
        %6149 = vmatprep.subr.mxu0 0.0
        %6150 = vmatpush1.msra.mxu0 0.0
        %6151 = vmatprep.subr.mxu0 0.0
        %6152 = vmatpush1.msra.mxu0 0.0
        %6153 = vmatprep.subr.mxu0 0.0
        %6154 = vmatpush1.msra.mxu0 0.0
        %6155 = vmatprep.subr.mxu0 0.0
        %6156 = vmatpush1.msra.mxu0 0.0
        %6157 = vmatprep.subr.mxu0 0.0
        %6158 = vmatpush1.msra.mxu0 0.0
        %6159 = vmatprep.subr.mxu0 0.0
        %6160 = vmatpush1.msra.mxu0 0.0
        %6161 = vmatprep.subr.mxu0 0.0
        %6162 = vmatpush1.msra.mxu0 0.0
        %6163 = vmatprep.subr.mxu0 0.0
        %6164 = vmatpush1.msra.mxu0 0.0
        %6165 = vmatprep.subr.mxu0 0.0
        %6166 = vmatpush1.msra.mxu0 0.0
        %6167 = vmatprep.subr.mxu0 0.0
        %6168 = vmatpush1.msra.mxu0 0.0
        %6169 = vmatprep.subr.mxu0 0.0
        %6170 = vmatpush1.msra.mxu0 0.0
        %6171 = vmatprep.subr.mxu0 0.0
        %6172 = vmatpush1.msra.mxu0 0.0
        %6173 = vmatprep.subr.mxu0 0.0
        %6174 = vmatpush1.msra.mxu0 0.0
        %6175 = vmatprep.subr.mxu0 0.0
        %6176 = vmatpush1.msra.mxu0 0.0
        %6177 = vmatprep.subr.mxu0 0.0
        %6178 = vmatpush1.msra.mxu0 0.0
        %6179 = vmatprep.mubr.f32.mxu0 0.0
        %6180 = vmatmul.mubr.f32.gmra.mrb[0].mxu0 %v6113
        %v6181 = vpop.f32.mrb[0].mxu0
        %v6182 = vadd.f32 0.0, %v6181
        %v6183 = vpop.f32.mrb[0].mxu0
        %6184 = vdwg.mxu0
        %v6186 = vsel %vm4082, %v4587, 0
        %6188 = vmatprep.subr.mxu0 0.0
        %6189 = vmatpush1.msra.mxu0 %v1803
        %6190 = vmatprep.subr.mxu0 0.0
        %6191 = vmatpush1.msra.mxu0 %v1804
        %6192 = vmatprep.subr.mxu0 0.0
        %6193 = vmatpush1.msra.mxu0 0.0
        %6194 = vmatprep.subr.mxu0 0.0
        %6195 = vmatpush1.msra.mxu0 0.0
        %6196 = vmatprep.subr.mxu0 0.0
        %6197 = vmatpush1.msra.mxu0 0.0
        %6198 = vmatprep.subr.mxu0 0.0
        %6199 = vmatpush1.msra.mxu0 0.0
        %6200 = vmatprep.subr.mxu0 0.0
        %6201 = vmatpush1.msra.mxu0 0.0
        %6202 = vmatprep.subr.mxu0 0.0
        %6203 = vmatpush1.msra.mxu0 0.0
        %6204 = vmatprep.subr.mxu0 0.0
        %6205 = vmatpush1.msra.mxu0 0.0
        %6206 = vmatprep.subr.mxu0 0.0
        %6207 = vmatpush1.msra.mxu0 0.0
        %6208 = vmatprep.subr.mxu0 0.0
        %6209 = vmatpush1.msra.mxu0 0.0
        %6210 = vmatprep.subr.mxu0 0.0
        %6211 = vmatpush1.msra.mxu0 0.0
        %6212 = vmatprep.subr.mxu0 0.0
        %6213 = vmatpush1.msra.mxu0 0.0
        %6214 = vmatprep.subr.mxu0 0.0
        %6215 = vmatpush1.msra.mxu0 0.0
        %6216 = vmatprep.subr.mxu0 0.0
        %6217 = vmatpush1.msra.mxu0 0.0
        %6218 = vmatprep.subr.mxu0 0.0
        %6219 = vmatpush1.msra.mxu0 0.0
        %6220 = vmatprep.subr.mxu0 0.0
        %6221 = vmatpush1.msra.mxu0 0.0
        %6222 = vmatprep.subr.mxu0 0.0
        %6223 = vmatpush1.msra.mxu0 0.0
        %6224 = vmatprep.subr.mxu0 0.0
        %6225 = vmatpush1.msra.mxu0 0.0
        %6226 = vmatprep.subr.mxu0 0.0
        %6227 = vmatpush1.msra.mxu0 0.0
        %6228 = vmatprep.subr.mxu0 0.0
        %6229 = vmatpush1.msra.mxu0 0.0
        %6230 = vmatprep.subr.mxu0 0.0
        %6231 = vmatpush1.msra.mxu0 0.0
        %6232 = vmatprep.subr.mxu0 0.0
        %6233 = vmatpush1.msra.mxu0 0.0
        %6234 = vmatprep.subr.mxu0 0.0
        %6235 = vmatpush1.msra.mxu0 0.0
        %6236 = vmatprep.subr.mxu0 0.0
        %6237 = vmatpush1.msra.mxu0 0.0
        %6238 = vmatprep.subr.mxu0 0.0
        %6239 = vmatpush1.msra.mxu0 0.0
        %6240 = vmatprep.subr.mxu0 0.0
        %6241 = vmatpush1.msra.mxu0 0.0
        %6242 = vmatprep.subr.mxu0 0.0
        %6243 = vmatpush1.msra.mxu0 0.0
        %6244 = vmatprep.subr.mxu0 0.0
        %6245 = vmatpush1.msra.mxu0 0.0
        %6246 = vmatprep.subr.mxu0 0.0
        %6247 = vmatpush1.msra.mxu0 0.0
        %6248 = vmatprep.subr.mxu0 0.0
        %6249 = vmatpush1.msra.mxu0 0.0
        %6250 = vmatprep.subr.mxu0 0.0
        %6251 = vmatpush1.msra.mxu0 0.0
        %6252 = vmatprep.mubr.f32.mxu0 0.0
        %6253 = vmatmul.mubr.f32.gmra.mrb[0].mxu0 %v6186
        %v6254 = vpop.f32.mrb[0].mxu0
        %v6255 = vadd.f32 0.0, %v6254
        %v6256 = vpop.f32.mrb[0].mxu0
        %6257 = vdwg.mxu0
        %v6259 = vsel %vm4082, %v4589, 0
        %6261 = vmatprep.subr.mxu0 0.0
        %6262 = vmatpush1.msra.mxu0 %v1805
        %6263 = vmatprep.subr.mxu0 0.0
        %6264 = vmatpush1.msra.mxu0 %v1806
        %6265 = vmatprep.subr.mxu0 0.0
        %6266 = vmatpush1.msra.mxu0 0.0
        %6267 = vmatprep.subr.mxu0 0.0
        %6268 = vmatpush1.msra.mxu0 0.0
        %6269 = vmatprep.subr.mxu0 0.0
        %6270 = vmatpush1.msra.mxu0 0.0
        %6271 = vmatprep.subr.mxu0 0.0
        %6272 = vmatpush1.msra.mxu0 0.0
        %6273 = vmatprep.subr.mxu0 0.0
        %6274 = vmatpush1.msra.mxu0 0.0
        %6275 = vmatprep.subr.mxu0 0.0
        %6276 = vmatpush1.msra.mxu0 0.0
        %6277 = vmatprep.subr.mxu0 0.0
        %6278 = vmatpush1.msra.mxu0 0.0
        %6279 = vmatprep.subr.mxu0 0.0
        %6280 = vmatpush1.msra.mxu0 0.0
        %6281 = vmatprep.subr.mxu0 0.0
        %6282 = vmatpush1.msra.mxu0 0.0
        %6283 = vmatprep.subr.mxu0 0.0
        %6284 = vmatpush1.msra.mxu0 0.0
        %6285 = vmatprep.subr.mxu0 0.0
        %6286 = vmatpush1.msra.mxu0 0.0
        %6287 = vmatprep.subr.mxu0 0.0
        %6288 = vmatpush1.msra.mxu0 0.0
        %6289 = vmatprep.subr.mxu0 0.0
        %6290 = vmatpush1.msra.mxu0 0.0
        %6291 = vmatprep.subr.mxu0 0.0
        %6292 = vmatpush1.msra.mxu0 0.0
        %6293 = vmatprep.subr.mxu0 0.0
        %6294 = vmatpush1.msra.mxu0 0.0
        %6295 = vmatprep.subr.mxu0 0.0
        %6296 = vmatpush1.msra.mxu0 0.0
        %6297 = vmatprep.subr.mxu0 0.0
        %6298 = vmatpush1.msra.mxu0 0.0
        %6299 = vmatprep.subr.mxu0 0.0
        %6300 = vmatpush1.msra.mxu0 0.0
        %6301 = vmatprep.subr.mxu0 0.0
        %6302 = vmatpush1.msra.mxu0 0.0
        %6303 = vmatprep.subr.mxu0 0.0
        %6304 = vmatpush1.msra.mxu0 0.0
        %6305 = vmatprep.subr.mxu0 0.0
        %6306 = vmatpush1.msra.mxu0 0.0
        %6307 = vmatprep.subr.mxu0 0.0
        %6308 = vmatpush1.msra.mxu0 0.0
        %6309 = vmatprep.subr.mxu0 0.0
        %6310 = vmatpush1.msra.mxu0 0.0
        %6311 = vmatprep.subr.mxu0 0.0
        %6312 = vmatpush1.msra.mxu0 0.0
        %6313 = vmatprep.subr.mxu0 0.0
        %6314 = vmatpush1.msra.mxu0 0.0
        %6315 = vmatprep.subr.mxu0 0.0
        %6316 = vmatpush1.msra.mxu0 0.0
        %6317 = vmatprep.subr.mxu0 0.0
        %6318 = vmatpush1.msra.mxu0 0.0
        %6319 = vmatprep.subr.mxu0 0.0
        %6320 = vmatpush1.msra.mxu0 0.0
        %6321 = vmatprep.subr.mxu0 0.0
        %6322 = vmatpush1.msra.mxu0 0.0
        %6323 = vmatprep.subr.mxu0 0.0
        %6324 = vmatpush1.msra.mxu0 0.0
        %6325 = vmatprep.mubr.f32.mxu0 0.0
        %6326 = vmatmul.mubr.f32.gmra.mrb[0].mxu0 %v6259
        %v6327 = vpop.f32.mrb[0].mxu0
        %v6328 = vadd.f32 0.0, %v6327
        %v6329 = vpop.f32.mrb[0].mxu0
        %6330 = vdwg.mxu0
        %v6332 = vsel %vm4082, %v4807, 0
        %v6335 = vsel %vm4082, %v4809, 0
        %6337 = vmatprep.subr.mxu0 0.0
        %6338 = vmatpush1.msra.mxu0 %v1952
        %6339 = vmatprep.subr.mxu0 0.0
        %6340 = vmatpush1.msra.mxu0 %v2088
        %6341 = vmatprep.subr.mxu0 0.0
        %6342 = vmatpush1.msra.mxu0 0.0
        %6343 = vmatprep.subr.mxu0 0.0
        %6344 = vmatpush1.msra.mxu0 0.0
        %6345 = vmatprep.subr.mxu0 0.0
        %6346 = vmatpush1.msra.mxu0 0.0
        %6347 = vmatprep.subr.mxu0 0.0
        %6348 = vmatpush1.msra.mxu0 0.0
        %6349 = vmatprep.subr.mxu0 0.0
        %6350 = vmatpush1.msra.mxu0 0.0
        %6351 = vmatprep.subr.mxu0 0.0
        %6352 = vmatpush1.msra.mxu0 0.0
        %6353 = vmatprep.subr.mxu0 0.0
        %6354 = vmatpush1.msra.mxu0 0.0
        %6355 = vmatprep.subr.mxu0 0.0
        %6356 = vmatpush1.msra.mxu0 0.0
        %6357 = vmatprep.subr.mxu0 0.0
        %6358 = vmatpush1.msra.mxu0 0.0
        %6359 = vmatprep.subr.mxu0 0.0
        %6360 = vmatpush1.msra.mxu0 0.0
        %6361 = vmatprep.subr.mxu0 0.0
        %6362 = vmatpush1.msra.mxu0 0.0
        %6363 = vmatprep.subr.mxu0 0.0
        %6364 = vmatpush1.msra.mxu0 0.0
        %6365 = vmatprep.subr.mxu0 0.0
        %6366 = vmatpush1.msra.mxu0 0.0
        %6367 = vmatprep.subr.mxu0 0.0
        %6368 = vmatpush1.msra.mxu0 0.0
        %6369 = vmatprep.subr.mxu0 0.0
        %6370 = vmatpush1.msra.mxu0 0.0
        %6371 = vmatprep.subr.mxu0 0.0
        %6372 = vmatpush1.msra.mxu0 0.0
        %6373 = vmatprep.subr.mxu0 0.0
        %6374 = vmatpush1.msra.mxu0 0.0
        %6375 = vmatprep.subr.mxu0 0.0
        %6376 = vmatpush1.msra.mxu0 0.0
        %6377 = vmatprep.subr.mxu0 0.0
        %6378 = vmatpush1.msra.mxu0 0.0
        %6379 = vmatprep.subr.mxu0 0.0
        %6380 = vmatpush1.msra.mxu0 0.0
        %6381 = vmatprep.subr.mxu0 0.0
        %6382 = vmatpush1.msra.mxu0 0.0
        %6383 = vmatprep.subr.mxu0 0.0
        %6384 = vmatpush1.msra.mxu0 0.0
        %6385 = vmatprep.subr.mxu0 0.0
        %6386 = vmatpush1.msra.mxu0 0.0
        %6387 = vmatprep.subr.mxu0 0.0
        %6388 = vmatpush1.msra.mxu0 0.0
        %6389 = vmatprep.subr.mxu0 0.0
        %6390 = vmatpush1.msra.mxu0 0.0
        %6391 = vmatprep.subr.mxu0 0.0
        %6392 = vmatpush1.msra.mxu0 0.0
        %6393 = vmatprep.subr.mxu0 0.0
        %6394 = vmatpush1.msra.mxu0 0.0
        %6395 = vmatprep.subr.mxu0 0.0
        %6396 = vmatpush1.msra.mxu0 0.0
        %6397 = vmatprep.subr.mxu0 0.0
        %6398 = vmatpush1.msra.mxu0 0.0
        %6399 = vmatprep.subr.mxu0 0.0
        %6400 = vmatpush1.msra.mxu0 0.0
        %6401 = vmatprep.mubr.f32.mxu0 0.0
        %6402 = vmatmul.mubr.f32.gmra.mrb[0].mxu0 %v6332
        %v6403 = vpop.f32.mrb[0].mxu0
        %v6404 = vadd.f32 0.0, %v6403
        %v6405 = vpop.f32.mrb[0].mxu0
        %6406 = vmatprep.mubr.f32.mxu0 0.0
        %6407 = vmatmul.mubr.f32.gmra.mrb[0].mxu0 %v6335
        %v6408 = vpop.f32.mrb[0].mxu0
        %v6409 = vadd.f32 0.0, %v6408
        %v6410 = vpop.f32.mrb[0].mxu0
        %6411 = vdwg.mxu0
        %v6413 = vsel %vm4082, %v4811, 0
        %v6416 = vsel %vm4082, %v4813, 0
        %6418 = vmatprep.subr.mxu0 0.0
        %6419 = vmatpush1.msra.mxu0 %v1953
        %6420 = vmatprep.subr.mxu0 0.0
        %6421 = vmatpush1.msra.mxu0 %v2089
        %6422 = vmatprep.subr.mxu0 0.0
        %6423 = vmatpush1.msra.mxu0 0.0
        %6424 = vmatprep.subr.mxu0 0.0
        %6425 = vmatpush1.msra.mxu0 0.0
        %6426 = vmatprep.subr.mxu0 0.0
        %6427 = vmatpush1.msra.mxu0 0.0
        %6428 = vmatprep.subr.mxu0 0.0
        %6429 = vmatpush1.msra.mxu0 0.0
        %6430 = vmatprep.subr.mxu0 0.0
        %6431 = vmatpush1.msra.mxu0 0.0
        %6432 = vmatprep.subr.mxu0 0.0
        %6433 = vmatpush1.msra.mxu0 0.0
        %6434 = vmatprep.subr.mxu0 0.0
        %6435 = vmatpush1.msra.mxu0 0.0
        %6436 = vmatprep.subr.mxu0 0.0
        %6437 = vmatpush1.msra.mxu0 0.0
        %6438 = vmatprep.subr.mxu0 0.0
        %6439 = vmatpush1.msra.mxu0 0.0
        %6440 = vmatprep.subr.mxu0 0.0
        %6441 = vmatpush1.msra.mxu0 0.0
        %6442 = vmatprep.subr.mxu0 0.0
        %6443 = vmatpush1.msra.mxu0 0.0
        %6444 = vmatprep.subr.mxu0 0.0
        %6445 = vmatpush1.msra.mxu0 0.0
        %6446 = vmatprep.subr.mxu0 0.0
        %6447 = vmatpush1.msra.mxu0 0.0
        %6448 = vmatprep.subr.mxu0 0.0
        %6449 = vmatpush1.msra.mxu0 0.0
        %6450 = vmatprep.subr.mxu0 0.0
        %6451 = vmatpush1.msra.mxu0 0.0
        %6452 = vmatprep.subr.mxu0 0.0
        %6453 = vmatpush1.msra.mxu0 0.0
        %6454 = vmatprep.subr.mxu0 0.0
        %6455 = vmatpush1.msra.mxu0 0.0
        %6456 = vmatprep.subr.mxu0 0.0
        %6457 = vmatpush1.msra.mxu0 0.0
        %6458 = vmatprep.subr.mxu0 0.0
        %6459 = vmatpush1.msra.mxu0 0.0
        %6460 = vmatprep.subr.mxu0 0.0
        %6461 = vmatpush1.msra.mxu0 0.0
        %6462 = vmatprep.subr.mxu0 0.0
        %6463 = vmatpush1.msra.mxu0 0.0
        %6464 = vmatprep.subr.mxu0 0.0
        %6465 = vmatpush1.msra.mxu0 0.0
        %6466 = vmatprep.subr.mxu0 0.0
        %6467 = vmatpush1.msra.mxu0 0.0
        %6468 = vmatprep.subr.mxu0 0.0
        %6469 = vmatpush1.msra.mxu0 0.0
        %6470 = vmatprep.subr.mxu0 0.0
        %6471 = vmatpush1.msra.mxu0 0.0
        %6472 = vmatprep.subr.mxu0 0.0
        %6473 = vmatpush1.msra.mxu0 0.0
        %6474 = vmatprep.subr.mxu0 0.0
        %6475 = vmatpush1.msra.mxu0 0.0
        %6476 = vmatprep.subr.mxu0 0.0
        %6477 = vmatpush1.msra.mxu0 0.0
        %6478 = vmatprep.subr.mxu0 0.0
        %6479 = vmatpush1.msra.mxu0 0.0
        %6480 = vmatprep.subr.mxu0 0.0
        %6481 = vmatpush1.msra.mxu0 0.0
        %6482 = vmatprep.mubr.f32.mxu0 0.0
        %6483 = vmatmul.mubr.f32.gmra.mrb[0].mxu0 %v6413
        %v6484 = vpop.f32.mrb[0].mxu0
        %v6485 = vadd.f32 0.0, %v6484
        %v6486 = vpop.f32.mrb[0].mxu0
        %6487 = vmatprep.mubr.f32.mxu0 0.0
        %6488 = vmatmul.mubr.f32.gmra.mrb[0].mxu0 %v6416
        %v6489 = vpop.f32.mrb[0].mxu0
        %v6490 = vadd.f32 0.0, %v6489
        %v6491 = vpop.f32.mrb[0].mxu0
        %6492 = vdwg.mxu0
        %v6494 = vsel %vm4082, %v4815, 0
        %v6497 = vsel %vm4082, %v4817, 0
        %6499 = vmatprep.subr.mxu0 0.0
        %6500 = vmatpush1.msra.mxu0 %v1954
        %6501 = vmatprep.subr.mxu0 0.0
        %6502 = vmatpush1.msra.mxu0 %v2090
        %6503 = vmatprep.subr.mxu0 0.0
        %6504 = vmatpush1.msra.mxu0 0.0
        %6505 = vmatprep.subr.mxu0 0.0
        %6506 = vmatpush1.msra.mxu0 0.0
        %6507 = vmatprep.subr.mxu0 0.0
        %6508 = vmatpush1.msra.mxu0 0.0
        %6509 = vmatprep.subr.mxu0 0.0
        %6510 = vmatpush1.msra.mxu0 0.0
        %6511 = vmatprep.subr.mxu0 0.0
        %6512 = vmatpush1.msra.mxu0 0.0
        %6513 = vmatprep.subr.mxu0 0.0
        %6514 = vmatpush1.msra.mxu0 0.0
        %6515 = vmatprep.subr.mxu0 0.0
        %6516 = vmatpush1.msra.mxu0 0.0
        %6517 = vmatprep.subr.mxu0 0.0
        %6518 = vmatpush1.msra.mxu0 0.0
        %6519 = vmatprep.subr.mxu0 0.0
        %6520 = vmatpush1.msra.mxu0 0.0
        %6521 = vmatprep.subr.mxu0 0.0
        %6522 = vmatpush1.msra.mxu0 0.0
        %6523 = vmatprep.subr.mxu0 0.0
        %6524 = vmatpush1.msra.mxu0 0.0
        %6525 = vmatprep.subr.mxu0 0.0
        %6526 = vmatpush1.msra.mxu0 0.0
        %6527 = vmatprep.subr.mxu0 0.0
        %6528 = vmatpush1.msra.mxu0 0.0
        %6529 = vmatprep.subr.mxu0 0.0
        %6530 = vmatpush1.msra.mxu0 0.0
        %6531 = vmatprep.subr.mxu0 0.0
        %6532 = vmatpush1.msra.mxu0 0.0
        %6533 = vmatprep.subr.mxu0 0.0
        %6534 = vmatpush1.msra.mxu0 0.0
        %6535 = vmatprep.subr.mxu0 0.0
        %6536 = vmatpush1.msra.mxu0 0.0
        %6537 = vmatprep.subr.mxu0 0.0
        %6538 = vmatpush1.msra.mxu0 0.0
        %6539 = vmatprep.subr.mxu0 0.0
        %6540 = vmatpush1.msra.mxu0 0.0
        %6541 = vmatprep.subr.mxu0 0.0
        %6542 = vmatpush1.msra.mxu0 0.0
        %6543 = vmatprep.subr.mxu0 0.0
        %6544 = vmatpush1.msra.mxu0 0.0
        %6545 = vmatprep.subr.mxu0 0.0
        %6546 = vmatpush1.msra.mxu0 0.0
        %6547 = vmatprep.subr.mxu0 0.0
        %6548 = vmatpush1.msra.mxu0 0.0
        %6549 = vmatprep.subr.mxu0 0.0
        %6550 = vmatpush1.msra.mxu0 0.0
        %6551 = vmatprep.subr.mxu0 0.0
        %6552 = vmatpush1.msra.mxu0 0.0
        %6553 = vmatprep.subr.mxu0 0.0
        %6554 = vmatpush1.msra.mxu0 0.0
        %6555 = vmatprep.subr.mxu0 0.0
        %6556 = vmatpush1.msra.mxu0 0.0
        %6557 = vmatprep.subr.mxu0 0.0
        %6558 = vmatpush1.msra.mxu0 0.0
        %6559 = vmatprep.subr.mxu0 0.0
        %6560 = vmatpush1.msra.mxu0 0.0
        %6561 = vmatprep.subr.mxu0 0.0
        %6562 = vmatpush1.msra.mxu0 0.0
        %6563 = vmatprep.mubr.f32.mxu0 0.0
        %6564 = vmatmul.mubr.f32.gmra.mrb[0].mxu0 %v6494
        %v6565 = vpop.f32.mrb[0].mxu0
        %v6566 = vadd.f32 0.0, %v6565
        %v6567 = vpop.f32.mrb[0].mxu0
        %6568 = vmatprep.mubr.f32.mxu0 0.0
        %6569 = vmatmul.mubr.f32.gmra.mrb[0].mxu0 %v6497
        %v6570 = vpop.f32.mrb[0].mxu0
        %v6571 = vadd.f32 0.0, %v6570
        %v6572 = vpop.f32.mrb[0].mxu0
        %6573 = vdwg.mxu0
        %v6575 = vsel %vm4082, %v4819, 0
        %v6578 = vsel %vm4082, %v4821, 0
        %6580 = vmatprep.subr.mxu0 0.0
        %6581 = vmatpush1.msra.mxu0 %v1955
        %6582 = vmatprep.subr.mxu0 0.0
        %6583 = vmatpush1.msra.mxu0 %v2091
        %6584 = vmatprep.subr.mxu0 0.0
        %6585 = vmatpush1.msra.mxu0 0.0
        %6586 = vmatprep.subr.mxu0 0.0
        %6587 = vmatpush1.msra.mxu0 0.0
        %6588 = vmatprep.subr.mxu0 0.0
        %6589 = vmatpush1.msra.mxu0 0.0
        %6590 = vmatprep.subr.mxu0 0.0
        %6591 = vmatpush1.msra.mxu0 0.0
        %6592 = vmatprep.subr.mxu0 0.0
        %6593 = vmatpush1.msra.mxu0 0.0
        %6594 = vmatprep.subr.mxu0 0.0
        %6595 = vmatpush1.msra.mxu0 0.0
        %6596 = vmatprep.subr.mxu0 0.0
        %6597 = vmatpush1.msra.mxu0 0.0
        %6598 = vmatprep.subr.mxu0 0.0
        %6599 = vmatpush1.msra.mxu0 0.0
        %6600 = vmatprep.subr.mxu0 0.0
        %6601 = vmatpush1.msra.mxu0 0.0
        %6602 = vmatprep.subr.mxu0 0.0
        %6603 = vmatpush1.msra.mxu0 0.0
        %6604 = vmatprep.subr.mxu0 0.0
        %6605 = vmatpush1.msra.mxu0 0.0
        %6606 = vmatprep.subr.mxu0 0.0
        %6607 = vmatpush1.msra.mxu0 0.0
        %6608 = vmatprep.subr.mxu0 0.0
        %6609 = vmatpush1.msra.mxu0 0.0
        %6610 = vmatprep.subr.mxu0 0.0
        %6611 = vmatpush1.msra.mxu0 0.0
        %6612 = vmatprep.subr.mxu0 0.0
        %6613 = vmatpush1.msra.mxu0 0.0
        %6614 = vmatprep.subr.mxu0 0.0
        %6615 = vmatpush1.msra.mxu0 0.0
        %6616 = vmatprep.subr.mxu0 0.0
        %6617 = vmatpush1.msra.mxu0 0.0
        %6618 = vmatprep.subr.mxu0 0.0
        %6619 = vmatpush1.msra.mxu0 0.0
        %6620 = vmatprep.subr.mxu0 0.0
        %6621 = vmatpush1.msra.mxu0 0.0
        %6622 = vmatprep.subr.mxu0 0.0
        %6623 = vmatpush1.msra.mxu0 0.0
        %6624 = vmatprep.subr.mxu0 0.0
        %6625 = vmatpush1.msra.mxu0 0.0
        %6626 = vmatprep.subr.mxu0 0.0
        %6627 = vmatpush1.msra.mxu0 0.0
        %6628 = vmatprep.subr.mxu0 0.0
        %6629 = vmatpush1.msra.mxu0 0.0
        %6630 = vmatprep.subr.mxu0 0.0
        %6631 = vmatpush1.msra.mxu0 0.0
        %6632 = vmatprep.subr.mxu0 0.0
        %6633 = vmatpush1.msra.mxu0 0.0
        %6634 = vmatprep.subr.mxu0 0.0
        %6635 = vmatpush1.msra.mxu0 0.0
        %6636 = vmatprep.subr.mxu0 0.0
        %6637 = vmatpush1.msra.mxu0 0.0
        %6638 = vmatprep.subr.mxu0 0.0
        %6639 = vmatpush1.msra.mxu0 0.0
        %6640 = vmatprep.subr.mxu0 0.0
        %6641 = vmatpush1.msra.mxu0 0.0
        %6642 = vmatprep.subr.mxu0 0.0
        %6643 = vmatpush1.msra.mxu0 0.0
        %6644 = vmatprep.mubr.f32.mxu0 0.0
        %6645 = vmatmul.mubr.f32.gmra.mrb[0].mxu0 %v6575
        %v6646 = vpop.f32.mrb[0].mxu0
        %v6647 = vadd.f32 0.0, %v6646
        %v6648 = vpop.f32.mrb[0].mxu0
        %6649 = vmatprep.mubr.f32.mxu0 0.0
        %6650 = vmatmul.mubr.f32.gmra.mrb[0].mxu0 %v6578
        %v6651 = vpop.f32.mrb[0].mxu0
        %v6652 = vadd.f32 0.0, %v6651
        %v6653 = vpop.f32.mrb[0].mxu0
        %6654 = vdwg.mxu0
        %v6656 = vsel %vm4082, %v4823, 0
        %v6659 = vsel %vm4082, %v4825, 0
        %6661 = vmatprep.subr.mxu0 0.0
        %6662 = vmatpush1.msra.mxu0 %v1956
        %6663 = vmatprep.subr.mxu0 0.0
        %6664 = vmatpush1.msra.mxu0 %v2092
        %6665 = vmatprep.subr.mxu0 0.0
        %6666 = vmatpush1.msra.mxu0 0.0
        %6667 = vmatprep.subr.mxu0 0.0
        %6668 = vmatpush1.msra.mxu0 0.0
        %6669 = vmatprep.subr.mxu0 0.0
        %6670 = vmatpush1.msra.mxu0 0.0
        %6671 = vmatprep.subr.mxu0 0.0
        %6672 = vmatpush1.msra.mxu0 0.0
        %6673 = vmatprep.subr.mxu0 0.0
        %6674 = vmatpush1.msra.mxu0 0.0
        %6675 = vmatprep.subr.mxu0 0.0
        %6676 = vmatpush1.msra.mxu0 0.0
        %6677 = vmatprep.subr.mxu0 0.0
        %6678 = vmatpush1.msra.mxu0 0.0
        %6679 = vmatprep.subr.mxu0 0.0
        %6680 = vmatpush1.msra.mxu0 0.0
        %6681 = vmatprep.subr.mxu0 0.0
        %6682 = vmatpush1.msra.mxu0 0.0
        %6683 = vmatprep.subr.mxu0 0.0
        %6684 = vmatpush1.msra.mxu0 0.0
        %6685 = vmatprep.subr.mxu0 0.0
        %6686 = vmatpush1.msra.mxu0 0.0
        %6687 = vmatprep.subr.mxu0 0.0
        %6688 = vmatpush1.msra.mxu0 0.0
        %6689 = vmatprep.subr.mxu0 0.0
        %6690 = vmatpush1.msra.mxu0 0.0
        %6691 = vmatprep.subr.mxu0 0.0
        %6692 = vmatpush1.msra.mxu0 0.0
        %6693 = vmatprep.subr.mxu0 0.0
        %6694 = vmatpush1.msra.mxu0 0.0
        %6695 = vmatprep.subr.mxu0 0.0
        %6696 = vmatpush1.msra.mxu0 0.0
        %6697 = vmatprep.subr.mxu0 0.0
        %6698 = vmatpush1.msra.mxu0 0.0
        %6699 = vmatprep.subr.mxu0 0.0
        %6700 = vmatpush1.msra.mxu0 0.0
        %6701 = vmatprep.subr.mxu0 0.0
        %6702 = vmatpush1.msra.mxu0 0.0
        %6703 = vmatprep.subr.mxu0 0.0
        %6704 = vmatpush1.msra.mxu0 0.0
        %6705 = vmatprep.subr.mxu0 0.0
        %6706 = vmatpush1.msra.mxu0 0.0
        %6707 = vmatprep.subr.mxu0 0.0
        %6708 = vmatpush1.msra.mxu0 0.0
        %6709 = vmatprep.subr.mxu0 0.0
        %6710 = vmatpush1.msra.mxu0 0.0
        %6711 = vmatprep.subr.mxu0 0.0
        %6712 = vmatpush1.msra.mxu0 0.0
        %6713 = vmatprep.subr.mxu0 0.0
        %6714 = vmatpush1.msra.mxu0 0.0
        %6715 = vmatprep.subr.mxu0 0.0
        %6716 = vmatpush1.msra.mxu0 0.0
        %6717 = vmatprep.subr.mxu0 0.0
        %6718 = vmatpush1.msra.mxu0 0.0
        %6719 = vmatprep.subr.mxu0 0.0
        %6720 = vmatpush1.msra.mxu0 0.0
        %6721 = vmatprep.subr.mxu0 0.0
        %6722 = vmatpush1.msra.mxu0 0.0
        %6723 = vmatprep.subr.mxu0 0.0
        %6724 = vmatpush1.msra.mxu0 0.0
        %6725 = vmatprep.mubr.f32.mxu0 0.0
        %6726 = vmatmul.mubr.f32.gmra.mrb[0].mxu0 %v6656
        %v6727 = vpop.f32.mrb[0].mxu0
        %v6728 = vadd.f32 0.0, %v6727
        %v6729 = vpop.f32.mrb[0].mxu0
        %6730 = vmatprep.mubr.f32.mxu0 0.0
        %6731 = vmatmul.mubr.f32.gmra.mrb[0].mxu0 %v6659
        %v6732 = vpop.f32.mrb[0].mxu0
        %v6733 = vadd.f32 0.0, %v6732
        %v6734 = vpop.f32.mrb[0].mxu0
        %6735 = vdwg.mxu0
        %v6737 = vsel %vm4082, %v4827, 0
        %v6740 = vsel %vm4082, %v4829, 0
        %6742 = vmatprep.subr.mxu0 0.0
        %6743 = vmatpush1.msra.mxu0 %v1957
        %6744 = vmatprep.subr.mxu0 0.0
        %6745 = vmatpush1.msra.mxu0 %v2093
        %6746 = vmatprep.subr.mxu0 0.0
        %6747 = vmatpush1.msra.mxu0 0.0
        %6748 = vmatprep.subr.mxu0 0.0
        %6749 = vmatpush1.msra.mxu0 0.0
        %6750 = vmatprep.subr.mxu0 0.0
        %6751 = vmatpush1.msra.mxu0 0.0
        %6752 = vmatprep.subr.mxu0 0.0
        %6753 = vmatpush1.msra.mxu0 0.0
        %6754 = vmatprep.subr.mxu0 0.0
        %6755 = vmatpush1.msra.mxu0 0.0
        %6756 = vmatprep.subr.mxu0 0.0
        %6757 = vmatpush1.msra.mxu0 0.0
        %6758 = vmatprep.subr.mxu0 0.0
        %6759 = vmatpush1.msra.mxu0 0.0
        %6760 = vmatprep.subr.mxu0 0.0
        %6761 = vmatpush1.msra.mxu0 0.0
        %6762 = vmatprep.subr.mxu0 0.0
        %6763 = vmatpush1.msra.mxu0 0.0
        %6764 = vmatprep.subr.mxu0 0.0
        %6765 = vmatpush1.msra.mxu0 0.0
        %6766 = vmatprep.subr.mxu0 0.0
        %6767 = vmatpush1.msra.mxu0 0.0
        %6768 = vmatprep.subr.mxu0 0.0
        %6769 = vmatpush1.msra.mxu0 0.0
        %6770 = vmatprep.subr.mxu0 0.0
        %6771 = vmatpush1.msra.mxu0 0.0
        %6772 = vmatprep.subr.mxu0 0.0
        %6773 = vmatpush1.msra.mxu0 0.0
        %6774 = vmatprep.subr.mxu0 0.0
        %6775 = vmatpush1.msra.mxu0 0.0
        %6776 = vmatprep.subr.mxu0 0.0
        %6777 = vmatpush1.msra.mxu0 0.0
        %6778 = vmatprep.subr.mxu0 0.0
        %6779 = vmatpush1.msra.mxu0 0.0
        %6780 = vmatprep.subr.mxu0 0.0
        %6781 = vmatpush1.msra.mxu0 0.0
        %6782 = vmatprep.subr.mxu0 0.0
        %6783 = vmatpush1.msra.mxu0 0.0
        %6784 = vmatprep.subr.mxu0 0.0
        %6785 = vmatpush1.msra.mxu0 0.0
        %6786 = vmatprep.subr.mxu0 0.0
        %6787 = vmatpush1.msra.mxu0 0.0
        %6788 = vmatprep.subr.mxu0 0.0
        %6789 = vmatpush1.msra.mxu0 0.0
        %6790 = vmatprep.subr.mxu0 0.0
        %6791 = vmatpush1.msra.mxu0 0.0
        %6792 = vmatprep.subr.mxu0 0.0
        %6793 = vmatpush1.msra.mxu0 0.0
        %6794 = vmatprep.subr.mxu0 0.0
        %6795 = vmatpush1.msra.mxu0 0.0
        %6796 = vmatprep.subr.mxu0 0.0
        %6797 = vmatpush1.msra.mxu0 0.0
        %6798 = vmatprep.subr.mxu0 0.0
        %6799 = vmatpush1.msra.mxu0 0.0
        %6800 = vmatprep.subr.mxu0 0.0
        %6801 = vmatpush1.msra.mxu0 0.0
        %6802 = vmatprep.subr.mxu0 0.0
        %6803 = vmatpush1.msra.mxu0 0.0
        %6804 = vmatprep.subr.mxu0 0.0
        %6805 = vmatpush1.msra.mxu0 0.0
        %6806 = vmatprep.mubr.f32.mxu0 0.0
        %6807 = vmatmul.mubr.f32.gmra.mrb[0].mxu0 %v6737
        %v6808 = vpop.f32.mrb[0].mxu0
        %v6809 = vadd.f32 0.0, %v6808
        %v6810 = vpop.f32.mrb[0].mxu0
        %6811 = vmatprep.mubr.f32.mxu0 0.0
        %6812 = vmatmul.mubr.f32.gmra.mrb[0].mxu0 %v6740
        %v6813 = vpop.f32.mrb[0].mxu0
        %v6814 = vadd.f32 0.0, %v6813
        %v6815 = vpop.f32.mrb[0].mxu0
        %6816 = vdwg.mxu0
        %v6818 = vsel %vm4082, %v4831, 0
        %v6821 = vsel %vm4082, %v4833, 0
        %6823 = vmatprep.subr.mxu0 0.0
        %6824 = vmatpush1.msra.mxu0 %v1958
        %6825 = vmatprep.subr.mxu0 0.0
        %6826 = vmatpush1.msra.mxu0 %v2094
        %6827 = vmatprep.subr.mxu0 0.0
        %6828 = vmatpush1.msra.mxu0 0.0
        %6829 = vmatprep.subr.mxu0 0.0
        %6830 = vmatpush1.msra.mxu0 0.0
        %6831 = vmatprep.subr.mxu0 0.0
        %6832 = vmatpush1.msra.mxu0 0.0
        %6833 = vmatprep.subr.mxu0 0.0
        %6834 = vmatpush1.msra.mxu0 0.0
        %6835 = vmatprep.subr.mxu0 0.0
        %6836 = vmatpush1.msra.mxu0 0.0
        %6837 = vmatprep.subr.mxu0 0.0
        %6838 = vmatpush1.msra.mxu0 0.0
        %6839 = vmatprep.subr.mxu0 0.0
        %6840 = vmatpush1.msra.mxu0 0.0
        %6841 = vmatprep.subr.mxu0 0.0
        %6842 = vmatpush1.msra.mxu0 0.0
        %6843 = vmatprep.subr.mxu0 0.0
        %6844 = vmatpush1.msra.mxu0 0.0
        %6845 = vmatprep.subr.mxu0 0.0
        %6846 = vmatpush1.msra.mxu0 0.0
        %6847 = vmatprep.subr.mxu0 0.0
        %6848 = vmatpush1.msra.mxu0 0.0
        %6849 = vmatprep.subr.mxu0 0.0
        %6850 = vmatpush1.msra.mxu0 0.0
        %6851 = vmatprep.subr.mxu0 0.0
        %6852 = vmatpush1.msra.mxu0 0.0
        %6853 = vmatprep.subr.mxu0 0.0
        %6854 = vmatpush1.msra.mxu0 0.0
        %6855 = vmatprep.subr.mxu0 0.0
        %6856 = vmatpush1.msra.mxu0 0.0
        %6857 = vmatprep.subr.mxu0 0.0
        %6858 = vmatpush1.msra.mxu0 0.0
        %6859 = vmatprep.subr.mxu0 0.0
        %6860 = vmatpush1.msra.mxu0 0.0
        %6861 = vmatprep.subr.mxu0 0.0
        %6862 = vmatpush1.msra.mxu0 0.0
        %6863 = vmatprep.subr.mxu0 0.0
        %6864 = vmatpush1.msra.mxu0 0.0
        %6865 = vmatprep.subr.mxu0 0.0
        %6866 = vmatpush1.msra.mxu0 0.0
        %6867 = vmatprep.subr.mxu0 0.0
        %6868 = vmatpush1.msra.mxu0 0.0
        %6869 = vmatprep.subr.mxu0 0.0
        %6870 = vmatpush1.msra.mxu0 0.0
        %6871 = vmatprep.subr.mxu0 0.0
        %6872 = vmatpush1.msra.mxu0 0.0
        %6873 = vmatprep.subr.mxu0 0.0
        %6874 = vmatpush1.msra.mxu0 0.0
        %6875 = vmatprep.subr.mxu0 0.0
        %6876 = vmatpush1.msra.mxu0 0.0
        %6877 = vmatprep.subr.mxu0 0.0
        %6878 = vmatpush1.msra.mxu0 0.0
        %6879 = vmatprep.subr.mxu0 0.0
        %6880 = vmatpush1.msra.mxu0 0.0
        %6881 = vmatprep.subr.mxu0 0.0
        %6882 = vmatpush1.msra.mxu0 0.0
        %6883 = vmatprep.subr.mxu0 0.0
        %6884 = vmatpush1.msra.mxu0 0.0
        %6885 = vmatprep.subr.mxu0 0.0
        %6886 = vmatpush1.msra.mxu0 0.0
        %6887 = vmatprep.mubr.f32.mxu0 0.0
        %6888 = vmatmul.mubr.f32.gmra.mrb[0].mxu0 %v6818
        %v6889 = vpop.f32.mrb[0].mxu0
        %v6890 = vadd.f32 0.0, %v6889
        %v6891 = vpop.f32.mrb[0].mxu0
        %6892 = vmatprep.mubr.f32.mxu0 0.0
        %6893 = vmatmul.mubr.f32.gmra.mrb[0].mxu0 %v6821
        %v6894 = vpop.f32.mrb[0].mxu0
        %v6895 = vadd.f32 0.0, %v6894
        %v6896 = vpop.f32.mrb[0].mxu0
        %6897 = vdwg.mxu0
        %v6899 = vsel %vm4082, %v4835, 0
        %v6902 = vsel %vm4082, %v4837, 0
        %6904 = vmatprep.subr.mxu0 0.0
        %6905 = vmatpush1.msra.mxu0 %v1959
        %6906 = vmatprep.subr.mxu0 0.0
        %6907 = vmatpush1.msra.mxu0 %v2095
        %6908 = vmatprep.subr.mxu0 0.0
        %6909 = vmatpush1.msra.mxu0 0.0
        %6910 = vmatprep.subr.mxu0 0.0
        %6911 = vmatpush1.msra.mxu0 0.0
        %6912 = vmatprep.subr.mxu0 0.0
        %6913 = vmatpush1.msra.mxu0 0.0
        %6914 = vmatprep.subr.mxu0 0.0
        %6915 = vmatpush1.msra.mxu0 0.0
        %6916 = vmatprep.subr.mxu0 0.0
        %6917 = vmatpush1.msra.mxu0 0.0
        %6918 = vmatprep.subr.mxu0 0.0
        %6919 = vmatpush1.msra.mxu0 0.0
        %6920 = vmatprep.subr.mxu0 0.0
        %6921 = vmatpush1.msra.mxu0 0.0
        %6922 = vmatprep.subr.mxu0 0.0
        %6923 = vmatpush1.msra.mxu0 0.0
        %6924 = vmatprep.subr.mxu0 0.0
        %6925 = vmatpush1.msra.mxu0 0.0
        %6926 = vmatprep.subr.mxu0 0.0
        %6927 = vmatpush1.msra.mxu0 0.0
        %6928 = vmatprep.subr.mxu0 0.0
        %6929 = vmatpush1.msra.mxu0 0.0
        %6930 = vmatprep.subr.mxu0 0.0
        %6931 = vmatpush1.msra.mxu0 0.0
        %6932 = vmatprep.subr.mxu0 0.0
        %6933 = vmatpush1.msra.mxu0 0.0
        %6934 = vmatprep.subr.mxu0 0.0
        %6935 = vmatpush1.msra.mxu0 0.0
        %6936 = vmatprep.subr.mxu0 0.0
        %6937 = vmatpush1.msra.mxu0 0.0
        %6938 = vmatprep.subr.mxu0 0.0
        %6939 = vmatpush1.msra.mxu0 0.0
        %6940 = vmatprep.subr.mxu0 0.0
        %6941 = vmatpush1.msra.mxu0 0.0
        %6942 = vmatprep.subr.mxu0 0.0
        %6943 = vmatpush1.msra.mxu0 0.0
        %6944 = vmatprep.subr.mxu0 0.0
        %6945 = vmatpush1.msra.mxu0 0.0
        %6946 = vmatprep.subr.mxu0 0.0
        %6947 = vmatpush1.msra.mxu0 0.0
        %6948 = vmatprep.subr.mxu0 0.0
        %6949 = vmatpush1.msra.mxu0 0.0
        %6950 = vmatprep.subr.mxu0 0.0
        %6951 = vmatpush1.msra.mxu0 0.0
        %6952 = vmatprep.subr.mxu0 0.0
        %6953 = vmatpush1.msra.mxu0 0.0
        %6954 = vmatprep.subr.mxu0 0.0
        %6955 = vmatpush1.msra.mxu0 0.0
        %6956 = vmatprep.subr.mxu0 0.0
        %6957 = vmatpush1.msra.mxu0 0.0
        %6958 = vmatprep.subr.mxu0 0.0
        %6959 = vmatpush1.msra.mxu0 0.0
        %6960 = vmatprep.subr.mxu0 0.0
        %6961 = vmatpush1.msra.mxu0 0.0
        %6962 = vmatprep.subr.mxu0 0.0
        %6963 = vmatpush1.msra.mxu0 0.0
        %6964 = vmatprep.subr.mxu0 0.0
        %6965 = vmatpush1.msra.mxu0 0.0
        %6966 = vmatprep.subr.mxu0 0.0
        %6967 = vmatpush1.msra.mxu0 0.0
        %6968 = vmatprep.mubr.f32.mxu0 0.0
        %6969 = vmatmul.mubr.f32.gmra.mrb[0].mxu0 %v6899
        %v6970 = vpop.f32.mrb[0].mxu0
        %v6971 = vadd.f32 0.0, %v6970
        %v6972 = vpop.f32.mrb[0].mxu0
        %6973 = vmatprep.mubr.f32.mxu0 0.0
        %6974 = vmatmul.mubr.f32.gmra.mrb[0].mxu0 %v6902
        %v6975 = vpop.f32.mrb[0].mxu0
        %v6976 = vadd.f32 0.0, %v6975
        %v6977 = vpop.f32.mrb[0].mxu0
        %6978 = vdwg.mxu0
        %v6979 = vcombine.low %v5233, %v5379
        %v6980 = vcombine.high %v5233, %v5379
        %v6982 = vunpack.c.l.s4 1983009808
        %v6983 = vunpack.c.0.s8 %v6982
        %v6984 = vlaneseq
        %v6985 = vshrl.u32 %v6984, 7
        %v6986 = vsub.s32 %v6983, %v6985
        %v6987 = vrot.slane %v6979, %v6986
        %v6989 = vunpack.c.l.s4 1983009808
        %v6990 = vunpack.c.0.s8 %v6989
        %v6991 = vlaneseq
        %v6992 = vshrl.u32 %v6991, 7
        %v6993 = vsub.s32 %v6990, %v6992
        %v6994 = vrot.slane %v6980, %v6993
        %v6995 = vcombine.low %v5306, %v5452
        %v6996 = vcombine.high %v5306, %v5452
        %v6998 = vunpack.c.l.s4 1983009808
        %v6999 = vunpack.c.0.s8 %v6998
        %v7000 = vlaneseq
        %v7001 = vshrl.u32 %v7000, 7
        %v7002 = vsub.s32 %v6999, %v7001
        %v7003 = vrot.slane %v6995, %v7002
        %v7005 = vunpack.c.l.s4 1983009808
        %v7006 = vunpack.c.0.s8 %v7005
        %v7007 = vlaneseq
        %v7008 = vshrl.u32 %v7007, 7
        %v7009 = vsub.s32 %v7006, %v7008
        %v7010 = vrot.slane %v6996, %v7009
        %v7011 = vcombine.low %v5525, %v5671
        %v7012 = vcombine.high %v5525, %v5671
        %v7014 = vunpack.c.l.s4 1983009808
        %v7015 = vunpack.c.0.s8 %v7014
        %v7016 = vlaneseq
        %v7017 = vshrl.u32 %v7016, 7
        %v7018 = vsub.s32 %v7015, %v7017
        %v7019 = vrot.slane %v7011, %v7018
        %v7021 = vunpack.c.l.s4 1983009808
        %v7022 = vunpack.c.0.s8 %v7021
        %v7023 = vlaneseq
        %v7024 = vshrl.u32 %v7023, 7
        %v7025 = vsub.s32 %v7022, %v7024
        %v7026 = vrot.slane %v7012, %v7025
        %v7027 = vcombine.low %v5598, %v5744
        %v7028 = vcombine.high %v5598, %v5744
        %v7030 = vunpack.c.l.s4 1983009808
        %v7031 = vunpack.c.0.s8 %v7030
        %v7032 = vlaneseq
        %v7033 = vshrl.u32 %v7032, 7
        %v7034 = vsub.s32 %v7031, %v7033
        %v7035 = vrot.slane %v7027, %v7034
        %v7037 = vunpack.c.l.s4 1983009808
        %v7038 = vunpack.c.0.s8 %v7037
        %v7039 = vlaneseq
        %v7040 = vshrl.u32 %v7039, 7
        %v7041 = vsub.s32 %v7038, %v7040
        %v7042 = vrot.slane %v7028, %v7041
        %v7043 = vcombine.low %v6987, %v7003
        %v7044 = vcombine.high %v6987, %v7003
        %v7046 = vunpack.c.l.s4 1934713408
        %v7047 = vunpack.c.0.s8 %v7046
        %v7048 = vlaneseq
        %v7049 = vshrl.u32 %v7048, 7
        %v7050 = vsub.s32 %v7047, %v7049
        %v7051 = vrot.slane %v7043, %v7050
        %v7053 = vunpack.c.l.s4 1934713408
        %v7054 = vunpack.c.0.s8 %v7053
        %v7055 = vlaneseq
        %v7056 = vshrl.u32 %v7055, 7
        %v7057 = vsub.s32 %v7054, %v7056
        %v7058 = vrot.slane %v7044, %v7057
        %v7059 = vcombine.low %v6994, %v7010
        %v7060 = vcombine.high %v6994, %v7010
        %v7062 = vunpack.c.l.s4 1934713408
        %v7063 = vunpack.c.0.s8 %v7062
        %v7064 = vlaneseq
        %v7065 = vshrl.u32 %v7064, 7
        %v7066 = vsub.s32 %v7063, %v7065
        %v7067 = vrot.slane %v7059, %v7066
        %v7069 = vunpack.c.l.s4 1934713408
        %v7070 = vunpack.c.0.s8 %v7069
        %v7071 = vlaneseq
        %v7072 = vshrl.u32 %v7071, 7
        %v7073 = vsub.s32 %v7070, %v7072
        %v7074 = vrot.slane %v7060, %v7073
        %v7075 = vcombine.low %v7019, %v7035
        %v7076 = vcombine.high %v7019, %v7035
        %v7078 = vunpack.c.l.s4 1934713408
        %v7079 = vunpack.c.0.s8 %v7078
        %v7080 = vlaneseq
        %v7081 = vshrl.u32 %v7080, 7
        %v7082 = vsub.s32 %v7079, %v7081
        %v7083 = vrot.slane %v7075, %v7082
        %v7085 = vunpack.c.l.s4 1934713408
        %v7086 = vunpack.c.0.s8 %v7085
        %v7087 = vlaneseq
        %v7088 = vshrl.u32 %v7087, 7
        %v7089 = vsub.s32 %v7086, %v7088
        %v7090 = vrot.slane %v7076, %v7089
        %v7091 = vcombine.low %v7026, %v7042
        %v7092 = vcombine.high %v7026, %v7042
        %v7094 = vunpack.c.l.s4 1934713408
        %v7095 = vunpack.c.0.s8 %v7094
        %v7096 = vlaneseq
        %v7097 = vshrl.u32 %v7096, 7
        %v7098 = vsub.s32 %v7095, %v7097
        %v7099 = vrot.slane %v7091, %v7098
        %v7101 = vunpack.c.l.s4 1934713408
        %v7102 = vunpack.c.0.s8 %v7101
        %v7103 = vlaneseq
        %v7104 = vshrl.u32 %v7103, 7
        %v7105 = vsub.s32 %v7102, %v7104
        %v7106 = vrot.slane %v7092, %v7105
        %v7107 = vcombine.low %v7051, %v7083
        %v7108 = vcombine.high %v7051, %v7083
        %v7109 = vcombine.low %v7058, %v7090
        %v7110 = vcombine.high %v7058, %v7090
        %v7111 = vcombine.low %v7067, %v7099
        %v7112 = vcombine.high %v7067, %v7099
        %v7113 = vcombine.low %v7074, %v7106
        %v7114 = vcombine.high %v7074, %v7106
        %v7115 = vcombine.low %v5817, %v5963
        %v7116 = vcombine.high %v5817, %v5963
        %v7118 = vunpack.c.l.s4 1983009808
        %v7119 = vunpack.c.0.s8 %v7118
        %v7120 = vlaneseq
        %v7121 = vshrl.u32 %v7120, 7
        %v7122 = vsub.s32 %v7119, %v7121
        %v7123 = vrot.slane %v7115, %v7122
        %v7125 = vunpack.c.l.s4 1983009808
        %v7126 = vunpack.c.0.s8 %v7125
        %v7127 = vlaneseq
        %v7128 = vshrl.u32 %v7127, 7
        %v7129 = vsub.s32 %v7126, %v7128
        %v7130 = vrot.slane %v7116, %v7129
        %v7131 = vcombine.low %v5890, %v6036
        %v7132 = vcombine.high %v5890, %v6036
        %v7134 = vunpack.c.l.s4 1983009808
        %v7135 = vunpack.c.0.s8 %v7134
        %v7136 = vlaneseq
        %v7137 = vshrl.u32 %v7136, 7
        %v7138 = vsub.s32 %v7135, %v7137
        %v7139 = vrot.slane %v7131, %v7138
        %v7141 = vunpack.c.l.s4 1983009808
        %v7142 = vunpack.c.0.s8 %v7141
        %v7143 = vlaneseq
        %v7144 = vshrl.u32 %v7143, 7
        %v7145 = vsub.s32 %v7142, %v7144
        %v7146 = vrot.slane %v7132, %v7145
        %v7147 = vcombine.low %v6109, %v6255
        %v7148 = vcombine.high %v6109, %v6255
        %v7150 = vunpack.c.l.s4 1983009808
        %v7151 = vunpack.c.0.s8 %v7150
        %v7152 = vlaneseq
        %v7153 = vshrl.u32 %v7152, 7
        %v7154 = vsub.s32 %v7151, %v7153
        %v7155 = vrot.slane %v7147, %v7154
        %v7157 = vunpack.c.l.s4 1983009808
        %v7158 = vunpack.c.0.s8 %v7157
        %v7159 = vlaneseq
        %v7160 = vshrl.u32 %v7159, 7
        %v7161 = vsub.s32 %v7158, %v7160
        %v7162 = vrot.slane %v7148, %v7161
        %v7163 = vcombine.low %v6182, %v6328
        %v7164 = vcombine.high %v6182, %v6328
        %v7166 = vunpack.c.l.s4 1983009808
        %v7167 = vunpack.c.0.s8 %v7166
        %v7168 = vlaneseq
        %v7169 = vshrl.u32 %v7168, 7
        %v7170 = vsub.s32 %v7167, %v7169
        %v7171 = vrot.slane %v7163, %v7170
        %v7173 = vunpack.c.l.s4 1983009808
        %v7174 = vunpack.c.0.s8 %v7173
        %v7175 = vlaneseq
        %v7176 = vshrl.u32 %v7175, 7
        %v7177 = vsub.s32 %v7174, %v7176
        %v7178 = vrot.slane %v7164, %v7177
        %v7179 = vcombine.low %v7123, %v7139
        %v7180 = vcombine.high %v7123, %v7139
        %v7182 = vunpack.c.l.s4 1934713408
        %v7183 = vunpack.c.0.s8 %v7182
        %v7184 = vlaneseq
        %v7185 = vshrl.u32 %v7184, 7
        %v7186 = vsub.s32 %v7183, %v7185
        %v7187 = vrot.slane %v7179, %v7186
        %v7189 = vunpack.c.l.s4 1934713408
        %v7190 = vunpack.c.0.s8 %v7189
        %v7191 = vlaneseq
        %v7192 = vshrl.u32 %v7191, 7
        %v7193 = vsub.s32 %v7190, %v7192
        %v7194 = vrot.slane %v7180, %v7193
        %v7195 = vcombine.low %v7130, %v7146
        %v7196 = vcombine.high %v7130, %v7146
        %v7198 = vunpack.c.l.s4 1934713408
        %v7199 = vunpack.c.0.s8 %v7198
        %v7200 = vlaneseq
        %v7201 = vshrl.u32 %v7200, 7
        %v7202 = vsub.s32 %v7199, %v7201
        %v7203 = vrot.slane %v7195, %v7202
        %v7205 = vunpack.c.l.s4 1934713408
        %v7206 = vunpack.c.0.s8 %v7205
        %v7207 = vlaneseq
        %v7208 = vshrl.u32 %v7207, 7
        %v7209 = vsub.s32 %v7206, %v7208
        %v7210 = vrot.slane %v7196, %v7209
        %v7211 = vcombine.low %v7155, %v7171
        %v7212 = vcombine.high %v7155, %v7171
        %v7214 = vunpack.c.l.s4 1934713408
        %v7215 = vunpack.c.0.s8 %v7214
        %v7216 = vlaneseq
        %v7217 = vshrl.u32 %v7216, 7
        %v7218 = vsub.s32 %v7215, %v7217
        %v7219 = vrot.slane %v7211, %v7218
        %v7221 = vunpack.c.l.s4 1934713408
        %v7222 = vunpack.c.0.s8 %v7221
        %v7223 = vlaneseq
        %v7224 = vshrl.u32 %v7223, 7
        %v7225 = vsub.s32 %v7222, %v7224
        %v7226 = vrot.slane %v7212, %v7225
        %v7227 = vcombine.low %v7162, %v7178
        %v7228 = vcombine.high %v7162, %v7178
        %v7230 = vunpack.c.l.s4 1934713408
        %v7231 = vunpack.c.0.s8 %v7230
        %v7232 = vlaneseq
        %v7233 = vshrl.u32 %v7232, 7
        %v7234 = vsub.s32 %v7231, %v7233
        %v7235 = vrot.slane %v7227, %v7234
        %v7237 = vunpack.c.l.s4 1934713408
        %v7238 = vunpack.c.0.s8 %v7237
        %v7239 = vlaneseq
        %v7240 = vshrl.u32 %v7239, 7
        %v7241 = vsub.s32 %v7238, %v7240
        %v7242 = vrot.slane %v7228, %v7241
        %v7243 = vcombine.low %v7187, %v7219
        %v7244 = vcombine.high %v7187, %v7219
        %v7245 = vcombine.low %v7194, %v7226
        %v7246 = vcombine.high %v7194, %v7226
        %v7247 = vcombine.low %v7203, %v7235
        %v7248 = vcombine.high %v7203, %v7235
        %v7249 = vcombine.low %v7210, %v7242
        %v7250 = vcombine.high %v7210, %v7242
        %v7251 = vadd.f32 %v7107, %v6404
        %v7252 = vadd.f32 %v7243, %v6409
        %v7253 = vadd.f32 %v7108, %v6485
        %v7254 = vadd.f32 %v7244, %v6490
        %v7255 = vadd.f32 %v7109, %v6566
        %v7256 = vadd.f32 %v7245, %v6571
        %v7257 = vadd.f32 %v7110, %v6647
        %v7258 = vadd.f32 %v7246, %v6652
        %v7259 = vadd.f32 %v7111, %v6728
        %v7260 = vadd.f32 %v7247, %v6733
        %v7261 = vadd.f32 %v7112, %v6809
        %v7262 = vadd.f32 %v7248, %v6814
        %v7263 = vadd.f32 %v7113, %v6890
        %v7264 = vadd.f32 %v7249, %v6895
        %v7265 = vadd.f32 %v7114, %v6971
        %v7266 = vadd.f32 %v7250, %v6976
        %v7267 = vlaneseq
        %v7268 = vshrl.u32 %v7267, 7
        %v7269 = vsub.s32 0, %v7268
        %v7270 = vrot.slane %v5162, %v7269
        %7272 = vbcast.lane.b32.xlu0 %v7270, 256
        %v7273 = vpop.permute.xlu0 %7272
        %s7275 = sor.u32 256, 8
        %7276 = vbcast.lane.b32.xlu0 %v7270, %s7275
        %v7277 = vpop.permute.xlu0 %7276
        %v7278 = vlaneseq
        %v7279 = vshrl.u32 %v7278, 7
        %v7280 = vsub.s32 1, %v7279
        %v7281 = vrot.slane %v5162, %v7280
        %7283 = vbcast.lane.b32.xlu0 %v7281, 256
        %v7284 = vpop.permute.xlu0 %7283
        %s7286 = sor.u32 256, 8
        %7287 = vbcast.lane.b32.xlu0 %v7281, %s7286
        %v7288 = vpop.permute.xlu0 %7287
        %v7289 = vlaneseq
        %v7290 = vshrl.u32 %v7289, 7
        %v7291 = vsub.s32 2, %v7290
        %v7292 = vrot.slane %v5162, %v7291
        %7294 = vbcast.lane.b32.xlu0 %v7292, 256
        %v7295 = vpop.permute.xlu0 %7294
        %s7297 = sor.u32 256, 8
        %7298 = vbcast.lane.b32.xlu0 %v7292, %s7297
        %v7299 = vpop.permute.xlu0 %7298
        %v7300 = vlaneseq
        %v7301 = vshrl.u32 %v7300, 7
        %v7302 = vsub.s32 3, %v7301
        %v7303 = vrot.slane %v5162, %v7302
        %7305 = vbcast.lane.b32.xlu0 %v7303, 256
        %v7306 = vpop.permute.xlu0 %7305
        %s7308 = sor.u32 256, 8
        %7309 = vbcast.lane.b32.xlu0 %v7303, %s7308
        %v7310 = vpop.permute.xlu0 %7309
        %v7311 = vlaneseq
        %v7312 = vshrl.u32 %v7311, 7
        %v7313 = vsub.s32 4, %v7312
        %v7314 = vrot.slane %v5162, %v7313
        %7316 = vbcast.lane.b32.xlu0 %v7314, 256
        %v7317 = vpop.permute.xlu0 %7316
        %s7319 = sor.u32 256, 8
        %7320 = vbcast.lane.b32.xlu0 %v7314, %s7319
        %v7321 = vpop.permute.xlu0 %7320
        %v7322 = vlaneseq
        %v7323 = vshrl.u32 %v7322, 7
        %v7324 = vsub.s32 5, %v7323
        %v7325 = vrot.slane %v5162, %v7324
        %7327 = vbcast.lane.b32.xlu0 %v7325, 256
        %v7328 = vpop.permute.xlu0 %7327
        %s7330 = sor.u32 256, 8
        %7331 = vbcast.lane.b32.xlu0 %v7325, %s7330
        %v7332 = vpop.permute.xlu0 %7331
        %v7333 = vlaneseq
        %v7334 = vshrl.u32 %v7333, 7
        %v7335 = vsub.s32 6, %v7334
        %v7336 = vrot.slane %v5162, %v7335
        %7338 = vbcast.lane.b32.xlu0 %v7336, 256
        %v7339 = vpop.permute.xlu0 %7338
        %s7341 = sor.u32 256, 8
        %7342 = vbcast.lane.b32.xlu0 %v7336, %s7341
        %v7343 = vpop.permute.xlu0 %7342
        %v7344 = vlaneseq
        %v7345 = vshrl.u32 %v7344, 7
        %v7346 = vsub.s32 7, %v7345
        %v7347 = vrot.slane %v5162, %v7346
        %7349 = vbcast.lane.b32.xlu0 %v7347, 256
        %v7350 = vpop.permute.xlu0 %7349
        %s7352 = sor.u32 256, 8
        %7353 = vbcast.lane.b32.xlu0 %v7347, %s7352
        %v7354 = vpop.permute.xlu0 %7353
        %v7355 = vmul.f32 %v7251, %v7273
        %v7356 = vmul.f32 %v7252, %v7277
        %v7357 = vmul.f32 %v7253, %v7284
        %v7358 = vmul.f32 %v7254, %v7288
        %v7359 = vmul.f32 %v7255, %v7295
        %v7360 = vmul.f32 %v7256, %v7299
        %v7361 = vmul.f32 %v7257, %v7306
        %v7362 = vmul.f32 %v7258, %v7310
        %v7363 = vmul.f32 %v7259, %v7317
        %v7364 = vmul.f32 %v7260, %v7321
        %v7365 = vmul.f32 %v7261, %v7328
        %v7366 = vmul.f32 %v7262, %v7332
        %v7367 = vmul.f32 %v7263, %v7339
        %v7368 = vmul.f32 %v7264, %v7343
        %v7369 = vmul.f32 %v7265, %v7350
        %v7370 = vmul.f32 %v7266, %v7354
        %7371 = vxpose.xlu0.b32.start [1/16] %v7355, 128
        %7372 = vxpose.xlu0.b32.cont [2/16] %v7356, 128
        %7373 = vxpose.xlu0.b32.cont [3/16] %v7357, 128
        %7374 = vxpose.xlu0.b32.cont [4/16] %v7358, 128
        %7375 = vxpose.xlu0.b32.cont [5/16] %v7359, 128
        %7376 = vxpose.xlu0.b32.cont [6/16] %v7360, 128
        %7377 = vxpose.xlu0.b32.cont [7/16] %v7361, 128
        %7378 = vxpose.xlu0.b32.cont [8/16] %v7362, 128
        %7379 = vxpose.xlu0.b32.cont [9/16] %v7363, 128
        %7380 = vxpose.xlu0.b32.cont [10/16] %v7364, 128
        %7381 = vxpose.xlu0.b32.cont [11/16] %v7365, 128
        %7382 = vxpose.xlu0.b32.cont [12/16] %v7366, 128
        %7383 = vxpose.xlu0.b32.cont [13/16] %v7367, 128
        %7384 = vxpose.xlu0.b32.cont [14/16] %v7368, 128
        %7385 = vxpose.xlu0.b32.cont [15/16] %v7369, 128
        %7386 = vxpose.xlu0.b32.end [16/16] %v7370, 128
        %v7387 = vpop.trf.xlu0
        %v7388 = vpop.trf.xlu0
        %v7389 = vpop.trf.xlu0
        %v7390 = vpop.trf.xlu0
        %v7391 = vpop.trf.xlu0
        %v7392 = vpop.trf.xlu0
        %v7393 = vpop.trf.xlu0
        %v7394 = vpop.trf.xlu0
        %v7395 = vpop.trf.xlu0
        %v7396 = vpop.trf.xlu0
        %v7397 = vpop.trf.xlu0
        %v7398 = vpop.trf.xlu0
        %v7399 = vpop.trf.xlu0
        %v7400 = vpop.trf.xlu0
        %v7401 = vpop.trf.xlu0
        %v7402 = vpop.trf.xlu0
        %s7403 = sshra.s32 %s1164, 7
        %s7404 = sand.u32 %s1164, 127
        %s7405 = smul.addr %s7403, 8
        %s7406 = scalar_lea.vmem [#allocation2], %s7405
        %v7407 = vld [vmem:[%s7406] sm:$0xff]
        %v7408 = vld [vmem:[%s7406 + $0x10] sm:$0xff]
        %v7409 = vld [vmem:[%s7406 + $0x20] sm:$0xff]
        %v7410 = vld [vmem:[%s7406 + $0x30] sm:$0xff]
        %v7411 = vadd.f32 %v7387, %v7407
        %v7412 = vadd.f32 %v7388, %v7408
        %v7413 = vadd.f32 %v7389, %v7409
        %v7414 = vadd.f32 %v7390, %v7410
        %7415 = vst [vmem:[%s179] sm:$0xff] %v7411
        %7416 = vst [vmem:[%s179 + $0x8] sm:$0xff] %v7412
        %7417 = vst [vmem:[%s179 + $0x10] sm:$0xff] %v7413
        %7418 = vst [vmem:[%s179 + $0x18] sm:$0xff] %v7414
        %s7419 = sand.u32 %s105, 1
        %s7420 = scalar_lea.sflag [#allocation10], %s7419
        %s7421 = sand.u32 %s105, 1
        %s7422 = smul.addr %s7421, 32
        %s7423 = scalar_lea.vmem [#allocation11], %s7422
        // Predicated region
        $region52: #{tpu_custom_call.1} parent=31 // pred_check
          %p7424 = pneg %p115
        $region53: #{tpu_custom_call.1} parent=31 // pred_check_branch
          %7426 = sbr.rel (%p7424) target = $region55
        $region54: #{tpu_custom_call.1} parent=31 // pred_region
          %s7428 = ssub.s32 512, 512
          %7429 = vsyncadd %s7420, %s7428
          %s7430 = smul.addr %s24, 8
          %s7431 = sadd.s32 %s25, %s7430
          %s7432 = smul.addr %s7431, 128
          %s7433 = scalar_lea.hbm %s4, %s7432
          %s7434 = sshll.u32 %s7423, 4
          %s7435 = int_to_ptr.vmem [resolvable:$true] %s7434
          %7440 = dma.vmem_to_hbm [thread:$0]  %s7435, 512, %s7433, %s7420, 128, 256, 8
        $region55: #{tpu_custom_call.1} parent=31 // pred_fallthru
          _
      $region32: #{tpu_custom_call.1} parent=5 // pred_fallthru
        _
      %p7441 = scmp.le.s32.totalorder 2, %s15
      // Predicated region
      $region56: #{tpu_custom_call.1} parent=5 // pred_check
        %p7442 = pneg %p7441
      $region57: #{tpu_custom_call.1} parent=5 // pred_check_branch
        %7444 = sbr.rel (%p7442) target = $region59
      $region58: #{tpu_custom_call.1} parent=5 // pred_region
        %s7445 = ssub.s32 %s15, 2
        // Predicated region
        $region60: #{tpu_custom_call.1} parent=58 // pred_check
          %p7446 = pneg %p121
        $region61: #{tpu_custom_call.1} parent=58 // pred_check_branch
          %7448 = sbr.rel (%p7446) target = $region63
        $region62: #{tpu_custom_call.1} parent=58 // pred_region
          %s7449 = sand.u32 %s106, 1
          %s7450 = scalar_lea.sflag [#allocation10], %s7449
          %s7451 = sand.u32 %s106, 1
          %s7452 = smul.addr %s7451, 32
          %s7453 = scalar_lea.vmem [#allocation11], %s7452
          %7454 = dma.done %s7450, 512
        $region63: #{tpu_custom_call.1} parent=58 // pred_fallthru
          _
      $region59: #{tpu_custom_call.1} parent=5 // pred_fallthru
        _
    $region6: #{tpu_custom_call.1} parent=1 // loop_footer
      %s19 = sadd.s32 1, %s15
    $region7: #{tpu_custom_call.1} parent=1 // loop_footer_branch
      %14 = sbr.rel target = $region3
    $region8: #{tpu_custom_call.1} parent=1 // loop_exit
      _
    %7455 = vsyncpa [#allocation9], 1
    %s7456 = scalar_lea.sflag [#allocation9], 1
    %7457 = vsyncpa %s7456, 1
    %7458 = vsyncpa [#allocation10], 1
    %s7459 = scalar_lea.sflag [#allocation10], 1
    %7460 = vsyncpa %s7459, 1
  %7461 = vsyncmov [#allocation6]
  %s7462 = vpop.sfrf %7461
  %p7463 = scmp.eq.s32.totalorder %s7462, 0
  %p7464 = pneg %p7463
  %7466 = shalt.err (%p7464)

</llo_original>
